<compile_context>
chip_gen: v5e
topology: v5e:2x2
jax: 0.10.0
libtpu: 0.0.40
codegen_flags: <defaults>
</compile_context>

<pallas_src>
import functools

import numpy as np
import jax
import jax.numpy as jnp
from jax import lax
from jax.experimental import pallas as pl
from jax.experimental.pallas import tpu as pltpu

LRELU_SLOPE = 0.1
_LANE = 128


def _round_up(x, m):
    return (x + m - 1) // m * m


def _vmem_limit(nbytes):
    # Explicit scoped-VMEM budget: >= the default limit on every generation
    # (16 MiB v5e / 32 MiB v6e,v7x), capped at v7x's 64 MiB physical VMEM.
    return int(max(32 << 20, min(int(nbytes * 1.5) + (2 << 20), 64 << 20)))


# --------------------------- STFT magnitude kernel ---------------------------

def _stft_mag_kernel(x_ref, basis_ref, o_ref, *, tm, n_rows, m_off, m_valid):
    # x_ref:     (Wr, hop)         hop-wide rows of the padded waveform for
    #                              this batch element (resident across tiles).
    # basis_ref: (n_rows, hop, 2T) windowed cos|sin DFT basis rows for this
    #                              128-bin frequency tile (rows >= n_fft = 0).
    # o_ref:     (tm, T)           |STFT| tile; rows outside [m_off, m_off+M)
    #                              are written as exact zeros (time margins).
    m = pl.program_id(1)
    base = pl.multiple_of(m * tm, 8)
    tf2 = basis_ref.shape[-1]
    acc = jnp.zeros((tm, tf2), jnp.float32)
    for c in range(n_rows):          # accumulate over static basis row-slices
        acc = acc + jnp.dot(x_ref[pl.ds(base + c, tm), :], basis_ref[c],
                            preferred_element_type=jnp.float32)
    tf = tf2 // 2
    re = acc[:, :tf]
    im = acc[:, tf:]
    mag = jnp.sqrt(re * re + im * im)
    rows = base + lax.broadcasted_iota(jnp.int32, mag.shape, 0)
    mag = jnp.where((rows >= m_off) & (rows < m_off + m_valid), mag, 0.0)
    o_ref[...] = mag.astype(o_ref.dtype)


def spectrogram(x, *, n_fft, hop_length, win_length, m_off, min_rows,
                out_dtype=jnp.float32):
    """x: (B, 1, T) -> (B, W_store, LP) magnitude spectrogram matching
    torch.stft(center=False, window=None) of the reflect-padded signal.
    Valid frames live at rows [m_off, m_off + M); all other rows and all
    frequency columns >= F are exact zeros (consumed as conv zero padding)."""
    hop = hop_length
    pad = (n_fft - hop) // 2
    xw = jnp.pad(x[:, 0, :], ((0, 0), (pad, pad)), mode="reflect")     # (B, Tp)
    B, Tp = xw.shape
    M = 1 + (Tp - n_fft) // hop
    F = n_fft // 2 + 1
    LP = _round_up(F, _LANE)
    n_ft = LP // _LANE
    R = -(-n_fft // hop)                          # waveform rows per frame

    tm = 128 if min_rows > 128 else _round_up(min_rows, 8)
    n_mt = -(-min_rows // tm)
    w_store = n_mt * tm

    # waveform -> (B, Wr, hop) rows; frame f occupies rows [m_off+f, m_off+f+R)
    rows_data = -(-Tp // hop)
    Wr = max(w_store + R - 1, m_off + rows_data)
    start = m_off * hop
    x_rows = jnp.pad(xw, ((0, 0), (start, Wr * hop - start - Tp)))
    x_rows = x_rows.reshape(B, Wr, hop).astype(jnp.float32)

    # windowed cos|sin DFT basis (torch: rectangular win_length window centered
    # in n_fft), zero-padded to R*hop rows and LP freq columns, laid out per
    # 128-bin frequency tile: (n_ft, R, hop, 2*128).
    win = np.zeros((n_fft,), np.float64)
    left = (n_fft - win_length) // 2
    win[left:left + win_length] = 1.0
    n = np.arange(n_fft, dtype=np.float64)[:, None]
    f = np.arange(F, dtype=np.float64)[None, :]
    ang = 2.0 * np.pi * n * f / n_fft
    cos_b = np.zeros((R * hop, LP), np.float32)
    sin_b = np.zeros((R * hop, LP), np.float32)
    cos_b[:n_fft, :F] = (np.cos(ang) * win[:, None]).astype(np.float32)
    sin_b[:n_fft, :F] = (np.sin(ang) * win[:, None]).astype(np.float32)

    def _tile(b):
        return b.reshape(R, hop, n_ft, _LANE).transpose(2, 0, 1, 3)

    basis = jnp.asarray(np.concatenate([_tile(cos_b), _tile(sin_b)], axis=-1))

    vmem = _vmem_limit(2 * Wr * hop * 4 + 2 * R * hop * 2 * _LANE * 4
                       + 2 * tm * _LANE * 4)
    out = pl.pallas_call(
        functools.partial(_stft_mag_kernel, tm=tm, n_rows=R, m_off=m_off,
                          m_valid=M),
        out_shape=jax.ShapeDtypeStruct((B, w_store, LP), out_dtype),
        grid=(B, n_mt, n_ft),
        in_specs=[pl.BlockSpec((None, Wr, hop), lambda b, m, ft: (b, 0, 0)),
                  pl.BlockSpec((None, R, hop, 2 * _LANE),
                               lambda b, m, ft: (ft, 0, 0, 0))],
        out_specs=pl.BlockSpec((None, tm, _LANE), lambda b, m, ft: (b, m, ft)),
        compiler_params=pltpu.CompilerParams(
            dimension_semantics=("parallel", "parallel", "parallel"),
            vmem_limit_bytes=vmem),
    )(x_rows, basis)
    return out


# -------------------------------- conv kernel --------------------------------

def _conv_kernel(x_ref, w_ref, b_ref, o_ref, *, KW, KH, sw, pad_w, pad_h, tw,
                 in_off, out_off, w_valid, f_valid, w_in, apply_act):
    # x_ref: (w_in, Cin, LP)   full per-batch input, freq lane-padded.  Valid
    #                          time rows start at in_off (== pad_w); margin
    #                          rows and freq cols >= f_valid are exact zeros.
    # w_ref: (Cout, KW*KH*Cin) taps folded into one MXU contraction axis.
    # b_ref: (Cout, 1)
    # o_ref: (tw, Cout, LP)    valid rows at [out_off, out_off + w_valid).
    j = pl.program_id(1)
    base = j * tw
    lp = x_ref.shape[-1]
    cin = x_ref.shape[1]
    cout = w_ref.shape[0]
    wmat = w_ref[...]
    bias = b_ref[...]
    lane_ok = lax.broadcasted_iota(jnp.int32, (cout, lp), 1) < f_valid
    zpad = jnp.zeros((cin, _LANE), x_ref.dtype)

    def body(t, carry):
        a = base + t                      # absolute output row
        o = a - out_off                   # conv output time index
        valid = jnp.logical_and(o >= 0, o < w_valid)
        r0 = jnp.clip(in_off - pad_w + o * sw, 0, w_in - KW)
        pieces = []
        for kw in range(KW):
            xw = x_ref[r0 + kw]                              # (Cin, LP)
            # lane halo (aligned concat of 128-multiples) -> freq tap slices
            xe = jnp.concatenate([zpad, xw, zpad], axis=1)   # (Cin, LP+256)
            for kh in range(KH):
                off = _LANE - pad_h + kh
                pieces.append(xe[:, off:off + lp])
        rhs = jnp.concatenate(pieces, axis=0)                # (KW*KH*Cin, LP)
        y = jnp.dot(wmat, rhs, preferred_element_type=jnp.float32) + bias
        if apply_act:
            y = jnp.where(y > 0, y, LRELU_SLOPE * y)
        # keep time margins and freq columns >= f_valid exactly zero: they are
        # the zero padding the next layer consumes.
        y = jnp.where(jnp.logical_and(valid, lane_ok), y, 0.0)
        o_ref[t] = y.astype(o_ref.dtype)
        return carry

    lax.fori_loop(0, tw, body, 0)


def conv2d_layer(x, weight, bias, *, sw, pad_w, pad_h, apply_act, in_off,
                 out_off, w_valid_out, w_store_out, tw, f_valid, out_dtype,
                 conv_dtype):
    """x: (N, W_in_store, Cin, LP) activations (carried layout).  weight:
    torch (Cout, Cin, KH, KW).  Returns (N, W_store_out, Cout, LP) with bias +
    (optional) leaky_relu fused and zero margins maintained."""
    N, w_in, Cin, LP = x.shape
    Cout, Cin_w, KH, KW = weight.shape
    assert Cin_w == Cin
    K = KW * KH * Cin
    # taps folded into the contraction axis, order (kw, kh, cin)
    w2 = jnp.transpose(weight, (0, 3, 2, 1)).reshape(Cout, K).astype(conv_dtype)
    b2 = bias.reshape(Cout, 1).astype(jnp.float32)
    n_wt = w_store_out // tw

    isz = jnp.dtype(conv_dtype).itemsize
    vmem = _vmem_limit(2 * w_in * Cin * LP * isz + 2 * Cout * K * isz
                       + 2 * tw * Cout * LP * 4 + 2 * (K + Cout) * LP * 4)
    # TODO(synk): pl.Buffered(1) / halo'd manual-DMA W tiling of the resident
    # input for seconds-long audio on v7x (64 MiB VMEM).
    out = pl.pallas_call(
        functools.partial(_conv_kernel, KW=KW, KH=KH, sw=sw, pad_w=pad_w,
                          pad_h=pad_h, tw=tw, in_off=in_off, out_off=out_off,
                          w_valid=w_valid_out, f_valid=f_valid, w_in=w_in,
                          apply_act=apply_act),
        out_shape=jax.ShapeDtypeStruct((N, w_store_out, Cout, LP), out_dtype),
        grid=(N, n_wt),
        in_specs=[pl.BlockSpec((None, w_in, Cin, LP),
                               lambda n, j: (n, 0, 0, 0)),
                  pl.BlockSpec((Cout, K), lambda n, j: (0, 0)),
                  pl.BlockSpec((Cout, 1), lambda n, j: (0, 0))],
        out_specs=pl.BlockSpec((None, tw, Cout, LP),
                               lambda n, j: (n, j, 0, 0)),
        compiler_params=pltpu.CompilerParams(
            dimension_semantics=("parallel", "parallel"),
            vmem_limit_bytes=vmem),
    )(x.astype(conv_dtype), w2, b2)
    return out


# ------------------------------- forward pass --------------------------------

_CONV_CFG = [  # (name, KW, stride_w, pad_w, leaky_relu)
    ("conv0", 9, 1, 4, True),
    ("conv1", 9, 2, 4, True),
    ("conv2", 9, 2, 4, True),
    ("conv3", 9, 2, 4, True),
    ("conv4", 3, 1, 1, True),
    ("post", 3, 1, 1, False),
]
_KH = 3
_PAD_H = 1


def discriminator_r_forward(x, params, *, n_fft, hop_length, win_length,
                            conv_dtype=jnp.float32):
    # conv_dtype=jnp.bfloat16 is the recommended setting on v6e/v7x for the
    # conv stack (accumulation / bias / leaky_relu stay f32); the STFT
    # operands always stay f32 for accuracy.
    B, _, T = x.shape
    F = n_fft // 2 + 1
    pad = (n_fft - hop_length) // 2
    Tp = T + 2 * pad
    M = 1 + (Tp - n_fft) // hop_length

    n_stage = len(_CONV_CFG)
    # valid time widths per stage (stage 0 == spectrogram, 1.. == convs)
    V = [M]
    for (_, KW, sw, pw, _) in _CONV_CFG:
        V.append((V[-1] + 2 * pw - KW) // sw + 1)
    # stored-array start offsets (== next stage's pad_w) and required extents
    out_off, extent = [], []
    for s in range(n_stage + 1):
        if s < n_stage:
            _, KWn, swn, pwn, _ = _CONV_CFG[s]
            oo = pwn
            need = max(oo + V[s], (V[s + 1] - 1) * swn + KWn)
        else:
            oo, need = 0, V[s]
        out_off.append(oo)
        extent.append(need)

    h = spectrogram(x, n_fft=n_fft, hop_length=hop_length,
                    win_length=win_length, m_off=out_off[0],
                    min_rows=extent[0], out_dtype=conv_dtype)
    h = h[:, :, None, :]                              # (B, W_store, 1, LP)

    fmap = []
    prev_off = out_off[0]
    final_nchw = None
    for s, (name, KW, sw, pw, act) in enumerate(_CONV_CFG, start=1):
        tw = extent[s] if extent[s] <= 32 else 32
        w_store = _round_up(extent[s], tw)
        h = conv2d_layer(h, params[f"{name}_w"], params[f"{name}_b"],
                         sw=sw, pad_w=pw, pad_h=_PAD_H, apply_act=act,
                         in_off=prev_off, out_off=out_off[s],
                         w_valid_out=V[s], w_store_out=w_store, tw=tw,
                         f_valid=F,
                         out_dtype=conv_dtype if act else jnp.float32,
                         conv_dtype=conv_dtype)
        prev_off = out_off[s]
        nchw = jnp.transpose(h[:, out_off[s]:out_off[s] + V[s], :, :F],
                             (0, 2, 3, 1)).astype(jnp.float32)  # (N, C, F, T)
        fmap.append(nchw)
        final_nchw = nchw
    out = final_nchw.reshape(B, -1)                  # torch.flatten(x, 1, -1)
    return out, fmap


# ---------------------------- deterministic params ---------------------------
# weight_norm is a reparametrization; forward semantics are a plain conv, so
# the effective weights are synthesized directly.

def init_params(key):
    shapes = [(32, 1, 3, 9), (32, 32, 3, 9), (32, 32, 3, 9),
              (32, 32, 3, 9), (32, 32, 3, 3)]
    params = {}
    for i, s in enumerate(shapes):
        key, k1, k2 = jax.random.split(key, 3)
        params[f"conv{i}_w"] = 0.02 * jax.random.normal(k1, s, jnp.float32)
        params[f"conv{i}_b"] = 0.01 * jax.random.normal(k2, (s[0],), jnp.float32)
    key, k1, k2 = jax.random.split(key, 3)
    params["post_w"] = 0.02 * jax.random.normal(k1, (1, 32, 3, 3), jnp.float32)
    params["post_b"] = 0.01 * jax.random.normal(k2, (1,), jnp.float32)
    return params


# ----------------------- pure-JAX reference (XLA only) -----------------------

def _reference_forward(x, params, *, n_fft, hop_length, win_length):
    pad = (n_fft - hop_length) // 2
    xw = jnp.pad(x[:, 0, :], ((0, 0), (pad, pad)), mode="reflect")
    B, Tp = xw.shape
    M = 1 + (Tp - n_fft) // hop_length
    F = n_fft // 2 + 1
    idx = jnp.arange(M)[:, None] * hop_length + jnp.arange(n_fft)[None, :]
    frames = xw[:, idx]                                   # (B, M, n_fft)
    win = np.zeros((n_fft,), np.float32)
    left = (n_fft - win_length) // 2
    win[left:left + win_length] = 1.0
    frames = frames * jnp.asarray(win)
    nn_ = np.arange(n_fft)[:, None].astype(np.float64)
    ff = np.arange(F)[None, :].astype(np.float64)
    ang = 2.0 * np.pi * nn_ * ff / n_fft
    cos_b = jnp.asarray(np.cos(ang), jnp.float32)
    sin_b = jnp.asarray(np.sin(ang), jnp.float32)
    re = jnp.matmul(frames, cos_b, precision=lax.Precision.HIGHEST)
    im = jnp.matmul(frames, sin_b, precision=lax.Precision.HIGHEST)
    mag = jnp.sqrt(re * re + im * im)                     # (B, M, F)
    h = jnp.transpose(mag, (0, 2, 1))[:, None]            # (B, 1, F, M)
    fmap = []
    cfg = [(1, 1, 4), (2, 1, 4), (2, 1, 4), (2, 1, 4), (1, 1, 1)]
    for i, (sw, ph, pw) in enumerate(cfg):
        h = lax.conv_general_dilated(
            h, params[f"conv{i}_w"], window_strides=(1, sw),
            padding=((ph, ph), (pw, pw)),
            dimension_numbers=("NCHW", "OIHW", "NCHW"),
            precision=lax.Precision.HIGHEST)
        h = h + params[f"conv{i}_b"][None, :, None, None]
        h = jnp.where(h > 0, h, LRELU_SLOPE * h)
        fmap.append(h)
    h = lax.conv_general_dilated(
        h, params["post_w"], window_strides=(1, 1), padding=((1, 1), (1, 1)),
        dimension_numbers=("NCHW", "OIHW", "NCHW"),
        precision=lax.Precision.HIGHEST)
    h = h + params["post_b"][None, :, None, None]
    fmap.append(h)
    return h.reshape(h.shape[0], -1), fmap


if __name__ == "__main__":
    key = jax.random.PRNGKey(0)
    kx, kp = jax.random.split(key)
    params = init_params(kp)

    # (n_fft, hop, win, T): first config has n_fft % hop != 0 (the production
    # style case the framing generalization targets), second is the divisible
    # case.
    configs = [(32, 12, 20, 96), (32, 8, 32, 64)]
    B = 2
    for (n_fft, hop, win, T) in configs:
        x = jax.random.normal(jax.random.fold_in(kx, 1000 * n_fft + hop),
                              (B, 1, T), jnp.float32)
        fwd = jax.jit(functools.partial(discriminator_r_forward, n_fft=n_fft,
                                        hop_length=hop, win_length=win))
        out, fmap = fwd(x, params)
        out = jax.block_until_ready(out)
        fmap = [jax.block_until_ready(f) for f in fmap]

        ref_out, ref_fmap = _reference_forward(x, params, n_fft=n_fft,
                                               hop_length=hop, win_length=win)
        assert out.shape == ref_out.shape, (out.shape, ref_out.shape)
        assert len(fmap) == len(ref_fmap) == 6
        np.testing.assert_allclose(np.asarray(out), np.asarray(ref_out),
                                   rtol=1e-3, atol=1e-3)
        for got, want in zip(fmap, ref_fmap):
            assert got.shape == want.shape, (got.shape, want.shape)
            np.testing.assert_allclose(np.asarray(got), np.asarray(want),
                                       rtol=1e-3, atol=1e-3)

    print("KERNEL_OK")
</pallas_src>

<mosaic_0001>
module attributes {stable_mosaic.version = 11 : i64} {
  func.func @_stft_mag_kernel(%arg0: i32, %arg1: i32, %arg2: i32, %arg3: memref<1x18x12xf32, #tpu.memory_space<vmem>>, %arg4: memref<1x3x12x256xf32, #tpu.memory_space<vmem>>, %arg5: memref<1x16x128xf32, #tpu.memory_space<vmem>>) attributes {dimension_semantics = [#tpu.dimension_semantics<parallel>, #tpu.dimension_semantics<parallel>, #tpu.dimension_semantics<parallel>], iteration_bounds = array<i64: 2, 1, 1>, scalar_prefetch = 0 : i64, scratch_operands = 0 : i64, tpu.core_type = #tpu.core_type<tc>, window_params = [{transform_indices = @transform_0, window_bounds = array<i64: 1, 18, 12>}, {transform_indices = @transform_1, window_bounds = array<i64: 1, 3, 12, 256>}, {transform_indices = @transform_2, window_bounds = array<i64: 1, 16, 128>}]} {
    %c16_i32 = arith.constant 16 : i32
    %0 = arith.muli %arg1, %c16_i32 : i32
    %1 = tpu.assume_multiple %0, 8 : i32
    %cst = arith.constant 0.000000e+00 : f32
    %2 = vector.broadcast %cst : f32 to vector<16x256xf32>
    %c0_i32 = arith.constant 0 : i32
    %3 = arith.addi %1, %c0_i32 : i32
    %c0 = arith.constant 0 : index
    %4 = arith.index_cast %3 : i32 to index
    %c0_0 = arith.constant 0 : index
    %5 = vector.load %arg3[%c0, %4, %c0_0] : memref<1x18x12xf32, #tpu.memory_space<vmem>>, vector<1x16x12xf32>
    %6 = vector.shape_cast %5 : vector<1x16x12xf32> to vector<16x12xf32>
    %c0_1 = arith.constant 0 : index
    %c0_2 = arith.constant 0 : index
    %c0_3 = arith.constant 0 : index
    %c0_4 = arith.constant 0 : index
    %7 = vector.load %arg4[%c0_1, %c0_2, %c0_3, %c0_4] : memref<1x3x12x256xf32, #tpu.memory_space<vmem>>, vector<1x1x12x256xf32>
    %8 = vector.shape_cast %7 : vector<1x1x12x256xf32> to vector<12x256xf32>
    %cst_5 = arith.constant dense<0.000000e+00> : vector<16x256xf32>
    %9 = tpu.matmul %6, %8, %cst_5 {dimension_numbers = #tpu.dot_dimension_numbers<[1], [0], [0], [1], [0, 0, 1, 1], [], []>} : vector<16x12xf32>, vector<12x256xf32>, vector<16x256xf32> -> vector<16x256xf32>
    %10 = arith.addf %2, %9 : vector<16x256xf32>
    %c1_i32 = arith.constant 1 : i32
    %11 = arith.addi %1, %c1_i32 : i32
    %c0_6 = arith.constant 0 : index
    %12 = arith.index_cast %11 : i32 to index
    %c0_7 = arith.constant 0 : index
    %13 = vector.load %arg3[%c0_6, %12, %c0_7] : memref<1x18x12xf32, #tpu.memory_space<vmem>>, vector<1x16x12xf32>
    %14 = vector.shape_cast %13 : vector<1x16x12xf32> to vector<16x12xf32>
    %c0_8 = arith.constant 0 : index
    %c1 = arith.constant 1 : index
    %c0_9 = arith.constant 0 : index
    %c0_10 = arith.constant 0 : index
    %15 = vector.load %arg4[%c0_8, %c1, %c0_9, %c0_10] : memref<1x3x12x256xf32, #tpu.memory_space<vmem>>, vector<1x1x12x256xf32>
    %16 = vector.shape_cast %15 : vector<1x1x12x256xf32> to vector<12x256xf32>
    %cst_11 = arith.constant dense<0.000000e+00> : vector<16x256xf32>
    %17 = tpu.matmul %14, %16, %cst_11 {dimension_numbers = #tpu.dot_dimension_numbers<[1], [0], [0], [1], [0, 0, 1, 1], [], []>} : vector<16x12xf32>, vector<12x256xf32>, vector<16x256xf32> -> vector<16x256xf32>
    %18 = arith.addf %10, %17 : vector<16x256xf32>
    %c2_i32 = arith.constant 2 : i32
    %19 = arith.addi %1, %c2_i32 : i32
    %c0_12 = arith.constant 0 : index
    %20 = arith.index_cast %19 : i32 to index
    %c0_13 = arith.constant 0 : index
    %21 = vector.load %arg3[%c0_12, %20, %c0_13] : memref<1x18x12xf32, #tpu.memory_space<vmem>>, vector<1x16x12xf32>
    %22 = vector.shape_cast %21 : vector<1x16x12xf32> to vector<16x12xf32>
    %c0_14 = arith.constant 0 : index
    %c2 = arith.constant 2 : index
    %c0_15 = arith.constant 0 : index
    %c0_16 = arith.constant 0 : index
    %23 = vector.load %arg4[%c0_14, %c2, %c0_15, %c0_16] : memref<1x3x12x256xf32, #tpu.memory_space<vmem>>, vector<1x1x12x256xf32>
    %24 = vector.shape_cast %23 : vector<1x1x12x256xf32> to vector<12x256xf32>
    %cst_17 = arith.constant dense<0.000000e+00> : vector<16x256xf32>
    %25 = tpu.matmul %22, %24, %cst_17 {dimension_numbers = #tpu.dot_dimension_numbers<[1], [0], [0], [1], [0, 0, 1, 1], [], []>} : vector<16x12xf32>, vector<12x256xf32>, vector<16x256xf32> -> vector<16x256xf32>
    %26 = arith.addf %18, %25 : vector<16x256xf32>
    %27 = vector.extract_strided_slice %26 {offsets = [0, 0], sizes = [16, 128], strides = [1, 1]} : vector<16x256xf32> to vector<16x128xf32>
    %28 = vector.extract_strided_slice %26 {offsets = [0, 128], sizes = [16, 128], strides = [1, 1]} : vector<16x256xf32> to vector<16x128xf32>
    %29 = arith.mulf %27, %27 : vector<16x128xf32>
    %30 = arith.mulf %28, %28 : vector<16x128xf32>
    %31 = arith.addf %29, %30 : vector<16x128xf32>
    %32 = math.sqrt %31 : vector<16x128xf32>
    %33 = tpu.iota {dimensions = array<i32: 0>} : vector<16x128xi32>
    %34 = vector.broadcast %1 : i32 to vector<16x128xi32>
    %35 = arith.addi %34, %33 : vector<16x128xi32>
    %c4_i32 = arith.constant 4 : i32
    %36 = vector.broadcast %c4_i32 : i32 to vector<16x128xi32>
    %37 = arith.cmpi sge, %35, %36 : vector<16x128xi32>
    %c12_i32 = arith.constant 12 : i32
    %38 = vector.broadcast %c12_i32 : i32 to vector<16x128xi32>
    %39 = arith.cmpi slt, %35, %38 : vector<16x128xi32>
    %40 = arith.andi %37, %39 : vector<16x128xi1>
    %cst_18 = arith.constant 0.000000e+00 : f32
    %41 = vector.broadcast %cst_18 : f32 to vector<16x128xf32>
    %42 = arith.select %40, %32, %41 : vector<16x128xi1>, vector<16x128xf32>
    %c0_19 = arith.constant 0 : index
    %c0_20 = arith.constant 0 : index
    %c0_21 = arith.constant 0 : index
    %43 = vector.load %arg5[%c0_19, %c0_20, %c0_21] : memref<1x16x128xf32, #tpu.memory_space<vmem>>, vector<1x16x128xf32>
    %44 = vector.shape_cast %43 : vector<1x16x128xf32> to vector<16x128xf32>
    %45 = vector.shape_cast %42 : vector<16x128xf32> to vector<1x16x128xf32>
    tpu.vector_store %arg5[%c0_19, %c0_20, %c0_21], %45 {strides = array<i32>} : memref<1x16x128xf32, #tpu.memory_space<vmem>>, vector<1x16x128xf32>,
    return
  }
  func.func @transform_0(%arg0: i32, %arg1: i32, %arg2: i32) -> (i32, i32, i32) {
    %c0_i32 = arith.constant 0 : i32
    %c0_i32_0 = arith.constant 0 : i32
    %c0_i32_1 = arith.constant 0 : i32
    return %arg0, %c0_i32, %c0_i32_0 : i32, i32, i32
  }
  func.func @transform_1(%arg0: i32, %arg1: i32, %arg2: i32) -> (i32, i32, i32, i32) {
    %c0_i32 = arith.constant 0 : i32
    %c0_i32_0 = arith.constant 0 : i32
    %c0_i32_1 = arith.constant 0 : i32
    %c0_i32_2 = arith.constant 0 : i32
    return %arg2, %c0_i32, %c0_i32_0, %c0_i32_1 : i32, i32, i32, i32
  }
  func.func @transform_2(%arg0: i32, %arg1: i32, %arg2: i32) -> (i32, i32, i32) {
    %c0_i32 = arith.constant 0 : i32
    return %arg0, %arg1, %arg2 : i32, i32, i32
  }
}

module attributes {stable_mosaic.version = 11 : i64} {
  func.func @_conv_kernel(%arg0: i32, %arg1: i32, %arg2: memref<1x16x1x128xf32, #tpu.memory_space<vmem>>, %arg3: memref<32x27xf32, #tpu.memory_space<vmem>>, %arg4: memref<32x1xf32, #tpu.memory_space<vmem>>, %arg5: memref<1x15x32x128xf32, #tpu.memory_space<vmem>>) attributes {dimension_semantics = [#tpu.dimension_semantics<parallel>, #tpu.dimension_semantics<parallel>], iteration_bounds = array<i64: 2, 1>, scalar_prefetch = 0 : i64, scratch_operands = 0 : i64, tpu.core_type = #tpu.core_type<tc>, window_params = [{transform_indices = @transform_0, window_bounds = array<i64: 1, 16, 1, 128>}, {pipeline_mode = #tpu.pipeline_mode<synchronous>, transform_indices = @transform_1, window_bounds = array<i64: 32, 27>}, {pipeline_mode = #tpu.pipeline_mode<synchronous>, transform_indices = @transform_2, window_bounds = array<i64: 32, 1>}, {transform_indices = @transform_3, window_bounds = array<i64: 1, 15, 32, 128>}]} {
    %c15_i32 = arith.constant 15 : i32
    %0 = arith.muli %arg1, %c15_i32 : i32
    %c0 = arith.constant 0 : index
    %c0_0 = arith.constant 0 : index
    %1 = vector.load %arg3[%c0, %c0_0] : memref<32x27xf32, #tpu.memory_space<vmem>>, vector<32x27xf32>
    %c0_1 = arith.constant 0 : index
    %c0_2 = arith.constant 0 : index
    %2 = vector.load %arg4[%c0_1, %c0_2] : memref<32x1xf32, #tpu.memory_space<vmem>>, vector<32x1xf32>
    %3 = tpu.iota {dimensions = array<i32: 1>} : vector<32x128xi32>
    %c17_i32 = arith.constant 17 : i32
    %4 = vector.broadcast %c17_i32 : i32 to vector<32x128xi32>
    %5 = arith.cmpi slt, %3, %4 : vector<32x128xi32>
    %cst = arith.constant 0.000000e+00 : f32
    %6 = vector.broadcast %cst : f32 to vector<1x128xf32>
    %c0_i32 = arith.constant 0 : i32
    %c15_i32_3 = arith.constant 15 : i32
    %7 = arith.addi %c0_i32, %c15_i32_3 : i32
    %c1_i32 = arith.constant 1 : i32
    scf.for %arg6 = %c0_i32 to %7 step %c1_i32  : i32 {
      %8 = arith.addi %0, %arg6 : i32
      %c4_i32 = arith.constant 4 : i32
      %9 = arith.subi %8, %c4_i32 : i32
      %c0_i32_5 = arith.constant 0 : i32
      %10 = arith.cmpi sge, %9, %c0_i32_5 : i32
      %c8_i32 = arith.constant 8 : i32
      %11 = arith.cmpi slt, %9, %c8_i32 : i32
      %12 = arith.andi %10, %11 : i1
      %c1_i32_6 = arith.constant 1 : i32
      %13 = arith.muli %9, %c1_i32_6 : i32
      %c0_i32_7 = arith.constant 0 : i32
      %14 = arith.addi %c0_i32_7, %13 : i32
      %c0_i32_8 = arith.constant 0 : i32
      %c7_i32 = arith.constant 7 : i32
      %15 = arith.maxsi %c0_i32_8, %14 : i32
      %16 = arith.minsi %c7_i32, %15 : i32
      %c0_i32_9 = arith.constant 0 : i32
      %17 = arith.addi %16, %c0_i32_9 : i32
      %c0_10 = arith.constant 0 : index
      %18 = arith.index_cast %17 : i32 to index
      %c0_11 = arith.constant 0 : index
      %c0_12 = arith.constant 0 : index
      %19 = vector.load %arg2[%c0_10, %18, %c0_11, %c0_12] : memref<1x16x1x128xf32, #tpu.memory_space<vmem>>, vector<1x1x1x128xf32>
      %20 = vector.shape_cast %19 : vector<1x1x1x128xf32> to vector<1x128xf32>
      %21 = tpu.concatenate %6, %20, %6 in 1 : vector<1x128xf32>, vector<1x128xf32>, vector<1x128xf32> -> vector<1x384xf32>
      %22 = vector.extract_strided_slice %21 {offsets = [0, 127], sizes = [1, 128], strides = [1, 1]} : vector<1x384xf32> to vector<1x128xf32>
      %23 = vector.extract_strided_slice %21 {offsets = [0, 128], sizes = [1, 128], strides = [1, 1]} : vector<1x384xf32> to vector<1x128xf32>
      %24 = vector.extract_strided_slice %21 {offsets = [0, 129], sizes = [1, 128], strides = [1, 1]} : vector<1x384xf32> to vector<1x128xf32>
      %c1_i32_13 = arith.constant 1 : i32
      %25 = arith.addi %16, %c1_i32_13 : i32
      %c0_14 = arith.constant 0 : index
      %26 = arith.index_cast %25 : i32 to index
      %c0_15 = arith.constant 0 : index
      %c0_16 = arith.constant 0 : index
      %27 = vector.load %arg2[%c0_14, %26, %c0_15, %c0_16] : memref<1x16x1x128xf32, #tpu.memory_space<vmem>>, vector<1x1x1x128xf32>
      %28 = vector.shape_cast %27 : vector<1x1x1x128xf32> to vector<1x128xf32>
      %29 = tpu.concatenate %6, %28, %6 in 1 : vector<1x128xf32>, vector<1x128xf32>, vector<1x128xf32> -> vector<1x384xf32>
      %30 = vector.extract_strided_slice %29 {offsets = [0, 127], sizes = [1, 128], strides = [1, 1]} : vector<1x384xf32> to vector<1x128xf32>
      %31 = vector.extract_strided_slice %29 {offsets = [0, 128], sizes = [1, 128], strides = [1, 1]} : vector<1x384xf32> to vector<1x128xf32>
      %32 = vector.extract_strided_slice %29 {offsets = [0, 129], sizes = [1, 128], strides = [1, 1]} : vector<1x384xf32> to vector<1x128xf32>
      %c2_i32 = arith.constant 2 : i32
      %33 = arith.addi %16, %c2_i32 : i32
      %c0_17 = arith.constant 0 : index
      %34 = arith.index_cast %33 : i32 to index
      %c0_18 = arith.constant 0 : index
      %c0_19 = arith.constant 0 : index
      %35 = vector.load %arg2[%c0_17, %34, %c0_18, %c0_19] : memref<1x16x1x128xf32, #tpu.memory_space<vmem>>, vector<1x1x1x128xf32>
      %36 = vector.shape_cast %35 : vector<1x1x1x128xf32> to vector<1x128xf32>
      %37 = tpu.concatenate %6, %36, %6 in 1 : vector<1x128xf32>, vector<1x128xf32>, vector<1x128xf32> -> vector<1x384xf32>
      %38 = vector.extract_strided_slice %37 {offsets = [0, 127], sizes = [1, 128], strides = [1, 1]} : vector<1x384xf32> to vector<1x128xf32>
      %39 = vector.extract_strided_slice %37 {offsets = [0, 128], sizes = [1, 128], strides = [1, 1]} : vector<1x384xf32> to vector<1x128xf32>
      %40 = vector.extract_strided_slice %37 {offsets = [0, 129], sizes = [1, 128], strides = [1, 1]} : vector<1x384xf32> to vector<1x128xf32>
      %c3_i32 = arith.constant 3 : i32
      %41 = arith.addi %16, %c3_i32 : i32
      %c0_20 = arith.constant 0 : index
      %42 = arith.index_cast %41 : i32 to index
      %c0_21 = arith.constant 0 : index
      %c0_22 = arith.constant 0 : index
      %43 = vector.load %arg2[%c0_20, %42, %c0_21, %c0_22] : memref<1x16x1x128xf32, #tpu.memory_space<vmem>>, vector<1x1x1x128xf32>
      %44 = vector.shape_cast %43 : vector<1x1x1x128xf32> to vector<1x128xf32>
      %45 = tpu.concatenate %6, %44, %6 in 1 : vector<1x128xf32>, vector<1x128xf32>, vector<1x128xf32> -> vector<1x384xf32>
      %46 = vector.extract_strided_slice %45 {offsets = [0, 127], sizes = [1, 128], strides = [1, 1]} : vector<1x384xf32> to vector<1x128xf32>
      %47 = vector.extract_strided_slice %45 {offsets = [0, 128], sizes = [1, 128], strides = [1, 1]} : vector<1x384xf32> to vector<1x128xf32>
      %48 = vector.extract_strided_slice %45 {offsets = [0, 129], sizes = [1, 128], strides = [1, 1]} : vector<1x384xf32> to vector<1x128xf32>
      %c4_i32_23 = arith.constant 4 : i32
      %49 = arith.addi %16, %c4_i32_23 : i32
      %c0_24 = arith.constant 0 : index
      %50 = arith.index_cast %49 : i32 to index
      %c0_25 = arith.constant 0 : index
      %c0_26 = arith.constant 0 : index
      %51 = vector.load %arg2[%c0_24, %50, %c0_25, %c0_26] : memref<1x16x1x128xf32, #tpu.memory_space<vmem>>, vector<1x1x1x128xf32>
      %52 = vector.shape_cast %51 : vector<1x1x1x128xf32> to vector<1x128xf32>
      %53 = tpu.concatenate %6, %52, %6 in 1 : vector<1x128xf32>, vector<1x128xf32>, vector<1x128xf32> -> vector<1x384xf32>
      %54 = vector.extract_strided_slice %53 {offsets = [0, 127], sizes = [1, 128], strides = [1, 1]} : vector<1x384xf32> to vector<1x128xf32>
      %55 = vector.extract_strided_slice %53 {offsets = [0, 128], sizes = [1, 128], strides = [1, 1]} : vector<1x384xf32> to vector<1x128xf32>
      %56 = vector.extract_strided_slice %53 {offsets = [0, 129], sizes = [1, 128], strides = [1, 1]} : vector<1x384xf32> to vector<1x128xf32>
      %c5_i32 = arith.constant 5 : i32
      %57 = arith.addi %16, %c5_i32 : i32
      %c0_27 = arith.constant 0 : index
      %58 = arith.index_cast %57 : i32 to index
      %c0_28 = arith.constant 0 : index
      %c0_29 = arith.constant 0 : index
      %59 = vector.load %arg2[%c0_27, %58, %c0_28, %c0_29] : memref<1x16x1x128xf32, #tpu.memory_space<vmem>>, vector<1x1x1x128xf32>
      %60 = vector.shape_cast %59 : vector<1x1x1x128xf32> to vector<1x128xf32>
      %61 = tpu.concatenate %6, %60, %6 in 1 : vector<1x128xf32>, vector<1x128xf32>, vector<1x128xf32> -> vector<1x384xf32>
      %62 = vector.extract_strided_slice %61 {offsets = [0, 127], sizes = [1, 128], strides = [1, 1]} : vector<1x384xf32> to vector<1x128xf32>
      %63 = vector.extract_strided_slice %61 {offsets = [0, 128], sizes = [1, 128], strides = [1, 1]} : vector<1x384xf32> to vector<1x128xf32>
      %64 = vector.extract_strided_slice %61 {offsets = [0, 129], sizes = [1, 128], strides = [1, 1]} : vector<1x384xf32> to vector<1x128xf32>
      %c6_i32 = arith.constant 6 : i32
      %65 = arith.addi %16, %c6_i32 : i32
      %c0_30 = arith.constant 0 : index
      %66 = arith.index_cast %65 : i32 to index
      %c0_31 = arith.constant 0 : index
      %c0_32 = arith.constant 0 : index
      %67 = vector.load %arg2[%c0_30, %66, %c0_31, %c0_32] : memref<1x16x1x128xf32, #tpu.memory_space<vmem>>, vector<1x1x1x128xf32>
      %68 = vector.shape_cast %67 : vector<1x1x1x128xf32> to vector<1x128xf32>
      %69 = tpu.concatenate %6, %68, %6 in 1 : vector<1x128xf32>, vector<1x128xf32>, vector<1x128xf32> -> vector<1x384xf32>
      %70 = vector.extract_strided_slice %69 {offsets = [0, 127], sizes = [1, 128], strides = [1, 1]} : vector<1x384xf32> to vector<1x128xf32>
      %71 = vector.extract_strided_slice %69 {offsets = [0, 128], sizes = [1, 128], strides = [1, 1]} : vector<1x384xf32> to vector<1x128xf32>
      %72 = vector.extract_strided_slice %69 {offsets = [0, 129], sizes = [1, 128], strides = [1, 1]} : vector<1x384xf32> to vector<1x128xf32>
      %c7_i32_33 = arith.constant 7 : i32
      %73 = arith.addi %16, %c7_i32_33 : i32
      %c0_34 = arith.constant 0 : index
      %74 = arith.index_cast %73 : i32 to index
      %c0_35 = arith.constant 0 : index
      %c0_36 = arith.constant 0 : index
      %75 = vector.load %arg2[%c0_34, %74, %c0_35, %c0_36] : memref<1x16x1x128xf32, #tpu.memory_space<vmem>>, vector<1x1x1x128xf32>
      %76 = vector.shape_cast %75 : vector<1x1x1x128xf32> to vector<1x128xf32>
      %77 = tpu.concatenate %6, %76, %6 in 1 : vector<1x128xf32>, vector<1x128xf32>, vector<1x128xf32> -> vector<1x384xf32>
      %78 = vector.extract_strided_slice %77 {offsets = [0, 127], sizes = [1, 128], strides = [1, 1]} : vector<1x384xf32> to vector<1x128xf32>
      %79 = vector.extract_strided_slice %77 {offsets = [0, 128], sizes = [1, 128], strides = [1, 1]} : vector<1x384xf32> to vector<1x128xf32>
      %80 = vector.extract_strided_slice %77 {offsets = [0, 129], sizes = [1, 128], strides = [1, 1]} : vector<1x384xf32> to vector<1x128xf32>
      %c8_i32_37 = arith.constant 8 : i32
      %81 = arith.addi %16, %c8_i32_37 : i32
      %c0_38 = arith.constant 0 : index
      %82 = arith.index_cast %81 : i32 to index
      %c0_39 = arith.constant 0 : index
      %c0_40 = arith.constant 0 : index
      %83 = vector.load %arg2[%c0_38, %82, %c0_39, %c0_40] : memref<1x16x1x128xf32, #tpu.memory_space<vmem>>, vector<1x1x1x128xf32>
      %84 = vector.shape_cast %83 : vector<1x1x1x128xf32> to vector<1x128xf32>
      %85 = tpu.concatenate %6, %84, %6 in 1 : vector<1x128xf32>, vector<1x128xf32>, vector<1x128xf32> -> vector<1x384xf32>
      %86 = vector.extract_strided_slice %85 {offsets = [0, 127], sizes = [1, 128], strides = [1, 1]} : vector<1x384xf32> to vector<1x128xf32>
      %87 = vector.extract_strided_slice %85 {offsets = [0, 128], sizes = [1, 128], strides = [1, 1]} : vector<1x384xf32> to vector<1x128xf32>
      %88 = vector.extract_strided_slice %85 {offsets = [0, 129], sizes = [1, 128], strides = [1, 1]} : vector<1x384xf32> to vector<1x128xf32>
      %89 = tpu.concatenate %22, %23, %24, %30, %31, %32, %38, %39, %40, %46, %47, %48, %54, %55, %56, %62 in 0 : vector<1x128xf32>, vector<1x128xf32>, vector<1x128xf32>, vector<1x128xf32>, vector<1x128xf32>, vector<1x128xf32>, vector<1x128xf32>, vector<1x128xf32>, vector<1x128xf32>, vector<1x128xf32>, vector<1x128xf32>, vector<1x128xf32>, vector<1x128xf32>, vector<1x128xf32>, vector<1x128xf32>, vector<1x128xf32> -> vector<16x128xf32>
      %90 = tpu.concatenate %63, %64, %70, %71, %72, %78, %79, %80, %86, %87, %88 in 0 : vector<1x128xf32>, vector<1x128xf32>, vector<1x128xf32>, vector<1x128xf32>, vector<1x128xf32>, vector<1x128xf32>, vector<1x128xf32>, vector<1x128xf32>, vector<1x128xf32>, vector<1x128xf32>, vector<1x128xf32> -> vector<11x128xf32>
      %91 = tpu.concatenate %89, %90 in 0 : vector<16x128xf32>, vector<11x128xf32> -> vector<27x128xf32>
      %cst_41 = arith.constant dense<0.000000e+00> : vector<32x128xf32>
      %92 = tpu.matmul %1, %91, %cst_41 {dimension_numbers = #tpu.dot_dimension_numbers<[1], [0], [0], [1], [0, 0, 1, 1], [], []>} : vector<32x27xf32>, vector<27x128xf32>, vector<32x128xf32> -> vector<32x128xf32>
      %93 = vector.broadcast %2 : vector<32x1xf32> to vector<32x128xf32>
      %94 = arith.addf %92, %93 : vector<32x128xf32>
      %cst_42 = arith.constant 0.000000e+00 : f32
      %95 = vector.broadcast %cst_42 : f32 to vector<32x128xf32>
      %96 = arith.cmpf ogt, %94, %95 : vector<32x128xf32>
      %cst_43 = arith.constant 1.000000e-01 : f32
      %97 = vector.broadcast %cst_43 : f32 to vector<32x128xf32>
      %98 = arith.mulf %97, %94 : vector<32x128xf32>
      %99 = arith.select %96, %94, %98 : vector<32x128xi1>, vector<32x128xf32>
      %100 = vector.broadcast %12 : i1 to vector<32x128xi1>
      %101 = arith.andi %100, %5 : vector<32x128xi1>
      %cst_44 = arith.constant 0.000000e+00 : f32
      %102 = vector.broadcast %cst_44 : f32 to vector<32x128xf32>
      %103 = arith.select %101, %99, %102 : vector<32x128xi1>, vector<32x128xf32>
      %c0_45 = arith.constant 0 : index
      %104 = arith.index_cast %arg6 : i32 to index
      %c0_46 = arith.constant 0 : index
      %c0_47 = arith.constant 0 : index
      %105 = vector.load %arg5[%c0_45, %104, %c0_46, %c0_47] : memref<1x15x32x128xf32, #tpu.memory_space<vmem>>, vector<1x1x32x128xf32>
      %106 = vector.shape_cast %105 : vector<1x1x32x128xf32> to vector<32x128xf32>
      %107 = vector.shape_cast %103 : vector<32x128xf32> to vector<1x1x32x128xf32>
      tpu.vector_store %arg5[%c0_45, %104, %c0_46, %c0_47], %107 {strides = array<i32>} : memref<1x15x32x128xf32, #tpu.memory_space<vmem>>, vector<1x1x32x128xf32>,
    }
    %c15_i32_4 = arith.constant 15 : i32
    return
  }
  func.func @transform_0(%arg0: i32, %arg1: i32) -> (i32, i32, i32, i32) {
    %c0_i32 = arith.constant 0 : i32
    %c0_i32_0 = arith.constant 0 : i32
    %c0_i32_1 = arith.constant 0 : i32
    %c0_i32_2 = arith.constant 0 : i32
    return %arg0, %c0_i32, %c0_i32_0, %c0_i32_1 : i32, i32, i32, i32
  }
  func.func @transform_1(%arg0: i32, %arg1: i32) -> (i32, i32) {
    %c0_i32 = arith.constant 0 : i32
    %c0_i32_0 = arith.constant 0 : i32
    %c0_i32_1 = arith.constant 0 : i32
    return %c0_i32, %c0_i32_0 : i32, i32
  }
  func.func @transform_2(%arg0: i32, %arg1: i32) -> (i32, i32) {
    %c0_i32 = arith.constant 0 : i32
    %c0_i32_0 = arith.constant 0 : i32
    %c0_i32_1 = arith.constant 0 : i32
    return %c0_i32, %c0_i32_0 : i32, i32
  }
  func.func @transform_3(%arg0: i32, %arg1: i32) -> (i32, i32, i32, i32) {
    %c0_i32 = arith.constant 0 : i32
    %c0_i32_0 = arith.constant 0 : i32
    %c0_i32_1 = arith.constant 0 : i32
    return %arg0, %arg1, %c0_i32, %c0_i32_0 : i32, i32, i32, i32
  }
}

module attributes {stable_mosaic.version = 11 : i64} {
  func.func @_conv_kernel(%arg0: i32, %arg1: i32, %arg2: memref<1x15x32x128xf32, #tpu.memory_space<vmem>>, %arg3: memref<32x864xf32, #tpu.memory_space<vmem>>, %arg4: memref<32x1xf32, #tpu.memory_space<vmem>>, %arg5: memref<1x11x32x128xf32, #tpu.memory_space<vmem>>) attributes {dimension_semantics = [#tpu.dimension_semantics<parallel>, #tpu.dimension_semantics<parallel>], iteration_bounds = array<i64: 2, 1>, scalar_prefetch = 0 : i64, scratch_operands = 0 : i64, tpu.core_type = #tpu.core_type<tc>, window_params = [{transform_indices = @transform_0, window_bounds = array<i64: 1, 15, 32, 128>}, {pipeline_mode = #tpu.pipeline_mode<synchronous>, transform_indices = @transform_1, window_bounds = array<i64: 32, 864>}, {pipeline_mode = #tpu.pipeline_mode<synchronous>, transform_indices = @transform_2, window_bounds = array<i64: 32, 1>}, {transform_indices = @transform_3, window_bounds = array<i64: 1, 11, 32, 128>}]} {
    %c11_i32 = arith.constant 11 : i32
    %0 = arith.muli %arg1, %c11_i32 : i32
    %c0 = arith.constant 0 : index
    %c0_0 = arith.constant 0 : index
    %1 = vector.load %arg3[%c0, %c0_0] : memref<32x864xf32, #tpu.memory_space<vmem>>, vector<32x864xf32>
    %c0_1 = arith.constant 0 : index
    %c0_2 = arith.constant 0 : index
    %2 = vector.load %arg4[%c0_1, %c0_2] : memref<32x1xf32, #tpu.memory_space<vmem>>, vector<32x1xf32>
    %3 = tpu.iota {dimensions = array<i32: 1>} : vector<32x128xi32>
    %c17_i32 = arith.constant 17 : i32
    %4 = vector.broadcast %c17_i32 : i32 to vector<32x128xi32>
    %5 = arith.cmpi slt, %3, %4 : vector<32x128xi32>
    %cst = arith.constant 0.000000e+00 : f32
    %6 = vector.broadcast %cst : f32 to vector<32x128xf32>
    %c0_i32 = arith.constant 0 : i32
    %c11_i32_3 = arith.constant 11 : i32
    %7 = arith.addi %c0_i32, %c11_i32_3 : i32
    %c1_i32 = arith.constant 1 : i32
    scf.for %arg6 = %c0_i32 to %7 step %c1_i32  : i32 {
      %8 = arith.addi %0, %arg6 : i32
      %c4_i32 = arith.constant 4 : i32
      %9 = arith.subi %8, %c4_i32 : i32
      %c0_i32_5 = arith.constant 0 : i32
      %10 = arith.cmpi sge, %9, %c0_i32_5 : i32
      %c4_i32_6 = arith.constant 4 : i32
      %11 = arith.cmpi slt, %9, %c4_i32_6 : i32
      %12 = arith.andi %10, %11 : i1
      %c2_i32 = arith.constant 2 : i32
      %13 = arith.muli %9, %c2_i32 : i32
      %c0_i32_7 = arith.constant 0 : i32
      %14 = arith.addi %c0_i32_7, %13 : i32
      %c0_i32_8 = arith.constant 0 : i32
      %c6_i32 = arith.constant 6 : i32
      %15 = arith.maxsi %c0_i32_8, %14 : i32
      %16 = arith.minsi %c6_i32, %15 : i32
      %c0_i32_9 = arith.constant 0 : i32
      %17 = arith.addi %16, %c0_i32_9 : i32
      %c0_10 = arith.constant 0 : index
      %18 = arith.index_cast %17 : i32 to index
      %c0_11 = arith.constant 0 : index
      %c0_12 = arith.constant 0 : index
      %19 = vector.load %arg2[%c0_10, %18, %c0_11, %c0_12] : memref<1x15x32x128xf32, #tpu.memory_space<vmem>>, vector<1x1x32x128xf32>
      %20 = vector.shape_cast %19 : vector<1x1x32x128xf32> to vector<32x128xf32>
      %21 = tpu.concatenate %6, %20, %6 in 1 : vector<32x128xf32>, vector<32x128xf32>, vector<32x128xf32> -> vector<32x384xf32>
      %22 = vector.extract_strided_slice %21 {offsets = [0, 127], sizes = [32, 128], strides = [1, 1]} : vector<32x384xf32> to vector<32x128xf32>
      %23 = vector.extract_strided_slice %21 {offsets = [0, 128], sizes = [32, 128], strides = [1, 1]} : vector<32x384xf32> to vector<32x128xf32>
      %24 = vector.extract_strided_slice %21 {offsets = [0, 129], sizes = [32, 128], strides = [1, 1]} : vector<32x384xf32> to vector<32x128xf32>
      %c1_i32_13 = arith.constant 1 : i32
      %25 = arith.addi %16, %c1_i32_13 : i32
      %c0_14 = arith.constant 0 : index
      %26 = arith.index_cast %25 : i32 to index
      %c0_15 = arith.constant 0 : index
      %c0_16 = arith.constant 0 : index
      %27 = vector.load %arg2[%c0_14, %26, %c0_15, %c0_16] : memref<1x15x32x128xf32, #tpu.memory_space<vmem>>, vector<1x1x32x128xf32>
      %28 = vector.shape_cast %27 : vector<1x1x32x128xf32> to vector<32x128xf32>
      %29 = tpu.concatenate %6, %28, %6 in 1 : vector<32x128xf32>, vector<32x128xf32>, vector<32x128xf32> -> vector<32x384xf32>
      %30 = vector.extract_strided_slice %29 {offsets = [0, 127], sizes = [32, 128], strides = [1, 1]} : vector<32x384xf32> to vector<32x128xf32>
      %31 = vector.extract_strided_slice %29 {offsets = [0, 128], sizes = [32, 128], strides = [1, 1]} : vector<32x384xf32> to vector<32x128xf32>
      %32 = vector.extract_strided_slice %29 {offsets = [0, 129], sizes = [32, 128], strides = [1, 1]} : vector<32x384xf32> to vector<32x128xf32>
      %c2_i32_17 = arith.constant 2 : i32
      %33 = arith.addi %16, %c2_i32_17 : i32
      %c0_18 = arith.constant 0 : index
      %34 = arith.index_cast %33 : i32 to index
      %c0_19 = arith.constant 0 : index
      %c0_20 = arith.constant 0 : index
      %35 = vector.load %arg2[%c0_18, %34, %c0_19, %c0_20] : memref<1x15x32x128xf32, #tpu.memory_space<vmem>>, vector<1x1x32x128xf32>
      %36 = vector.shape_cast %35 : vector<1x1x32x128xf32> to vector<32x128xf32>
      %37 = tpu.concatenate %6, %36, %6 in 1 : vector<32x128xf32>, vector<32x128xf32>, vector<32x128xf32> -> vector<32x384xf32>
      %38 = vector.extract_strided_slice %37 {offsets = [0, 127], sizes = [32, 128], strides = [1, 1]} : vector<32x384xf32> to vector<32x128xf32>
      %39 = vector.extract_strided_slice %37 {offsets = [0, 128], sizes = [32, 128], strides = [1, 1]} : vector<32x384xf32> to vector<32x128xf32>
      %40 = vector.extract_strided_slice %37 {offsets = [0, 129], sizes = [32, 128], strides = [1, 1]} : vector<32x384xf32> to vector<32x128xf32>
      %c3_i32 = arith.constant 3 : i32
      %41 = arith.addi %16, %c3_i32 : i32
      %c0_21 = arith.constant 0 : index
      %42 = arith.index_cast %41 : i32 to index
      %c0_22 = arith.constant 0 : index
      %c0_23 = arith.constant 0 : index
      %43 = vector.load %arg2[%c0_21, %42, %c0_22, %c0_23] : memref<1x15x32x128xf32, #tpu.memory_space<vmem>>, vector<1x1x32x128xf32>
      %44 = vector.shape_cast %43 : vector<1x1x32x128xf32> to vector<32x128xf32>
      %45 = tpu.concatenate %6, %44, %6 in 1 : vector<32x128xf32>, vector<32x128xf32>, vector<32x128xf32> -> vector<32x384xf32>
      %46 = vector.extract_strided_slice %45 {offsets = [0, 127], sizes = [32, 128], strides = [1, 1]} : vector<32x384xf32> to vector<32x128xf32>
      %47 = vector.extract_strided_slice %45 {offsets = [0, 128], sizes = [32, 128], strides = [1, 1]} : vector<32x384xf32> to vector<32x128xf32>
      %48 = vector.extract_strided_slice %45 {offsets = [0, 129], sizes = [32, 128], strides = [1, 1]} : vector<32x384xf32> to vector<32x128xf32>
      %c4_i32_24 = arith.constant 4 : i32
      %49 = arith.addi %16, %c4_i32_24 : i32
      %c0_25 = arith.constant 0 : index
      %50 = arith.index_cast %49 : i32 to index
      %c0_26 = arith.constant 0 : index
      %c0_27 = arith.constant 0 : index
      %51 = vector.load %arg2[%c0_25, %50, %c0_26, %c0_27] : memref<1x15x32x128xf32, #tpu.memory_space<vmem>>, vector<1x1x32x128xf32>
      %52 = vector.shape_cast %51 : vector<1x1x32x128xf32> to vector<32x128xf32>
      %53 = tpu.concatenate %6, %52, %6 in 1 : vector<32x128xf32>, vector<32x128xf32>, vector<32x128xf32> -> vector<32x384xf32>
      %54 = vector.extract_strided_slice %53 {offsets = [0, 127], sizes = [32, 128], strides = [1, 1]} : vector<32x384xf32> to vector<32x128xf32>
      %55 = vector.extract_strided_slice %53 {offsets = [0, 128], sizes = [32, 128], strides = [1, 1]} : vector<32x384xf32> to vector<32x128xf32>
      %56 = vector.extract_strided_slice %53 {offsets = [0, 129], sizes = [32, 128], strides = [1, 1]} : vector<32x384xf32> to vector<32x128xf32>
      %c5_i32 = arith.constant 5 : i32
      %57 = arith.addi %16, %c5_i32 : i32
      %c0_28 = arith.constant 0 : index
      %58 = arith.index_cast %57 : i32 to index
      %c0_29 = arith.constant 0 : index
      %c0_30 = arith.constant 0 : index
      %59 = vector.load %arg2[%c0_28, %58, %c0_29, %c0_30] : memref<1x15x32x128xf32, #tpu.memory_space<vmem>>, vector<1x1x32x128xf32>
      %60 = vector.shape_cast %59 : vector<1x1x32x128xf32> to vector<32x128xf32>
      %61 = tpu.concatenate %6, %60, %6 in 1 : vector<32x128xf32>, vector<32x128xf32>, vector<32x128xf32> -> vector<32x384xf32>
      %62 = vector.extract_strided_slice %61 {offsets = [0, 127], sizes = [32, 128], strides = [1, 1]} : vector<32x384xf32> to vector<32x128xf32>
      %63 = vector.extract_strided_slice %61 {offsets = [0, 128], sizes = [32, 128], strides = [1, 1]} : vector<32x384xf32> to vector<32x128xf32>
      %64 = vector.extract_strided_slice %61 {offsets = [0, 129], sizes = [32, 128], strides = [1, 1]} : vector<32x384xf32> to vector<32x128xf32>
      %c6_i32_31 = arith.constant 6 : i32
      %65 = arith.addi %16, %c6_i32_31 : i32
      %c0_32 = arith.constant 0 : index
      %66 = arith.index_cast %65 : i32 to index
      %c0_33 = arith.constant 0 : index
      %c0_34 = arith.constant 0 : index
      %67 = vector.load %arg2[%c0_32, %66, %c0_33, %c0_34] : memref<1x15x32x128xf32, #tpu.memory_space<vmem>>, vector<1x1x32x128xf32>
      %68 = vector.shape_cast %67 : vector<1x1x32x128xf32> to vector<32x128xf32>
      %69 = tpu.concatenate %6, %68, %6 in 1 : vector<32x128xf32>, vector<32x128xf32>, vector<32x128xf32> -> vector<32x384xf32>
      %70 = vector.extract_strided_slice %69 {offsets = [0, 127], sizes = [32, 128], strides = [1, 1]} : vector<32x384xf32> to vector<32x128xf32>
      %71 = vector.extract_strided_slice %69 {offsets = [0, 128], sizes = [32, 128], strides = [1, 1]} : vector<32x384xf32> to vector<32x128xf32>
      %72 = vector.extract_strided_slice %69 {offsets = [0, 129], sizes = [32, 128], strides = [1, 1]} : vector<32x384xf32> to vector<32x128xf32>
      %c7_i32 = arith.constant 7 : i32
      %73 = arith.addi %16, %c7_i32 : i32
      %c0_35 = arith.constant 0 : index
      %74 = arith.index_cast %73 : i32 to index
      %c0_36 = arith.constant 0 : index
      %c0_37 = arith.constant 0 : index
      %75 = vector.load %arg2[%c0_35, %74, %c0_36, %c0_37] : memref<1x15x32x128xf32, #tpu.memory_space<vmem>>, vector<1x1x32x128xf32>
      %76 = vector.shape_cast %75 : vector<1x1x32x128xf32> to vector<32x128xf32>
      %77 = tpu.concatenate %6, %76, %6 in 1 : vector<32x128xf32>, vector<32x128xf32>, vector<32x128xf32> -> vector<32x384xf32>
      %78 = vector.extract_strided_slice %77 {offsets = [0, 127], sizes = [32, 128], strides = [1, 1]} : vector<32x384xf32> to vector<32x128xf32>
      %79 = vector.extract_strided_slice %77 {offsets = [0, 128], sizes = [32, 128], strides = [1, 1]} : vector<32x384xf32> to vector<32x128xf32>
      %80 = vector.extract_strided_slice %77 {offsets = [0, 129], sizes = [32, 128], strides = [1, 1]} : vector<32x384xf32> to vector<32x128xf32>
      %c8_i32 = arith.constant 8 : i32
      %81 = arith.addi %16, %c8_i32 : i32
      %c0_38 = arith.constant 0 : index
      %82 = arith.index_cast %81 : i32 to index
      %c0_39 = arith.constant 0 : index
      %c0_40 = arith.constant 0 : index
      %83 = vector.load %arg2[%c0_38, %82, %c0_39, %c0_40] : memref<1x15x32x128xf32, #tpu.memory_space<vmem>>, vector<1x1x32x128xf32>
      %84 = vector.shape_cast %83 : vector<1x1x32x128xf32> to vector<32x128xf32>
      %85 = tpu.concatenate %6, %84, %6 in 1 : vector<32x128xf32>, vector<32x128xf32>, vector<32x128xf32> -> vector<32x384xf32>
      %86 = vector.extract_strided_slice %85 {offsets = [0, 127], sizes = [32, 128], strides = [1, 1]} : vector<32x384xf32> to vector<32x128xf32>
      %87 = vector.extract_strided_slice %85 {offsets = [0, 128], sizes = [32, 128], strides = [1, 1]} : vector<32x384xf32> to vector<32x128xf32>
      %88 = vector.extract_strided_slice %85 {offsets = [0, 129], sizes = [32, 128], strides = [1, 1]} : vector<32x384xf32> to vector<32x128xf32>
      %89 = tpu.concatenate %22, %23, %24, %30, %31, %32, %38, %39, %40, %46, %47, %48, %54, %55, %56, %62 in 0 : vector<32x128xf32>, vector<32x128xf32>, vector<32x128xf32>, vector<32x128xf32>, vector<32x128xf32>, vector<32x128xf32>, vector<32x128xf32>, vector<32x128xf32>, vector<32x128xf32>, vector<32x128xf32>, vector<32x128xf32>, vector<32x128xf32>, vector<32x128xf32>, vector<32x128xf32>, vector<32x128xf32>, vector<32x128xf32> -> vector<512x128xf32>
      %90 = tpu.concatenate %63, %64, %70, %71, %72, %78, %79, %80, %86, %87, %88 in 0 : vector<32x128xf32>, vector<32x128xf32>, vector<32x128xf32>, vector<32x128xf32>, vector<32x128xf32>, vector<32x128xf32>, vector<32x128xf32>, vector<32x128xf32>, vector<32x128xf32>, vector<32x128xf32>, vector<32x128xf32> -> vector<352x128xf32>
      %91 = tpu.concatenate %89, %90 in 0 : vector<512x128xf32>, vector<352x128xf32> -> vector<864x128xf32>
      %cst_41 = arith.constant dense<0.000000e+00> : vector<32x128xf32>
      %92 = tpu.matmul %1, %91, %cst_41 {dimension_numbers = #tpu.dot_dimension_numbers<[1], [0], [0], [1], [0, 0, 1, 1], [], []>} : vector<32x864xf32>, vector<864x128xf32>, vector<32x128xf32> -> vector<32x128xf32>
      %93 = vector.broadcast %2 : vector<32x1xf32> to vector<32x128xf32>
      %94 = arith.addf %92, %93 : vector<32x128xf32>
      %cst_42 = arith.constant 0.000000e+00 : f32
      %95 = vector.broadcast %cst_42 : f32 to vector<32x128xf32>
      %96 = arith.cmpf ogt, %94, %95 : vector<32x128xf32>
      %cst_43 = arith.constant 1.000000e-01 : f32
      %97 = vector.broadcast %cst_43 : f32 to vector<32x128xf32>
      %98 = arith.mulf %97, %94 : vector<32x128xf32>
      %99 = arith.select %96, %94, %98 : vector<32x128xi1>, vector<32x128xf32>
      %100 = vector.broadcast %12 : i1 to vector<32x128xi1>
      %101 = arith.andi %100, %5 : vector<32x128xi1>
      %cst_44 = arith.constant 0.000000e+00 : f32
      %102 = vector.broadcast %cst_44 : f32 to vector<32x128xf32>
      %103 = arith.select %101, %99, %102 : vector<32x128xi1>, vector<32x128xf32>
      %c0_45 = arith.constant 0 : index
      %104 = arith.index_cast %arg6 : i32 to index
      %c0_46 = arith.constant 0 : index
      %c0_47 = arith.constant 0 : index
      %105 = vector.load %arg5[%c0_45, %104, %c0_46, %c0_47] : memref<1x11x32x128xf32, #tpu.memory_space<vmem>>, vector<1x1x32x128xf32>
      %106 = vector.shape_cast %105 : vector<1x1x32x128xf32> to vector<32x128xf32>
      %107 = vector.shape_cast %103 : vector<32x128xf32> to vector<1x1x32x128xf32>
      tpu.vector_store %arg5[%c0_45, %104, %c0_46, %c0_47], %107 {strides = array<i32>} : memref<1x11x32x128xf32, #tpu.memory_space<vmem>>, vector<1x1x32x128xf32>,
    }
    %c11_i32_4 = arith.constant 11 : i32
    return
  }
  func.func @transform_0(%arg0: i32, %arg1: i32) -> (i32, i32, i32, i32) {
    %c0_i32 = arith.constant 0 : i32
    %c0_i32_0 = arith.constant 0 : i32
    %c0_i32_1 = arith.constant 0 : i32
    %c0_i32_2 = arith.constant 0 : i32
    return %arg0, %c0_i32, %c0_i32_0, %c0_i32_1 : i32, i32, i32, i32
  }
  func.func @transform_1(%arg0: i32, %arg1: i32) -> (i32, i32) {
    %c0_i32 = arith.constant 0 : i32
    %c0_i32_0 = arith.constant 0 : i32
    %c0_i32_1 = arith.constant 0 : i32
    return %c0_i32, %c0_i32_0 : i32, i32
  }
  func.func @transform_2(%arg0: i32, %arg1: i32) -> (i32, i32) {
    %c0_i32 = arith.constant 0 : i32
    %c0_i32_0 = arith.constant 0 : i32
    %c0_i32_1 = arith.constant 0 : i32
    return %c0_i32, %c0_i32_0 : i32, i32
  }
  func.func @transform_3(%arg0: i32, %arg1: i32) -> (i32, i32, i32, i32) {
    %c0_i32 = arith.constant 0 : i32
    %c0_i32_0 = arith.constant 0 : i32
    %c0_i32_1 = arith.constant 0 : i32
    return %arg0, %arg1, %c0_i32, %c0_i32_0 : i32, i32, i32, i32
  }
}

module attributes {stable_mosaic.version = 11 : i64} {
  func.func @_conv_kernel(%arg0: i32, %arg1: i32, %arg2: memref<1x11x32x128xf32, #tpu.memory_space<vmem>>, %arg3: memref<32x864xf32, #tpu.memory_space<vmem>>, %arg4: memref<32x1xf32, #tpu.memory_space<vmem>>, %arg5: memref<1x9x32x128xf32, #tpu.memory_space<vmem>>) attributes {dimension_semantics = [#tpu.dimension_semantics<parallel>, #tpu.dimension_semantics<parallel>], iteration_bounds = array<i64: 2, 1>, scalar_prefetch = 0 : i64, scratch_operands = 0 : i64, tpu.core_type = #tpu.core_type<tc>, window_params = [{transform_indices = @transform_0, window_bounds = array<i64: 1, 11, 32, 128>}, {pipeline_mode = #tpu.pipeline_mode<synchronous>, transform_indices = @transform_1, window_bounds = array<i64: 32, 864>}, {pipeline_mode = #tpu.pipeline_mode<synchronous>, transform_indices = @transform_2, window_bounds = array<i64: 32, 1>}, {transform_indices = @transform_3, window_bounds = array<i64: 1, 9, 32, 128>}]} {
    %c9_i32 = arith.constant 9 : i32
    %0 = arith.muli %arg1, %c9_i32 : i32
    %c0 = arith.constant 0 : index
    %c0_0 = arith.constant 0 : index
    %1 = vector.load %arg3[%c0, %c0_0] : memref<32x864xf32, #tpu.memory_space<vmem>>, vector<32x864xf32>
    %c0_1 = arith.constant 0 : index
    %c0_2 = arith.constant 0 : index
    %2 = vector.load %arg4[%c0_1, %c0_2] : memref<32x1xf32, #tpu.memory_space<vmem>>, vector<32x1xf32>
    %3 = tpu.iota {dimensions = array<i32: 1>} : vector<32x128xi32>
    %c17_i32 = arith.constant 17 : i32
    %4 = vector.broadcast %c17_i32 : i32 to vector<32x128xi32>
    %5 = arith.cmpi slt, %3, %4 : vector<32x128xi32>
    %cst = arith.constant 0.000000e+00 : f32
    %6 = vector.broadcast %cst : f32 to vector<32x128xf32>
    %c0_i32 = arith.constant 0 : i32
    %c9_i32_3 = arith.constant 9 : i32
    %7 = arith.addi %c0_i32, %c9_i32_3 : i32
    %c1_i32 = arith.constant 1 : i32
    scf.for %arg6 = %c0_i32 to %7 step %c1_i32  : i32 {
      %8 = arith.addi %0, %arg6 : i32
      %c4_i32 = arith.constant 4 : i32
      %9 = arith.subi %8, %c4_i32 : i32
      %c0_i32_5 = arith.constant 0 : i32
      %10 = arith.cmpi sge, %9, %c0_i32_5 : i32
      %c2_i32 = arith.constant 2 : i32
      %11 = arith.cmpi slt, %9, %c2_i32 : i32
      %12 = arith.andi %10, %11 : i1
      %c2_i32_6 = arith.constant 2 : i32
      %13 = arith.muli %9, %c2_i32_6 : i32
      %c0_i32_7 = arith.constant 0 : i32
      %14 = arith.addi %c0_i32_7, %13 : i32
      %c0_i32_8 = arith.constant 0 : i32
      %c2_i32_9 = arith.constant 2 : i32
      %15 = arith.maxsi %c0_i32_8, %14 : i32
      %16 = arith.minsi %c2_i32_9, %15 : i32
      %c0_i32_10 = arith.constant 0 : i32
      %17 = arith.addi %16, %c0_i32_10 : i32
      %c0_11 = arith.constant 0 : index
      %18 = arith.index_cast %17 : i32 to index
      %c0_12 = arith.constant 0 : index
      %c0_13 = arith.constant 0 : index
      %19 = vector.load %arg2[%c0_11, %18, %c0_12, %c0_13] : memref<1x11x32x128xf32, #tpu.memory_space<vmem>>, vector<1x1x32x128xf32>
      %20 = vector.shape_cast %19 : vector<1x1x32x128xf32> to vector<32x128xf32>
      %21 = tpu.concatenate %6, %20, %6 in 1 : vector<32x128xf32>, vector<32x128xf32>, vector<32x128xf32> -> vector<32x384xf32>
      %22 = vector.extract_strided_slice %21 {offsets = [0, 127], sizes = [32, 128], strides = [1, 1]} : vector<32x384xf32> to vector<32x128xf32>
      %23 = vector.extract_strided_slice %21 {offsets = [0, 128], sizes = [32, 128], strides = [1, 1]} : vector<32x384xf32> to vector<32x128xf32>
      %24 = vector.extract_strided_slice %21 {offsets = [0, 129], sizes = [32, 128], strides = [1, 1]} : vector<32x384xf32> to vector<32x128xf32>
      %c1_i32_14 = arith.constant 1 : i32
      %25 = arith.addi %16, %c1_i32_14 : i32
      %c0_15 = arith.constant 0 : index
      %26 = arith.index_cast %25 : i32 to index
      %c0_16 = arith.constant 0 : index
      %c0_17 = arith.constant 0 : index
      %27 = vector.load %arg2[%c0_15, %26, %c0_16, %c0_17] : memref<1x11x32x128xf32, #tpu.memory_space<vmem>>, vector<1x1x32x128xf32>
      %28 = vector.shape_cast %27 : vector<1x1x32x128xf32> to vector<32x128xf32>
      %29 = tpu.concatenate %6, %28, %6 in 1 : vector<32x128xf32>, vector<32x128xf32>, vector<32x128xf32> -> vector<32x384xf32>
      %30 = vector.extract_strided_slice %29 {offsets = [0, 127], sizes = [32, 128], strides = [1, 1]} : vector<32x384xf32> to vector<32x128xf32>
      %31 = vector.extract_strided_slice %29 {offsets = [0, 128], sizes = [32, 128], strides = [1, 1]} : vector<32x384xf32> to vector<32x128xf32>
      %32 = vector.extract_strided_slice %29 {offsets = [0, 129], sizes = [32, 128], strides = [1, 1]} : vector<32x384xf32> to vector<32x128xf32>
      %c2_i32_18 = arith.constant 2 : i32
      %33 = arith.addi %16, %c2_i32_18 : i32
      %c0_19 = arith.constant 0 : index
      %34 = arith.index_cast %33 : i32 to index
      %c0_20 = arith.constant 0 : index
      %c0_21 = arith.constant 0 : index
      %35 = vector.load %arg2[%c0_19, %34, %c0_20, %c0_21] : memref<1x11x32x128xf32, #tpu.memory_space<vmem>>, vector<1x1x32x128xf32>
      %36 = vector.shape_cast %35 : vector<1x1x32x128xf32> to vector<32x128xf32>
      %37 = tpu.concatenate %6, %36, %6 in 1 : vector<32x128xf32>, vector<32x128xf32>, vector<32x128xf32> -> vector<32x384xf32>
      %38 = vector.extract_strided_slice %37 {offsets = [0, 127], sizes = [32, 128], strides = [1, 1]} : vector<32x384xf32> to vector<32x128xf32>
      %39 = vector.extract_strided_slice %37 {offsets = [0, 128], sizes = [32, 128], strides = [1, 1]} : vector<32x384xf32> to vector<32x128xf32>
      %40 = vector.extract_strided_slice %37 {offsets = [0, 129], sizes = [32, 128], strides = [1, 1]} : vector<32x384xf32> to vector<32x128xf32>
      %c3_i32 = arith.constant 3 : i32
      %41 = arith.addi %16, %c3_i32 : i32
      %c0_22 = arith.constant 0 : index
      %42 = arith.index_cast %41 : i32 to index
      %c0_23 = arith.constant 0 : index
      %c0_24 = arith.constant 0 : index
      %43 = vector.load %arg2[%c0_22, %42, %c0_23, %c0_24] : memref<1x11x32x128xf32, #tpu.memory_space<vmem>>, vector<1x1x32x128xf32>
      %44 = vector.shape_cast %43 : vector<1x1x32x128xf32> to vector<32x128xf32>
      %45 = tpu.concatenate %6, %44, %6 in 1 : vector<32x128xf32>, vector<32x128xf32>, vector<32x128xf32> -> vector<32x384xf32>
      %46 = vector.extract_strided_slice %45 {offsets = [0, 127], sizes = [32, 128], strides = [1, 1]} : vector<32x384xf32> to vector<32x128xf32>
      %47 = vector.extract_strided_slice %45 {offsets = [0, 128], sizes = [32, 128], strides = [1, 1]} : vector<32x384xf32> to vector<32x128xf32>
      %48 = vector.extract_strided_slice %45 {offsets = [0, 129], sizes = [32, 128], strides = [1, 1]} : vector<32x384xf32> to vector<32x128xf32>
      %c4_i32_25 = arith.constant 4 : i32
      %49 = arith.addi %16, %c4_i32_25 : i32
      %c0_26 = arith.constant 0 : index
      %50 = arith.index_cast %49 : i32 to index
      %c0_27 = arith.constant 0 : index
      %c0_28 = arith.constant 0 : index
      %51 = vector.load %arg2[%c0_26, %50, %c0_27, %c0_28] : memref<1x11x32x128xf32, #tpu.memory_space<vmem>>, vector<1x1x32x128xf32>
      %52 = vector.shape_cast %51 : vector<1x1x32x128xf32> to vector<32x128xf32>
      %53 = tpu.concatenate %6, %52, %6 in 1 : vector<32x128xf32>, vector<32x128xf32>, vector<32x128xf32> -> vector<32x384xf32>
      %54 = vector.extract_strided_slice %53 {offsets = [0, 127], sizes = [32, 128], strides = [1, 1]} : vector<32x384xf32> to vector<32x128xf32>
      %55 = vector.extract_strided_slice %53 {offsets = [0, 128], sizes = [32, 128], strides = [1, 1]} : vector<32x384xf32> to vector<32x128xf32>
      %56 = vector.extract_strided_slice %53 {offsets = [0, 129], sizes = [32, 128], strides = [1, 1]} : vector<32x384xf32> to vector<32x128xf32>
      %c5_i32 = arith.constant 5 : i32
      %57 = arith.addi %16, %c5_i32 : i32
      %c0_29 = arith.constant 0 : index
      %58 = arith.index_cast %57 : i32 to index
      %c0_30 = arith.constant 0 : index
      %c0_31 = arith.constant 0 : index
      %59 = vector.load %arg2[%c0_29, %58, %c0_30, %c0_31] : memref<1x11x32x128xf32, #tpu.memory_space<vmem>>, vector<1x1x32x128xf32>
      %60 = vector.shape_cast %59 : vector<1x1x32x128xf32> to vector<32x128xf32>
      %61 = tpu.concatenate %6, %60, %6 in 1 : vector<32x128xf32>, vector<32x128xf32>, vector<32x128xf32> -> vector<32x384xf32>
      %62 = vector.extract_strided_slice %61 {offsets = [0, 127], sizes = [32, 128], strides = [1, 1]} : vector<32x384xf32> to vector<32x128xf32>
      %63 = vector.extract_strided_slice %61 {offsets = [0, 128], sizes = [32, 128], strides = [1, 1]} : vector<32x384xf32> to vector<32x128xf32>
      %64 = vector.extract_strided_slice %61 {offsets = [0, 129], sizes = [32, 128], strides = [1, 1]} : vector<32x384xf32> to vector<32x128xf32>
      %c6_i32 = arith.constant 6 : i32
      %65 = arith.addi %16, %c6_i32 : i32
      %c0_32 = arith.constant 0 : index
      %66 = arith.index_cast %65 : i32 to index
      %c0_33 = arith.constant 0 : index
      %c0_34 = arith.constant 0 : index
      %67 = vector.load %arg2[%c0_32, %66, %c0_33, %c0_34] : memref<1x11x32x128xf32, #tpu.memory_space<vmem>>, vector<1x1x32x128xf32>
      %68 = vector.shape_cast %67 : vector<1x1x32x128xf32> to vector<32x128xf32>
      %69 = tpu.concatenate %6, %68, %6 in 1 : vector<32x128xf32>, vector<32x128xf32>, vector<32x128xf32> -> vector<32x384xf32>
      %70 = vector.extract_strided_slice %69 {offsets = [0, 127], sizes = [32, 128], strides = [1, 1]} : vector<32x384xf32> to vector<32x128xf32>
      %71 = vector.extract_strided_slice %69 {offsets = [0, 128], sizes = [32, 128], strides = [1, 1]} : vector<32x384xf32> to vector<32x128xf32>
      %72 = vector.extract_strided_slice %69 {offsets = [0, 129], sizes = [32, 128], strides = [1, 1]} : vector<32x384xf32> to vector<32x128xf32>
      %c7_i32 = arith.constant 7 : i32
      %73 = arith.addi %16, %c7_i32 : i32
      %c0_35 = arith.constant 0 : index
      %74 = arith.index_cast %73 : i32 to index
      %c0_36 = arith.constant 0 : index
      %c0_37 = arith.constant 0 : index
      %75 = vector.load %arg2[%c0_35, %74, %c0_36, %c0_37] : memref<1x11x32x128xf32, #tpu.memory_space<vmem>>, vector<1x1x32x128xf32>
      %76 = vector.shape_cast %75 : vector<1x1x32x128xf32> to vector<32x128xf32>
      %77 = tpu.concatenate %6, %76, %6 in 1 : vector<32x128xf32>, vector<32x128xf32>, vector<32x128xf32> -> vector<32x384xf32>
      %78 = vector.extract_strided_slice %77 {offsets = [0, 127], sizes = [32, 128], strides = [1, 1]} : vector<32x384xf32> to vector<32x128xf32>
      %79 = vector.extract_strided_slice %77 {offsets = [0, 128], sizes = [32, 128], strides = [1, 1]} : vector<32x384xf32> to vector<32x128xf32>
      %80 = vector.extract_strided_slice %77 {offsets = [0, 129], sizes = [32, 128], strides = [1, 1]} : vector<32x384xf32> to vector<32x128xf32>
      %c8_i32 = arith.constant 8 : i32
      %81 = arith.addi %16, %c8_i32 : i32
      %c0_38 = arith.constant 0 : index
      %82 = arith.index_cast %81 : i32 to index
      %c0_39 = arith.constant 0 : index
      %c0_40 = arith.constant 0 : index
      %83 = vector.load %arg2[%c0_38, %82, %c0_39, %c0_40] : memref<1x11x32x128xf32, #tpu.memory_space<vmem>>, vector<1x1x32x128xf32>
      %84 = vector.shape_cast %83 : vector<1x1x32x128xf32> to vector<32x128xf32>
      %85 = tpu.concatenate %6, %84, %6 in 1 : vector<32x128xf32>, vector<32x128xf32>, vector<32x128xf32> -> vector<32x384xf32>
      %86 = vector.extract_strided_slice %85 {offsets = [0, 127], sizes = [32, 128], strides = [1, 1]} : vector<32x384xf32> to vector<32x128xf32>
      %87 = vector.extract_strided_slice %85 {offsets = [0, 128], sizes = [32, 128], strides = [1, 1]} : vector<32x384xf32> to vector<32x128xf32>
      %88 = vector.extract_strided_slice %85 {offsets = [0, 129], sizes = [32, 128], strides = [1, 1]} : vector<32x384xf32> to vector<32x128xf32>
      %89 = tpu.concatenate %22, %23, %24, %30, %31, %32, %38, %39, %40, %46, %47, %48, %54, %55, %56, %62 in 0 : vector<32x128xf32>, vector<32x128xf32>, vector<32x128xf32>, vector<32x128xf32>, vector<32x128xf32>, vector<32x128xf32>, vector<32x128xf32>, vector<32x128xf32>, vector<32x128xf32>, vector<32x128xf32>, vector<32x128xf32>, vector<32x128xf32>, vector<32x128xf32>, vector<32x128xf32>, vector<32x128xf32>, vector<32x128xf32> -> vector<512x128xf32>
      %90 = tpu.concatenate %63, %64, %70, %71, %72, %78, %79, %80, %86, %87, %88 in 0 : vector<32x128xf32>, vector<32x128xf32>, vector<32x128xf32>, vector<32x128xf32>, vector<32x128xf32>, vector<32x128xf32>, vector<32x128xf32>, vector<32x128xf32>, vector<32x128xf32>, vector<32x128xf32>, vector<32x128xf32> -> vector<352x128xf32>
      %91 = tpu.concatenate %89, %90 in 0 : vector<512x128xf32>, vector<352x128xf32> -> vector<864x128xf32>
      %cst_41 = arith.constant dense<0.000000e+00> : vector<32x128xf32>
      %92 = tpu.matmul %1, %91, %cst_41 {dimension_numbers = #tpu.dot_dimension_numbers<[1], [0], [0], [1], [0, 0, 1, 1], [], []>} : vector<32x864xf32>, vector<864x128xf32>, vector<32x128xf32> -> vector<32x128xf32>
      %93 = vector.broadcast %2 : vector<32x1xf32> to vector<32x128xf32>
      %94 = arith.addf %92, %93 : vector<32x128xf32>
      %cst_42 = arith.constant 0.000000e+00 : f32
      %95 = vector.broadcast %cst_42 : f32 to vector<32x128xf32>
      %96 = arith.cmpf ogt, %94, %95 : vector<32x128xf32>
      %cst_43 = arith.constant 1.000000e-01 : f32
      %97 = vector.broadcast %cst_43 : f32 to vector<32x128xf32>
      %98 = arith.mulf %97, %94 : vector<32x128xf32>
      %99 = arith.select %96, %94, %98 : vector<32x128xi1>, vector<32x128xf32>
      %100 = vector.broadcast %12 : i1 to vector<32x128xi1>
      %101 = arith.andi %100, %5 : vector<32x128xi1>
      %cst_44 = arith.constant 0.000000e+00 : f32
      %102 = vector.broadcast %cst_44 : f32 to vector<32x128xf32>
      %103 = arith.select %101, %99, %102 : vector<32x128xi1>, vector<32x128xf32>
      %c0_45 = arith.constant 0 : index
      %104 = arith.index_cast %arg6 : i32 to index
      %c0_46 = arith.constant 0 : index
      %c0_47 = arith.constant 0 : index
      %105 = vector.load %arg5[%c0_45, %104, %c0_46, %c0_47] : memref<1x9x32x128xf32, #tpu.memory_space<vmem>>, vector<1x1x32x128xf32>
      %106 = vector.shape_cast %105 : vector<1x1x32x128xf32> to vector<32x128xf32>
      %107 = vector.shape_cast %103 : vector<32x128xf32> to vector<1x1x32x128xf32>
      tpu.vector_store %arg5[%c0_45, %104, %c0_46, %c0_47], %107 {strides = array<i32>} : memref<1x9x32x128xf32, #tpu.memory_space<vmem>>, vector<1x1x32x128xf32>,
    }
    %c9_i32_4 = arith.constant 9 : i32
    return
  }
  func.func @transform_0(%arg0: i32, %arg1: i32) -> (i32, i32, i32, i32) {
    %c0_i32 = arith.constant 0 : i32
    %c0_i32_0 = arith.constant 0 : i32
    %c0_i32_1 = arith.constant 0 : i32
    %c0_i32_2 = arith.constant 0 : i32
    return %arg0, %c0_i32, %c0_i32_0, %c0_i32_1 : i32, i32, i32, i32
  }
  func.func @transform_1(%arg0: i32, %arg1: i32) -> (i32, i32) {
    %c0_i32 = arith.constant 0 : i32
    %c0_i32_0 = arith.constant 0 : i32
    %c0_i32_1 = arith.constant 0 : i32
    return %c0_i32, %c0_i32_0 : i32, i32
  }
  func.func @transform_2(%arg0: i32, %arg1: i32) -> (i32, i32) {
    %c0_i32 = arith.constant 0 : i32
    %c0_i32_0 = arith.constant 0 : i32
    %c0_i32_1 = arith.constant 0 : i32
    return %c0_i32, %c0_i32_0 : i32, i32
  }
  func.func @transform_3(%arg0: i32, %arg1: i32) -> (i32, i32, i32, i32) {
    %c0_i32 = arith.constant 0 : i32
    %c0_i32_0 = arith.constant 0 : i32
    %c0_i32_1 = arith.constant 0 : i32
    return %arg0, %arg1, %c0_i32, %c0_i32_0 : i32, i32, i32, i32
  }
}

module attributes {stable_mosaic.version = 11 : i64} {
  func.func @_conv_kernel(%arg0: i32, %arg1: i32, %arg2: memref<1x9x32x128xf32, #tpu.memory_space<vmem>>, %arg3: memref<32x864xf32, #tpu.memory_space<vmem>>, %arg4: memref<32x1xf32, #tpu.memory_space<vmem>>, %arg5: memref<1x3x32x128xf32, #tpu.memory_space<vmem>>) attributes {dimension_semantics = [#tpu.dimension_semantics<parallel>, #tpu.dimension_semantics<parallel>], iteration_bounds = array<i64: 2, 1>, scalar_prefetch = 0 : i64, scratch_operands = 0 : i64, tpu.core_type = #tpu.core_type<tc>, window_params = [{transform_indices = @transform_0, window_bounds = array<i64: 1, 9, 32, 128>}, {pipeline_mode = #tpu.pipeline_mode<synchronous>, transform_indices = @transform_1, window_bounds = array<i64: 32, 864>}, {pipeline_mode = #tpu.pipeline_mode<synchronous>, transform_indices = @transform_2, window_bounds = array<i64: 32, 1>}, {transform_indices = @transform_3, window_bounds = array<i64: 1, 3, 32, 128>}]} {
    %c3_i32 = arith.constant 3 : i32
    %0 = arith.muli %arg1, %c3_i32 : i32
    %c0 = arith.constant 0 : index
    %c0_0 = arith.constant 0 : index
    %1 = vector.load %arg3[%c0, %c0_0] : memref<32x864xf32, #tpu.memory_space<vmem>>, vector<32x864xf32>
    %c0_1 = arith.constant 0 : index
    %c0_2 = arith.constant 0 : index
    %2 = vector.load %arg4[%c0_1, %c0_2] : memref<32x1xf32, #tpu.memory_space<vmem>>, vector<32x1xf32>
    %3 = tpu.iota {dimensions = array<i32: 1>} : vector<32x128xi32>
    %c17_i32 = arith.constant 17 : i32
    %4 = vector.broadcast %c17_i32 : i32 to vector<32x128xi32>
    %5 = arith.cmpi slt, %3, %4 : vector<32x128xi32>
    %cst = arith.constant 0.000000e+00 : f32
    %6 = vector.broadcast %cst : f32 to vector<32x128xf32>
    %c0_i32 = arith.constant 0 : i32
    %c3_i32_3 = arith.constant 3 : i32
    %7 = arith.addi %c0_i32, %c3_i32_3 : i32
    %c1_i32 = arith.constant 1 : i32
    scf.for %arg6 = %c0_i32 to %7 step %c1_i32  : i32 {
      %8 = arith.addi %0, %arg6 : i32
      %c1_i32_5 = arith.constant 1 : i32
      %9 = arith.subi %8, %c1_i32_5 : i32
      %c0_i32_6 = arith.constant 0 : i32
      %10 = arith.cmpi sge, %9, %c0_i32_6 : i32
      %c1_i32_7 = arith.constant 1 : i32
      %11 = arith.cmpi slt, %9, %c1_i32_7 : i32
      %12 = arith.andi %10, %11 : i1
      %c2_i32 = arith.constant 2 : i32
      %13 = arith.muli %9, %c2_i32 : i32
      %c0_i32_8 = arith.constant 0 : i32
      %14 = arith.addi %c0_i32_8, %13 : i32
      %c0_i32_9 = arith.constant 0 : i32
      %c0_i32_10 = arith.constant 0 : i32
      %15 = arith.maxsi %c0_i32_9, %14 : i32
      %16 = arith.minsi %c0_i32_10, %15 : i32
      %c0_i32_11 = arith.constant 0 : i32
      %17 = arith.addi %16, %c0_i32_11 : i32
      %c0_12 = arith.constant 0 : index
      %18 = arith.index_cast %17 : i32 to index
      %c0_13 = arith.constant 0 : index
      %c0_14 = arith.constant 0 : index
      %19 = vector.load %arg2[%c0_12, %18, %c0_13, %c0_14] : memref<1x9x32x128xf32, #tpu.memory_space<vmem>>, vector<1x1x32x128xf32>
      %20 = vector.shape_cast %19 : vector<1x1x32x128xf32> to vector<32x128xf32>
      %21 = tpu.concatenate %6, %20, %6 in 1 : vector<32x128xf32>, vector<32x128xf32>, vector<32x128xf32> -> vector<32x384xf32>
      %22 = vector.extract_strided_slice %21 {offsets = [0, 127], sizes = [32, 128], strides = [1, 1]} : vector<32x384xf32> to vector<32x128xf32>
      %23 = vector.extract_strided_slice %21 {offsets = [0, 128], sizes = [32, 128], strides = [1, 1]} : vector<32x384xf32> to vector<32x128xf32>
      %24 = vector.extract_strided_slice %21 {offsets = [0, 129], sizes = [32, 128], strides = [1, 1]} : vector<32x384xf32> to vector<32x128xf32>
      %c1_i32_15 = arith.constant 1 : i32
      %25 = arith.addi %16, %c1_i32_15 : i32
      %c0_16 = arith.constant 0 : index
      %26 = arith.index_cast %25 : i32 to index
      %c0_17 = arith.constant 0 : index
      %c0_18 = arith.constant 0 : index
      %27 = vector.load %arg2[%c0_16, %26, %c0_17, %c0_18] : memref<1x9x32x128xf32, #tpu.memory_space<vmem>>, vector<1x1x32x128xf32>
      %28 = vector.shape_cast %27 : vector<1x1x32x128xf32> to vector<32x128xf32>
      %29 = tpu.concatenate %6, %28, %6 in 1 : vector<32x128xf32>, vector<32x128xf32>, vector<32x128xf32> -> vector<32x384xf32>
      %30 = vector.extract_strided_slice %29 {offsets = [0, 127], sizes = [32, 128], strides = [1, 1]} : vector<32x384xf32> to vector<32x128xf32>
      %31 = vector.extract_strided_slice %29 {offsets = [0, 128], sizes = [32, 128], strides = [1, 1]} : vector<32x384xf32> to vector<32x128xf32>
      %32 = vector.extract_strided_slice %29 {offsets = [0, 129], sizes = [32, 128], strides = [1, 1]} : vector<32x384xf32> to vector<32x128xf32>
      %c2_i32_19 = arith.constant 2 : i32
      %33 = arith.addi %16, %c2_i32_19 : i32
      %c0_20 = arith.constant 0 : index
      %34 = arith.index_cast %33 : i32 to index
      %c0_21 = arith.constant 0 : index
      %c0_22 = arith.constant 0 : index
      %35 = vector.load %arg2[%c0_20, %34, %c0_21, %c0_22] : memref<1x9x32x128xf32, #tpu.memory_space<vmem>>, vector<1x1x32x128xf32>
      %36 = vector.shape_cast %35 : vector<1x1x32x128xf32> to vector<32x128xf32>
      %37 = tpu.concatenate %6, %36, %6 in 1 : vector<32x128xf32>, vector<32x128xf32>, vector<32x128xf32> -> vector<32x384xf32>
      %38 = vector.extract_strided_slice %37 {offsets = [0, 127], sizes = [32, 128], strides = [1, 1]} : vector<32x384xf32> to vector<32x128xf32>
      %39 = vector.extract_strided_slice %37 {offsets = [0, 128], sizes = [32, 128], strides = [1, 1]} : vector<32x384xf32> to vector<32x128xf32>
      %40 = vector.extract_strided_slice %37 {offsets = [0, 129], sizes = [32, 128], strides = [1, 1]} : vector<32x384xf32> to vector<32x128xf32>
      %c3_i32_23 = arith.constant 3 : i32
      %41 = arith.addi %16, %c3_i32_23 : i32
      %c0_24 = arith.constant 0 : index
      %42 = arith.index_cast %41 : i32 to index
      %c0_25 = arith.constant 0 : index
      %c0_26 = arith.constant 0 : index
      %43 = vector.load %arg2[%c0_24, %42, %c0_25, %c0_26] : memref<1x9x32x128xf32, #tpu.memory_space<vmem>>, vector<1x1x32x128xf32>
      %44 = vector.shape_cast %43 : vector<1x1x32x128xf32> to vector<32x128xf32>
      %45 = tpu.concatenate %6, %44, %6 in 1 : vector<32x128xf32>, vector<32x128xf32>, vector<32x128xf32> -> vector<32x384xf32>
      %46 = vector.extract_strided_slice %45 {offsets = [0, 127], sizes = [32, 128], strides = [1, 1]} : vector<32x384xf32> to vector<32x128xf32>
      %47 = vector.extract_strided_slice %45 {offsets = [0, 128], sizes = [32, 128], strides = [1, 1]} : vector<32x384xf32> to vector<32x128xf32>
      %48 = vector.extract_strided_slice %45 {offsets = [0, 129], sizes = [32, 128], strides = [1, 1]} : vector<32x384xf32> to vector<32x128xf32>
      %c4_i32 = arith.constant 4 : i32
      %49 = arith.addi %16, %c4_i32 : i32
      %c0_27 = arith.constant 0 : index
      %50 = arith.index_cast %49 : i32 to index
      %c0_28 = arith.constant 0 : index
      %c0_29 = arith.constant 0 : index
      %51 = vector.load %arg2[%c0_27, %50, %c0_28, %c0_29] : memref<1x9x32x128xf32, #tpu.memory_space<vmem>>, vector<1x1x32x128xf32>
      %52 = vector.shape_cast %51 : vector<1x1x32x128xf32> to vector<32x128xf32>
      %53 = tpu.concatenate %6, %52, %6 in 1 : vector<32x128xf32>, vector<32x128xf32>, vector<32x128xf32> -> vector<32x384xf32>
      %54 = vector.extract_strided_slice %53 {offsets = [0, 127], sizes = [32, 128], strides = [1, 1]} : vector<32x384xf32> to vector<32x128xf32>
      %55 = vector.extract_strided_slice %53 {offsets = [0, 128], sizes = [32, 128], strides = [1, 1]} : vector<32x384xf32> to vector<32x128xf32>
      %56 = vector.extract_strided_slice %53 {offsets = [0, 129], sizes = [32, 128], strides = [1, 1]} : vector<32x384xf32> to vector<32x128xf32>
      %c5_i32 = arith.constant 5 : i32
      %57 = arith.addi %16, %c5_i32 : i32
      %c0_30 = arith.constant 0 : index
      %58 = arith.index_cast %57 : i32 to index
      %c0_31 = arith.constant 0 : index
      %c0_32 = arith.constant 0 : index
      %59 = vector.load %arg2[%c0_30, %58, %c0_31, %c0_32] : memref<1x9x32x128xf32, #tpu.memory_space<vmem>>, vector<1x1x32x128xf32>
      %60 = vector.shape_cast %59 : vector<1x1x32x128xf32> to vector<32x128xf32>
      %61 = tpu.concatenate %6, %60, %6 in 1 : vector<32x128xf32>, vector<32x128xf32>, vector<32x128xf32> -> vector<32x384xf32>
      %62 = vector.extract_strided_slice %61 {offsets = [0, 127], sizes = [32, 128], strides = [1, 1]} : vector<32x384xf32> to vector<32x128xf32>
      %63 = vector.extract_strided_slice %61 {offsets = [0, 128], sizes = [32, 128], strides = [1, 1]} : vector<32x384xf32> to vector<32x128xf32>
      %64 = vector.extract_strided_slice %61 {offsets = [0, 129], sizes = [32, 128], strides = [1, 1]} : vector<32x384xf32> to vector<32x128xf32>
      %c6_i32 = arith.constant 6 : i32
      %65 = arith.addi %16, %c6_i32 : i32
      %c0_33 = arith.constant 0 : index
      %66 = arith.index_cast %65 : i32 to index
      %c0_34 = arith.constant 0 : index
      %c0_35 = arith.constant 0 : index
      %67 = vector.load %arg2[%c0_33, %66, %c0_34, %c0_35] : memref<1x9x32x128xf32, #tpu.memory_space<vmem>>, vector<1x1x32x128xf32>
      %68 = vector.shape_cast %67 : vector<1x1x32x128xf32> to vector<32x128xf32>
      %69 = tpu.concatenate %6, %68, %6 in 1 : vector<32x128xf32>, vector<32x128xf32>, vector<32x128xf32> -> vector<32x384xf32>
      %70 = vector.extract_strided_slice %69 {offsets = [0, 127], sizes = [32, 128], strides = [1, 1]} : vector<32x384xf32> to vector<32x128xf32>
      %71 = vector.extract_strided_slice %69 {offsets = [0, 128], sizes = [32, 128], strides = [1, 1]} : vector<32x384xf32> to vector<32x128xf32>
      %72 = vector.extract_strided_slice %69 {offsets = [0, 129], sizes = [32, 128], strides = [1, 1]} : vector<32x384xf32> to vector<32x128xf32>
      %c7_i32 = arith.constant 7 : i32
      %73 = arith.addi %16, %c7_i32 : i32
      %c0_36 = arith.constant 0 : index
      %74 = arith.index_cast %73 : i32 to index
      %c0_37 = arith.constant 0 : index
      %c0_38 = arith.constant 0 : index
      %75 = vector.load %arg2[%c0_36, %74, %c0_37, %c0_38] : memref<1x9x32x128xf32, #tpu.memory_space<vmem>>, vector<1x1x32x128xf32>
      %76 = vector.shape_cast %75 : vector<1x1x32x128xf32> to vector<32x128xf32>
      %77 = tpu.concatenate %6, %76, %6 in 1 : vector<32x128xf32>, vector<32x128xf32>, vector<32x128xf32> -> vector<32x384xf32>
      %78 = vector.extract_strided_slice %77 {offsets = [0, 127], sizes = [32, 128], strides = [1, 1]} : vector<32x384xf32> to vector<32x128xf32>
      %79 = vector.extract_strided_slice %77 {offsets = [0, 128], sizes = [32, 128], strides = [1, 1]} : vector<32x384xf32> to vector<32x128xf32>
      %80 = vector.extract_strided_slice %77 {offsets = [0, 129], sizes = [32, 128], strides = [1, 1]} : vector<32x384xf32> to vector<32x128xf32>
      %c8_i32 = arith.constant 8 : i32
      %81 = arith.addi %16, %c8_i32 : i32
      %c0_39 = arith.constant 0 : index
      %82 = arith.index_cast %81 : i32 to index
      %c0_40 = arith.constant 0 : index
      %c0_41 = arith.constant 0 : index
      %83 = vector.load %arg2[%c0_39, %82, %c0_40, %c0_41] : memref<1x9x32x128xf32, #tpu.memory_space<vmem>>, vector<1x1x32x128xf32>
      %84 = vector.shape_cast %83 : vector<1x1x32x128xf32> to vector<32x128xf32>
      %85 = tpu.concatenate %6, %84, %6 in 1 : vector<32x128xf32>, vector<32x128xf32>, vector<32x128xf32> -> vector<32x384xf32>
      %86 = vector.extract_strided_slice %85 {offsets = [0, 127], sizes = [32, 128], strides = [1, 1]} : vector<32x384xf32> to vector<32x128xf32>
      %87 = vector.extract_strided_slice %85 {offsets = [0, 128], sizes = [32, 128], strides = [1, 1]} : vector<32x384xf32> to vector<32x128xf32>
      %88 = vector.extract_strided_slice %85 {offsets = [0, 129], sizes = [32, 128], strides = [1, 1]} : vector<32x384xf32> to vector<32x128xf32>
      %89 = tpu.concatenate %22, %23, %24, %30, %31, %32, %38, %39, %40, %46, %47, %48, %54, %55, %56, %62 in 0 : vector<32x128xf32>, vector<32x128xf32>, vector<32x128xf32>, vector<32x128xf32>, vector<32x128xf32>, vector<32x128xf32>, vector<32x128xf32>, vector<32x128xf32>, vector<32x128xf32>, vector<32x128xf32>, vector<32x128xf32>, vector<32x128xf32>, vector<32x128xf32>, vector<32x128xf32>, vector<32x128xf32>, vector<32x128xf32> -> vector<512x128xf32>
      %90 = tpu.concatenate %63, %64, %70, %71, %72, %78, %79, %80, %86, %87, %88 in 0 : vector<32x128xf32>, vector<32x128xf32>, vector<32x128xf32>, vector<32x128xf32>, vector<32x128xf32>, vector<32x128xf32>, vector<32x128xf32>, vector<32x128xf32>, vector<32x128xf32>, vector<32x128xf32>, vector<32x128xf32> -> vector<352x128xf32>
      %91 = tpu.concatenate %89, %90 in 0 : vector<512x128xf32>, vector<352x128xf32> -> vector<864x128xf32>
      %cst_42 = arith.constant dense<0.000000e+00> : vector<32x128xf32>
      %92 = tpu.matmul %1, %91, %cst_42 {dimension_numbers = #tpu.dot_dimension_numbers<[1], [0], [0], [1], [0, 0, 1, 1], [], []>} : vector<32x864xf32>, vector<864x128xf32>, vector<32x128xf32> -> vector<32x128xf32>
      %93 = vector.broadcast %2 : vector<32x1xf32> to vector<32x128xf32>
      %94 = arith.addf %92, %93 : vector<32x128xf32>
      %cst_43 = arith.constant 0.000000e+00 : f32
      %95 = vector.broadcast %cst_43 : f32 to vector<32x128xf32>
      %96 = arith.cmpf ogt, %94, %95 : vector<32x128xf32>
      %cst_44 = arith.constant 1.000000e-01 : f32
      %97 = vector.broadcast %cst_44 : f32 to vector<32x128xf32>
      %98 = arith.mulf %97, %94 : vector<32x128xf32>
      %99 = arith.select %96, %94, %98 : vector<32x128xi1>, vector<32x128xf32>
      %100 = vector.broadcast %12 : i1 to vector<32x128xi1>
      %101 = arith.andi %100, %5 : vector<32x128xi1>
      %cst_45 = arith.constant 0.000000e+00 : f32
      %102 = vector.broadcast %cst_45 : f32 to vector<32x128xf32>
      %103 = arith.select %101, %99, %102 : vector<32x128xi1>, vector<32x128xf32>
      %c0_46 = arith.constant 0 : index
      %104 = arith.index_cast %arg6 : i32 to index
      %c0_47 = arith.constant 0 : index
      %c0_48 = arith.constant 0 : index
      %105 = vector.load %arg5[%c0_46, %104, %c0_47, %c0_48] : memref<1x3x32x128xf32, #tpu.memory_space<vmem>>, vector<1x1x32x128xf32>
      %106 = vector.shape_cast %105 : vector<1x1x32x128xf32> to vector<32x128xf32>
      %107 = vector.shape_cast %103 : vector<32x128xf32> to vector<1x1x32x128xf32>
      tpu.vector_store %arg5[%c0_46, %104, %c0_47, %c0_48], %107 {strides = array<i32>} : memref<1x3x32x128xf32, #tpu.memory_space<vmem>>, vector<1x1x32x128xf32>,
    }
    %c3_i32_4 = arith.constant 3 : i32
    return
  }
  func.func @transform_0(%arg0: i32, %arg1: i32) -> (i32, i32, i32, i32) {
    %c0_i32 = arith.constant 0 : i32
    %c0_i32_0 = arith.constant 0 : i32
    %c0_i32_1 = arith.constant 0 : i32
    %c0_i32_2 = arith.constant 0 : i32
    return %arg0, %c0_i32, %c0_i32_0, %c0_i32_1 : i32, i32, i32, i32
  }
  func.func @transform_1(%arg0: i32, %arg1: i32) -> (i32, i32) {
    %c0_i32 = arith.constant 0 : i32
    %c0_i32_0 = arith.constant 0 : i32
    %c0_i32_1 = arith.constant 0 : i32
    return %c0_i32, %c0_i32_0 : i32, i32
  }
  func.func @transform_2(%arg0: i32, %arg1: i32) -> (i32, i32) {
    %c0_i32 = arith.constant 0 : i32
    %c0_i32_0 = arith.constant 0 : i32
    %c0_i32_1 = arith.constant 0 : i32
    return %c0_i32, %c0_i32_0 : i32, i32
  }
  func.func @transform_3(%arg0: i32, %arg1: i32) -> (i32, i32, i32, i32) {
    %c0_i32 = arith.constant 0 : i32
    %c0_i32_0 = arith.constant 0 : i32
    %c0_i32_1 = arith.constant 0 : i32
    return %arg0, %arg1, %c0_i32, %c0_i32_0 : i32, i32, i32, i32
  }
}

module attributes {stable_mosaic.version = 11 : i64} {
  func.func @_conv_kernel(%arg0: i32, %arg1: i32, %arg2: memref<1x3x32x128xf32, #tpu.memory_space<vmem>>, %arg3: memref<32x288xf32, #tpu.memory_space<vmem>>, %arg4: memref<32x1xf32, #tpu.memory_space<vmem>>, %arg5: memref<1x3x32x128xf32, #tpu.memory_space<vmem>>) attributes {dimension_semantics = [#tpu.dimension_semantics<parallel>, #tpu.dimension_semantics<parallel>], iteration_bounds = array<i64: 2, 1>, scalar_prefetch = 0 : i64, scratch_operands = 0 : i64, tpu.core_type = #tpu.core_type<tc>, window_params = [{transform_indices = @transform_0, window_bounds = array<i64: 1, 3, 32, 128>}, {pipeline_mode = #tpu.pipeline_mode<synchronous>, transform_indices = @transform_1, window_bounds = array<i64: 32, 288>}, {pipeline_mode = #tpu.pipeline_mode<synchronous>, transform_indices = @transform_2, window_bounds = array<i64: 32, 1>}, {transform_indices = @transform_3, window_bounds = array<i64: 1, 3, 32, 128>}]} {
    %c3_i32 = arith.constant 3 : i32
    %0 = arith.muli %arg1, %c3_i32 : i32
    %c0 = arith.constant 0 : index
    %c0_0 = arith.constant 0 : index
    %1 = vector.load %arg3[%c0, %c0_0] : memref<32x288xf32, #tpu.memory_space<vmem>>, vector<32x288xf32>
    %c0_1 = arith.constant 0 : index
    %c0_2 = arith.constant 0 : index
    %2 = vector.load %arg4[%c0_1, %c0_2] : memref<32x1xf32, #tpu.memory_space<vmem>>, vector<32x1xf32>
    %3 = tpu.iota {dimensions = array<i32: 1>} : vector<32x128xi32>
    %c17_i32 = arith.constant 17 : i32
    %4 = vector.broadcast %c17_i32 : i32 to vector<32x128xi32>
    %5 = arith.cmpi slt, %3, %4 : vector<32x128xi32>
    %cst = arith.constant 0.000000e+00 : f32
    %6 = vector.broadcast %cst : f32 to vector<32x128xf32>
    %c0_i32 = arith.constant 0 : i32
    %c3_i32_3 = arith.constant 3 : i32
    %7 = arith.addi %c0_i32, %c3_i32_3 : i32
    %c1_i32 = arith.constant 1 : i32
    scf.for %arg6 = %c0_i32 to %7 step %c1_i32  : i32 {
      %8 = arith.addi %0, %arg6 : i32
      %c1_i32_5 = arith.constant 1 : i32
      %9 = arith.subi %8, %c1_i32_5 : i32
      %c0_i32_6 = arith.constant 0 : i32
      %10 = arith.cmpi sge, %9, %c0_i32_6 : i32
      %c1_i32_7 = arith.constant 1 : i32
      %11 = arith.cmpi slt, %9, %c1_i32_7 : i32
      %12 = arith.andi %10, %11 : i1
      %c1_i32_8 = arith.constant 1 : i32
      %13 = arith.muli %9, %c1_i32_8 : i32
      %c0_i32_9 = arith.constant 0 : i32
      %14 = arith.addi %c0_i32_9, %13 : i32
      %c0_i32_10 = arith.constant 0 : i32
      %c0_i32_11 = arith.constant 0 : i32
      %15 = arith.maxsi %c0_i32_10, %14 : i32
      %16 = arith.minsi %c0_i32_11, %15 : i32
      %c0_i32_12 = arith.constant 0 : i32
      %17 = arith.addi %16, %c0_i32_12 : i32
      %c0_13 = arith.constant 0 : index
      %18 = arith.index_cast %17 : i32 to index
      %c0_14 = arith.constant 0 : index
      %c0_15 = arith.constant 0 : index
      %19 = vector.load %arg2[%c0_13, %18, %c0_14, %c0_15] : memref<1x3x32x128xf32, #tpu.memory_space<vmem>>, vector<1x1x32x128xf32>
      %20 = vector.shape_cast %19 : vector<1x1x32x128xf32> to vector<32x128xf32>
      %21 = tpu.concatenate %6, %20, %6 in 1 : vector<32x128xf32>, vector<32x128xf32>, vector<32x128xf32> -> vector<32x384xf32>
      %22 = vector.extract_strided_slice %21 {offsets = [0, 127], sizes = [32, 128], strides = [1, 1]} : vector<32x384xf32> to vector<32x128xf32>
      %23 = vector.extract_strided_slice %21 {offsets = [0, 128], sizes = [32, 128], strides = [1, 1]} : vector<32x384xf32> to vector<32x128xf32>
      %24 = vector.extract_strided_slice %21 {offsets = [0, 129], sizes = [32, 128], strides = [1, 1]} : vector<32x384xf32> to vector<32x128xf32>
      %c1_i32_16 = arith.constant 1 : i32
      %25 = arith.addi %16, %c1_i32_16 : i32
      %c0_17 = arith.constant 0 : index
      %26 = arith.index_cast %25 : i32 to index
      %c0_18 = arith.constant 0 : index
      %c0_19 = arith.constant 0 : index
      %27 = vector.load %arg2[%c0_17, %26, %c0_18, %c0_19] : memref<1x3x32x128xf32, #tpu.memory_space<vmem>>, vector<1x1x32x128xf32>
      %28 = vector.shape_cast %27 : vector<1x1x32x128xf32> to vector<32x128xf32>
      %29 = tpu.concatenate %6, %28, %6 in 1 : vector<32x128xf32>, vector<32x128xf32>, vector<32x128xf32> -> vector<32x384xf32>
      %30 = vector.extract_strided_slice %29 {offsets = [0, 127], sizes = [32, 128], strides = [1, 1]} : vector<32x384xf32> to vector<32x128xf32>
      %31 = vector.extract_strided_slice %29 {offsets = [0, 128], sizes = [32, 128], strides = [1, 1]} : vector<32x384xf32> to vector<32x128xf32>
      %32 = vector.extract_strided_slice %29 {offsets = [0, 129], sizes = [32, 128], strides = [1, 1]} : vector<32x384xf32> to vector<32x128xf32>
      %c2_i32 = arith.constant 2 : i32
      %33 = arith.addi %16, %c2_i32 : i32
      %c0_20 = arith.constant 0 : index
      %34 = arith.index_cast %33 : i32 to index
      %c0_21 = arith.constant 0 : index
      %c0_22 = arith.constant 0 : index
      %35 = vector.load %arg2[%c0_20, %34, %c0_21, %c0_22] : memref<1x3x32x128xf32, #tpu.memory_space<vmem>>, vector<1x1x32x128xf32>
      %36 = vector.shape_cast %35 : vector<1x1x32x128xf32> to vector<32x128xf32>
      %37 = tpu.concatenate %6, %36, %6 in 1 : vector<32x128xf32>, vector<32x128xf32>, vector<32x128xf32> -> vector<32x384xf32>
      %38 = vector.extract_strided_slice %37 {offsets = [0, 127], sizes = [32, 128], strides = [1, 1]} : vector<32x384xf32> to vector<32x128xf32>
      %39 = vector.extract_strided_slice %37 {offsets = [0, 128], sizes = [32, 128], strides = [1, 1]} : vector<32x384xf32> to vector<32x128xf32>
      %40 = vector.extract_strided_slice %37 {offsets = [0, 129], sizes = [32, 128], strides = [1, 1]} : vector<32x384xf32> to vector<32x128xf32>
      %41 = tpu.concatenate %22, %23, %24, %30, %31, %32, %38, %39, %40 in 0 : vector<32x128xf32>, vector<32x128xf32>, vector<32x128xf32>, vector<32x128xf32>, vector<32x128xf32>, vector<32x128xf32>, vector<32x128xf32>, vector<32x128xf32>, vector<32x128xf32> -> vector<288x128xf32>
      %cst_23 = arith.constant dense<0.000000e+00> : vector<32x128xf32>
      %42 = tpu.matmul %1, %41, %cst_23 {dimension_numbers = #tpu.dot_dimension_numbers<[1], [0], [0], [1], [0, 0, 1, 1], [], []>} : vector<32x288xf32>, vector<288x128xf32>, vector<32x128xf32> -> vector<32x128xf32>
      %43 = vector.broadcast %2 : vector<32x1xf32> to vector<32x128xf32>
      %44 = arith.addf %42, %43 : vector<32x128xf32>
      %cst_24 = arith.constant 0.000000e+00 : f32
      %45 = vector.broadcast %cst_24 : f32 to vector<32x128xf32>
      %46 = arith.cmpf ogt, %44, %45 : vector<32x128xf32>
      %cst_25 = arith.constant 1.000000e-01 : f32
      %47 = vector.broadcast %cst_25 : f32 to vector<32x128xf32>
      %48 = arith.mulf %47, %44 : vector<32x128xf32>
      %49 = arith.select %46, %44, %48 : vector<32x128xi1>, vector<32x128xf32>
      %50 = vector.broadcast %12 : i1 to vector<32x128xi1>
      %51 = arith.andi %50, %5 : vector<32x128xi1>
      %cst_26 = arith.constant 0.000000e+00 : f32
      %52 = vector.broadcast %cst_26 : f32 to vector<32x128xf32>
      %53 = arith.select %51, %49, %52 : vector<32x128xi1>, vector<32x128xf32>
      %c0_27 = arith.constant 0 : index
      %54 = arith.index_cast %arg6 : i32 to index
      %c0_28 = arith.constant 0 : index
      %c0_29 = arith.constant 0 : index
      %55 = vector.load %arg5[%c0_27, %54, %c0_28, %c0_29] : memref<1x3x32x128xf32, #tpu.memory_space<vmem>>, vector<1x1x32x128xf32>
      %56 = vector.shape_cast %55 : vector<1x1x32x128xf32> to vector<32x128xf32>
      %57 = vector.shape_cast %53 : vector<32x128xf32> to vector<1x1x32x128xf32>
      tpu.vector_store %arg5[%c0_27, %54, %c0_28, %c0_29], %57 {strides = array<i32>} : memref<1x3x32x128xf32, #tpu.memory_space<vmem>>, vector<1x1x32x128xf32>,
    }
    %c3_i32_4 = arith.constant 3 : i32
    return
  }
  func.func @transform_0(%arg0: i32, %arg1: i32) -> (i32, i32, i32, i32) {
    %c0_i32 = arith.constant 0 : i32
    %c0_i32_0 = arith.constant 0 : i32
    %c0_i32_1 = arith.constant 0 : i32
    %c0_i32_2 = arith.constant 0 : i32
    return %arg0, %c0_i32, %c0_i32_0, %c0_i32_1 : i32, i32, i32, i32
  }
  func.func @transform_1(%arg0: i32, %arg1: i32) -> (i32, i32) {
    %c0_i32 = arith.constant 0 : i32
    %c0_i32_0 = arith.constant 0 : i32
    %c0_i32_1 = arith.constant 0 : i32
    return %c0_i32, %c0_i32_0 : i32, i32
  }
  func.func @transform_2(%arg0: i32, %arg1: i32) -> (i32, i32) {
    %c0_i32 = arith.constant 0 : i32
    %c0_i32_0 = arith.constant 0 : i32
    %c0_i32_1 = arith.constant 0 : i32
    return %c0_i32, %c0_i32_0 : i32, i32
  }
  func.func @transform_3(%arg0: i32, %arg1: i32) -> (i32, i32, i32, i32) {
    %c0_i32 = arith.constant 0 : i32
    %c0_i32_0 = arith.constant 0 : i32
    %c0_i32_1 = arith.constant 0 : i32
    return %arg0, %arg1, %c0_i32, %c0_i32_0 : i32, i32, i32, i32
  }
}

module attributes {stable_mosaic.version = 11 : i64} {
  func.func @_conv_kernel(%arg0: i32, %arg1: i32, %arg2: memref<1x3x32x128xf32, #tpu.memory_space<vmem>>, %arg3: memref<1x288xf32, #tpu.memory_space<vmem>>, %arg4: memref<1x1xf32, #tpu.memory_space<vmem>>, %arg5: memref<1x1x1x128xf32, #tpu.memory_space<vmem>>) attributes {dimension_semantics = [#tpu.dimension_semantics<parallel>, #tpu.dimension_semantics<parallel>], iteration_bounds = array<i64: 2, 1>, scalar_prefetch = 0 : i64, scratch_operands = 0 : i64, tpu.core_type = #tpu.core_type<tc>, window_params = [{transform_indices = @transform_0, window_bounds = array<i64: 1, 3, 32, 128>}, {pipeline_mode = #tpu.pipeline_mode<synchronous>, transform_indices = @transform_1, window_bounds = array<i64: 1, 288>}, {pipeline_mode = #tpu.pipeline_mode<synchronous>, transform_indices = @transform_2, window_bounds = array<i64: 1, 1>}, {transform_indices = @transform_3, window_bounds = array<i64: 1, 1, 1, 128>}]} {
    %c1_i32 = arith.constant 1 : i32
    %0 = arith.muli %arg1, %c1_i32 : i32
    %c0 = arith.constant 0 : index
    %c0_0 = arith.constant 0 : index
    %1 = vector.load %arg3[%c0, %c0_0] : memref<1x288xf32, #tpu.memory_space<vmem>>, vector<1x288xf32>
    %c0_1 = arith.constant 0 : index
    %c0_2 = arith.constant 0 : index
    %2 = vector.load %arg4[%c0_1, %c0_2] : memref<1x1xf32, #tpu.memory_space<vmem>>, vector<1x1xf32>
    %3 = tpu.iota {dimensions = array<i32: 1>} : vector<1x128xi32>
    %c17_i32 = arith.constant 17 : i32
    %4 = vector.broadcast %c17_i32 : i32 to vector<1x128xi32>
    %5 = arith.cmpi slt, %3, %4 : vector<1x128xi32>
    %cst = arith.constant 0.000000e+00 : f32
    %6 = vector.broadcast %cst : f32 to vector<32x128xf32>
    %c0_i32 = arith.constant 0 : i32
    %7 = arith.addi %0, %c0_i32 : i32
    %c0_i32_3 = arith.constant 0 : i32
    %8 = arith.subi %7, %c0_i32_3 : i32
    %c0_i32_4 = arith.constant 0 : i32
    %9 = arith.cmpi sge, %8, %c0_i32_4 : i32
    %c1_i32_5 = arith.constant 1 : i32
    %10 = arith.cmpi slt, %8, %c1_i32_5 : i32
    %11 = arith.andi %9, %10 : i1
    %c1_i32_6 = arith.constant 1 : i32
    %12 = arith.muli %8, %c1_i32_6 : i32
    %c0_i32_7 = arith.constant 0 : i32
    %13 = arith.addi %c0_i32_7, %12 : i32
    %c0_i32_8 = arith.constant 0 : i32
    %c0_i32_9 = arith.constant 0 : i32
    %14 = arith.maxsi %c0_i32_8, %13 : i32
    %15 = arith.minsi %c0_i32_9, %14 : i32
    %c0_i32_10 = arith.constant 0 : i32
    %16 = arith.addi %15, %c0_i32_10 : i32
    %c0_11 = arith.constant 0 : index
    %17 = arith.index_cast %16 : i32 to index
    %c0_12 = arith.constant 0 : index
    %c0_13 = arith.constant 0 : index
    %18 = vector.load %arg2[%c0_11, %17, %c0_12, %c0_13] : memref<1x3x32x128xf32, #tpu.memory_space<vmem>>, vector<1x1x32x128xf32>
    %19 = vector.shape_cast %18 : vector<1x1x32x128xf32> to vector<32x128xf32>
    %20 = tpu.concatenate %6, %19, %6 in 1 : vector<32x128xf32>, vector<32x128xf32>, vector<32x128xf32> -> vector<32x384xf32>
    %21 = vector.extract_strided_slice %20 {offsets = [0, 127], sizes = [32, 128], strides = [1, 1]} : vector<32x384xf32> to vector<32x128xf32>
    %22 = vector.extract_strided_slice %20 {offsets = [0, 128], sizes = [32, 128], strides = [1, 1]} : vector<32x384xf32> to vector<32x128xf32>
    %23 = vector.extract_strided_slice %20 {offsets = [0, 129], sizes = [32, 128], strides = [1, 1]} : vector<32x384xf32> to vector<32x128xf32>
    %c1_i32_14 = arith.constant 1 : i32
    %24 = arith.addi %15, %c1_i32_14 : i32
    %c0_15 = arith.constant 0 : index
    %25 = arith.index_cast %24 : i32 to index
    %c0_16 = arith.constant 0 : index
    %c0_17 = arith.constant 0 : index
    %26 = vector.load %arg2[%c0_15, %25, %c0_16, %c0_17] : memref<1x3x32x128xf32, #tpu.memory_space<vmem>>, vector<1x1x32x128xf32>
    %27 = vector.shape_cast %26 : vector<1x1x32x128xf32> to vector<32x128xf32>
    %28 = tpu.concatenate %6, %27, %6 in 1 : vector<32x128xf32>, vector<32x128xf32>, vector<32x128xf32> -> vector<32x384xf32>
    %29 = vector.extract_strided_slice %28 {offsets = [0, 127], sizes = [32, 128], strides = [1, 1]} : vector<32x384xf32> to vector<32x128xf32>
    %30 = vector.extract_strided_slice %28 {offsets = [0, 128], sizes = [32, 128], strides = [1, 1]} : vector<32x384xf32> to vector<32x128xf32>
    %31 = vector.extract_strided_slice %28 {offsets = [0, 129], sizes = [32, 128], strides = [1, 1]} : vector<32x384xf32> to vector<32x128xf32>
    %c2_i32 = arith.constant 2 : i32
    %32 = arith.addi %15, %c2_i32 : i32
    %c0_18 = arith.constant 0 : index
    %33 = arith.index_cast %32 : i32 to index
    %c0_19 = arith.constant 0 : index
    %c0_20 = arith.constant 0 : index
    %34 = vector.load %arg2[%c0_18, %33, %c0_19, %c0_20] : memref<1x3x32x128xf32, #tpu.memory_space<vmem>>, vector<1x1x32x128xf32>
    %35 = vector.shape_cast %34 : vector<1x1x32x128xf32> to vector<32x128xf32>
    %36 = tpu.concatenate %6, %35, %6 in 1 : vector<32x128xf32>, vector<32x128xf32>, vector<32x128xf32> -> vector<32x384xf32>
    %37 = vector.extract_strided_slice %36 {offsets = [0, 127], sizes = [32, 128], strides = [1, 1]} : vector<32x384xf32> to vector<32x128xf32>
    %38 = vector.extract_strided_slice %36 {offsets = [0, 128], sizes = [32, 128], strides = [1, 1]} : vector<32x384xf32> to vector<32x128xf32>
    %39 = vector.extract_strided_slice %36 {offsets = [0, 129], sizes = [32, 128], strides = [1, 1]} : vector<32x384xf32> to vector<32x128xf32>
    %40 = tpu.concatenate %21, %22, %23, %29, %30, %31, %37, %38, %39 in 0 : vector<32x128xf32>, vector<32x128xf32>, vector<32x128xf32>, vector<32x128xf32>, vector<32x128xf32>, vector<32x128xf32>, vector<32x128xf32>, vector<32x128xf32>, vector<32x128xf32> -> vector<288x128xf32>
    %cst_21 = arith.constant dense<0.000000e+00> : vector<1x128xf32>
    %41 = tpu.matmul %1, %40, %cst_21 {dimension_numbers = #tpu.dot_dimension_numbers<[1], [0], [0], [1], [0, 0, 1, 1], [], []>} : vector<1x288xf32>, vector<288x128xf32>, vector<1x128xf32> -> vector<1x128xf32>
    %42 = vector.broadcast %2 : vector<1x1xf32> to vector<1x128xf32>
    %43 = arith.addf %41, %42 : vector<1x128xf32>
    %44 = vector.broadcast %11 : i1 to vector<1x128xi1>
    %45 = arith.andi %44, %5 : vector<1x128xi1>
    %cst_22 = arith.constant 0.000000e+00 : f32
    %46 = vector.broadcast %cst_22 : f32 to vector<1x128xf32>
    %47 = arith.select %45, %43, %46 : vector<1x128xi1>, vector<1x128xf32>
    %c0_23 = arith.constant 0 : index
    %48 = arith.index_cast %c0_i32 : i32 to index
    %c0_24 = arith.constant 0 : index
    %c0_25 = arith.constant 0 : index
    %49 = vector.load %arg5[%c0_23, %48, %c0_24, %c0_25] : memref<1x1x1x128xf32, #tpu.memory_space<vmem>>, vector<1x1x1x128xf32>
    %50 = vector.shape_cast %49 : vector<1x1x1x128xf32> to vector<1x128xf32>
    %51 = vector.shape_cast %47 : vector<1x128xf32> to vector<1x1x1x128xf32>
    tpu.vector_store %arg5[%c0_23, %48, %c0_24, %c0_25], %51 {strides = array<i32>} : memref<1x1x1x128xf32, #tpu.memory_space<vmem>>, vector<1x1x1x128xf32>,
    %c1_i32_26 = arith.constant 1 : i32
    return
  }
  func.func @transform_0(%arg0: i32, %arg1: i32) -> (i32, i32, i32, i32) {
    %c0_i32 = arith.constant 0 : i32
    %c0_i32_0 = arith.constant 0 : i32
    %c0_i32_1 = arith.constant 0 : i32
    %c0_i32_2 = arith.constant 0 : i32
    return %arg0, %c0_i32, %c0_i32_0, %c0_i32_1 : i32, i32, i32, i32
  }
  func.func @transform_1(%arg0: i32, %arg1: i32) -> (i32, i32) {
    %c0_i32 = arith.constant 0 : i32
    %c0_i32_0 = arith.constant 0 : i32
    %c0_i32_1 = arith.constant 0 : i32
    return %c0_i32, %c0_i32_0 : i32, i32
  }
  func.func @transform_2(%arg0: i32, %arg1: i32) -> (i32, i32) {
    %c0_i32 = arith.constant 0 : i32
    %c0_i32_0 = arith.constant 0 : i32
    %c0_i32_1 = arith.constant 0 : i32
    return %c0_i32, %c0_i32_0 : i32, i32
  }
  func.func @transform_3(%arg0: i32, %arg1: i32) -> (i32, i32, i32, i32) {
    %c0_i32 = arith.constant 0 : i32
    %c0_i32_0 = arith.constant 0 : i32
    %c0_i32_1 = arith.constant 0 : i32
    return %arg0, %arg1, %c0_i32, %c0_i32_0 : i32, i32, i32, i32
  }
}

</mosaic_0001>

<llo_original>
// kernel: discriminator_r_forward.7
$region0: #{discriminator_r_forward.7}
  #allocation0 [shape = 'u32[]', space=smem, size = 0x4, offset = 0x4, fixed_abs, tag = 'smem constant byte address 0x4 - core index']
  #allocation1 [shape = 'u32[72,128]{1,0:T(1,128)}', space=vmem, size = 0x9000, scoped, tag = 'internal scratch']
  %s0 = inlined_call_operand.vmem [shape: f32[2,18,12], index: 0, kind: input, shape index: {}]
  %s1 = inlined_call_operand.vmem [shape: f32[1,3,12,256], index: 1, kind: input, shape index: {}]
  %s2 = inlined_call_operand.vmem [shape: f32[2,16,128], index: 2, kind: output, shape index: {}]
  %s3 = sld [smem:[#allocation0]]
  $region41: #{discriminator_r_forward.7} parent=0
    _
  %s5 = ssub.s32 1, %s3
  %s6 = scalar_select 0, %s5, %s3
  loop: start=0, step=1, limit=4
  $region2: #{discriminator_r_forward.7} parent=0 // loop_pre_header
    _
  $region3: #{discriminator_r_forward.7} parent=0 // loop_header
    %s8 = sphi 0, %s12
    %p9 = scmp.ge.s32.totalorder %s8, 4
    %s15 = sphi 0, %s34
    %s16 = sphi 0, %s30
    %s17 = sphi 0, %s26
    %s18 = sphi 0, %s15
    %s19 = sphi 0, %s16
    %s20 = sphi 0, %s17
    %s21 = sphi 0, %s18
    %s22 = sphi 0, %s19
    %s23 = sphi 0, %s20
    %s37 = sphi 0, %s39
    %s40 = sphi 0, %s37
    %s41 = sphi 0, %s40
    %s57 = sphi 0, %s41
    %s63 = sphi 0, %s65
    %s66 = sphi 0, %s63
    %s67 = sphi 0, %s66
    %s83 = sphi 0, %s67
    %s93 = sphi 0, %s95
    %s96 = sphi 0, %s93
    %s97 = sphi 0, %s96
    %s113 = sphi 0, %s97
  $region4: #{discriminator_r_forward.7} parent=0 // loop_header_branch
    %11 = sbr.rel (%p9) target = $region8
  $region5: #{discriminator_r_forward.7} parent=0 // loop_body
    %s13 = ssub.s32 %s8, 1
    %s14 = ssub.s32 %s8, 2
    %s24 = sadd.s32 1, %s17
    %p25 = scmp.ge.s32.totalorder %s24, 1
    %s26 = scalar_select %p25, 0, %s24
    %s27 = sadd.s32 1, %s16
    %s28 = scalar_select %p25, %s27, %s16
    %p29 = scmp.ge.s32.totalorder %s28, 1
    %s30 = scalar_select %p29, 0, %s28
    %s31 = sadd.s32 1, %s15
    %s32 = scalar_select %p29, %s31, %s15
    %p33 = scmp.ge.s32.totalorder %s32, 2
    %s34 = scalar_select %p33, 0, %s32
    %s35 = ssub.s32 %s15, %s34
    %p36 = scmp.eq.s32.totalorder %s35, 0
    %s38 = sadd.s32 %s37, 1
    %s39 = scalar_select %p36, %s37, %s38
    %p42 = pneg %p36
    %p43 = scmp.eq.s32.totalorder %s8, 1
    %p44 = por %p42, %p43
    %p45 = scmp.ne.s32.totalorder %s37, %s40
    %p46 = scmp.eq.s32.totalorder %s8, 0
    %p47 = por %p45, %p46
    %p48 = scmp.ne.s32.totalorder %s37, %s40
    %p49 = scmp.eq.s32.totalorder %s13, 1
    %p50 = por %p48, %p49
    %p51 = scmp.ne.s32.totalorder %s40, %s41
    %p52 = scmp.eq.s32.totalorder %s13, 0
    %p53 = por %p51, %p52
    %p54 = scmp.ne.s32.totalorder %s40, %s41
    %p55 = scmp.eq.s32.totalorder %s14, 1
    %p56 = por %p54, %p55
    %p58 = scmp.ne.s32.totalorder %s41, %s57
    %p59 = scmp.eq.s32.totalorder %s14, 0
    %p60 = por %p58, %p59
    %s61 = ssub.s32 %s17, %s26
    %p62 = scmp.eq.s32.totalorder %s61, 0
    %s64 = sadd.s32 %s63, 1
    %s65 = scalar_select %p62, %s63, %s64
    %p68 = pneg %p62
    %p69 = scmp.eq.s32.totalorder %s8, 1
    %p70 = por %p68, %p69
    %p71 = scmp.ne.s32.totalorder %s63, %s66
    %p72 = scmp.eq.s32.totalorder %s8, 0
    %p73 = por %p71, %p72
    %p74 = scmp.ne.s32.totalorder %s63, %s66
    %p75 = scmp.eq.s32.totalorder %s13, 1
    %p76 = por %p74, %p75
    %p77 = scmp.ne.s32.totalorder %s66, %s67
    %p78 = scmp.eq.s32.totalorder %s13, 0
    %p79 = por %p77, %p78
    %p80 = scmp.ne.s32.totalorder %s66, %s67
    %p81 = scmp.eq.s32.totalorder %s14, 1
    %p82 = por %p80, %p81
    %p84 = scmp.ne.s32.totalorder %s67, %s83
    %p85 = scmp.eq.s32.totalorder %s14, 0
    %p86 = por %p84, %p85
    %s87 = ssub.s32 %s15, %s34
    %s88 = ssub.s32 %s16, %s30
    %s89 = sor.u32 %s87, %s88
    %s90 = ssub.s32 %s17, %s26
    %s91 = sor.u32 %s89, %s90
    %p92 = scmp.eq.s32.totalorder %s91, 0
    %s94 = sadd.s32 %s93, 1
    %s95 = scalar_select %p92, %s93, %s94
    %p98 = pneg %p92
    %p99 = scmp.eq.s32.totalorder %s8, 1
    %p100 = por %p98, %p99
    %p101 = scmp.ne.s32.totalorder %s93, %s96
    %p102 = scmp.eq.s32.totalorder %s8, 0
    %p103 = por %p101, %p102
    %p104 = scmp.ne.s32.totalorder %s93, %s96
    %p105 = scmp.eq.s32.totalorder %s13, 1
    %p106 = por %p104, %p105
    %p107 = scmp.ne.s32.totalorder %s96, %s97
    %p108 = scmp.eq.s32.totalorder %s13, 0
    %p109 = por %p107, %p108
    %p110 = scmp.ne.s32.totalorder %s96, %s97
    %p111 = scmp.eq.s32.totalorder %s14, 1
    %p112 = por %p110, %p111
    %p114 = scmp.ne.s32.totalorder %s97, %s113
    %p115 = scmp.eq.s32.totalorder %s14, 0
    %p116 = por %p114, %p115
    %p117 = scmp.le.s32.totalorder 1, %s8
    %p118 = scmp.lt.s32.totalorder %s8, 3
    %p119 = pnand %p117, %p118
    %p120 = pneg %p119
    // Predicated region
    $region9: #{discriminator_r_forward.7} parent=5 // pred_check
      _
    $region10: #{discriminator_r_forward.7} parent=5 // pred_check_branch
      %122 = sbr.rel (%p119) target = $region12
    $region11: #{discriminator_r_forward.7} parent=5 // pred_region
      %s123 = ssub.s32 %s8, 1
      // Predicated region
      $region13: #{discriminator_r_forward.7} parent=11 // pred_check
        %p124 = pneg %p79
      $region14: #{discriminator_r_forward.7} parent=11 // pred_check_branch
        %126 = sbr.rel (%p124) target = $region16
      $region15: #{discriminator_r_forward.7} parent=11 // pred_region
        %p127 = scmp.lt.s32.totalorder %s20, 0
        %s128 = scalar_select %p127, %s20, 0
        %s129 = smul.addr %s128, 12
        %s130 = smul.addr %s129, 8
        %s131 = scalar_lea.vmem %s1, %s130
      $region16: #{discriminator_r_forward.7} parent=11 // pred_fallthru
        _
    $region12: #{discriminator_r_forward.7} parent=5 // pred_fallthru
      _
    %p132 = scmp.lt.s32.totalorder %s8, 2
    // Predicated region
    $region17: #{discriminator_r_forward.7} parent=5 // pred_check
      %p133 = pneg %p132
    $region18: #{discriminator_r_forward.7} parent=5 // pred_check_branch
      %135 = sbr.rel (%p133) target = $region20
    $region19: #{discriminator_r_forward.7} parent=5 // pred_region
      // Predicated region
      $region21: #{discriminator_r_forward.7} parent=19 // pred_check
        %p136 = pneg %p47
      $region22: #{discriminator_r_forward.7} parent=19 // pred_check_branch
        %138 = sbr.rel (%p136) target = $region24
      $region23: #{discriminator_r_forward.7} parent=19 // pred_region
        %p139 = scmp.lt.s32.totalorder %s15, 1
        %s140 = scalar_select %p139, %s15, 1
        %s141 = smul.addr %s140, 3
        %s142 = smul.addr %s141, 8
        %s143 = scalar_lea.vmem %s0, %s142
      $region24: #{discriminator_r_forward.7} parent=19 // pred_fallthru
        _
    $region20: #{discriminator_r_forward.7} parent=5 // pred_fallthru
      _
    %p144 = scmp.le.s32.totalorder 1, %s8
    %p145 = scmp.lt.s32.totalorder %s8, 3
    %p146 = pnand %p144, %p145
    %p147 = pneg %p146
    // Predicated region
    $region25: #{discriminator_r_forward.7} parent=5 // pred_check
      _
    $region26: #{discriminator_r_forward.7} parent=5 // pred_check_branch
      %149 = sbr.rel (%p146) target = $region28
    $region27: #{discriminator_r_forward.7} parent=5 // pred_region
      %s150 = ssub.s32 %s8, 1
      %p151 = scmp.lt.s32.totalorder %s18, 1
      %s152 = scalar_select %p151, %s18, 1
      %s153 = smul.addr %s152, 3
      %s154 = smul.addr %s153, 8
      %s155 = scalar_lea.vmem %s0, %s154
      %p156 = pneg %p53
      %p157 = pneg %p50
      %p158 = scmp.lt.s32.totalorder %s20, 0
      %s159 = scalar_select %p158, %s20, 0
      %s160 = smul.addr %s159, 12
      %s161 = smul.addr %s160, 8
      %s162 = scalar_lea.vmem %s1, %s161
      %p163 = pneg %p79
      %p164 = pneg %p76
      %p165 = pneg %p109
      %p166 = pneg %p106
      %s167 = smul.u32 2, %s19
      %p168 = scmp.lt.s32.totalorder %s18, 1
      %s169 = scalar_select %p168, %s18, 1
      %p170 = scmp.lt.s32.totalorder %s167, 1
      %s171 = scalar_select %p170, %s167, 1
      %p172 = scmp.lt.s32.totalorder %s20, 0
      %s173 = scalar_select %p172, %s20, 0
      %s174 = sadd.s32 %s173, %s171
      %s175 = smul.addr %s169, 2
      %s176 = sadd.s32 %s174, %s175
      %s177 = smul.addr %s176, 8
      %s178 = scalar_lea.vmem %s2, %s177
      %p179 = scmp.lt.s32.totalorder %s18, 1
      %s180 = scalar_select %p179, %s18, 1
      %s181 = smul.addr %s180, 3
      %s182 = smul.addr %s181, 8
      %s183 = scalar_lea.vmem %s0, %s182
      %p184 = scmp.lt.s32.totalorder %s20, 0
      %s185 = scalar_select %p184, %s20, 0
      %s186 = smul.addr %s185, 12
      %s187 = smul.addr %s186, 8
      %s188 = scalar_lea.vmem %s1, %s187
      %s189 = smul.u32 2, %s19
      %p190 = scmp.lt.s32.totalorder %s18, 1
      %s191 = scalar_select %p190, %s18, 1
      %p192 = scmp.lt.s32.totalorder %s189, 1
      %s193 = scalar_select %p192, %s189, 1
      %p194 = scmp.lt.s32.totalorder %s20, 0
      %s195 = scalar_select %p194, %s20, 0
      %s196 = sadd.s32 %s195, %s193
      %s197 = smul.addr %s191, 2
      %s198 = sadd.s32 %s196, %s197
      %s199 = smul.addr %s198, 8
      %s200 = scalar_lea.vmem %s2, %s199
      %s201 = smul.u32 2, %s19
      %s202 = smul.u32 %s19, 16
      %s203 = scalar_lea.vmem %s183, %s202
      %v204 = vld [vmem:[%s203] sm:$0xff]
      %v205 = vld [vmem:[%s203 + $0x8] sm:$0xff]
      %v206 = vld [vmem:[%s188] sm:$0xff]
      %v207 = vld [vmem:[%s188 + $0x8] sm:$0xff]
      %v208 = vld [vmem:[%s188 + $0x10] sm:$0xf]
      %v209 = vld [vmem:[%s188 + $0x18] sm:$0xf]
      %s210 = sadd.s32 %s202, 1
      %s211 = scalar_lea.vmem %s183, %s210
      %v212 = vld [vmem:[%s211] sm:$0xff]
      %v213 = vld [vmem:[%s211 + $0x8] sm:$0xff]
      %s214 = scalar_lea.vmem %s188, 32
      %v215 = vld [vmem:[%s214] sm:$0xff]
      %v216 = vld [vmem:[%s214 + $0x8] sm:$0xff]
      %v217 = vld [vmem:[%s214 + $0x10] sm:$0xf]
      %v218 = vld [vmem:[%s214 + $0x18] sm:$0xf]
      %vm219 = vcmask 97280
      %v221 = vsel %vm219, %v212, 0
      %v224 = vsel %vm219, %v213, 0
      %vm226 = vcmask 1043456
      %v228 = vsel %vm226, %v217, 0
      %v231 = vsel %vm226, %v218, 0
      %233 = vmatpush.msra.mxu0 0.0
      %234 = vmatpush.msra.mxu0 0.0
      %235 = vmatpush.msra.mxu0 0.0
      %236 = vmatpush.msra.mxu0 0.0
      %237 = vmatpush.msra.mxu0 0.0
      %238 = vmatpush.msra.mxu0 0.0
      %239 = vmatpush.msra.mxu0 0.0
      %240 = vmatpush.msra.mxu0 0.0
      %241 = vmatpush.msra.mxu0 0.0
      %242 = vmatpush.msra.mxu0 0.0
      %243 = vmatpush.msra.mxu0 0.0
      %244 = vmatpush.msra.mxu0 0.0
      %245 = vmatpush.msra.mxu0 0.0
      %246 = vmatpush.msra.mxu0 0.0
      %247 = vmatpush.msra.mxu0 %v228
      %248 = vmatpush.msra.mxu0 %v215
      %249 = vmatmul.f32.gmra.mxu0 %v221
      %v250 = vpop.f32.mrf.mxu0
      %v251 = vadd.f32 0.0, %v250
      %252 = vmatmul.f32.gmra.mxu0 %v224
      %v253 = vpop.f32.mrf.mxu0
      %v254 = vadd.f32 0.0, %v253
      %255 = vdwg.mxu0
      %256 = vmatpush.msra.mxu0 0.0
      %257 = vmatpush.msra.mxu0 0.0
      %258 = vmatpush.msra.mxu0 0.0
      %259 = vmatpush.msra.mxu0 0.0
      %260 = vmatpush.msra.mxu0 0.0
      %261 = vmatpush.msra.mxu0 0.0
      %262 = vmatpush.msra.mxu0 0.0
      %263 = vmatpush.msra.mxu0 0.0
      %264 = vmatpush.msra.mxu0 0.0
      %265 = vmatpush.msra.mxu0 0.0
      %266 = vmatpush.msra.mxu0 0.0
      %267 = vmatpush.msra.mxu0 0.0
      %268 = vmatpush.msra.mxu0 0.0
      %269 = vmatpush.msra.mxu0 0.0
      %270 = vmatpush.msra.mxu0 %v231
      %271 = vmatpush.msra.mxu0 %v216
      %272 = vmatmul.f32.gmra.mxu0 %v221
      %v273 = vpop.f32.mrf.mxu0
      %v274 = vadd.f32 0.0, %v273
      %275 = vmatmul.f32.gmra.mxu0 %v224
      %v276 = vpop.f32.mrf.mxu0
      %v277 = vadd.f32 0.0, %v276
      %278 = vdwg.mxu0
      %v280 = vsel %vm219, %v204, 0
      %v283 = vsel %vm219, %v205, 0
      %v286 = vsel %vm226, %v208, 0
      %v289 = vsel %vm226, %v209, 0
      %291 = vmatpush.msra.mxu0 0.0
      %292 = vmatpush.msra.mxu0 0.0
      %293 = vmatpush.msra.mxu0 0.0
      %294 = vmatpush.msra.mxu0 0.0
      %295 = vmatpush.msra.mxu0 0.0
      %296 = vmatpush.msra.mxu0 0.0
      %297 = vmatpush.msra.mxu0 0.0
      %298 = vmatpush.msra.mxu0 0.0
      %299 = vmatpush.msra.mxu0 0.0
      %300 = vmatpush.msra.mxu0 0.0
      %301 = vmatpush.msra.mxu0 0.0
      %302 = vmatpush.msra.mxu0 0.0
      %303 = vmatpush.msra.mxu0 0.0
      %304 = vmatpush.msra.mxu0 0.0
      %305 = vmatpush.msra.mxu0 %v286
      %306 = vmatpush.msra.mxu0 %v206
      %307 = vmatmul.f32.gmra.mxu0 %v280
      %v308 = vpop.f32.mrf.mxu0
      %v309 = vadd.f32 %v251, %v308
      %310 = vmatmul.f32.gmra.mxu0 %v283
      %v311 = vpop.f32.mrf.mxu0
      %v312 = vadd.f32 %v254, %v311
      %313 = vdwg.mxu0
      %314 = vmatpush.msra.mxu0 0.0
      %315 = vmatpush.msra.mxu0 0.0
      %316 = vmatpush.msra.mxu0 0.0
      %317 = vmatpush.msra.mxu0 0.0
      %318 = vmatpush.msra.mxu0 0.0
      %319 = vmatpush.msra.mxu0 0.0
      %320 = vmatpush.msra.mxu0 0.0
      %321 = vmatpush.msra.mxu0 0.0
      %322 = vmatpush.msra.mxu0 0.0
      %323 = vmatpush.msra.mxu0 0.0
      %324 = vmatpush.msra.mxu0 0.0
      %325 = vmatpush.msra.mxu0 0.0
      %326 = vmatpush.msra.mxu0 0.0
      %327 = vmatpush.msra.mxu0 0.0
      %328 = vmatpush.msra.mxu0 %v289
      %329 = vmatpush.msra.mxu0 %v207
      %330 = vmatmul.f32.gmra.mxu0 %v280
      %v331 = vpop.f32.mrf.mxu0
      %v332 = vadd.f32 %v274, %v331
      %333 = vmatmul.f32.gmra.mxu0 %v283
      %v334 = vpop.f32.mrf.mxu0
      %v335 = vadd.f32 %v277, %v334
      %336 = vdwg.mxu0
      %s337 = sadd.s32 %s202, 2
      %s338 = scalar_lea.vmem %s183, %s337
      %v339 = vld [vmem:[%s338] sm:$0xff]
      %v340 = vld [vmem:[%s338 + $0x8] sm:$0xff]
      %s341 = scalar_lea.vmem %s188, 64
      %v342 = vld [vmem:[%s341] sm:$0xff]
      %v343 = vld [vmem:[%s341 + $0x8] sm:$0xff]
      %v344 = vld [vmem:[%s341 + $0x10] sm:$0xf]
      %v345 = vld [vmem:[%s341 + $0x18] sm:$0xf]
      %v347 = vsel %vm219, %v339, 0
      %v350 = vsel %vm219, %v340, 0
      %v353 = vsel %vm226, %v344, 0
      %v356 = vsel %vm226, %v345, 0
      %358 = vmatpush.msra.mxu0 0.0
      %359 = vmatpush.msra.mxu0 0.0
      %360 = vmatpush.msra.mxu0 0.0
      %361 = vmatpush.msra.mxu0 0.0
      %362 = vmatpush.msra.mxu0 0.0
      %363 = vmatpush.msra.mxu0 0.0
      %364 = vmatpush.msra.mxu0 0.0
      %365 = vmatpush.msra.mxu0 0.0
      %366 = vmatpush.msra.mxu0 0.0
      %367 = vmatpush.msra.mxu0 0.0
      %368 = vmatpush.msra.mxu0 0.0
      %369 = vmatpush.msra.mxu0 0.0
      %370 = vmatpush.msra.mxu0 0.0
      %371 = vmatpush.msra.mxu0 0.0
      %372 = vmatpush.msra.mxu0 %v353
      %373 = vmatpush.msra.mxu0 %v342
      %374 = vmatmul.f32.gmra.mxu0 %v347
      %v375 = vpop.f32.mrf.mxu0
      %v376 = vadd.f32 0.0, %v375
      %377 = vmatmul.f32.gmra.mxu0 %v350
      %v378 = vpop.f32.mrf.mxu0
      %v379 = vadd.f32 0.0, %v378
      %380 = vdwg.mxu0
      %381 = vmatpush.msra.mxu0 0.0
      %382 = vmatpush.msra.mxu0 0.0
      %383 = vmatpush.msra.mxu0 0.0
      %384 = vmatpush.msra.mxu0 0.0
      %385 = vmatpush.msra.mxu0 0.0
      %386 = vmatpush.msra.mxu0 0.0
      %387 = vmatpush.msra.mxu0 0.0
      %388 = vmatpush.msra.mxu0 0.0
      %389 = vmatpush.msra.mxu0 0.0
      %390 = vmatpush.msra.mxu0 0.0
      %391 = vmatpush.msra.mxu0 0.0
      %392 = vmatpush.msra.mxu0 0.0
      %393 = vmatpush.msra.mxu0 0.0
      %394 = vmatpush.msra.mxu0 0.0
      %395 = vmatpush.msra.mxu0 %v356
      %396 = vmatpush.msra.mxu0 %v343
      %397 = vmatmul.f32.gmra.mxu0 %v347
      %v398 = vpop.f32.mrf.mxu0
      %v399 = vadd.f32 0.0, %v398
      %400 = vmatmul.f32.gmra.mxu0 %v350
      %v401 = vpop.f32.mrf.mxu0
      %v402 = vadd.f32 0.0, %v401
      %403 = vdwg.mxu0
      %v404 = vadd.f32 %v309, %v376
      %v405 = vadd.f32 %v332, %v399
      %v406 = vadd.f32 %v312, %v379
      %v407 = vadd.f32 %v335, %v402
      %v408 = vmul.f32 %v404, %v404
      %v409 = vmul.f32 %v406, %v406
      %v410 = vmul.f32 %v405, %v405
      %v411 = vmul.f32 %v407, %v407
      %v412 = vadd.f32 %v408, %v410
      %v413 = vadd.f32 %v409, %v411
      %v414 = vrsqrt.pop %v412
      %v415 = vmul.f32 %v414, %v412
      %v416 = vmul.f32 %v415, %v414
      %v417 = vmul.f32 0.5, %v416
      %v418 = vsub.f32 1.5, %v417
      %v419 = vmul.f32 %v414, %v418
      %v420 = vmul.f32 %v412, %v419
      %vm421 = vcmp.eq.f32.partialorder %v412, inf
      %v422 = vsel %vm421, %v412, %v420
      %vm423 = vcmp.eq.f32.partialorder %v412, 0.0
      %v424 = vand.u32 %v412, 2147483648
      %v425 = vsel %vm423, %v424, %v422
      %v426 = vrsqrt.pop %v413
      %v427 = vmul.f32 %v426, %v413
      %v428 = vmul.f32 %v427, %v426
      %v429 = vmul.f32 0.5, %v428
      %v430 = vsub.f32 1.5, %v429
      %v431 = vmul.f32 %v426, %v430
      %v432 = vmul.f32 %v413, %v431
      %vm433 = vcmp.eq.f32.partialorder %v413, inf
      %v434 = vsel %vm433, %v413, %v432
      %vm435 = vcmp.eq.f32.partialorder %v413, 0.0
      %v436 = vand.u32 %v413, 2147483648
      %v437 = vsel %vm435, %v436, %v434
      %v438 = vlaneseq
      %v439 = vshrl.u32 %v438, 7
      %v440 = vadd.s32 %v439, 8
      %v441 = vstv %s202
      %v442 = vadd.s32 %v441, %v439
      %v443 = vadd.s32 %v441, %v440
      %vm444 = vcmp.ge.s32.totalorder %v442, 4
      %vm445 = vcmp.ge.s32.totalorder %v443, 4
      %vm446 = vcmp.lt.s32.totalorder %v442, 12
      %vm447 = vcmp.lt.s32.totalorder %v443, 12
      %vm448 = vmand %vm444, %vm446
      %vm449 = vmand %vm445, %vm447
      %v450 = vsel %vm448, %v425, 0.0
      %v451 = vsel %vm449, %v437, 0.0
      %452 = vst [vmem:[%s200] sm:$0xff] %v450
      %453 = vst [vmem:[%s200 + $0x8] sm:$0xff] %v451
      %s454 = smul.u32 2, %s19
      %p455 = scmp.lt.s32.totalorder %s18, 1
      %s456 = scalar_select %p455, %s18, 1
      %p457 = scmp.lt.s32.totalorder %s454, 1
      %s458 = scalar_select %p457, %s454, 1
      %p459 = scmp.lt.s32.totalorder %s20, 0
      %s460 = scalar_select %p459, %s20, 0
      %s461 = sadd.s32 %s460, %s458
      %s462 = smul.addr %s456, 2
      %s463 = sadd.s32 %s461, %s462
      %s464 = smul.addr %s463, 8
      %s465 = scalar_lea.vmem %s2, %s464
      // Predicated region
      $region29: #{discriminator_r_forward.7} parent=27 // pred_check
        %p466 = pneg %p106
      $region30: #{discriminator_r_forward.7} parent=27 // pred_check_branch
        %468 = sbr.rel (%p466) target = $region32
      $region31: #{discriminator_r_forward.7} parent=27 // pred_region
        %s469 = smul.u32 2, %s19
      $region32: #{discriminator_r_forward.7} parent=27 // pred_fallthru
        _
    $region28: #{discriminator_r_forward.7} parent=5 // pred_fallthru
      _
    %p470 = scmp.le.s32.totalorder 2, %s8
    // Predicated region
    $region33: #{discriminator_r_forward.7} parent=5 // pred_check
      %p471 = pneg %p470
    $region34: #{discriminator_r_forward.7} parent=5 // pred_check_branch
      %473 = sbr.rel (%p471) target = $region36
    $region35: #{discriminator_r_forward.7} parent=5 // pred_region
      %s474 = ssub.s32 %s8, 2
      // Predicated region
      $region37: #{discriminator_r_forward.7} parent=35 // pred_check
        %p475 = pneg %p112
      $region38: #{discriminator_r_forward.7} parent=35 // pred_check_branch
        %477 = sbr.rel (%p475) target = $region40
      $region39: #{discriminator_r_forward.7} parent=35 // pred_region
        %s478 = smul.u32 2, %s22
        %p479 = scmp.lt.s32.totalorder %s21, 1
        %s480 = scalar_select %p479, %s21, 1
        %p481 = scmp.lt.s32.totalorder %s478, 1
        %s482 = scalar_select %p481, %s478, 1
        %p483 = scmp.lt.s32.totalorder %s23, 0
        %s484 = scalar_select %p483, %s23, 0
        %s485 = sadd.s32 %s484, %s482
        %s486 = smul.addr %s480, 2
        %s487 = sadd.s32 %s485, %s486
        %s488 = smul.addr %s487, 8
        %s489 = scalar_lea.vmem %s2, %s488
      $region40: #{discriminator_r_forward.7} parent=35 // pred_fallthru
        _
    $region36: #{discriminator_r_forward.7} parent=5 // pred_fallthru
      _
  $region6: #{discriminator_r_forward.7} parent=0 // loop_footer
    %s12 = sadd.s32 1, %s8
  $region7: #{discriminator_r_forward.7} parent=0 // loop_footer_branch
    %7 = sbr.rel target = $region3
  $region8: #{discriminator_r_forward.7} parent=0 // loop_exit
    _

// kernel: discriminator_r_forward.8
$region0: #{discriminator_r_forward.8}
  #allocation0 [shape = 'u32[]', space=smem, size = 0x4, offset = 0x4, fixed_abs, tag = 'smem constant byte address 0x4 - core index']
  #allocation1 [shape = 'u32[72,128]{1,0:T(1,128)}', space=vmem, size = 0x9000, scoped, tag = 'internal scratch']
  %s0 = inlined_call_operand.vmem [shape: f32[2,16,1,128], index: 0, kind: input, shape index: {}]
  %s1 = inlined_call_operand.vmem [shape: f32[32,27], index: 1, kind: input, shape index: {}]
  %s2 = inlined_call_operand.vmem [shape: f32[32,1], index: 2, kind: input, shape index: {}]
  %s3 = inlined_call_operand.vmem [shape: f32[2,15,32,128], index: 3, kind: output, shape index: {}]
  %s4 = sld [smem:[#allocation0]]
  $region52: #{discriminator_r_forward.8} parent=0
    _
  %s6 = ssub.s32 1, %s4
  %s7 = scalar_select 0, %s6, %s4
  loop: start=0, step=1, limit=4
  $region2: #{discriminator_r_forward.8} parent=0 // loop_pre_header
    _
  $region3: #{discriminator_r_forward.8} parent=0 // loop_header
    %s9 = sphi 0, %s13
    %p10 = scmp.ge.s32.totalorder %s9, 4
    %s16 = sphi 0, %s28
    %s17 = sphi 0, %s24
    %s18 = sphi 0, %s16
    %s19 = sphi 0, %s17
    %s20 = sphi 0, %s18
    %s21 = sphi 0, %s19
    %s31 = sphi 0, %s33
    %s34 = sphi 0, %s31
    %s35 = sphi 0, %s34
    %s51 = sphi 0, %s35
    %s55 = sphi 0, %s55
    %s57 = sphi 0, %s55
    %s58 = sphi 0, %s57
    %s72 = sphi 0, %s58
    %s76 = sphi 0, %s76
    %s78 = sphi 0, %s76
    %s79 = sphi 0, %s78
    %s93 = sphi 0, %s79
    %s101 = sphi 0, %s103
    %s104 = sphi 0, %s101
    %s105 = sphi 0, %s104
    %s121 = sphi 0, %s105
  $region4: #{discriminator_r_forward.8} parent=0 // loop_header_branch
    %12 = sbr.rel (%p10) target = $region8
  $region5: #{discriminator_r_forward.8} parent=0 // loop_body
    %s14 = ssub.s32 %s9, 1
    %s15 = ssub.s32 %s9, 2
    %s22 = sadd.s32 1, %s17
    %p23 = scmp.ge.s32.totalorder %s22, 1
    %s24 = scalar_select %p23, 0, %s22
    %s25 = sadd.s32 1, %s16
    %s26 = scalar_select %p23, %s25, %s16
    %p27 = scmp.ge.s32.totalorder %s26, 2
    %s28 = scalar_select %p27, 0, %s26
    %s29 = ssub.s32 %s16, %s28
    %p30 = scmp.eq.s32.totalorder %s29, 0
    %s32 = sadd.s32 %s31, 1
    %s33 = scalar_select %p30, %s31, %s32
    %p36 = pneg %p30
    %p37 = scmp.eq.s32.totalorder %s9, 1
    %p38 = por %p36, %p37
    %p39 = scmp.ne.s32.totalorder %s31, %s34
    %p40 = scmp.eq.s32.totalorder %s9, 0
    %p41 = por %p39, %p40
    %p42 = scmp.ne.s32.totalorder %s31, %s34
    %p43 = scmp.eq.s32.totalorder %s14, 1
    %p44 = por %p42, %p43
    %p45 = scmp.ne.s32.totalorder %s34, %s35
    %p46 = scmp.eq.s32.totalorder %s14, 0
    %p47 = por %p45, %p46
    %p48 = scmp.ne.s32.totalorder %s34, %s35
    %p49 = scmp.eq.s32.totalorder %s15, 1
    %p50 = por %p48, %p49
    %p52 = scmp.ne.s32.totalorder %s35, %s51
    %p53 = scmp.eq.s32.totalorder %s15, 0
    %p54 = por %p52, %p53
    %s56 = sadd.s32 %s55, 1
    %p59 = scmp.eq.s32.totalorder %s9, 1
    %p60 = scmp.ne.s32.totalorder %s55, %s57
    %p61 = scmp.eq.s32.totalorder %s9, 0
    %p62 = por %p60, %p61
    %p63 = scmp.ne.s32.totalorder %s55, %s57
    %p64 = scmp.eq.s32.totalorder %s14, 1
    %p65 = por %p63, %p64
    %p66 = scmp.ne.s32.totalorder %s57, %s58
    %p67 = scmp.eq.s32.totalorder %s14, 0
    %p68 = por %p66, %p67
    %p69 = scmp.ne.s32.totalorder %s57, %s58
    %p70 = scmp.eq.s32.totalorder %s15, 1
    %p71 = por %p69, %p70
    %p73 = scmp.ne.s32.totalorder %s58, %s72
    %p74 = scmp.eq.s32.totalorder %s15, 0
    %p75 = por %p73, %p74
    %s77 = sadd.s32 %s76, 1
    %p80 = scmp.eq.s32.totalorder %s9, 1
    %p81 = scmp.ne.s32.totalorder %s76, %s78
    %p82 = scmp.eq.s32.totalorder %s9, 0
    %p83 = por %p81, %p82
    %p84 = scmp.ne.s32.totalorder %s76, %s78
    %p85 = scmp.eq.s32.totalorder %s14, 1
    %p86 = por %p84, %p85
    %p87 = scmp.ne.s32.totalorder %s78, %s79
    %p88 = scmp.eq.s32.totalorder %s14, 0
    %p89 = por %p87, %p88
    %p90 = scmp.ne.s32.totalorder %s78, %s79
    %p91 = scmp.eq.s32.totalorder %s15, 1
    %p92 = por %p90, %p91
    %p94 = scmp.ne.s32.totalorder %s79, %s93
    %p95 = scmp.eq.s32.totalorder %s15, 0
    %p96 = por %p94, %p95
    %s97 = ssub.s32 %s16, %s28
    %s98 = ssub.s32 %s17, %s24
    %s99 = sor.u32 %s97, %s98
    %p100 = scmp.eq.s32.totalorder %s99, 0
    %s102 = sadd.s32 %s101, 1
    %s103 = scalar_select %p100, %s101, %s102
    %p106 = pneg %p100
    %p107 = scmp.eq.s32.totalorder %s9, 1
    %p108 = por %p106, %p107
    %p109 = scmp.ne.s32.totalorder %s101, %s104
    %p110 = scmp.eq.s32.totalorder %s9, 0
    %p111 = por %p109, %p110
    %p112 = scmp.ne.s32.totalorder %s101, %s104
    %p113 = scmp.eq.s32.totalorder %s14, 1
    %p114 = por %p112, %p113
    %p115 = scmp.ne.s32.totalorder %s104, %s105
    %p116 = scmp.eq.s32.totalorder %s14, 0
    %p117 = por %p115, %p116
    %p118 = scmp.ne.s32.totalorder %s104, %s105
    %p119 = scmp.eq.s32.totalorder %s15, 1
    %p120 = por %p118, %p119
    %p122 = scmp.ne.s32.totalorder %s105, %s121
    %p123 = scmp.eq.s32.totalorder %s15, 0
    %p124 = por %p122, %p123
    %p125 = scmp.le.s32.totalorder 1, %s9
    %p126 = scmp.lt.s32.totalorder %s9, 3
    %p127 = pnand %p125, %p126
    %p128 = pneg %p127
    // Predicated region
    $region9: #{discriminator_r_forward.8} parent=5 // pred_check
      _
    $region10: #{discriminator_r_forward.8} parent=5 // pred_check_branch
      %130 = sbr.rel (%p127) target = $region12
    $region11: #{discriminator_r_forward.8} parent=5 // pred_region
      %s131 = ssub.s32 %s9, 1
      // Predicated region
      $region13: #{discriminator_r_forward.8} parent=11 // pred_check
        %p132 = pneg %p68
      $region14: #{discriminator_r_forward.8} parent=11 // pred_check_branch
        %134 = sbr.rel (%p132) target = $region16
      $region15: #{discriminator_r_forward.8} parent=11 // pred_region
        _
      $region16: #{discriminator_r_forward.8} parent=11 // pred_fallthru
        _
      // Predicated region
      $region17: #{discriminator_r_forward.8} parent=11 // pred_check
        %p135 = pneg %p89
      $region18: #{discriminator_r_forward.8} parent=11 // pred_check_branch
        %137 = sbr.rel (%p135) target = $region20
      $region19: #{discriminator_r_forward.8} parent=11 // pred_region
        _
      $region20: #{discriminator_r_forward.8} parent=11 // pred_fallthru
        _
    $region12: #{discriminator_r_forward.8} parent=5 // pred_fallthru
      _
    %p138 = scmp.lt.s32.totalorder %s9, 2
    // Predicated region
    $region21: #{discriminator_r_forward.8} parent=5 // pred_check
      %p139 = pneg %p138
    $region22: #{discriminator_r_forward.8} parent=5 // pred_check_branch
      %141 = sbr.rel (%p139) target = $region24
    $region23: #{discriminator_r_forward.8} parent=5 // pred_region
      // Predicated region
      $region25: #{discriminator_r_forward.8} parent=23 // pred_check
        %p142 = pneg %p41
      $region26: #{discriminator_r_forward.8} parent=23 // pred_check_branch
        %144 = sbr.rel (%p142) target = $region28
      $region27: #{discriminator_r_forward.8} parent=23 // pred_region
        %p145 = scmp.lt.s32.totalorder %s16, 1
        %s146 = scalar_select %p145, %s16, 1
        %s147 = smul.addr %s146, 16
        %s148 = scalar_lea.vmem %s0, %s147
      $region28: #{discriminator_r_forward.8} parent=23 // pred_fallthru
        _
    $region24: #{discriminator_r_forward.8} parent=5 // pred_fallthru
      _
    %p149 = scmp.le.s32.totalorder 1, %s9
    %p150 = scmp.lt.s32.totalorder %s9, 3
    %p151 = pnand %p149, %p150
    %p152 = pneg %p151
    // Predicated region
    $region29: #{discriminator_r_forward.8} parent=5 // pred_check
      _
    $region30: #{discriminator_r_forward.8} parent=5 // pred_check_branch
      %154 = sbr.rel (%p151) target = $region32
    $region31: #{discriminator_r_forward.8} parent=5 // pred_region
      %s155 = ssub.s32 %s9, 1
      %p156 = scmp.lt.s32.totalorder %s18, 1
      %s157 = scalar_select %p156, %s18, 1
      %s158 = smul.addr %s157, 16
      %s159 = scalar_lea.vmem %s0, %s158
      %p160 = pneg %p47
      %p161 = pneg %p44
      %p162 = pneg %p68
      %p163 = pneg %p65
      %p164 = pneg %p89
      %p165 = pneg %p86
      %p166 = pneg %p117
      %p167 = pneg %p114
      %s168 = smul.u32 15, %s19
      %p169 = scmp.lt.s32.totalorder %s18, 1
      %s170 = scalar_select %p169, %s18, 1
      %p171 = scmp.lt.s32.totalorder %s168, 14
      %s172 = scalar_select %p171, %s168, 14
      %s173 = smul.addr %s172, 4
      %s174 = smul.addr %s170, 60
      %s175 = sadd.s32 %s173, %s174
      %s176 = smul.addr %s175, 8
      %s177 = scalar_lea.vmem %s3, %s176
      %p178 = scmp.lt.s32.totalorder %s18, 1
      %s179 = scalar_select %p178, %s18, 1
      %s180 = smul.addr %s179, 16
      %s181 = scalar_lea.vmem %s0, %s180
      %s182 = smul.u32 15, %s19
      %p183 = scmp.lt.s32.totalorder %s18, 1
      %s184 = scalar_select %p183, %s18, 1
      %p185 = scmp.lt.s32.totalorder %s182, 14
      %s186 = scalar_select %p185, %s182, 14
      %s187 = smul.addr %s186, 4
      %s188 = smul.addr %s184, 60
      %s189 = sadd.s32 %s187, %s188
      %s190 = smul.addr %s189, 8
      %s191 = scalar_lea.vmem %s3, %s190
      %s192 = smul.u32 15, %s19
      %s193 = smul.u32 %s19, 15
      %v194 = vld [vmem:[%s1] sm:$0xff]
      %v195 = vld [vmem:[%s1 + $0x8] sm:$0xff]
      %v196 = vld [vmem:[%s1 + $0x10] sm:$0xff]
      %v197 = vld [vmem:[%s1 + $0x18] sm:$0xff]
      %v198 = vld [vmem:[%s2] sm:$0xff]
      %v199 = vld [vmem:[%s2 + $0x8] sm:$0xff]
      %v200 = vld [vmem:[%s2 + $0x10] sm:$0xff]
      %v201 = vld [vmem:[%s2 + $0x18] sm:$0xff]
      %v202 = vlaneseq
      %v203 = vand.u32 %v202, 127
      %vm204 = vcmp.lt.s32.totalorder %v203, 17
      loop: start=0, step=1, limit=15
      $region33: #{discriminator_r_forward.8} parent=31 // loop_pre_header
        _
      $region34: #{discriminator_r_forward.8} parent=31 // loop_header
        %s206 = sphi 0, %s210
        %p207 = scmp.ge.s32.totalorder %s206, 15
      $region35: #{discriminator_r_forward.8} parent=31 // loop_header_branch
        %209 = sbr.rel (%p207) target = $region39
      $region36: #{discriminator_r_forward.8} parent=31 // loop_body
        %s211 = sadd.s32 %s193, %s206
        %s212 = ssub.s32 %s211, 4
        %p213 = scmp.ge.s32.totalorder %s212, 0
        %p214 = scmp.lt.s32.totalorder %s212, 8
        %p215 = pnand %p213, %p214
        %p216 = pneg %p215
        %p217 = scmp.gt.s32.totalorder %s212, 0
        %s218 = scalar_select %p217, %s212, 0
        %p219 = scmp.lt.s32.totalorder %s218, 7
        %s220 = scalar_select %p219, %s218, 7
        %s221 = scalar_lea.vmem %s181, %s220
        %v222 = vld [vmem:[%s221] sm:$0x1]
        %s223 = sadd.s32 %s220, 1
        %s224 = scalar_lea.vmem %s181, %s223
        %v225 = vld [vmem:[%s224] sm:$0x1]
        %s226 = sadd.s32 %s220, 2
        %s227 = scalar_lea.vmem %s181, %s226
        %v228 = vld [vmem:[%s227] sm:$0x1]
        %s229 = sadd.s32 %s220, 3
        %s230 = scalar_lea.vmem %s181, %s229
        %v231 = vld [vmem:[%s230] sm:$0x1]
        %s232 = sadd.s32 %s220, 4
        %s233 = scalar_lea.vmem %s181, %s232
        %v234 = vld [vmem:[%s233] sm:$0x1]
        %s235 = sadd.s32 %s220, 5
        %s236 = scalar_lea.vmem %s181, %s235
        %v237 = vld [vmem:[%s236] sm:$0x1]
        %s238 = sadd.s32 %s220, 6
        %s239 = scalar_lea.vmem %s181, %s238
        %v240 = vld [vmem:[%s239] sm:$0x1]
        %s241 = sadd.s32 %s220, 7
        %s242 = scalar_lea.vmem %s181, %s241
        %v243 = vld [vmem:[%s242] sm:$0x1]
        %s244 = sadd.s32 %s220, 8
        %s245 = scalar_lea.vmem %s181, %s244
        %v246 = vld [vmem:[%s245] sm:$0x1]
        %v248 = vrot.slane %v222, 7
        %249 = vrot.lane.b32.xlu0 %v248, 127
        %v250 = vpop.permute.xlu0 %249
        %v253 = vrot.slane %v222, 6
        %v254 = vrot.slane 0.0, 6
        %255 = vrot.lane.b32.xlu0 %v253, 126
        %v256 = vpop.permute.xlu0 %255
        %257 = vrot.lane.b32.xlu0 %v254, 126
        %v258 = vpop.permute.xlu0 %257
        %vm259 = vcmask 1031168
        %v260 = vsel %vm259, %v256, %v258
        %v264 = vrot.slane 0.0, 5
        %v265 = vrot.slane %v225, 5
        %v268 = vrot.slane %v225, 4
        %269 = vrot.lane.b32.xlu0 %v268, 127
        %v270 = vpop.permute.xlu0 %269
        %v272 = vrot.slane %v225, 3
        %v273 = vrot.slane 0.0, 3
        %274 = vrot.lane.b32.xlu0 %v272, 126
        %v275 = vpop.permute.xlu0 %274
        %276 = vrot.lane.b32.xlu0 %v273, 126
        %v277 = vpop.permute.xlu0 %276
        %v278 = vsel %vm259, %v275, %v277
        %v282 = vrot.slane 0.0, 2
        %v283 = vrot.slane %v228, 2
        %v286 = vrot.slane %v228, 1
        %287 = vrot.lane.b32.xlu0 %v286, 127
        %v288 = vpop.permute.xlu0 %287
        %290 = vrot.lane.b32.xlu0 %v228, 126
        %v291 = vpop.permute.xlu0 %290
        %292 = vrot.lane.b32.xlu0 0.0, 126
        %v293 = vpop.permute.xlu0 %292
        %v294 = vsel %vm259, %v291, %v293
        %v298 = vrot.slane 0.0, 7
        %v299 = vrot.slane %v231, 7
        %v302 = vrot.slane %v231, 6
        %303 = vrot.lane.b32.xlu0 %v302, 127
        %v304 = vpop.permute.xlu0 %303
        %v306 = vrot.slane %v231, 5
        %307 = vrot.lane.b32.xlu0 %v306, 126
        %v308 = vpop.permute.xlu0 %307
        %309 = vrot.lane.b32.xlu0 %v264, 126
        %v310 = vpop.permute.xlu0 %309
        %v311 = vsel %vm259, %v308, %v310
        %v315 = vrot.slane 0.0, 4
        %v316 = vrot.slane %v234, 4
        %v319 = vrot.slane %v234, 3
        %320 = vrot.lane.b32.xlu0 %v319, 127
        %v321 = vpop.permute.xlu0 %320
        %v323 = vrot.slane %v234, 2
        %324 = vrot.lane.b32.xlu0 %v323, 126
        %v325 = vpop.permute.xlu0 %324
        %326 = vrot.lane.b32.xlu0 %v282, 126
        %v327 = vpop.permute.xlu0 %326
        %v328 = vsel %vm259, %v325, %v327
        %v332 = vrot.slane 0.0, 1
        %v333 = vrot.slane %v237, 1
        %vm336 = vcmask 1040384
        %v337 = vsel %vm336, 0.0, %v250
        %v338 = vsel %vm336, %v222, %v250
        %vm339 = vcmask 1041408
        %v340 = vsel %vm339, %v337, %v256
        %v341 = vsel %vm339, %v338, %v260
        %vm342 = vcmask 1042432
        %v343 = vsel %vm342, %v340, %v264
        %v344 = vsel %vm342, %v341, %v265
        %vm345 = vcmask 1043456
        %v346 = vsel %vm345, %v343, %v270
        %v347 = vsel %vm345, %v344, %v270
        %vm348 = vcmask 1044480
        %v349 = vsel %vm348, %v346, %v275
        %v350 = vsel %vm348, %v347, %v278
        %vm351 = vcmask 1045504
        %v352 = vsel %vm351, %v349, %v282
        %v353 = vsel %vm351, %v350, %v283
        %vm354 = vcmask 1046528
        %v355 = vsel %vm354, %v352, %v288
        %v356 = vsel %vm354, %v353, %v288
        %v357 = vsel %vm336, %v291, %v298
        %v358 = vsel %vm336, %v294, %v299
        %v359 = vsel %vm339, %v357, %v304
        %v360 = vsel %vm339, %v358, %v304
        %v361 = vsel %vm342, %v359, %v308
        %v362 = vsel %vm342, %v360, %v311
        %v363 = vsel %vm345, %v361, %v315
        %v364 = vsel %vm345, %v362, %v316
        %v365 = vsel %vm348, %v363, %v321
        %v366 = vsel %vm348, %v364, %v321
        %v367 = vsel %vm351, %v365, %v325
        %v368 = vsel %vm351, %v366, %v328
        %v369 = vsel %vm354, %v367, %v332
        %v370 = vsel %vm354, %v368, %v333
        %v371 = vrot.slane %v237, 7
        %372 = vrot.lane.b32.xlu0 %v371, 127
        %v373 = vpop.permute.xlu0 %372
        %374 = vrot.lane.b32.xlu0 %v298, 127
        %v375 = vpop.permute.xlu0 %374
        %vm376 = vcmask 1039360
        %v377 = vsel %vm376, %v373, %v375
        %v380 = vrot.slane %v240, 6
        %381 = vrot.lane.b32.xlu0 %v254, 1
        %v382 = vpop.permute.xlu0 %381
        %383 = vrot.lane.b32.xlu0 %v380, 1
        %v384 = vpop.permute.xlu0 %383
        %vm385 = vcmask 7168
        %v386 = vsel %vm385, %v382, %v384
        %v388 = vrot.slane %v240, 5
        %v390 = vrot.slane %v240, 4
        %391 = vrot.lane.b32.xlu0 %v390, 127
        %v392 = vpop.permute.xlu0 %391
        %393 = vrot.lane.b32.xlu0 %v315, 127
        %v394 = vpop.permute.xlu0 %393
        %v395 = vsel %vm376, %v392, %v394
        %v398 = vrot.slane %v243, 3
        %399 = vrot.lane.b32.xlu0 %v273, 1
        %v400 = vpop.permute.xlu0 %399
        %401 = vrot.lane.b32.xlu0 %v398, 1
        %v402 = vpop.permute.xlu0 %401
        %v403 = vsel %vm385, %v400, %v402
        %v405 = vrot.slane %v243, 2
        %v407 = vrot.slane %v243, 1
        %408 = vrot.lane.b32.xlu0 %v407, 127
        %v409 = vpop.permute.xlu0 %408
        %410 = vrot.lane.b32.xlu0 %v332, 127
        %v411 = vpop.permute.xlu0 %410
        %v412 = vsel %vm376, %v409, %v411
        %415 = vrot.lane.b32.xlu0 0.0, 1
        %v416 = vpop.permute.xlu0 %415
        %417 = vrot.lane.b32.xlu0 %v246, 1
        %v418 = vpop.permute.xlu0 %417
        %v419 = vsel %vm385, %v416, %v418
        %v421 = vrot.slane %v246, 7
        %v423 = vrot.slane %v246, 6
        %424 = vrot.lane.b32.xlu0 %v423, 127
        %v425 = vpop.permute.xlu0 %424
        %426 = vrot.lane.b32.xlu0 %v254, 127
        %v427 = vpop.permute.xlu0 %426
        %v428 = vsel %vm376, %v425, %v427
        %v430 = vsel %vm336, %v237, %v377
        %v431 = vsel %vm339, %v430, %v386
        %v432 = vsel %vm342, %v431, %v388
        %v433 = vsel %vm345, %v432, %v395
        %v434 = vsel %vm348, %v433, %v403
        %v435 = vsel %vm351, %v434, %v405
        %v436 = vsel %vm354, %v435, %v412
        %v437 = vsel %vm336, %v419, %v421
        %v438 = vsel %vm339, %v437, %v428
        %441 = vrot.lane.b32.xlu0 %v436, 127
        %v442 = vpop.permute.xlu0 %441
        %443 = vrot.lane.b32.xlu0 %v438, 127
        %v444 = vpop.permute.xlu0 %443
        %446 = vset.pattern.permute.xlu0 0
        %447 = vperm.xlu0 %446, %v198
        %v448 = vpop.permute.xlu0 %447
        %451 = vset.pattern.permute.xlu0 0
        %452 = vperm.xlu0 %451, %v199
        %v453 = vpop.permute.xlu0 %452
        %456 = vset.pattern.permute.xlu0 0
        %457 = vperm.xlu0 %456, %v200
        %v458 = vpop.permute.xlu0 %457
        %461 = vset.pattern.permute.xlu0 0
        %462 = vperm.xlu0 %461, %v201
        %v463 = vpop.permute.xlu0 %462
        %469 = vrot.lane.b32.xlu0 %v355, 1
        %v470 = vpop.permute.xlu0 %469
        %471 = vrot.lane.b32.xlu0 %v356, 1
        %v472 = vpop.permute.xlu0 %471
        %473 = vrot.lane.b32.xlu0 %v369, 1
        %v474 = vpop.permute.xlu0 %473
        %475 = vrot.lane.b32.xlu0 %v370, 1
        %v476 = vpop.permute.xlu0 %475
        %477 = vrot.lane.b32.xlu0 %v442, 1
        %v478 = vpop.permute.xlu0 %477
        %479 = vrot.lane.b32.xlu0 %v444, 1
        %v480 = vpop.permute.xlu0 %479
        %v481 = vsel %vm385, %v470, %v472
        %v482 = vsel %vm385, %v474, %v476
        %vm486 = vcmask 220160
        %v488 = vsel %vm486, %v194, 0
        %v491 = vsel %vm486, %v195, 0
        %v494 = vsel %vm486, %v196, 0
        %v497 = vsel %vm486, %v197, 0
        %v499 = vsel %vm342, %v480, 0
        %501 = vmatpush.msra.mxu0 0.0
        %502 = vmatpush.msra.mxu0 0.0
        %503 = vmatpush.msra.mxu0 0.0
        %504 = vmatpush.msra.mxu0 0.0
        %505 = vmatpush.msra.mxu0 0.0
        %506 = vmatpush.msra.mxu0 0.0
        %507 = vmatpush.msra.mxu0 0.0
        %508 = vmatpush.msra.mxu0 0.0
        %509 = vmatpush.msra.mxu0 0.0
        %510 = vmatpush.msra.mxu0 0.0
        %511 = vmatpush.msra.mxu0 0.0
        %512 = vmatpush.msra.mxu0 0.0
        %513 = vmatpush.msra.mxu0 %v499
        %514 = vmatpush.msra.mxu0 %v478
        %515 = vmatpush.msra.mxu0 %v482
        %516 = vmatpush.msra.mxu0 %v481
        %517 = vmatmul.f32.gmra.mxu0 %v488
        %v518 = vpop.f32.mrf.mxu0
        %v519 = vadd.f32 %v448, %v518
        %520 = vmatmul.f32.gmra.mxu0 %v491
        %v521 = vpop.f32.mrf.mxu0
        %v522 = vadd.f32 %v453, %v521
        %523 = vmatmul.f32.gmra.mxu0 %v494
        %v524 = vpop.f32.mrf.mxu0
        %v525 = vadd.f32 %v458, %v524
        %526 = vmatmul.f32.gmra.mxu0 %v497
        %v527 = vpop.f32.mrf.mxu0
        %v528 = vadd.f32 %v463, %v527
        %529 = vdwg.mxu0
        %vm530 = vcmp.gt.f32.partialorder %v519, 0.0
        %vm531 = vcmp.gt.f32.partialorder %v522, 0.0
        %vm532 = vcmp.gt.f32.partialorder %v525, 0.0
        %vm533 = vcmp.gt.f32.partialorder %v528, 0.0
        %v534 = vmul.f32 %v519, 0.1
        %v535 = vmul.f32 %v522, 0.1
        %v536 = vmul.f32 %v525, 0.1
        %v537 = vmul.f32 %v528, 0.1
        %v538 = vsel %vm530, %v519, %v534
        %v539 = vsel %vm531, %v522, %v535
        %v540 = vsel %vm532, %v525, %v536
        %v541 = vsel %vm533, %v528, %v537
        %s542 = scalar_select %p216, 1, 0
        %v543 = vstv %s542
        %vm544 = vcmp.eq.s32.totalorder %v543, 1
        %vm545 = vmand %vm544, %vm204
        %v546 = vsel %vm545, %v538, 0.0
        %v547 = vsel %vm545, %v539, 0.0
        %v548 = vsel %vm545, %v540, 0.0
        %v549 = vsel %vm545, %v541, 0.0
        %s550 = smul.u32 %s206, 32
        %s551 = scalar_lea.vmem %s191, %s550
        %552 = vst [vmem:[%s551] sm:$0xff] %v546
        %553 = vst [vmem:[%s551 + $0x8] sm:$0xff] %v547
        %554 = vst [vmem:[%s551 + $0x10] sm:$0xff] %v548
        %555 = vst [vmem:[%s551 + $0x18] sm:$0xff] %v549
      $region37: #{discriminator_r_forward.8} parent=31 // loop_footer
        %s210 = sadd.s32 1, %s206
      $region38: #{discriminator_r_forward.8} parent=31 // loop_footer_branch
        %205 = sbr.rel target = $region34
      $region39: #{discriminator_r_forward.8} parent=31 // loop_exit
        _
      %s556 = smul.u32 15, %s19
      %p557 = scmp.lt.s32.totalorder %s18, 1
      %s558 = scalar_select %p557, %s18, 1
      %p559 = scmp.lt.s32.totalorder %s556, 14
      %s560 = scalar_select %p559, %s556, 14
      %s561 = smul.addr %s560, 4
      %s562 = smul.addr %s558, 60
      %s563 = sadd.s32 %s561, %s562
      %s564 = smul.addr %s563, 8
      %s565 = scalar_lea.vmem %s3, %s564
      // Predicated region
      $region40: #{discriminator_r_forward.8} parent=31 // pred_check
        %p566 = pneg %p114
      $region41: #{discriminator_r_forward.8} parent=31 // pred_check_branch
        %568 = sbr.rel (%p566) target = $region43
      $region42: #{discriminator_r_forward.8} parent=31 // pred_region
        %s569 = smul.u32 15, %s19
      $region43: #{discriminator_r_forward.8} parent=31 // pred_fallthru
        _
    $region32: #{discriminator_r_forward.8} parent=5 // pred_fallthru
      _
    %p570 = scmp.le.s32.totalorder 2, %s9
    // Predicated region
    $region44: #{discriminator_r_forward.8} parent=5 // pred_check
      %p571 = pneg %p570
    $region45: #{discriminator_r_forward.8} parent=5 // pred_check_branch
      %573 = sbr.rel (%p571) target = $region47
    $region46: #{discriminator_r_forward.8} parent=5 // pred_region
      %s574 = ssub.s32 %s9, 2
      // Predicated region
      $region48: #{discriminator_r_forward.8} parent=46 // pred_check
        %p575 = pneg %p120
      $region49: #{discriminator_r_forward.8} parent=46 // pred_check_branch
        %577 = sbr.rel (%p575) target = $region51
      $region50: #{discriminator_r_forward.8} parent=46 // pred_region
        %s578 = smul.u32 15, %s21
        %p579 = scmp.lt.s32.totalorder %s20, 1
        %s580 = scalar_select %p579, %s20, 1
        %p581 = scmp.lt.s32.totalorder %s578, 14
        %s582 = scalar_select %p581, %s578, 14
        %s583 = smul.addr %s582, 4
        %s584 = smul.addr %s580, 60
        %s585 = sadd.s32 %s583, %s584
        %s586 = smul.addr %s585, 8
        %s587 = scalar_lea.vmem %s3, %s586
      $region51: #{discriminator_r_forward.8} parent=46 // pred_fallthru
        _
    $region47: #{discriminator_r_forward.8} parent=5 // pred_fallthru
      _
  $region6: #{discriminator_r_forward.8} parent=0 // loop_footer
    %s13 = sadd.s32 1, %s9
  $region7: #{discriminator_r_forward.8} parent=0 // loop_footer_branch
    %8 = sbr.rel target = $region3
  $region8: #{discriminator_r_forward.8} parent=0 // loop_exit
    _

// kernel: discriminator_r_forward.9
$region0: #{discriminator_r_forward.9}
  #allocation0 [shape = 'u32[]', space=smem, size = 0x4, offset = 0x4, fixed_abs, tag = 'smem constant byte address 0x4 - core index']
  #allocation1 [shape = 'u32[72,128]{1,0:T(1,128)}', space=vmem, size = 0x9000, scoped, tag = 'internal scratch']
  %s0 = inlined_call_operand.vmem [shape: f32[2,15,32,128], index: 0, kind: input, shape index: {}]
  %s1 = inlined_call_operand.vmem [shape: f32[32,864], index: 1, kind: input, shape index: {}]
  %s2 = inlined_call_operand.vmem [shape: f32[32,1], index: 2, kind: input, shape index: {}]
  %s3 = inlined_call_operand.vmem [shape: f32[2,11,32,128], index: 3, kind: output, shape index: {}]
  %s4 = sld [smem:[#allocation0]]
  $region52: #{discriminator_r_forward.9} parent=0
    _
  %s6 = ssub.s32 1, %s4
  %s7 = scalar_select 0, %s6, %s4
  loop: start=0, step=1, limit=4
  $region2: #{discriminator_r_forward.9} parent=0 // loop_pre_header
    _
  $region3: #{discriminator_r_forward.9} parent=0 // loop_header
    %s9 = sphi 0, %s13
    %p10 = scmp.ge.s32.totalorder %s9, 4
    %s16 = sphi 0, %s28
    %s17 = sphi 0, %s24
    %s18 = sphi 0, %s16
    %s19 = sphi 0, %s17
    %s20 = sphi 0, %s18
    %s21 = sphi 0, %s19
    %s31 = sphi 0, %s33
    %s34 = sphi 0, %s31
    %s35 = sphi 0, %s34
    %s51 = sphi 0, %s35
    %s55 = sphi 0, %s55
    %s57 = sphi 0, %s55
    %s58 = sphi 0, %s57
    %s72 = sphi 0, %s58
    %s76 = sphi 0, %s76
    %s78 = sphi 0, %s76
    %s79 = sphi 0, %s78
    %s93 = sphi 0, %s79
    %s101 = sphi 0, %s103
    %s104 = sphi 0, %s101
    %s105 = sphi 0, %s104
    %s121 = sphi 0, %s105
  $region4: #{discriminator_r_forward.9} parent=0 // loop_header_branch
    %12 = sbr.rel (%p10) target = $region8
  $region5: #{discriminator_r_forward.9} parent=0 // loop_body
    %s14 = ssub.s32 %s9, 1
    %s15 = ssub.s32 %s9, 2
    %s22 = sadd.s32 1, %s17
    %p23 = scmp.ge.s32.totalorder %s22, 1
    %s24 = scalar_select %p23, 0, %s22
    %s25 = sadd.s32 1, %s16
    %s26 = scalar_select %p23, %s25, %s16
    %p27 = scmp.ge.s32.totalorder %s26, 2
    %s28 = scalar_select %p27, 0, %s26
    %s29 = ssub.s32 %s16, %s28
    %p30 = scmp.eq.s32.totalorder %s29, 0
    %s32 = sadd.s32 %s31, 1
    %s33 = scalar_select %p30, %s31, %s32
    %p36 = pneg %p30
    %p37 = scmp.eq.s32.totalorder %s9, 1
    %p38 = por %p36, %p37
    %p39 = scmp.ne.s32.totalorder %s31, %s34
    %p40 = scmp.eq.s32.totalorder %s9, 0
    %p41 = por %p39, %p40
    %p42 = scmp.ne.s32.totalorder %s31, %s34
    %p43 = scmp.eq.s32.totalorder %s14, 1
    %p44 = por %p42, %p43
    %p45 = scmp.ne.s32.totalorder %s34, %s35
    %p46 = scmp.eq.s32.totalorder %s14, 0
    %p47 = por %p45, %p46
    %p48 = scmp.ne.s32.totalorder %s34, %s35
    %p49 = scmp.eq.s32.totalorder %s15, 1
    %p50 = por %p48, %p49
    %p52 = scmp.ne.s32.totalorder %s35, %s51
    %p53 = scmp.eq.s32.totalorder %s15, 0
    %p54 = por %p52, %p53
    %s56 = sadd.s32 %s55, 1
    %p59 = scmp.eq.s32.totalorder %s9, 1
    %p60 = scmp.ne.s32.totalorder %s55, %s57
    %p61 = scmp.eq.s32.totalorder %s9, 0
    %p62 = por %p60, %p61
    %p63 = scmp.ne.s32.totalorder %s55, %s57
    %p64 = scmp.eq.s32.totalorder %s14, 1
    %p65 = por %p63, %p64
    %p66 = scmp.ne.s32.totalorder %s57, %s58
    %p67 = scmp.eq.s32.totalorder %s14, 0
    %p68 = por %p66, %p67
    %p69 = scmp.ne.s32.totalorder %s57, %s58
    %p70 = scmp.eq.s32.totalorder %s15, 1
    %p71 = por %p69, %p70
    %p73 = scmp.ne.s32.totalorder %s58, %s72
    %p74 = scmp.eq.s32.totalorder %s15, 0
    %p75 = por %p73, %p74
    %s77 = sadd.s32 %s76, 1
    %p80 = scmp.eq.s32.totalorder %s9, 1
    %p81 = scmp.ne.s32.totalorder %s76, %s78
    %p82 = scmp.eq.s32.totalorder %s9, 0
    %p83 = por %p81, %p82
    %p84 = scmp.ne.s32.totalorder %s76, %s78
    %p85 = scmp.eq.s32.totalorder %s14, 1
    %p86 = por %p84, %p85
    %p87 = scmp.ne.s32.totalorder %s78, %s79
    %p88 = scmp.eq.s32.totalorder %s14, 0
    %p89 = por %p87, %p88
    %p90 = scmp.ne.s32.totalorder %s78, %s79
    %p91 = scmp.eq.s32.totalorder %s15, 1
    %p92 = por %p90, %p91
    %p94 = scmp.ne.s32.totalorder %s79, %s93
    %p95 = scmp.eq.s32.totalorder %s15, 0
    %p96 = por %p94, %p95
    %s97 = ssub.s32 %s16, %s28
    %s98 = ssub.s32 %s17, %s24
    %s99 = sor.u32 %s97, %s98
    %p100 = scmp.eq.s32.totalorder %s99, 0
    %s102 = sadd.s32 %s101, 1
    %s103 = scalar_select %p100, %s101, %s102
    %p106 = pneg %p100
    %p107 = scmp.eq.s32.totalorder %s9, 1
    %p108 = por %p106, %p107
    %p109 = scmp.ne.s32.totalorder %s101, %s104
    %p110 = scmp.eq.s32.totalorder %s9, 0
    %p111 = por %p109, %p110
    %p112 = scmp.ne.s32.totalorder %s101, %s104
    %p113 = scmp.eq.s32.totalorder %s14, 1
    %p114 = por %p112, %p113
    %p115 = scmp.ne.s32.totalorder %s104, %s105
    %p116 = scmp.eq.s32.totalorder %s14, 0
    %p117 = por %p115, %p116
    %p118 = scmp.ne.s32.totalorder %s104, %s105
    %p119 = scmp.eq.s32.totalorder %s15, 1
    %p120 = por %p118, %p119
    %p122 = scmp.ne.s32.totalorder %s105, %s121
    %p123 = scmp.eq.s32.totalorder %s15, 0
    %p124 = por %p122, %p123
    %p125 = scmp.le.s32.totalorder 1, %s9
    %p126 = scmp.lt.s32.totalorder %s9, 3
    %p127 = pnand %p125, %p126
    %p128 = pneg %p127
    // Predicated region
    $region9: #{discriminator_r_forward.9} parent=5 // pred_check
      _
    $region10: #{discriminator_r_forward.9} parent=5 // pred_check_branch
      %130 = sbr.rel (%p127) target = $region12
    $region11: #{discriminator_r_forward.9} parent=5 // pred_region
      %s131 = ssub.s32 %s9, 1
      // Predicated region
      $region13: #{discriminator_r_forward.9} parent=11 // pred_check
        %p132 = pneg %p68
      $region14: #{discriminator_r_forward.9} parent=11 // pred_check_branch
        %134 = sbr.rel (%p132) target = $region16
      $region15: #{discriminator_r_forward.9} parent=11 // pred_region
        _
      $region16: #{discriminator_r_forward.9} parent=11 // pred_fallthru
        _
      // Predicated region
      $region17: #{discriminator_r_forward.9} parent=11 // pred_check
        %p135 = pneg %p89
      $region18: #{discriminator_r_forward.9} parent=11 // pred_check_branch
        %137 = sbr.rel (%p135) target = $region20
      $region19: #{discriminator_r_forward.9} parent=11 // pred_region
        _
      $region20: #{discriminator_r_forward.9} parent=11 // pred_fallthru
        _
    $region12: #{discriminator_r_forward.9} parent=5 // pred_fallthru
      _
    %p138 = scmp.lt.s32.totalorder %s9, 2
    // Predicated region
    $region21: #{discriminator_r_forward.9} parent=5 // pred_check
      %p139 = pneg %p138
    $region22: #{discriminator_r_forward.9} parent=5 // pred_check_branch
      %141 = sbr.rel (%p139) target = $region24
    $region23: #{discriminator_r_forward.9} parent=5 // pred_region
      // Predicated region
      $region25: #{discriminator_r_forward.9} parent=23 // pred_check
        %p142 = pneg %p41
      $region26: #{discriminator_r_forward.9} parent=23 // pred_check_branch
        %144 = sbr.rel (%p142) target = $region28
      $region27: #{discriminator_r_forward.9} parent=23 // pred_region
        %p145 = scmp.lt.s32.totalorder %s16, 1
        %s146 = scalar_select %p145, %s16, 1
        %s147 = smul.addr %s146, 60
        %s148 = smul.addr %s147, 8
        %s149 = scalar_lea.vmem %s0, %s148
      $region28: #{discriminator_r_forward.9} parent=23 // pred_fallthru
        _
    $region24: #{discriminator_r_forward.9} parent=5 // pred_fallthru
      _
    %p150 = scmp.le.s32.totalorder 1, %s9
    %p151 = scmp.lt.s32.totalorder %s9, 3
    %p152 = pnand %p150, %p151
    %p153 = pneg %p152
    // Predicated region
    $region29: #{discriminator_r_forward.9} parent=5 // pred_check
      _
    $region30: #{discriminator_r_forward.9} parent=5 // pred_check_branch
      %155 = sbr.rel (%p152) target = $region32
    $region31: #{discriminator_r_forward.9} parent=5 // pred_region
      %s156 = ssub.s32 %s9, 1
      %p157 = scmp.lt.s32.totalorder %s18, 1
      %s158 = scalar_select %p157, %s18, 1
      %s159 = smul.addr %s158, 60
      %s160 = smul.addr %s159, 8
      %s161 = scalar_lea.vmem %s0, %s160
      %p162 = pneg %p47
      %p163 = pneg %p44
      %p164 = pneg %p68
      %p165 = pneg %p65
      %p166 = pneg %p89
      %p167 = pneg %p86
      %p168 = pneg %p117
      %p169 = pneg %p114
      %s170 = smul.u32 11, %s19
      %p171 = scmp.lt.s32.totalorder %s18, 1
      %s172 = scalar_select %p171, %s18, 1
      %p173 = scmp.lt.s32.totalorder %s170, 10
      %s174 = scalar_select %p173, %s170, 10
      %s175 = smul.addr %s174, 4
      %s176 = smul.addr %s172, 44
      %s177 = sadd.s32 %s175, %s176
      %s178 = smul.addr %s177, 8
      %s179 = scalar_lea.vmem %s3, %s178
      %p180 = scmp.lt.s32.totalorder %s18, 1
      %s181 = scalar_select %p180, %s18, 1
      %s182 = smul.addr %s181, 60
      %s183 = smul.addr %s182, 8
      %s184 = scalar_lea.vmem %s0, %s183
      %s185 = smul.u32 11, %s19
      %p186 = scmp.lt.s32.totalorder %s18, 1
      %s187 = scalar_select %p186, %s18, 1
      %p188 = scmp.lt.s32.totalorder %s185, 10
      %s189 = scalar_select %p188, %s185, 10
      %s190 = smul.addr %s189, 4
      %s191 = smul.addr %s187, 44
      %s192 = sadd.s32 %s190, %s191
      %s193 = smul.addr %s192, 8
      %s194 = scalar_lea.vmem %s3, %s193
      %s195 = smul.u32 11, %s19
      %s196 = smul.u32 %s19, 11
      %v197 = vld [vmem:[%s1] sm:$0xff]
      %v198 = vld [vmem:[%s1 + $0x8] sm:$0xff]
      %v199 = vld [vmem:[%s1 + $0x10] sm:$0xff]
      %v200 = vld [vmem:[%s1 + $0x18] sm:$0xff]
      %v201 = vld [vmem:[%s1 + $0x20] sm:$0xff]
      %v202 = vld [vmem:[%s1 + $0x28] sm:$0xff]
      %v203 = vld [vmem:[%s1 + $0x30] sm:$0xff]
      %v204 = vld [vmem:[%s1 + $0x38] sm:$0xff]
      %v205 = vld [vmem:[%s1 + $0x40] sm:$0xff]
      %v206 = vld [vmem:[%s1 + $0x48] sm:$0xff]
      %v207 = vld [vmem:[%s1 + $0x50] sm:$0xff]
      %v208 = vld [vmem:[%s1 + $0x58] sm:$0xff]
      %v209 = vld [vmem:[%s1 + $0x60] sm:$0xff]
      %v210 = vld [vmem:[%s1 + $0x68] sm:$0xff]
      %v211 = vld [vmem:[%s1 + $0x70] sm:$0xff]
      %v212 = vld [vmem:[%s1 + $0x78] sm:$0xff]
      %v213 = vld [vmem:[%s1 + $0x80] sm:$0xff]
      %v214 = vld [vmem:[%s1 + $0x88] sm:$0xff]
      %v215 = vld [vmem:[%s1 + $0x90] sm:$0xff]
      %v216 = vld [vmem:[%s1 + $0x98] sm:$0xff]
      %v217 = vld [vmem:[%s1 + $0xa0] sm:$0xff]
      %v218 = vld [vmem:[%s1 + $0xa8] sm:$0xff]
      %v219 = vld [vmem:[%s1 + $0xb0] sm:$0xff]
      %v220 = vld [vmem:[%s1 + $0xb8] sm:$0xff]
      %v221 = vld [vmem:[%s1 + $0xc0] sm:$0xff]
      %v222 = vld [vmem:[%s1 + $0xc8] sm:$0xff]
      %v223 = vld [vmem:[%s1 + $0xd0] sm:$0xff]
      %v224 = vld [vmem:[%s1 + $0xd8] sm:$0xff]
      %v225 = vld [vmem:[%s2] sm:$0xff]
      %v226 = vld [vmem:[%s2 + $0x8] sm:$0xff]
      %v227 = vld [vmem:[%s2 + $0x10] sm:$0xff]
      %v228 = vld [vmem:[%s2 + $0x18] sm:$0xff]
      %v229 = vlaneseq
      %v230 = vand.u32 %v229, 127
      %vm231 = vcmp.lt.s32.totalorder %v230, 17
      loop: start=0, step=1, limit=11
      $region33: #{discriminator_r_forward.9} parent=31 // loop_pre_header
        _
      $region34: #{discriminator_r_forward.9} parent=31 // loop_header
        %s233 = sphi 0, %s237
        %p234 = scmp.ge.s32.totalorder %s233, 11
      $region35: #{discriminator_r_forward.9} parent=31 // loop_header_branch
        %236 = sbr.rel (%p234) target = $region39
      $region36: #{discriminator_r_forward.9} parent=31 // loop_body
        %s238 = sadd.s32 %s196, %s233
        %s239 = ssub.s32 %s238, 4
        %p240 = scmp.ge.s32.totalorder %s239, 0
        %p241 = scmp.lt.s32.totalorder %s239, 4
        %p242 = pnand %p240, %p241
        %p243 = pneg %p242
        %s244 = smul.u32 %s239, 2
        %p245 = scmp.gt.s32.totalorder %s244, 0
        %s246 = scalar_select %p245, %s244, 0
        %p247 = scmp.lt.s32.totalorder %s246, 6
        %s248 = scalar_select %p247, %s246, 6
        %s249 = smul.u32 %s248, 32
        %s250 = scalar_lea.vmem %s184, %s249
        %v251 = vld [vmem:[%s250] sm:$0xff]
        %v252 = vld [vmem:[%s250 + $0x8] sm:$0xff]
        %v253 = vld [vmem:[%s250 + $0x10] sm:$0xff]
        %v254 = vld [vmem:[%s250 + $0x18] sm:$0xff]
        %s255 = sadd.s32 %s248, 1
        %s256 = smul.u32 %s255, 32
        %s257 = scalar_lea.vmem %s184, %s256
        %v258 = vld [vmem:[%s257] sm:$0xff]
        %v259 = vld [vmem:[%s257 + $0x8] sm:$0xff]
        %v260 = vld [vmem:[%s257 + $0x10] sm:$0xff]
        %v261 = vld [vmem:[%s257 + $0x18] sm:$0xff]
        %s262 = sadd.s32 %s248, 2
        %s263 = smul.u32 %s262, 32
        %s264 = scalar_lea.vmem %s184, %s263
        %v265 = vld [vmem:[%s264] sm:$0xff]
        %v266 = vld [vmem:[%s264 + $0x8] sm:$0xff]
        %v267 = vld [vmem:[%s264 + $0x10] sm:$0xff]
        %v268 = vld [vmem:[%s264 + $0x18] sm:$0xff]
        %s269 = sadd.s32 %s248, 3
        %s270 = smul.u32 %s269, 32
        %s271 = scalar_lea.vmem %s184, %s270
        %v272 = vld [vmem:[%s271] sm:$0xff]
        %v273 = vld [vmem:[%s271 + $0x8] sm:$0xff]
        %v274 = vld [vmem:[%s271 + $0x10] sm:$0xff]
        %v275 = vld [vmem:[%s271 + $0x18] sm:$0xff]
        %s276 = sadd.s32 %s248, 4
        %s277 = smul.u32 %s276, 32
        %s278 = scalar_lea.vmem %s184, %s277
        %v279 = vld [vmem:[%s278] sm:$0xff]
        %v280 = vld [vmem:[%s278 + $0x8] sm:$0xff]
        %v281 = vld [vmem:[%s278 + $0x10] sm:$0xff]
        %v282 = vld [vmem:[%s278 + $0x18] sm:$0xff]
        %s283 = sadd.s32 %s248, 5
        %s284 = smul.u32 %s283, 32
        %s285 = scalar_lea.vmem %s184, %s284
        %v286 = vld [vmem:[%s285] sm:$0xff]
        %v287 = vld [vmem:[%s285 + $0x8] sm:$0xff]
        %v288 = vld [vmem:[%s285 + $0x10] sm:$0xff]
        %v289 = vld [vmem:[%s285 + $0x18] sm:$0xff]
        %s290 = sadd.s32 %s248, 6
        %s291 = smul.u32 %s290, 32
        %s292 = scalar_lea.vmem %s184, %s291
        %v293 = vld [vmem:[%s292] sm:$0xff]
        %v294 = vld [vmem:[%s292 + $0x8] sm:$0xff]
        %v295 = vld [vmem:[%s292 + $0x10] sm:$0xff]
        %v296 = vld [vmem:[%s292 + $0x18] sm:$0xff]
        %s297 = sadd.s32 %s248, 7
        %s298 = smul.u32 %s297, 32
        %s299 = scalar_lea.vmem %s184, %s298
        %v300 = vld [vmem:[%s299] sm:$0xff]
        %v301 = vld [vmem:[%s299 + $0x8] sm:$0xff]
        %v302 = vld [vmem:[%s299 + $0x10] sm:$0xff]
        %v303 = vld [vmem:[%s299 + $0x18] sm:$0xff]
        %s304 = sadd.s32 %s248, 8
        %s305 = smul.u32 %s304, 32
        %s306 = scalar_lea.vmem %s184, %s305
        %v307 = vld [vmem:[%s306] sm:$0xff]
        %v308 = vld [vmem:[%s306 + $0x8] sm:$0xff]
        %v309 = vld [vmem:[%s306 + $0x10] sm:$0xff]
        %v310 = vld [vmem:[%s306 + $0x18] sm:$0xff]
        %315 = vrot.lane.b32.xlu0 %v251, 127
        %v316 = vpop.permute.xlu0 %315
        %317 = vrot.lane.b32.xlu0 %v252, 127
        %v318 = vpop.permute.xlu0 %317
        %319 = vrot.lane.b32.xlu0 %v253, 127
        %v320 = vpop.permute.xlu0 %319
        %321 = vrot.lane.b32.xlu0 %v254, 127
        %v322 = vpop.permute.xlu0 %321
        %324 = vrot.lane.b32.xlu0 %v251, 126
        %v325 = vpop.permute.xlu0 %324
        %326 = vrot.lane.b32.xlu0 0.0, 126
        %v327 = vpop.permute.xlu0 %326
        %328 = vrot.lane.b32.xlu0 %v252, 126
        %v329 = vpop.permute.xlu0 %328
        %330 = vrot.lane.b32.xlu0 %v253, 126
        %v331 = vpop.permute.xlu0 %330
        %332 = vrot.lane.b32.xlu0 %v254, 126
        %v333 = vpop.permute.xlu0 %332
        %vm334 = vcmask 1031168
        %v335 = vsel %vm334, %v325, %v327
        %v336 = vsel %vm334, %v329, %v327
        %v337 = vsel %vm334, %v331, %v327
        %v338 = vsel %vm334, %v333, %v327
        %343 = vrot.lane.b32.xlu0 %v258, 127
        %v344 = vpop.permute.xlu0 %343
        %345 = vrot.lane.b32.xlu0 %v259, 127
        %v346 = vpop.permute.xlu0 %345
        %347 = vrot.lane.b32.xlu0 %v260, 127
        %v348 = vpop.permute.xlu0 %347
        %349 = vrot.lane.b32.xlu0 %v261, 127
        %v350 = vpop.permute.xlu0 %349
        %351 = vrot.lane.b32.xlu0 %v258, 126
        %v352 = vpop.permute.xlu0 %351
        %353 = vrot.lane.b32.xlu0 %v259, 126
        %v354 = vpop.permute.xlu0 %353
        %355 = vrot.lane.b32.xlu0 %v260, 126
        %v356 = vpop.permute.xlu0 %355
        %357 = vrot.lane.b32.xlu0 %v261, 126
        %v358 = vpop.permute.xlu0 %357
        %v359 = vsel %vm334, %v352, %v327
        %v360 = vsel %vm334, %v354, %v327
        %v361 = vsel %vm334, %v356, %v327
        %v362 = vsel %vm334, %v358, %v327
        %367 = vrot.lane.b32.xlu0 %v265, 127
        %v368 = vpop.permute.xlu0 %367
        %369 = vrot.lane.b32.xlu0 %v266, 127
        %v370 = vpop.permute.xlu0 %369
        %371 = vrot.lane.b32.xlu0 %v267, 127
        %v372 = vpop.permute.xlu0 %371
        %373 = vrot.lane.b32.xlu0 %v268, 127
        %v374 = vpop.permute.xlu0 %373
        %375 = vrot.lane.b32.xlu0 %v265, 126
        %v376 = vpop.permute.xlu0 %375
        %377 = vrot.lane.b32.xlu0 %v266, 126
        %v378 = vpop.permute.xlu0 %377
        %379 = vrot.lane.b32.xlu0 %v267, 126
        %v380 = vpop.permute.xlu0 %379
        %381 = vrot.lane.b32.xlu0 %v268, 126
        %v382 = vpop.permute.xlu0 %381
        %v383 = vsel %vm334, %v376, %v327
        %v384 = vsel %vm334, %v378, %v327
        %v385 = vsel %vm334, %v380, %v327
        %v386 = vsel %vm334, %v382, %v327
        %391 = vrot.lane.b32.xlu0 %v272, 127
        %v392 = vpop.permute.xlu0 %391
        %393 = vrot.lane.b32.xlu0 %v273, 127
        %v394 = vpop.permute.xlu0 %393
        %395 = vrot.lane.b32.xlu0 %v274, 127
        %v396 = vpop.permute.xlu0 %395
        %397 = vrot.lane.b32.xlu0 %v275, 127
        %v398 = vpop.permute.xlu0 %397
        %399 = vrot.lane.b32.xlu0 %v272, 126
        %v400 = vpop.permute.xlu0 %399
        %401 = vrot.lane.b32.xlu0 %v273, 126
        %v402 = vpop.permute.xlu0 %401
        %403 = vrot.lane.b32.xlu0 %v274, 126
        %v404 = vpop.permute.xlu0 %403
        %405 = vrot.lane.b32.xlu0 %v275, 126
        %v406 = vpop.permute.xlu0 %405
        %v407 = vsel %vm334, %v400, %v327
        %v408 = vsel %vm334, %v402, %v327
        %v409 = vsel %vm334, %v404, %v327
        %v410 = vsel %vm334, %v406, %v327
        %415 = vrot.lane.b32.xlu0 %v279, 127
        %v416 = vpop.permute.xlu0 %415
        %417 = vrot.lane.b32.xlu0 %v280, 127
        %v418 = vpop.permute.xlu0 %417
        %419 = vrot.lane.b32.xlu0 %v281, 127
        %v420 = vpop.permute.xlu0 %419
        %421 = vrot.lane.b32.xlu0 %v282, 127
        %v422 = vpop.permute.xlu0 %421
        %423 = vrot.lane.b32.xlu0 %v279, 126
        %v424 = vpop.permute.xlu0 %423
        %425 = vrot.lane.b32.xlu0 %v280, 126
        %v426 = vpop.permute.xlu0 %425
        %427 = vrot.lane.b32.xlu0 %v281, 126
        %v428 = vpop.permute.xlu0 %427
        %429 = vrot.lane.b32.xlu0 %v282, 126
        %v430 = vpop.permute.xlu0 %429
        %v431 = vsel %vm334, %v424, %v327
        %v432 = vsel %vm334, %v426, %v327
        %v433 = vsel %vm334, %v428, %v327
        %v434 = vsel %vm334, %v430, %v327
        %439 = vrot.lane.b32.xlu0 %v286, 127
        %v440 = vpop.permute.xlu0 %439
        %441 = vrot.lane.b32.xlu0 0.0, 127
        %v442 = vpop.permute.xlu0 %441
        %443 = vrot.lane.b32.xlu0 %v287, 127
        %v444 = vpop.permute.xlu0 %443
        %445 = vrot.lane.b32.xlu0 %v288, 127
        %v446 = vpop.permute.xlu0 %445
        %447 = vrot.lane.b32.xlu0 %v289, 127
        %v448 = vpop.permute.xlu0 %447
        %vm449 = vcmask 1039360
        %v450 = vsel %vm449, %v440, %v442
        %v451 = vsel %vm449, %v444, %v442
        %v452 = vsel %vm449, %v446, %v442
        %v453 = vsel %vm449, %v448, %v442
        %458 = vrot.lane.b32.xlu0 0.0, 1
        %v459 = vpop.permute.xlu0 %458
        %460 = vrot.lane.b32.xlu0 %v293, 1
        %v461 = vpop.permute.xlu0 %460
        %462 = vrot.lane.b32.xlu0 %v294, 1
        %v463 = vpop.permute.xlu0 %462
        %464 = vrot.lane.b32.xlu0 %v295, 1
        %v465 = vpop.permute.xlu0 %464
        %466 = vrot.lane.b32.xlu0 %v296, 1
        %v467 = vpop.permute.xlu0 %466
        %vm468 = vcmask 7168
        %v469 = vsel %vm468, %v459, %v461
        %v470 = vsel %vm468, %v459, %v463
        %v471 = vsel %vm468, %v459, %v465
        %v472 = vsel %vm468, %v459, %v467
        %473 = vrot.lane.b32.xlu0 %v293, 127
        %v474 = vpop.permute.xlu0 %473
        %475 = vrot.lane.b32.xlu0 %v294, 127
        %v476 = vpop.permute.xlu0 %475
        %477 = vrot.lane.b32.xlu0 %v295, 127
        %v478 = vpop.permute.xlu0 %477
        %479 = vrot.lane.b32.xlu0 %v296, 127
        %v480 = vpop.permute.xlu0 %479
        %v481 = vsel %vm449, %v474, %v442
        %v482 = vsel %vm449, %v476, %v442
        %v483 = vsel %vm449, %v478, %v442
        %v484 = vsel %vm449, %v480, %v442
        %489 = vrot.lane.b32.xlu0 %v300, 1
        %v490 = vpop.permute.xlu0 %489
        %491 = vrot.lane.b32.xlu0 %v301, 1
        %v492 = vpop.permute.xlu0 %491
        %493 = vrot.lane.b32.xlu0 %v302, 1
        %v494 = vpop.permute.xlu0 %493
        %495 = vrot.lane.b32.xlu0 %v303, 1
        %v496 = vpop.permute.xlu0 %495
        %v497 = vsel %vm468, %v459, %v490
        %v498 = vsel %vm468, %v459, %v492
        %v499 = vsel %vm468, %v459, %v494
        %v500 = vsel %vm468, %v459, %v496
        %501 = vrot.lane.b32.xlu0 %v300, 127
        %v502 = vpop.permute.xlu0 %501
        %503 = vrot.lane.b32.xlu0 %v301, 127
        %v504 = vpop.permute.xlu0 %503
        %505 = vrot.lane.b32.xlu0 %v302, 127
        %v506 = vpop.permute.xlu0 %505
        %507 = vrot.lane.b32.xlu0 %v303, 127
        %v508 = vpop.permute.xlu0 %507
        %v509 = vsel %vm449, %v502, %v442
        %v510 = vsel %vm449, %v504, %v442
        %v511 = vsel %vm449, %v506, %v442
        %v512 = vsel %vm449, %v508, %v442
        %517 = vrot.lane.b32.xlu0 %v307, 1
        %v518 = vpop.permute.xlu0 %517
        %519 = vrot.lane.b32.xlu0 %v308, 1
        %v520 = vpop.permute.xlu0 %519
        %521 = vrot.lane.b32.xlu0 %v309, 1
        %v522 = vpop.permute.xlu0 %521
        %523 = vrot.lane.b32.xlu0 %v310, 1
        %v524 = vpop.permute.xlu0 %523
        %v525 = vsel %vm468, %v459, %v518
        %v526 = vsel %vm468, %v459, %v520
        %v527 = vsel %vm468, %v459, %v522
        %v528 = vsel %vm468, %v459, %v524
        %529 = vrot.lane.b32.xlu0 %v307, 127
        %v530 = vpop.permute.xlu0 %529
        %531 = vrot.lane.b32.xlu0 %v308, 127
        %v532 = vpop.permute.xlu0 %531
        %533 = vrot.lane.b32.xlu0 %v309, 127
        %v534 = vpop.permute.xlu0 %533
        %535 = vrot.lane.b32.xlu0 %v310, 127
        %v536 = vpop.permute.xlu0 %535
        %v537 = vsel %vm449, %v530, %v442
        %v538 = vsel %vm449, %v532, %v442
        %v539 = vsel %vm449, %v534, %v442
        %v540 = vsel %vm449, %v536, %v442
        %541 = vrot.lane.b32.xlu0 %v450, 127
        %v542 = vpop.permute.xlu0 %541
        %543 = vrot.lane.b32.xlu0 %v451, 127
        %v544 = vpop.permute.xlu0 %543
        %545 = vrot.lane.b32.xlu0 %v452, 127
        %v546 = vpop.permute.xlu0 %545
        %547 = vrot.lane.b32.xlu0 %v453, 127
        %v548 = vpop.permute.xlu0 %547
        %549 = vrot.lane.b32.xlu0 %v469, 127
        %v550 = vpop.permute.xlu0 %549
        %551 = vrot.lane.b32.xlu0 %v470, 127
        %v552 = vpop.permute.xlu0 %551
        %553 = vrot.lane.b32.xlu0 %v471, 127
        %v554 = vpop.permute.xlu0 %553
        %555 = vrot.lane.b32.xlu0 %v472, 127
        %v556 = vpop.permute.xlu0 %555
        %557 = vrot.lane.b32.xlu0 %v481, 127
        %v558 = vpop.permute.xlu0 %557
        %559 = vrot.lane.b32.xlu0 %v482, 127
        %v560 = vpop.permute.xlu0 %559
        %561 = vrot.lane.b32.xlu0 %v483, 127
        %v562 = vpop.permute.xlu0 %561
        %563 = vrot.lane.b32.xlu0 %v484, 127
        %v564 = vpop.permute.xlu0 %563
        %565 = vrot.lane.b32.xlu0 %v497, 127
        %v566 = vpop.permute.xlu0 %565
        %567 = vrot.lane.b32.xlu0 %v498, 127
        %v568 = vpop.permute.xlu0 %567
        %569 = vrot.lane.b32.xlu0 %v499, 127
        %v570 = vpop.permute.xlu0 %569
        %571 = vrot.lane.b32.xlu0 %v500, 127
        %v572 = vpop.permute.xlu0 %571
        %573 = vrot.lane.b32.xlu0 %v509, 127
        %v574 = vpop.permute.xlu0 %573
        %575 = vrot.lane.b32.xlu0 %v510, 127
        %v576 = vpop.permute.xlu0 %575
        %577 = vrot.lane.b32.xlu0 %v511, 127
        %v578 = vpop.permute.xlu0 %577
        %579 = vrot.lane.b32.xlu0 %v512, 127
        %v580 = vpop.permute.xlu0 %579
        %581 = vrot.lane.b32.xlu0 %v525, 127
        %v582 = vpop.permute.xlu0 %581
        %583 = vrot.lane.b32.xlu0 %v526, 127
        %v584 = vpop.permute.xlu0 %583
        %585 = vrot.lane.b32.xlu0 %v527, 127
        %v586 = vpop.permute.xlu0 %585
        %587 = vrot.lane.b32.xlu0 %v528, 127
        %v588 = vpop.permute.xlu0 %587
        %589 = vrot.lane.b32.xlu0 %v537, 127
        %v590 = vpop.permute.xlu0 %589
        %591 = vrot.lane.b32.xlu0 %v538, 127
        %v592 = vpop.permute.xlu0 %591
        %593 = vrot.lane.b32.xlu0 %v539, 127
        %v594 = vpop.permute.xlu0 %593
        %595 = vrot.lane.b32.xlu0 %v540, 127
        %v596 = vpop.permute.xlu0 %595
        %598 = vset.pattern.permute.xlu0 0
        %599 = vperm.xlu0 %598, %v225
        %v600 = vpop.permute.xlu0 %599
        %603 = vset.pattern.permute.xlu0 0
        %604 = vperm.xlu0 %603, %v226
        %v605 = vpop.permute.xlu0 %604
        %608 = vset.pattern.permute.xlu0 0
        %609 = vperm.xlu0 %608, %v227
        %v610 = vpop.permute.xlu0 %609
        %613 = vset.pattern.permute.xlu0 0
        %614 = vperm.xlu0 %613, %v228
        %v615 = vpop.permute.xlu0 %614
        %617 = vrot.lane.b32.xlu0 %v251, 1
        %v618 = vpop.permute.xlu0 %617
        %619 = vrot.lane.b32.xlu0 %v252, 1
        %v620 = vpop.permute.xlu0 %619
        %621 = vrot.lane.b32.xlu0 %v253, 1
        %v622 = vpop.permute.xlu0 %621
        %623 = vrot.lane.b32.xlu0 %v254, 1
        %v624 = vpop.permute.xlu0 %623
        %625 = vrot.lane.b32.xlu0 %v316, 1
        %v626 = vpop.permute.xlu0 %625
        %627 = vrot.lane.b32.xlu0 %v318, 1
        %v628 = vpop.permute.xlu0 %627
        %629 = vrot.lane.b32.xlu0 %v320, 1
        %v630 = vpop.permute.xlu0 %629
        %631 = vrot.lane.b32.xlu0 %v322, 1
        %v632 = vpop.permute.xlu0 %631
        %633 = vrot.lane.b32.xlu0 %v325, 1
        %v634 = vpop.permute.xlu0 %633
        %635 = vrot.lane.b32.xlu0 %v335, 1
        %v636 = vpop.permute.xlu0 %635
        %637 = vrot.lane.b32.xlu0 %v329, 1
        %v638 = vpop.permute.xlu0 %637
        %639 = vrot.lane.b32.xlu0 %v336, 1
        %v640 = vpop.permute.xlu0 %639
        %641 = vrot.lane.b32.xlu0 %v331, 1
        %v642 = vpop.permute.xlu0 %641
        %643 = vrot.lane.b32.xlu0 %v337, 1
        %v644 = vpop.permute.xlu0 %643
        %645 = vrot.lane.b32.xlu0 %v333, 1
        %v646 = vpop.permute.xlu0 %645
        %647 = vrot.lane.b32.xlu0 %v338, 1
        %v648 = vpop.permute.xlu0 %647
        %649 = vrot.lane.b32.xlu0 %v258, 1
        %v650 = vpop.permute.xlu0 %649
        %651 = vrot.lane.b32.xlu0 %v259, 1
        %v652 = vpop.permute.xlu0 %651
        %653 = vrot.lane.b32.xlu0 %v260, 1
        %v654 = vpop.permute.xlu0 %653
        %655 = vrot.lane.b32.xlu0 %v261, 1
        %v656 = vpop.permute.xlu0 %655
        %657 = vrot.lane.b32.xlu0 %v344, 1
        %v658 = vpop.permute.xlu0 %657
        %659 = vrot.lane.b32.xlu0 %v346, 1
        %v660 = vpop.permute.xlu0 %659
        %661 = vrot.lane.b32.xlu0 %v348, 1
        %v662 = vpop.permute.xlu0 %661
        %663 = vrot.lane.b32.xlu0 %v350, 1
        %v664 = vpop.permute.xlu0 %663
        %665 = vrot.lane.b32.xlu0 %v352, 1
        %v666 = vpop.permute.xlu0 %665
        %667 = vrot.lane.b32.xlu0 %v359, 1
        %v668 = vpop.permute.xlu0 %667
        %669 = vrot.lane.b32.xlu0 %v354, 1
        %v670 = vpop.permute.xlu0 %669
        %671 = vrot.lane.b32.xlu0 %v360, 1
        %v672 = vpop.permute.xlu0 %671
        %673 = vrot.lane.b32.xlu0 %v356, 1
        %v674 = vpop.permute.xlu0 %673
        %675 = vrot.lane.b32.xlu0 %v361, 1
        %v676 = vpop.permute.xlu0 %675
        %677 = vrot.lane.b32.xlu0 %v358, 1
        %v678 = vpop.permute.xlu0 %677
        %679 = vrot.lane.b32.xlu0 %v362, 1
        %v680 = vpop.permute.xlu0 %679
        %681 = vrot.lane.b32.xlu0 %v265, 1
        %v682 = vpop.permute.xlu0 %681
        %683 = vrot.lane.b32.xlu0 %v266, 1
        %v684 = vpop.permute.xlu0 %683
        %685 = vrot.lane.b32.xlu0 %v267, 1
        %v686 = vpop.permute.xlu0 %685
        %687 = vrot.lane.b32.xlu0 %v268, 1
        %v688 = vpop.permute.xlu0 %687
        %689 = vrot.lane.b32.xlu0 %v368, 1
        %v690 = vpop.permute.xlu0 %689
        %691 = vrot.lane.b32.xlu0 %v370, 1
        %v692 = vpop.permute.xlu0 %691
        %693 = vrot.lane.b32.xlu0 %v372, 1
        %v694 = vpop.permute.xlu0 %693
        %695 = vrot.lane.b32.xlu0 %v374, 1
        %v696 = vpop.permute.xlu0 %695
        %697 = vrot.lane.b32.xlu0 %v376, 1
        %v698 = vpop.permute.xlu0 %697
        %699 = vrot.lane.b32.xlu0 %v383, 1
        %v700 = vpop.permute.xlu0 %699
        %701 = vrot.lane.b32.xlu0 %v378, 1
        %v702 = vpop.permute.xlu0 %701
        %703 = vrot.lane.b32.xlu0 %v384, 1
        %v704 = vpop.permute.xlu0 %703
        %705 = vrot.lane.b32.xlu0 %v380, 1
        %v706 = vpop.permute.xlu0 %705
        %707 = vrot.lane.b32.xlu0 %v385, 1
        %v708 = vpop.permute.xlu0 %707
        %709 = vrot.lane.b32.xlu0 %v382, 1
        %v710 = vpop.permute.xlu0 %709
        %711 = vrot.lane.b32.xlu0 %v386, 1
        %v712 = vpop.permute.xlu0 %711
        %713 = vrot.lane.b32.xlu0 %v272, 1
        %v714 = vpop.permute.xlu0 %713
        %715 = vrot.lane.b32.xlu0 %v273, 1
        %v716 = vpop.permute.xlu0 %715
        %717 = vrot.lane.b32.xlu0 %v274, 1
        %v718 = vpop.permute.xlu0 %717
        %719 = vrot.lane.b32.xlu0 %v275, 1
        %v720 = vpop.permute.xlu0 %719
        %721 = vrot.lane.b32.xlu0 %v392, 1
        %v722 = vpop.permute.xlu0 %721
        %723 = vrot.lane.b32.xlu0 %v394, 1
        %v724 = vpop.permute.xlu0 %723
        %725 = vrot.lane.b32.xlu0 %v396, 1
        %v726 = vpop.permute.xlu0 %725
        %727 = vrot.lane.b32.xlu0 %v398, 1
        %v728 = vpop.permute.xlu0 %727
        %729 = vrot.lane.b32.xlu0 %v400, 1
        %v730 = vpop.permute.xlu0 %729
        %731 = vrot.lane.b32.xlu0 %v407, 1
        %v732 = vpop.permute.xlu0 %731
        %733 = vrot.lane.b32.xlu0 %v402, 1
        %v734 = vpop.permute.xlu0 %733
        %735 = vrot.lane.b32.xlu0 %v408, 1
        %v736 = vpop.permute.xlu0 %735
        %737 = vrot.lane.b32.xlu0 %v404, 1
        %v738 = vpop.permute.xlu0 %737
        %739 = vrot.lane.b32.xlu0 %v409, 1
        %v740 = vpop.permute.xlu0 %739
        %741 = vrot.lane.b32.xlu0 %v406, 1
        %v742 = vpop.permute.xlu0 %741
        %743 = vrot.lane.b32.xlu0 %v410, 1
        %v744 = vpop.permute.xlu0 %743
        %745 = vrot.lane.b32.xlu0 %v279, 1
        %v746 = vpop.permute.xlu0 %745
        %747 = vrot.lane.b32.xlu0 %v280, 1
        %v748 = vpop.permute.xlu0 %747
        %749 = vrot.lane.b32.xlu0 %v281, 1
        %v750 = vpop.permute.xlu0 %749
        %751 = vrot.lane.b32.xlu0 %v282, 1
        %v752 = vpop.permute.xlu0 %751
        %753 = vrot.lane.b32.xlu0 %v416, 1
        %v754 = vpop.permute.xlu0 %753
        %755 = vrot.lane.b32.xlu0 %v418, 1
        %v756 = vpop.permute.xlu0 %755
        %757 = vrot.lane.b32.xlu0 %v420, 1
        %v758 = vpop.permute.xlu0 %757
        %759 = vrot.lane.b32.xlu0 %v422, 1
        %v760 = vpop.permute.xlu0 %759
        %761 = vrot.lane.b32.xlu0 %v424, 1
        %v762 = vpop.permute.xlu0 %761
        %763 = vrot.lane.b32.xlu0 %v431, 1
        %v764 = vpop.permute.xlu0 %763
        %765 = vrot.lane.b32.xlu0 %v426, 1
        %v766 = vpop.permute.xlu0 %765
        %767 = vrot.lane.b32.xlu0 %v432, 1
        %v768 = vpop.permute.xlu0 %767
        %769 = vrot.lane.b32.xlu0 %v428, 1
        %v770 = vpop.permute.xlu0 %769
        %771 = vrot.lane.b32.xlu0 %v433, 1
        %v772 = vpop.permute.xlu0 %771
        %773 = vrot.lane.b32.xlu0 %v430, 1
        %v774 = vpop.permute.xlu0 %773
        %775 = vrot.lane.b32.xlu0 %v434, 1
        %v776 = vpop.permute.xlu0 %775
        %777 = vrot.lane.b32.xlu0 %v286, 1
        %v778 = vpop.permute.xlu0 %777
        %779 = vrot.lane.b32.xlu0 %v287, 1
        %v780 = vpop.permute.xlu0 %779
        %781 = vrot.lane.b32.xlu0 %v288, 1
        %v782 = vpop.permute.xlu0 %781
        %783 = vrot.lane.b32.xlu0 %v289, 1
        %v784 = vpop.permute.xlu0 %783
        %785 = vrot.lane.b32.xlu0 %v440, 1
        %v786 = vpop.permute.xlu0 %785
        %787 = vrot.lane.b32.xlu0 %v444, 1
        %v788 = vpop.permute.xlu0 %787
        %789 = vrot.lane.b32.xlu0 %v446, 1
        %v790 = vpop.permute.xlu0 %789
        %791 = vrot.lane.b32.xlu0 %v448, 1
        %v792 = vpop.permute.xlu0 %791
        %793 = vrot.lane.b32.xlu0 %v542, 1
        %v794 = vpop.permute.xlu0 %793
        %795 = vrot.lane.b32.xlu0 %v544, 1
        %v796 = vpop.permute.xlu0 %795
        %797 = vrot.lane.b32.xlu0 %v546, 1
        %v798 = vpop.permute.xlu0 %797
        %799 = vrot.lane.b32.xlu0 %v548, 1
        %v800 = vpop.permute.xlu0 %799
        %801 = vrot.lane.b32.xlu0 %v550, 1
        %v802 = vpop.permute.xlu0 %801
        %803 = vrot.lane.b32.xlu0 %v552, 1
        %v804 = vpop.permute.xlu0 %803
        %805 = vrot.lane.b32.xlu0 %v554, 1
        %v806 = vpop.permute.xlu0 %805
        %807 = vrot.lane.b32.xlu0 %v556, 1
        %v808 = vpop.permute.xlu0 %807
        %809 = vrot.lane.b32.xlu0 %v474, 1
        %v810 = vpop.permute.xlu0 %809
        %811 = vrot.lane.b32.xlu0 %v476, 1
        %v812 = vpop.permute.xlu0 %811
        %813 = vrot.lane.b32.xlu0 %v478, 1
        %v814 = vpop.permute.xlu0 %813
        %815 = vrot.lane.b32.xlu0 %v480, 1
        %v816 = vpop.permute.xlu0 %815
        %817 = vrot.lane.b32.xlu0 %v558, 1
        %v818 = vpop.permute.xlu0 %817
        %819 = vrot.lane.b32.xlu0 %v560, 1
        %v820 = vpop.permute.xlu0 %819
        %821 = vrot.lane.b32.xlu0 %v562, 1
        %v822 = vpop.permute.xlu0 %821
        %823 = vrot.lane.b32.xlu0 %v564, 1
        %v824 = vpop.permute.xlu0 %823
        %825 = vrot.lane.b32.xlu0 %v566, 1
        %v826 = vpop.permute.xlu0 %825
        %827 = vrot.lane.b32.xlu0 %v568, 1
        %v828 = vpop.permute.xlu0 %827
        %829 = vrot.lane.b32.xlu0 %v570, 1
        %v830 = vpop.permute.xlu0 %829
        %831 = vrot.lane.b32.xlu0 %v572, 1
        %v832 = vpop.permute.xlu0 %831
        %833 = vrot.lane.b32.xlu0 %v502, 1
        %v834 = vpop.permute.xlu0 %833
        %835 = vrot.lane.b32.xlu0 %v504, 1
        %v836 = vpop.permute.xlu0 %835
        %837 = vrot.lane.b32.xlu0 %v506, 1
        %v838 = vpop.permute.xlu0 %837
        %839 = vrot.lane.b32.xlu0 %v508, 1
        %v840 = vpop.permute.xlu0 %839
        %841 = vrot.lane.b32.xlu0 %v574, 1
        %v842 = vpop.permute.xlu0 %841
        %843 = vrot.lane.b32.xlu0 %v576, 1
        %v844 = vpop.permute.xlu0 %843
        %845 = vrot.lane.b32.xlu0 %v578, 1
        %v846 = vpop.permute.xlu0 %845
        %847 = vrot.lane.b32.xlu0 %v580, 1
        %v848 = vpop.permute.xlu0 %847
        %849 = vrot.lane.b32.xlu0 %v582, 1
        %v850 = vpop.permute.xlu0 %849
        %851 = vrot.lane.b32.xlu0 %v584, 1
        %v852 = vpop.permute.xlu0 %851
        %853 = vrot.lane.b32.xlu0 %v586, 1
        %v854 = vpop.permute.xlu0 %853
        %855 = vrot.lane.b32.xlu0 %v588, 1
        %v856 = vpop.permute.xlu0 %855
        %857 = vrot.lane.b32.xlu0 %v530, 1
        %v858 = vpop.permute.xlu0 %857
        %859 = vrot.lane.b32.xlu0 %v532, 1
        %v860 = vpop.permute.xlu0 %859
        %861 = vrot.lane.b32.xlu0 %v534, 1
        %v862 = vpop.permute.xlu0 %861
        %863 = vrot.lane.b32.xlu0 %v536, 1
        %v864 = vpop.permute.xlu0 %863
        %865 = vrot.lane.b32.xlu0 %v590, 1
        %v866 = vpop.permute.xlu0 %865
        %867 = vrot.lane.b32.xlu0 %v592, 1
        %v868 = vpop.permute.xlu0 %867
        %869 = vrot.lane.b32.xlu0 %v594, 1
        %v870 = vpop.permute.xlu0 %869
        %871 = vrot.lane.b32.xlu0 %v596, 1
        %v872 = vpop.permute.xlu0 %871
        %v873 = vsel %vm468, %v459, %v618
        %v874 = vsel %vm468, %v459, %v620
        %v875 = vsel %vm468, %v459, %v622
        %v876 = vsel %vm468, %v459, %v624
        %v877 = vsel %vm468, %v634, %v636
        %v878 = vsel %vm468, %v638, %v640
        %v879 = vsel %vm468, %v642, %v644
        %v880 = vsel %vm468, %v646, %v648
        %v881 = vsel %vm468, %v459, %v650
        %v882 = vsel %vm468, %v459, %v652
        %v883 = vsel %vm468, %v459, %v654
        %v884 = vsel %vm468, %v459, %v656
        %v885 = vsel %vm468, %v666, %v668
        %v886 = vsel %vm468, %v670, %v672
        %v887 = vsel %vm468, %v674, %v676
        %v888 = vsel %vm468, %v678, %v680
        %v889 = vsel %vm468, %v459, %v682
        %v890 = vsel %vm468, %v459, %v684
        %v891 = vsel %vm468, %v459, %v686
        %v892 = vsel %vm468, %v459, %v688
        %v893 = vsel %vm468, %v698, %v700
        %v894 = vsel %vm468, %v702, %v704
        %v895 = vsel %vm468, %v706, %v708
        %v896 = vsel %vm468, %v710, %v712
        %v897 = vsel %vm468, %v459, %v714
        %v898 = vsel %vm468, %v459, %v716
        %v899 = vsel %vm468, %v459, %v718
        %v900 = vsel %vm468, %v459, %v720
        %v901 = vsel %vm468, %v730, %v732
        %v902 = vsel %vm468, %v734, %v736
        %v903 = vsel %vm468, %v738, %v740
        %v904 = vsel %vm468, %v742, %v744
        %v905 = vsel %vm468, %v459, %v746
        %v906 = vsel %vm468, %v459, %v748
        %v907 = vsel %vm468, %v459, %v750
        %v908 = vsel %vm468, %v459, %v752
        %v909 = vsel %vm468, %v762, %v764
        %v910 = vsel %vm468, %v766, %v768
        %v911 = vsel %vm468, %v770, %v772
        %v912 = vsel %vm468, %v774, %v776
        %v913 = vsel %vm468, %v459, %v778
        %v914 = vsel %vm468, %v459, %v780
        %v915 = vsel %vm468, %v459, %v782
        %v916 = vsel %vm468, %v459, %v784
        %vm1025 = vcmask 785408
        %v1027 = vsel %vm1025, %v203, 0
        %v1030 = vsel %vm1025, %v210, 0
        %v1033 = vsel %vm1025, %v217, 0
        %v1036 = vsel %vm1025, %v224, 0
        %1038 = vmatpush.msra.mxu0 %v884
        %1039 = vmatpush.msra.mxu0 %v883
        %1040 = vmatpush.msra.mxu0 %v882
        %1041 = vmatpush.msra.mxu0 %v881
        %1042 = vmatpush.msra.mxu0 %v880
        %1043 = vmatpush.msra.mxu0 %v879
        %1044 = vmatpush.msra.mxu0 %v878
        %1045 = vmatpush.msra.mxu0 %v877
        %1046 = vmatpush.msra.mxu0 %v632
        %1047 = vmatpush.msra.mxu0 %v630
        %1048 = vmatpush.msra.mxu0 %v628
        %1049 = vmatpush.msra.mxu0 %v626
        %1050 = vmatpush.msra.mxu0 %v876
        %1051 = vmatpush.msra.mxu0 %v875
        %1052 = vmatpush.msra.mxu0 %v874
        %1053 = vmatpush.msra.mxu0 %v873
        %1054 = vmatmul.f32.gmra.mxu0 %v197
        %v1055 = vpop.f32.mrf.mxu0
        %v1056 = vadd.f32 %v600, %v1055
        %1057 = vmatmul.f32.gmra.mxu0 %v204
        %v1058 = vpop.f32.mrf.mxu0
        %v1059 = vadd.f32 %v605, %v1058
        %1060 = vmatmul.f32.gmra.mxu0 %v211
        %v1061 = vpop.f32.mrf.mxu0
        %v1062 = vadd.f32 %v610, %v1061
        %1063 = vmatmul.f32.gmra.mxu0 %v218
        %v1064 = vpop.f32.mrf.mxu0
        %v1065 = vadd.f32 %v615, %v1064
        %1066 = vdwg.mxu0
        %1067 = vmatpush.msra.mxu0 %v696
        %1068 = vmatpush.msra.mxu0 %v694
        %1069 = vmatpush.msra.mxu0 %v692
        %1070 = vmatpush.msra.mxu0 %v690
        %1071 = vmatpush.msra.mxu0 %v892
        %1072 = vmatpush.msra.mxu0 %v891
        %1073 = vmatpush.msra.mxu0 %v890
        %1074 = vmatpush.msra.mxu0 %v889
        %1075 = vmatpush.msra.mxu0 %v888
        %1076 = vmatpush.msra.mxu0 %v887
        %1077 = vmatpush.msra.mxu0 %v886
        %1078 = vmatpush.msra.mxu0 %v885
        %1079 = vmatpush.msra.mxu0 %v664
        %1080 = vmatpush.msra.mxu0 %v662
        %1081 = vmatpush.msra.mxu0 %v660
        %1082 = vmatpush.msra.mxu0 %v658
        %1083 = vmatmul.f32.gmra.mxu0 %v198
        %v1084 = vpop.f32.mrf.mxu0
        %v1085 = vadd.f32 %v1056, %v1084
        %1086 = vmatmul.f32.gmra.mxu0 %v205
        %v1087 = vpop.f32.mrf.mxu0
        %v1088 = vadd.f32 %v1059, %v1087
        %1089 = vmatmul.f32.gmra.mxu0 %v212
        %v1090 = vpop.f32.mrf.mxu0
        %v1091 = vadd.f32 %v1062, %v1090
        %1092 = vmatmul.f32.gmra.mxu0 %v219
        %v1093 = vpop.f32.mrf.mxu0
        %v1094 = vadd.f32 %v1065, %v1093
        %1095 = vdwg.mxu0
        %1096 = vmatpush.msra.mxu0 %v904
        %1097 = vmatpush.msra.mxu0 %v903
        %1098 = vmatpush.msra.mxu0 %v902
        %1099 = vmatpush.msra.mxu0 %v901
        %1100 = vmatpush.msra.mxu0 %v728
        %1101 = vmatpush.msra.mxu0 %v726
        %1102 = vmatpush.msra.mxu0 %v724
        %1103 = vmatpush.msra.mxu0 %v722
        %1104 = vmatpush.msra.mxu0 %v900
        %1105 = vmatpush.msra.mxu0 %v899
        %1106 = vmatpush.msra.mxu0 %v898
        %1107 = vmatpush.msra.mxu0 %v897
        %1108 = vmatpush.msra.mxu0 %v896
        %1109 = vmatpush.msra.mxu0 %v895
        %1110 = vmatpush.msra.mxu0 %v894
        %1111 = vmatpush.msra.mxu0 %v893
        %1112 = vmatmul.f32.gmra.mxu0 %v199
        %v1113 = vpop.f32.mrf.mxu0
        %v1114 = vadd.f32 %v1085, %v1113
        %1115 = vmatmul.f32.gmra.mxu0 %v206
        %v1116 = vpop.f32.mrf.mxu0
        %v1117 = vadd.f32 %v1088, %v1116
        %1118 = vmatmul.f32.gmra.mxu0 %v213
        %v1119 = vpop.f32.mrf.mxu0
        %v1120 = vadd.f32 %v1091, %v1119
        %1121 = vmatmul.f32.gmra.mxu0 %v220
        %v1122 = vpop.f32.mrf.mxu0
        %v1123 = vadd.f32 %v1094, %v1122
        %1124 = vdwg.mxu0
        %1125 = vmatpush.msra.mxu0 %v916
        %1126 = vmatpush.msra.mxu0 %v915
        %1127 = vmatpush.msra.mxu0 %v914
        %1128 = vmatpush.msra.mxu0 %v913
        %1129 = vmatpush.msra.mxu0 %v912
        %1130 = vmatpush.msra.mxu0 %v911
        %1131 = vmatpush.msra.mxu0 %v910
        %1132 = vmatpush.msra.mxu0 %v909
        %1133 = vmatpush.msra.mxu0 %v760
        %1134 = vmatpush.msra.mxu0 %v758
        %1135 = vmatpush.msra.mxu0 %v756
        %1136 = vmatpush.msra.mxu0 %v754
        %1137 = vmatpush.msra.mxu0 %v908
        %1138 = vmatpush.msra.mxu0 %v907
        %1139 = vmatpush.msra.mxu0 %v906
        %1140 = vmatpush.msra.mxu0 %v905
        %1141 = vmatmul.f32.gmra.mxu0 %v200
        %v1142 = vpop.f32.mrf.mxu0
        %v1143 = vadd.f32 %v1114, %v1142
        %1144 = vmatmul.f32.gmra.mxu0 %v207
        %v1145 = vpop.f32.mrf.mxu0
        %v1146 = vadd.f32 %v1117, %v1145
        %1147 = vmatmul.f32.gmra.mxu0 %v214
        %v1148 = vpop.f32.mrf.mxu0
        %v1149 = vadd.f32 %v1120, %v1148
        %1150 = vmatmul.f32.gmra.mxu0 %v221
        %v1151 = vpop.f32.mrf.mxu0
        %v1152 = vadd.f32 %v1123, %v1151
        %1153 = vdwg.mxu0
        %1154 = vmatpush.msra.mxu0 %v816
        %1155 = vmatpush.msra.mxu0 %v814
        %1156 = vmatpush.msra.mxu0 %v812
        %1157 = vmatpush.msra.mxu0 %v810
        %1158 = vmatpush.msra.mxu0 %v808
        %1159 = vmatpush.msra.mxu0 %v806
        %1160 = vmatpush.msra.mxu0 %v804
        %1161 = vmatpush.msra.mxu0 %v802
        %1162 = vmatpush.msra.mxu0 %v800
        %1163 = vmatpush.msra.mxu0 %v798
        %1164 = vmatpush.msra.mxu0 %v796
        %1165 = vmatpush.msra.mxu0 %v794
        %1166 = vmatpush.msra.mxu0 %v792
        %1167 = vmatpush.msra.mxu0 %v790
        %1168 = vmatpush.msra.mxu0 %v788
        %1169 = vmatpush.msra.mxu0 %v786
        %1170 = vmatmul.f32.gmra.mxu0 %v201
        %v1171 = vpop.f32.mrf.mxu0
        %v1172 = vadd.f32 %v1143, %v1171
        %1173 = vmatmul.f32.gmra.mxu0 %v208
        %v1174 = vpop.f32.mrf.mxu0
        %v1175 = vadd.f32 %v1146, %v1174
        %1176 = vmatmul.f32.gmra.mxu0 %v215
        %v1177 = vpop.f32.mrf.mxu0
        %v1178 = vadd.f32 %v1149, %v1177
        %1179 = vmatmul.f32.gmra.mxu0 %v222
        %v1180 = vpop.f32.mrf.mxu0
        %v1181 = vadd.f32 %v1152, %v1180
        %1182 = vdwg.mxu0
        %1183 = vmatpush.msra.mxu0 %v848
        %1184 = vmatpush.msra.mxu0 %v846
        %1185 = vmatpush.msra.mxu0 %v844
        %1186 = vmatpush.msra.mxu0 %v842
        %1187 = vmatpush.msra.mxu0 %v840
        %1188 = vmatpush.msra.mxu0 %v838
        %1189 = vmatpush.msra.mxu0 %v836
        %1190 = vmatpush.msra.mxu0 %v834
        %1191 = vmatpush.msra.mxu0 %v832
        %1192 = vmatpush.msra.mxu0 %v830
        %1193 = vmatpush.msra.mxu0 %v828
        %1194 = vmatpush.msra.mxu0 %v826
        %1195 = vmatpush.msra.mxu0 %v824
        %1196 = vmatpush.msra.mxu0 %v822
        %1197 = vmatpush.msra.mxu0 %v820
        %1198 = vmatpush.msra.mxu0 %v818
        %1199 = vmatmul.f32.gmra.mxu0 %v202
        %v1200 = vpop.f32.mrf.mxu0
        %v1201 = vadd.f32 %v1172, %v1200
        %1202 = vmatmul.f32.gmra.mxu0 %v209
        %v1203 = vpop.f32.mrf.mxu0
        %v1204 = vadd.f32 %v1175, %v1203
        %1205 = vmatmul.f32.gmra.mxu0 %v216
        %v1206 = vpop.f32.mrf.mxu0
        %v1207 = vadd.f32 %v1178, %v1206
        %1208 = vmatmul.f32.gmra.mxu0 %v223
        %v1209 = vpop.f32.mrf.mxu0
        %v1210 = vadd.f32 %v1181, %v1209
        %1211 = vdwg.mxu0
        %1212 = vmatpush.msra.mxu0 0.0
        %1213 = vmatpush.msra.mxu0 0.0
        %1214 = vmatpush.msra.mxu0 0.0
        %1215 = vmatpush.msra.mxu0 0.0
        %1216 = vmatpush.msra.mxu0 %v872
        %1217 = vmatpush.msra.mxu0 %v870
        %1218 = vmatpush.msra.mxu0 %v868
        %1219 = vmatpush.msra.mxu0 %v866
        %1220 = vmatpush.msra.mxu0 %v864
        %1221 = vmatpush.msra.mxu0 %v862
        %1222 = vmatpush.msra.mxu0 %v860
        %1223 = vmatpush.msra.mxu0 %v858
        %1224 = vmatpush.msra.mxu0 %v856
        %1225 = vmatpush.msra.mxu0 %v854
        %1226 = vmatpush.msra.mxu0 %v852
        %1227 = vmatpush.msra.mxu0 %v850
        %1228 = vmatmul.f32.gmra.mxu0 %v1027
        %v1229 = vpop.f32.mrf.mxu0
        %v1230 = vadd.f32 %v1201, %v1229
        %1231 = vmatmul.f32.gmra.mxu0 %v1030
        %v1232 = vpop.f32.mrf.mxu0
        %v1233 = vadd.f32 %v1204, %v1232
        %1234 = vmatmul.f32.gmra.mxu0 %v1033
        %v1235 = vpop.f32.mrf.mxu0
        %v1236 = vadd.f32 %v1207, %v1235
        %1237 = vmatmul.f32.gmra.mxu0 %v1036
        %v1238 = vpop.f32.mrf.mxu0
        %v1239 = vadd.f32 %v1210, %v1238
        %1240 = vdwg.mxu0
        %vm1241 = vcmp.gt.f32.partialorder %v1230, 0.0
        %vm1242 = vcmp.gt.f32.partialorder %v1233, 0.0
        %vm1243 = vcmp.gt.f32.partialorder %v1236, 0.0
        %vm1244 = vcmp.gt.f32.partialorder %v1239, 0.0
        %v1245 = vmul.f32 %v1230, 0.1
        %v1246 = vmul.f32 %v1233, 0.1
        %v1247 = vmul.f32 %v1236, 0.1
        %v1248 = vmul.f32 %v1239, 0.1
        %v1249 = vsel %vm1241, %v1230, %v1245
        %v1250 = vsel %vm1242, %v1233, %v1246
        %v1251 = vsel %vm1243, %v1236, %v1247
        %v1252 = vsel %vm1244, %v1239, %v1248
        %s1253 = scalar_select %p243, 1, 0
        %v1254 = vstv %s1253
        %vm1255 = vcmp.eq.s32.totalorder %v1254, 1
        %vm1256 = vmand %vm1255, %vm231
        %v1257 = vsel %vm1256, %v1249, 0.0
        %v1258 = vsel %vm1256, %v1250, 0.0
        %v1259 = vsel %vm1256, %v1251, 0.0
        %v1260 = vsel %vm1256, %v1252, 0.0
        %s1261 = smul.u32 %s233, 32
        %s1262 = scalar_lea.vmem %s194, %s1261
        %1263 = vst [vmem:[%s1262] sm:$0xff] %v1257
        %1264 = vst [vmem:[%s1262 + $0x8] sm:$0xff] %v1258
        %1265 = vst [vmem:[%s1262 + $0x10] sm:$0xff] %v1259
        %1266 = vst [vmem:[%s1262 + $0x18] sm:$0xff] %v1260
      $region37: #{discriminator_r_forward.9} parent=31 // loop_footer
        %s237 = sadd.s32 1, %s233
      $region38: #{discriminator_r_forward.9} parent=31 // loop_footer_branch
        %232 = sbr.rel target = $region34
      $region39: #{discriminator_r_forward.9} parent=31 // loop_exit
        _
      %s1267 = smul.u32 11, %s19
      %p1268 = scmp.lt.s32.totalorder %s18, 1
      %s1269 = scalar_select %p1268, %s18, 1
      %p1270 = scmp.lt.s32.totalorder %s1267, 10
      %s1271 = scalar_select %p1270, %s1267, 10
      %s1272 = smul.addr %s1271, 4
      %s1273 = smul.addr %s1269, 44
      %s1274 = sadd.s32 %s1272, %s1273
      %s1275 = smul.addr %s1274, 8
      %s1276 = scalar_lea.vmem %s3, %s1275
      // Predicated region
      $region40: #{discriminator_r_forward.9} parent=31 // pred_check
        %p1277 = pneg %p114
      $region41: #{discriminator_r_forward.9} parent=31 // pred_check_branch
        %1279 = sbr.rel (%p1277) target = $region43
      $region42: #{discriminator_r_forward.9} parent=31 // pred_region
        %s1280 = smul.u32 11, %s19
      $region43: #{discriminator_r_forward.9} parent=31 // pred_fallthru
        _
    $region32: #{discriminator_r_forward.9} parent=5 // pred_fallthru
      _
    %p1281 = scmp.le.s32.totalorder 2, %s9
    // Predicated region
    $region44: #{discriminator_r_forward.9} parent=5 // pred_check
      %p1282 = pneg %p1281
    $region45: #{discriminator_r_forward.9} parent=5 // pred_check_branch
      %1284 = sbr.rel (%p1282) target = $region47
    $region46: #{discriminator_r_forward.9} parent=5 // pred_region
      %s1285 = ssub.s32 %s9, 2
      // Predicated region
      $region48: #{discriminator_r_forward.9} parent=46 // pred_check
        %p1286 = pneg %p120
      $region49: #{discriminator_r_forward.9} parent=46 // pred_check_branch
        %1288 = sbr.rel (%p1286) target = $region51
      $region50: #{discriminator_r_forward.9} parent=46 // pred_region
        %s1289 = smul.u32 11, %s21
        %p1290 = scmp.lt.s32.totalorder %s20, 1
        %s1291 = scalar_select %p1290, %s20, 1
        %p1292 = scmp.lt.s32.totalorder %s1289, 10
        %s1293 = scalar_select %p1292, %s1289, 10
        %s1294 = smul.addr %s1293, 4
        %s1295 = smul.addr %s1291, 44
        %s1296 = sadd.s32 %s1294, %s1295
        %s1297 = smul.addr %s1296, 8
        %s1298 = scalar_lea.vmem %s3, %s1297
      $region51: #{discriminator_r_forward.9} parent=46 // pred_fallthru
        _
    $region47: #{discriminator_r_forward.9} parent=5 // pred_fallthru
      _
  $region6: #{discriminator_r_forward.9} parent=0 // loop_footer
    %s13 = sadd.s32 1, %s9
  $region7: #{discriminator_r_forward.9} parent=0 // loop_footer_branch
    %8 = sbr.rel target = $region3
  $region8: #{discriminator_r_forward.9} parent=0 // loop_exit
    _

// kernel: discriminator_r_forward.10
$region0: #{discriminator_r_forward.10}
  #allocation0 [shape = 'u32[]', space=smem, size = 0x4, offset = 0x4, fixed_abs, tag = 'smem constant byte address 0x4 - core index']
  #allocation1 [shape = 'u32[72,128]{1,0:T(1,128)}', space=vmem, size = 0x9000, scoped, tag = 'internal scratch']
  %s0 = inlined_call_operand.vmem [shape: f32[2,11,32,128], index: 0, kind: input, shape index: {}]
  %s1 = inlined_call_operand.vmem [shape: f32[32,864], index: 1, kind: input, shape index: {}]
  %s2 = inlined_call_operand.vmem [shape: f32[32,1], index: 2, kind: input, shape index: {}]
  %s3 = inlined_call_operand.vmem [shape: f32[2,9,32,128], index: 3, kind: output, shape index: {}]
  %s4 = sld [smem:[#allocation0]]
  $region52: #{discriminator_r_forward.10} parent=0
    _
  %s6 = ssub.s32 1, %s4
  %s7 = scalar_select 0, %s6, %s4
  loop: start=0, step=1, limit=4
  $region2: #{discriminator_r_forward.10} parent=0 // loop_pre_header
    _
  $region3: #{discriminator_r_forward.10} parent=0 // loop_header
    %s9 = sphi 0, %s13
    %p10 = scmp.ge.s32.totalorder %s9, 4
    %s16 = sphi 0, %s28
    %s17 = sphi 0, %s24
    %s18 = sphi 0, %s16
    %s19 = sphi 0, %s17
    %s20 = sphi 0, %s18
    %s21 = sphi 0, %s19
    %s31 = sphi 0, %s33
    %s34 = sphi 0, %s31
    %s35 = sphi 0, %s34
    %s51 = sphi 0, %s35
    %s55 = sphi 0, %s55
    %s57 = sphi 0, %s55
    %s58 = sphi 0, %s57
    %s72 = sphi 0, %s58
    %s76 = sphi 0, %s76
    %s78 = sphi 0, %s76
    %s79 = sphi 0, %s78
    %s93 = sphi 0, %s79
    %s101 = sphi 0, %s103
    %s104 = sphi 0, %s101
    %s105 = sphi 0, %s104
    %s121 = sphi 0, %s105
  $region4: #{discriminator_r_forward.10} parent=0 // loop_header_branch
    %12 = sbr.rel (%p10) target = $region8
  $region5: #{discriminator_r_forward.10} parent=0 // loop_body
    %s14 = ssub.s32 %s9, 1
    %s15 = ssub.s32 %s9, 2
    %s22 = sadd.s32 1, %s17
    %p23 = scmp.ge.s32.totalorder %s22, 1
    %s24 = scalar_select %p23, 0, %s22
    %s25 = sadd.s32 1, %s16
    %s26 = scalar_select %p23, %s25, %s16
    %p27 = scmp.ge.s32.totalorder %s26, 2
    %s28 = scalar_select %p27, 0, %s26
    %s29 = ssub.s32 %s16, %s28
    %p30 = scmp.eq.s32.totalorder %s29, 0
    %s32 = sadd.s32 %s31, 1
    %s33 = scalar_select %p30, %s31, %s32
    %p36 = pneg %p30
    %p37 = scmp.eq.s32.totalorder %s9, 1
    %p38 = por %p36, %p37
    %p39 = scmp.ne.s32.totalorder %s31, %s34
    %p40 = scmp.eq.s32.totalorder %s9, 0
    %p41 = por %p39, %p40
    %p42 = scmp.ne.s32.totalorder %s31, %s34
    %p43 = scmp.eq.s32.totalorder %s14, 1
    %p44 = por %p42, %p43
    %p45 = scmp.ne.s32.totalorder %s34, %s35
    %p46 = scmp.eq.s32.totalorder %s14, 0
    %p47 = por %p45, %p46
    %p48 = scmp.ne.s32.totalorder %s34, %s35
    %p49 = scmp.eq.s32.totalorder %s15, 1
    %p50 = por %p48, %p49
    %p52 = scmp.ne.s32.totalorder %s35, %s51
    %p53 = scmp.eq.s32.totalorder %s15, 0
    %p54 = por %p52, %p53
    %s56 = sadd.s32 %s55, 1
    %p59 = scmp.eq.s32.totalorder %s9, 1
    %p60 = scmp.ne.s32.totalorder %s55, %s57
    %p61 = scmp.eq.s32.totalorder %s9, 0
    %p62 = por %p60, %p61
    %p63 = scmp.ne.s32.totalorder %s55, %s57
    %p64 = scmp.eq.s32.totalorder %s14, 1
    %p65 = por %p63, %p64
    %p66 = scmp.ne.s32.totalorder %s57, %s58
    %p67 = scmp.eq.s32.totalorder %s14, 0
    %p68 = por %p66, %p67
    %p69 = scmp.ne.s32.totalorder %s57, %s58
    %p70 = scmp.eq.s32.totalorder %s15, 1
    %p71 = por %p69, %p70
    %p73 = scmp.ne.s32.totalorder %s58, %s72
    %p74 = scmp.eq.s32.totalorder %s15, 0
    %p75 = por %p73, %p74
    %s77 = sadd.s32 %s76, 1
    %p80 = scmp.eq.s32.totalorder %s9, 1
    %p81 = scmp.ne.s32.totalorder %s76, %s78
    %p82 = scmp.eq.s32.totalorder %s9, 0
    %p83 = por %p81, %p82
    %p84 = scmp.ne.s32.totalorder %s76, %s78
    %p85 = scmp.eq.s32.totalorder %s14, 1
    %p86 = por %p84, %p85
    %p87 = scmp.ne.s32.totalorder %s78, %s79
    %p88 = scmp.eq.s32.totalorder %s14, 0
    %p89 = por %p87, %p88
    %p90 = scmp.ne.s32.totalorder %s78, %s79
    %p91 = scmp.eq.s32.totalorder %s15, 1
    %p92 = por %p90, %p91
    %p94 = scmp.ne.s32.totalorder %s79, %s93
    %p95 = scmp.eq.s32.totalorder %s15, 0
    %p96 = por %p94, %p95
    %s97 = ssub.s32 %s16, %s28
    %s98 = ssub.s32 %s17, %s24
    %s99 = sor.u32 %s97, %s98
    %p100 = scmp.eq.s32.totalorder %s99, 0
    %s102 = sadd.s32 %s101, 1
    %s103 = scalar_select %p100, %s101, %s102
    %p106 = pneg %p100
    %p107 = scmp.eq.s32.totalorder %s9, 1
    %p108 = por %p106, %p107
    %p109 = scmp.ne.s32.totalorder %s101, %s104
    %p110 = scmp.eq.s32.totalorder %s9, 0
    %p111 = por %p109, %p110
    %p112 = scmp.ne.s32.totalorder %s101, %s104
    %p113 = scmp.eq.s32.totalorder %s14, 1
    %p114 = por %p112, %p113
    %p115 = scmp.ne.s32.totalorder %s104, %s105
    %p116 = scmp.eq.s32.totalorder %s14, 0
    %p117 = por %p115, %p116
    %p118 = scmp.ne.s32.totalorder %s104, %s105
    %p119 = scmp.eq.s32.totalorder %s15, 1
    %p120 = por %p118, %p119
    %p122 = scmp.ne.s32.totalorder %s105, %s121
    %p123 = scmp.eq.s32.totalorder %s15, 0
    %p124 = por %p122, %p123
    %p125 = scmp.le.s32.totalorder 1, %s9
    %p126 = scmp.lt.s32.totalorder %s9, 3
    %p127 = pnand %p125, %p126
    %p128 = pneg %p127
    // Predicated region
    $region9: #{discriminator_r_forward.10} parent=5 // pred_check
      _
    $region10: #{discriminator_r_forward.10} parent=5 // pred_check_branch
      %130 = sbr.rel (%p127) target = $region12
    $region11: #{discriminator_r_forward.10} parent=5 // pred_region
      %s131 = ssub.s32 %s9, 1
      // Predicated region
      $region13: #{discriminator_r_forward.10} parent=11 // pred_check
        %p132 = pneg %p68
      $region14: #{discriminator_r_forward.10} parent=11 // pred_check_branch
        %134 = sbr.rel (%p132) target = $region16
      $region15: #{discriminator_r_forward.10} parent=11 // pred_region
        _
      $region16: #{discriminator_r_forward.10} parent=11 // pred_fallthru
        _
      // Predicated region
      $region17: #{discriminator_r_forward.10} parent=11 // pred_check
        %p135 = pneg %p89
      $region18: #{discriminator_r_forward.10} parent=11 // pred_check_branch
        %137 = sbr.rel (%p135) target = $region20
      $region19: #{discriminator_r_forward.10} parent=11 // pred_region
        _
      $region20: #{discriminator_r_forward.10} parent=11 // pred_fallthru
        _
    $region12: #{discriminator_r_forward.10} parent=5 // pred_fallthru
      _
    %p138 = scmp.lt.s32.totalorder %s9, 2
    // Predicated region
    $region21: #{discriminator_r_forward.10} parent=5 // pred_check
      %p139 = pneg %p138
    $region22: #{discriminator_r_forward.10} parent=5 // pred_check_branch
      %141 = sbr.rel (%p139) target = $region24
    $region23: #{discriminator_r_forward.10} parent=5 // pred_region
      // Predicated region
      $region25: #{discriminator_r_forward.10} parent=23 // pred_check
        %p142 = pneg %p41
      $region26: #{discriminator_r_forward.10} parent=23 // pred_check_branch
        %144 = sbr.rel (%p142) target = $region28
      $region27: #{discriminator_r_forward.10} parent=23 // pred_region
        %p145 = scmp.lt.s32.totalorder %s16, 1
        %s146 = scalar_select %p145, %s16, 1
        %s147 = smul.addr %s146, 44
        %s148 = smul.addr %s147, 8
        %s149 = scalar_lea.vmem %s0, %s148
      $region28: #{discriminator_r_forward.10} parent=23 // pred_fallthru
        _
    $region24: #{discriminator_r_forward.10} parent=5 // pred_fallthru
      _
    %p150 = scmp.le.s32.totalorder 1, %s9
    %p151 = scmp.lt.s32.totalorder %s9, 3
    %p152 = pnand %p150, %p151
    %p153 = pneg %p152
    // Predicated region
    $region29: #{discriminator_r_forward.10} parent=5 // pred_check
      _
    $region30: #{discriminator_r_forward.10} parent=5 // pred_check_branch
      %155 = sbr.rel (%p152) target = $region32
    $region31: #{discriminator_r_forward.10} parent=5 // pred_region
      %s156 = ssub.s32 %s9, 1
      %p157 = scmp.lt.s32.totalorder %s18, 1
      %s158 = scalar_select %p157, %s18, 1
      %s159 = smul.addr %s158, 44
      %s160 = smul.addr %s159, 8
      %s161 = scalar_lea.vmem %s0, %s160
      %p162 = pneg %p47
      %p163 = pneg %p44
      %p164 = pneg %p68
      %p165 = pneg %p65
      %p166 = pneg %p89
      %p167 = pneg %p86
      %p168 = pneg %p117
      %p169 = pneg %p114
      %s170 = smul.u32 9, %s19
      %p171 = scmp.lt.s32.totalorder %s18, 1
      %s172 = scalar_select %p171, %s18, 1
      %p173 = scmp.lt.s32.totalorder %s170, 8
      %s174 = scalar_select %p173, %s170, 8
      %s175 = smul.addr %s174, 4
      %s176 = smul.addr %s172, 36
      %s177 = sadd.s32 %s175, %s176
      %s178 = smul.addr %s177, 8
      %s179 = scalar_lea.vmem %s3, %s178
      %p180 = scmp.lt.s32.totalorder %s18, 1
      %s181 = scalar_select %p180, %s18, 1
      %s182 = smul.addr %s181, 44
      %s183 = smul.addr %s182, 8
      %s184 = scalar_lea.vmem %s0, %s183
      %s185 = smul.u32 9, %s19
      %p186 = scmp.lt.s32.totalorder %s18, 1
      %s187 = scalar_select %p186, %s18, 1
      %p188 = scmp.lt.s32.totalorder %s185, 8
      %s189 = scalar_select %p188, %s185, 8
      %s190 = smul.addr %s189, 4
      %s191 = smul.addr %s187, 36
      %s192 = sadd.s32 %s190, %s191
      %s193 = smul.addr %s192, 8
      %s194 = scalar_lea.vmem %s3, %s193
      %s195 = smul.u32 9, %s19
      %s196 = smul.u32 %s19, 9
      %v197 = vld [vmem:[%s1] sm:$0xff]
      %v198 = vld [vmem:[%s1 + $0x8] sm:$0xff]
      %v199 = vld [vmem:[%s1 + $0x10] sm:$0xff]
      %v200 = vld [vmem:[%s1 + $0x18] sm:$0xff]
      %v201 = vld [vmem:[%s1 + $0x20] sm:$0xff]
      %v202 = vld [vmem:[%s1 + $0x28] sm:$0xff]
      %v203 = vld [vmem:[%s1 + $0x30] sm:$0xff]
      %v204 = vld [vmem:[%s1 + $0x38] sm:$0xff]
      %v205 = vld [vmem:[%s1 + $0x40] sm:$0xff]
      %v206 = vld [vmem:[%s1 + $0x48] sm:$0xff]
      %v207 = vld [vmem:[%s1 + $0x50] sm:$0xff]
      %v208 = vld [vmem:[%s1 + $0x58] sm:$0xff]
      %v209 = vld [vmem:[%s1 + $0x60] sm:$0xff]
      %v210 = vld [vmem:[%s1 + $0x68] sm:$0xff]
      %v211 = vld [vmem:[%s1 + $0x70] sm:$0xff]
      %v212 = vld [vmem:[%s1 + $0x78] sm:$0xff]
      %v213 = vld [vmem:[%s1 + $0x80] sm:$0xff]
      %v214 = vld [vmem:[%s1 + $0x88] sm:$0xff]
      %v215 = vld [vmem:[%s1 + $0x90] sm:$0xff]
      %v216 = vld [vmem:[%s1 + $0x98] sm:$0xff]
      %v217 = vld [vmem:[%s1 + $0xa0] sm:$0xff]
      %v218 = vld [vmem:[%s1 + $0xa8] sm:$0xff]
      %v219 = vld [vmem:[%s1 + $0xb0] sm:$0xff]
      %v220 = vld [vmem:[%s1 + $0xb8] sm:$0xff]
      %v221 = vld [vmem:[%s1 + $0xc0] sm:$0xff]
      %v222 = vld [vmem:[%s1 + $0xc8] sm:$0xff]
      %v223 = vld [vmem:[%s1 + $0xd0] sm:$0xff]
      %v224 = vld [vmem:[%s1 + $0xd8] sm:$0xff]
      %v225 = vld [vmem:[%s2] sm:$0xff]
      %v226 = vld [vmem:[%s2 + $0x8] sm:$0xff]
      %v227 = vld [vmem:[%s2 + $0x10] sm:$0xff]
      %v228 = vld [vmem:[%s2 + $0x18] sm:$0xff]
      %v229 = vlaneseq
      %v230 = vand.u32 %v229, 127
      %vm231 = vcmp.lt.s32.totalorder %v230, 17
      loop: start=0, step=1, limit=9
      $region33: #{discriminator_r_forward.10} parent=31 // loop_pre_header
        _
      $region34: #{discriminator_r_forward.10} parent=31 // loop_header
        %s233 = sphi 0, %s237
        %p234 = scmp.ge.s32.totalorder %s233, 9
      $region35: #{discriminator_r_forward.10} parent=31 // loop_header_branch
        %236 = sbr.rel (%p234) target = $region39
      $region36: #{discriminator_r_forward.10} parent=31 // loop_body
        %s238 = sadd.s32 %s196, %s233
        %s239 = ssub.s32 %s238, 4
        %p240 = scmp.ge.s32.totalorder %s239, 0
        %p241 = scmp.lt.s32.totalorder %s239, 2
        %p242 = pnand %p240, %p241
        %p243 = pneg %p242
        %s244 = smul.u32 %s239, 2
        %p245 = scmp.gt.s32.totalorder %s244, 0
        %s246 = scalar_select %p245, %s244, 0
        %p247 = scmp.lt.s32.totalorder %s246, 2
        %s248 = scalar_select %p247, %s246, 2
        %s249 = smul.u32 %s248, 32
        %s250 = scalar_lea.vmem %s184, %s249
        %v251 = vld [vmem:[%s250] sm:$0xff]
        %v252 = vld [vmem:[%s250 + $0x8] sm:$0xff]
        %v253 = vld [vmem:[%s250 + $0x10] sm:$0xff]
        %v254 = vld [vmem:[%s250 + $0x18] sm:$0xff]
        %s255 = sadd.s32 %s248, 1
        %s256 = smul.u32 %s255, 32
        %s257 = scalar_lea.vmem %s184, %s256
        %v258 = vld [vmem:[%s257] sm:$0xff]
        %v259 = vld [vmem:[%s257 + $0x8] sm:$0xff]
        %v260 = vld [vmem:[%s257 + $0x10] sm:$0xff]
        %v261 = vld [vmem:[%s257 + $0x18] sm:$0xff]
        %s262 = sadd.s32 %s248, 2
        %s263 = smul.u32 %s262, 32
        %s264 = scalar_lea.vmem %s184, %s263
        %v265 = vld [vmem:[%s264] sm:$0xff]
        %v266 = vld [vmem:[%s264 + $0x8] sm:$0xff]
        %v267 = vld [vmem:[%s264 + $0x10] sm:$0xff]
        %v268 = vld [vmem:[%s264 + $0x18] sm:$0xff]
        %s269 = sadd.s32 %s248, 3
        %s270 = smul.u32 %s269, 32
        %s271 = scalar_lea.vmem %s184, %s270
        %v272 = vld [vmem:[%s271] sm:$0xff]
        %v273 = vld [vmem:[%s271 + $0x8] sm:$0xff]
        %v274 = vld [vmem:[%s271 + $0x10] sm:$0xff]
        %v275 = vld [vmem:[%s271 + $0x18] sm:$0xff]
        %s276 = sadd.s32 %s248, 4
        %s277 = smul.u32 %s276, 32
        %s278 = scalar_lea.vmem %s184, %s277
        %v279 = vld [vmem:[%s278] sm:$0xff]
        %v280 = vld [vmem:[%s278 + $0x8] sm:$0xff]
        %v281 = vld [vmem:[%s278 + $0x10] sm:$0xff]
        %v282 = vld [vmem:[%s278 + $0x18] sm:$0xff]
        %s283 = sadd.s32 %s248, 5
        %s284 = smul.u32 %s283, 32
        %s285 = scalar_lea.vmem %s184, %s284
        %v286 = vld [vmem:[%s285] sm:$0xff]
        %v287 = vld [vmem:[%s285 + $0x8] sm:$0xff]
        %v288 = vld [vmem:[%s285 + $0x10] sm:$0xff]
        %v289 = vld [vmem:[%s285 + $0x18] sm:$0xff]
        %s290 = sadd.s32 %s248, 6
        %s291 = smul.u32 %s290, 32
        %s292 = scalar_lea.vmem %s184, %s291
        %v293 = vld [vmem:[%s292] sm:$0xff]
        %v294 = vld [vmem:[%s292 + $0x8] sm:$0xff]
        %v295 = vld [vmem:[%s292 + $0x10] sm:$0xff]
        %v296 = vld [vmem:[%s292 + $0x18] sm:$0xff]
        %s297 = sadd.s32 %s248, 7
        %s298 = smul.u32 %s297, 32
        %s299 = scalar_lea.vmem %s184, %s298
        %v300 = vld [vmem:[%s299] sm:$0xff]
        %v301 = vld [vmem:[%s299 + $0x8] sm:$0xff]
        %v302 = vld [vmem:[%s299 + $0x10] sm:$0xff]
        %v303 = vld [vmem:[%s299 + $0x18] sm:$0xff]
        %s304 = sadd.s32 %s248, 8
        %s305 = smul.u32 %s304, 32
        %s306 = scalar_lea.vmem %s184, %s305
        %v307 = vld [vmem:[%s306] sm:$0xff]
        %v308 = vld [vmem:[%s306 + $0x8] sm:$0xff]
        %v309 = vld [vmem:[%s306 + $0x10] sm:$0xff]
        %v310 = vld [vmem:[%s306 + $0x18] sm:$0xff]
        %315 = vrot.lane.b32.xlu0 %v251, 127
        %v316 = vpop.permute.xlu0 %315
        %317 = vrot.lane.b32.xlu0 %v252, 127
        %v318 = vpop.permute.xlu0 %317
        %319 = vrot.lane.b32.xlu0 %v253, 127
        %v320 = vpop.permute.xlu0 %319
        %321 = vrot.lane.b32.xlu0 %v254, 127
        %v322 = vpop.permute.xlu0 %321
        %324 = vrot.lane.b32.xlu0 %v251, 126
        %v325 = vpop.permute.xlu0 %324
        %326 = vrot.lane.b32.xlu0 0.0, 126
        %v327 = vpop.permute.xlu0 %326
        %328 = vrot.lane.b32.xlu0 %v252, 126
        %v329 = vpop.permute.xlu0 %328
        %330 = vrot.lane.b32.xlu0 %v253, 126
        %v331 = vpop.permute.xlu0 %330
        %332 = vrot.lane.b32.xlu0 %v254, 126
        %v333 = vpop.permute.xlu0 %332
        %vm334 = vcmask 1031168
        %v335 = vsel %vm334, %v325, %v327
        %v336 = vsel %vm334, %v329, %v327
        %v337 = vsel %vm334, %v331, %v327
        %v338 = vsel %vm334, %v333, %v327
        %343 = vrot.lane.b32.xlu0 %v258, 127
        %v344 = vpop.permute.xlu0 %343
        %345 = vrot.lane.b32.xlu0 %v259, 127
        %v346 = vpop.permute.xlu0 %345
        %347 = vrot.lane.b32.xlu0 %v260, 127
        %v348 = vpop.permute.xlu0 %347
        %349 = vrot.lane.b32.xlu0 %v261, 127
        %v350 = vpop.permute.xlu0 %349
        %351 = vrot.lane.b32.xlu0 %v258, 126
        %v352 = vpop.permute.xlu0 %351
        %353 = vrot.lane.b32.xlu0 %v259, 126
        %v354 = vpop.permute.xlu0 %353
        %355 = vrot.lane.b32.xlu0 %v260, 126
        %v356 = vpop.permute.xlu0 %355
        %357 = vrot.lane.b32.xlu0 %v261, 126
        %v358 = vpop.permute.xlu0 %357
        %v359 = vsel %vm334, %v352, %v327
        %v360 = vsel %vm334, %v354, %v327
        %v361 = vsel %vm334, %v356, %v327
        %v362 = vsel %vm334, %v358, %v327
        %367 = vrot.lane.b32.xlu0 %v265, 127
        %v368 = vpop.permute.xlu0 %367
        %369 = vrot.lane.b32.xlu0 %v266, 127
        %v370 = vpop.permute.xlu0 %369
        %371 = vrot.lane.b32.xlu0 %v267, 127
        %v372 = vpop.permute.xlu0 %371
        %373 = vrot.lane.b32.xlu0 %v268, 127
        %v374 = vpop.permute.xlu0 %373
        %375 = vrot.lane.b32.xlu0 %v265, 126
        %v376 = vpop.permute.xlu0 %375
        %377 = vrot.lane.b32.xlu0 %v266, 126
        %v378 = vpop.permute.xlu0 %377
        %379 = vrot.lane.b32.xlu0 %v267, 126
        %v380 = vpop.permute.xlu0 %379
        %381 = vrot.lane.b32.xlu0 %v268, 126
        %v382 = vpop.permute.xlu0 %381
        %v383 = vsel %vm334, %v376, %v327
        %v384 = vsel %vm334, %v378, %v327
        %v385 = vsel %vm334, %v380, %v327
        %v386 = vsel %vm334, %v382, %v327
        %391 = vrot.lane.b32.xlu0 %v272, 127
        %v392 = vpop.permute.xlu0 %391
        %393 = vrot.lane.b32.xlu0 %v273, 127
        %v394 = vpop.permute.xlu0 %393
        %395 = vrot.lane.b32.xlu0 %v274, 127
        %v396 = vpop.permute.xlu0 %395
        %397 = vrot.lane.b32.xlu0 %v275, 127
        %v398 = vpop.permute.xlu0 %397
        %399 = vrot.lane.b32.xlu0 %v272, 126
        %v400 = vpop.permute.xlu0 %399
        %401 = vrot.lane.b32.xlu0 %v273, 126
        %v402 = vpop.permute.xlu0 %401
        %403 = vrot.lane.b32.xlu0 %v274, 126
        %v404 = vpop.permute.xlu0 %403
        %405 = vrot.lane.b32.xlu0 %v275, 126
        %v406 = vpop.permute.xlu0 %405
        %v407 = vsel %vm334, %v400, %v327
        %v408 = vsel %vm334, %v402, %v327
        %v409 = vsel %vm334, %v404, %v327
        %v410 = vsel %vm334, %v406, %v327
        %415 = vrot.lane.b32.xlu0 %v279, 127
        %v416 = vpop.permute.xlu0 %415
        %417 = vrot.lane.b32.xlu0 %v280, 127
        %v418 = vpop.permute.xlu0 %417
        %419 = vrot.lane.b32.xlu0 %v281, 127
        %v420 = vpop.permute.xlu0 %419
        %421 = vrot.lane.b32.xlu0 %v282, 127
        %v422 = vpop.permute.xlu0 %421
        %423 = vrot.lane.b32.xlu0 %v279, 126
        %v424 = vpop.permute.xlu0 %423
        %425 = vrot.lane.b32.xlu0 %v280, 126
        %v426 = vpop.permute.xlu0 %425
        %427 = vrot.lane.b32.xlu0 %v281, 126
        %v428 = vpop.permute.xlu0 %427
        %429 = vrot.lane.b32.xlu0 %v282, 126
        %v430 = vpop.permute.xlu0 %429
        %v431 = vsel %vm334, %v424, %v327
        %v432 = vsel %vm334, %v426, %v327
        %v433 = vsel %vm334, %v428, %v327
        %v434 = vsel %vm334, %v430, %v327
        %439 = vrot.lane.b32.xlu0 %v286, 127
        %v440 = vpop.permute.xlu0 %439
        %441 = vrot.lane.b32.xlu0 0.0, 127
        %v442 = vpop.permute.xlu0 %441
        %443 = vrot.lane.b32.xlu0 %v287, 127
        %v444 = vpop.permute.xlu0 %443
        %445 = vrot.lane.b32.xlu0 %v288, 127
        %v446 = vpop.permute.xlu0 %445
        %447 = vrot.lane.b32.xlu0 %v289, 127
        %v448 = vpop.permute.xlu0 %447
        %vm449 = vcmask 1039360
        %v450 = vsel %vm449, %v440, %v442
        %v451 = vsel %vm449, %v444, %v442
        %v452 = vsel %vm449, %v446, %v442
        %v453 = vsel %vm449, %v448, %v442
        %458 = vrot.lane.b32.xlu0 0.0, 1
        %v459 = vpop.permute.xlu0 %458
        %460 = vrot.lane.b32.xlu0 %v293, 1
        %v461 = vpop.permute.xlu0 %460
        %462 = vrot.lane.b32.xlu0 %v294, 1
        %v463 = vpop.permute.xlu0 %462
        %464 = vrot.lane.b32.xlu0 %v295, 1
        %v465 = vpop.permute.xlu0 %464
        %466 = vrot.lane.b32.xlu0 %v296, 1
        %v467 = vpop.permute.xlu0 %466
        %vm468 = vcmask 7168
        %v469 = vsel %vm468, %v459, %v461
        %v470 = vsel %vm468, %v459, %v463
        %v471 = vsel %vm468, %v459, %v465
        %v472 = vsel %vm468, %v459, %v467
        %473 = vrot.lane.b32.xlu0 %v293, 127
        %v474 = vpop.permute.xlu0 %473
        %475 = vrot.lane.b32.xlu0 %v294, 127
        %v476 = vpop.permute.xlu0 %475
        %477 = vrot.lane.b32.xlu0 %v295, 127
        %v478 = vpop.permute.xlu0 %477
        %479 = vrot.lane.b32.xlu0 %v296, 127
        %v480 = vpop.permute.xlu0 %479
        %v481 = vsel %vm449, %v474, %v442
        %v482 = vsel %vm449, %v476, %v442
        %v483 = vsel %vm449, %v478, %v442
        %v484 = vsel %vm449, %v480, %v442
        %489 = vrot.lane.b32.xlu0 %v300, 1
        %v490 = vpop.permute.xlu0 %489
        %491 = vrot.lane.b32.xlu0 %v301, 1
        %v492 = vpop.permute.xlu0 %491
        %493 = vrot.lane.b32.xlu0 %v302, 1
        %v494 = vpop.permute.xlu0 %493
        %495 = vrot.lane.b32.xlu0 %v303, 1
        %v496 = vpop.permute.xlu0 %495
        %v497 = vsel %vm468, %v459, %v490
        %v498 = vsel %vm468, %v459, %v492
        %v499 = vsel %vm468, %v459, %v494
        %v500 = vsel %vm468, %v459, %v496
        %501 = vrot.lane.b32.xlu0 %v300, 127
        %v502 = vpop.permute.xlu0 %501
        %503 = vrot.lane.b32.xlu0 %v301, 127
        %v504 = vpop.permute.xlu0 %503
        %505 = vrot.lane.b32.xlu0 %v302, 127
        %v506 = vpop.permute.xlu0 %505
        %507 = vrot.lane.b32.xlu0 %v303, 127
        %v508 = vpop.permute.xlu0 %507
        %v509 = vsel %vm449, %v502, %v442
        %v510 = vsel %vm449, %v504, %v442
        %v511 = vsel %vm449, %v506, %v442
        %v512 = vsel %vm449, %v508, %v442
        %517 = vrot.lane.b32.xlu0 %v307, 1
        %v518 = vpop.permute.xlu0 %517
        %519 = vrot.lane.b32.xlu0 %v308, 1
        %v520 = vpop.permute.xlu0 %519
        %521 = vrot.lane.b32.xlu0 %v309, 1
        %v522 = vpop.permute.xlu0 %521
        %523 = vrot.lane.b32.xlu0 %v310, 1
        %v524 = vpop.permute.xlu0 %523
        %v525 = vsel %vm468, %v459, %v518
        %v526 = vsel %vm468, %v459, %v520
        %v527 = vsel %vm468, %v459, %v522
        %v528 = vsel %vm468, %v459, %v524
        %529 = vrot.lane.b32.xlu0 %v307, 127
        %v530 = vpop.permute.xlu0 %529
        %531 = vrot.lane.b32.xlu0 %v308, 127
        %v532 = vpop.permute.xlu0 %531
        %533 = vrot.lane.b32.xlu0 %v309, 127
        %v534 = vpop.permute.xlu0 %533
        %535 = vrot.lane.b32.xlu0 %v310, 127
        %v536 = vpop.permute.xlu0 %535
        %v537 = vsel %vm449, %v530, %v442
        %v538 = vsel %vm449, %v532, %v442
        %v539 = vsel %vm449, %v534, %v442
        %v540 = vsel %vm449, %v536, %v442
        %541 = vrot.lane.b32.xlu0 %v450, 127
        %v542 = vpop.permute.xlu0 %541
        %543 = vrot.lane.b32.xlu0 %v451, 127
        %v544 = vpop.permute.xlu0 %543
        %545 = vrot.lane.b32.xlu0 %v452, 127
        %v546 = vpop.permute.xlu0 %545
        %547 = vrot.lane.b32.xlu0 %v453, 127
        %v548 = vpop.permute.xlu0 %547
        %549 = vrot.lane.b32.xlu0 %v469, 127
        %v550 = vpop.permute.xlu0 %549
        %551 = vrot.lane.b32.xlu0 %v470, 127
        %v552 = vpop.permute.xlu0 %551
        %553 = vrot.lane.b32.xlu0 %v471, 127
        %v554 = vpop.permute.xlu0 %553
        %555 = vrot.lane.b32.xlu0 %v472, 127
        %v556 = vpop.permute.xlu0 %555
        %557 = vrot.lane.b32.xlu0 %v481, 127
        %v558 = vpop.permute.xlu0 %557
        %559 = vrot.lane.b32.xlu0 %v482, 127
        %v560 = vpop.permute.xlu0 %559
        %561 = vrot.lane.b32.xlu0 %v483, 127
        %v562 = vpop.permute.xlu0 %561
        %563 = vrot.lane.b32.xlu0 %v484, 127
        %v564 = vpop.permute.xlu0 %563
        %565 = vrot.lane.b32.xlu0 %v497, 127
        %v566 = vpop.permute.xlu0 %565
        %567 = vrot.lane.b32.xlu0 %v498, 127
        %v568 = vpop.permute.xlu0 %567
        %569 = vrot.lane.b32.xlu0 %v499, 127
        %v570 = vpop.permute.xlu0 %569
        %571 = vrot.lane.b32.xlu0 %v500, 127
        %v572 = vpop.permute.xlu0 %571
        %573 = vrot.lane.b32.xlu0 %v509, 127
        %v574 = vpop.permute.xlu0 %573
        %575 = vrot.lane.b32.xlu0 %v510, 127
        %v576 = vpop.permute.xlu0 %575
        %577 = vrot.lane.b32.xlu0 %v511, 127
        %v578 = vpop.permute.xlu0 %577
        %579 = vrot.lane.b32.xlu0 %v512, 127
        %v580 = vpop.permute.xlu0 %579
        %581 = vrot.lane.b32.xlu0 %v525, 127
        %v582 = vpop.permute.xlu0 %581
        %583 = vrot.lane.b32.xlu0 %v526, 127
        %v584 = vpop.permute.xlu0 %583
        %585 = vrot.lane.b32.xlu0 %v527, 127
        %v586 = vpop.permute.xlu0 %585
        %587 = vrot.lane.b32.xlu0 %v528, 127
        %v588 = vpop.permute.xlu0 %587
        %589 = vrot.lane.b32.xlu0 %v537, 127
        %v590 = vpop.permute.xlu0 %589
        %591 = vrot.lane.b32.xlu0 %v538, 127
        %v592 = vpop.permute.xlu0 %591
        %593 = vrot.lane.b32.xlu0 %v539, 127
        %v594 = vpop.permute.xlu0 %593
        %595 = vrot.lane.b32.xlu0 %v540, 127
        %v596 = vpop.permute.xlu0 %595
        %598 = vset.pattern.permute.xlu0 0
        %599 = vperm.xlu0 %598, %v225
        %v600 = vpop.permute.xlu0 %599
        %603 = vset.pattern.permute.xlu0 0
        %604 = vperm.xlu0 %603, %v226
        %v605 = vpop.permute.xlu0 %604
        %608 = vset.pattern.permute.xlu0 0
        %609 = vperm.xlu0 %608, %v227
        %v610 = vpop.permute.xlu0 %609
        %613 = vset.pattern.permute.xlu0 0
        %614 = vperm.xlu0 %613, %v228
        %v615 = vpop.permute.xlu0 %614
        %617 = vrot.lane.b32.xlu0 %v251, 1
        %v618 = vpop.permute.xlu0 %617
        %619 = vrot.lane.b32.xlu0 %v252, 1
        %v620 = vpop.permute.xlu0 %619
        %621 = vrot.lane.b32.xlu0 %v253, 1
        %v622 = vpop.permute.xlu0 %621
        %623 = vrot.lane.b32.xlu0 %v254, 1
        %v624 = vpop.permute.xlu0 %623
        %625 = vrot.lane.b32.xlu0 %v316, 1
        %v626 = vpop.permute.xlu0 %625
        %627 = vrot.lane.b32.xlu0 %v318, 1
        %v628 = vpop.permute.xlu0 %627
        %629 = vrot.lane.b32.xlu0 %v320, 1
        %v630 = vpop.permute.xlu0 %629
        %631 = vrot.lane.b32.xlu0 %v322, 1
        %v632 = vpop.permute.xlu0 %631
        %633 = vrot.lane.b32.xlu0 %v325, 1
        %v634 = vpop.permute.xlu0 %633
        %635 = vrot.lane.b32.xlu0 %v335, 1
        %v636 = vpop.permute.xlu0 %635
        %637 = vrot.lane.b32.xlu0 %v329, 1
        %v638 = vpop.permute.xlu0 %637
        %639 = vrot.lane.b32.xlu0 %v336, 1
        %v640 = vpop.permute.xlu0 %639
        %641 = vrot.lane.b32.xlu0 %v331, 1
        %v642 = vpop.permute.xlu0 %641
        %643 = vrot.lane.b32.xlu0 %v337, 1
        %v644 = vpop.permute.xlu0 %643
        %645 = vrot.lane.b32.xlu0 %v333, 1
        %v646 = vpop.permute.xlu0 %645
        %647 = vrot.lane.b32.xlu0 %v338, 1
        %v648 = vpop.permute.xlu0 %647
        %649 = vrot.lane.b32.xlu0 %v258, 1
        %v650 = vpop.permute.xlu0 %649
        %651 = vrot.lane.b32.xlu0 %v259, 1
        %v652 = vpop.permute.xlu0 %651
        %653 = vrot.lane.b32.xlu0 %v260, 1
        %v654 = vpop.permute.xlu0 %653
        %655 = vrot.lane.b32.xlu0 %v261, 1
        %v656 = vpop.permute.xlu0 %655
        %657 = vrot.lane.b32.xlu0 %v344, 1
        %v658 = vpop.permute.xlu0 %657
        %659 = vrot.lane.b32.xlu0 %v346, 1
        %v660 = vpop.permute.xlu0 %659
        %661 = vrot.lane.b32.xlu0 %v348, 1
        %v662 = vpop.permute.xlu0 %661
        %663 = vrot.lane.b32.xlu0 %v350, 1
        %v664 = vpop.permute.xlu0 %663
        %665 = vrot.lane.b32.xlu0 %v352, 1
        %v666 = vpop.permute.xlu0 %665
        %667 = vrot.lane.b32.xlu0 %v359, 1
        %v668 = vpop.permute.xlu0 %667
        %669 = vrot.lane.b32.xlu0 %v354, 1
        %v670 = vpop.permute.xlu0 %669
        %671 = vrot.lane.b32.xlu0 %v360, 1
        %v672 = vpop.permute.xlu0 %671
        %673 = vrot.lane.b32.xlu0 %v356, 1
        %v674 = vpop.permute.xlu0 %673
        %675 = vrot.lane.b32.xlu0 %v361, 1
        %v676 = vpop.permute.xlu0 %675
        %677 = vrot.lane.b32.xlu0 %v358, 1
        %v678 = vpop.permute.xlu0 %677
        %679 = vrot.lane.b32.xlu0 %v362, 1
        %v680 = vpop.permute.xlu0 %679
        %681 = vrot.lane.b32.xlu0 %v265, 1
        %v682 = vpop.permute.xlu0 %681
        %683 = vrot.lane.b32.xlu0 %v266, 1
        %v684 = vpop.permute.xlu0 %683
        %685 = vrot.lane.b32.xlu0 %v267, 1
        %v686 = vpop.permute.xlu0 %685
        %687 = vrot.lane.b32.xlu0 %v268, 1
        %v688 = vpop.permute.xlu0 %687
        %689 = vrot.lane.b32.xlu0 %v368, 1
        %v690 = vpop.permute.xlu0 %689
        %691 = vrot.lane.b32.xlu0 %v370, 1
        %v692 = vpop.permute.xlu0 %691
        %693 = vrot.lane.b32.xlu0 %v372, 1
        %v694 = vpop.permute.xlu0 %693
        %695 = vrot.lane.b32.xlu0 %v374, 1
        %v696 = vpop.permute.xlu0 %695
        %697 = vrot.lane.b32.xlu0 %v376, 1
        %v698 = vpop.permute.xlu0 %697
        %699 = vrot.lane.b32.xlu0 %v383, 1
        %v700 = vpop.permute.xlu0 %699
        %701 = vrot.lane.b32.xlu0 %v378, 1
        %v702 = vpop.permute.xlu0 %701
        %703 = vrot.lane.b32.xlu0 %v384, 1
        %v704 = vpop.permute.xlu0 %703
        %705 = vrot.lane.b32.xlu0 %v380, 1
        %v706 = vpop.permute.xlu0 %705
        %707 = vrot.lane.b32.xlu0 %v385, 1
        %v708 = vpop.permute.xlu0 %707
        %709 = vrot.lane.b32.xlu0 %v382, 1
        %v710 = vpop.permute.xlu0 %709
        %711 = vrot.lane.b32.xlu0 %v386, 1
        %v712 = vpop.permute.xlu0 %711
        %713 = vrot.lane.b32.xlu0 %v272, 1
        %v714 = vpop.permute.xlu0 %713
        %715 = vrot.lane.b32.xlu0 %v273, 1
        %v716 = vpop.permute.xlu0 %715
        %717 = vrot.lane.b32.xlu0 %v274, 1
        %v718 = vpop.permute.xlu0 %717
        %719 = vrot.lane.b32.xlu0 %v275, 1
        %v720 = vpop.permute.xlu0 %719
        %721 = vrot.lane.b32.xlu0 %v392, 1
        %v722 = vpop.permute.xlu0 %721
        %723 = vrot.lane.b32.xlu0 %v394, 1
        %v724 = vpop.permute.xlu0 %723
        %725 = vrot.lane.b32.xlu0 %v396, 1
        %v726 = vpop.permute.xlu0 %725
        %727 = vrot.lane.b32.xlu0 %v398, 1
        %v728 = vpop.permute.xlu0 %727
        %729 = vrot.lane.b32.xlu0 %v400, 1
        %v730 = vpop.permute.xlu0 %729
        %731 = vrot.lane.b32.xlu0 %v407, 1
        %v732 = vpop.permute.xlu0 %731
        %733 = vrot.lane.b32.xlu0 %v402, 1
        %v734 = vpop.permute.xlu0 %733
        %735 = vrot.lane.b32.xlu0 %v408, 1
        %v736 = vpop.permute.xlu0 %735
        %737 = vrot.lane.b32.xlu0 %v404, 1
        %v738 = vpop.permute.xlu0 %737
        %739 = vrot.lane.b32.xlu0 %v409, 1
        %v740 = vpop.permute.xlu0 %739
        %741 = vrot.lane.b32.xlu0 %v406, 1
        %v742 = vpop.permute.xlu0 %741
        %743 = vrot.lane.b32.xlu0 %v410, 1
        %v744 = vpop.permute.xlu0 %743
        %745 = vrot.lane.b32.xlu0 %v279, 1
        %v746 = vpop.permute.xlu0 %745
        %747 = vrot.lane.b32.xlu0 %v280, 1
        %v748 = vpop.permute.xlu0 %747
        %749 = vrot.lane.b32.xlu0 %v281, 1
        %v750 = vpop.permute.xlu0 %749
        %751 = vrot.lane.b32.xlu0 %v282, 1
        %v752 = vpop.permute.xlu0 %751
        %753 = vrot.lane.b32.xlu0 %v416, 1
        %v754 = vpop.permute.xlu0 %753
        %755 = vrot.lane.b32.xlu0 %v418, 1
        %v756 = vpop.permute.xlu0 %755
        %757 = vrot.lane.b32.xlu0 %v420, 1
        %v758 = vpop.permute.xlu0 %757
        %759 = vrot.lane.b32.xlu0 %v422, 1
        %v760 = vpop.permute.xlu0 %759
        %761 = vrot.lane.b32.xlu0 %v424, 1
        %v762 = vpop.permute.xlu0 %761
        %763 = vrot.lane.b32.xlu0 %v431, 1
        %v764 = vpop.permute.xlu0 %763
        %765 = vrot.lane.b32.xlu0 %v426, 1
        %v766 = vpop.permute.xlu0 %765
        %767 = vrot.lane.b32.xlu0 %v432, 1
        %v768 = vpop.permute.xlu0 %767
        %769 = vrot.lane.b32.xlu0 %v428, 1
        %v770 = vpop.permute.xlu0 %769
        %771 = vrot.lane.b32.xlu0 %v433, 1
        %v772 = vpop.permute.xlu0 %771
        %773 = vrot.lane.b32.xlu0 %v430, 1
        %v774 = vpop.permute.xlu0 %773
        %775 = vrot.lane.b32.xlu0 %v434, 1
        %v776 = vpop.permute.xlu0 %775
        %777 = vrot.lane.b32.xlu0 %v286, 1
        %v778 = vpop.permute.xlu0 %777
        %779 = vrot.lane.b32.xlu0 %v287, 1
        %v780 = vpop.permute.xlu0 %779
        %781 = vrot.lane.b32.xlu0 %v288, 1
        %v782 = vpop.permute.xlu0 %781
        %783 = vrot.lane.b32.xlu0 %v289, 1
        %v784 = vpop.permute.xlu0 %783
        %785 = vrot.lane.b32.xlu0 %v440, 1
        %v786 = vpop.permute.xlu0 %785
        %787 = vrot.lane.b32.xlu0 %v444, 1
        %v788 = vpop.permute.xlu0 %787
        %789 = vrot.lane.b32.xlu0 %v446, 1
        %v790 = vpop.permute.xlu0 %789
        %791 = vrot.lane.b32.xlu0 %v448, 1
        %v792 = vpop.permute.xlu0 %791
        %793 = vrot.lane.b32.xlu0 %v542, 1
        %v794 = vpop.permute.xlu0 %793
        %795 = vrot.lane.b32.xlu0 %v544, 1
        %v796 = vpop.permute.xlu0 %795
        %797 = vrot.lane.b32.xlu0 %v546, 1
        %v798 = vpop.permute.xlu0 %797
        %799 = vrot.lane.b32.xlu0 %v548, 1
        %v800 = vpop.permute.xlu0 %799
        %801 = vrot.lane.b32.xlu0 %v550, 1
        %v802 = vpop.permute.xlu0 %801
        %803 = vrot.lane.b32.xlu0 %v552, 1
        %v804 = vpop.permute.xlu0 %803
        %805 = vrot.lane.b32.xlu0 %v554, 1
        %v806 = vpop.permute.xlu0 %805
        %807 = vrot.lane.b32.xlu0 %v556, 1
        %v808 = vpop.permute.xlu0 %807
        %809 = vrot.lane.b32.xlu0 %v474, 1
        %v810 = vpop.permute.xlu0 %809
        %811 = vrot.lane.b32.xlu0 %v476, 1
        %v812 = vpop.permute.xlu0 %811
        %813 = vrot.lane.b32.xlu0 %v478, 1
        %v814 = vpop.permute.xlu0 %813
        %815 = vrot.lane.b32.xlu0 %v480, 1
        %v816 = vpop.permute.xlu0 %815
        %817 = vrot.lane.b32.xlu0 %v558, 1
        %v818 = vpop.permute.xlu0 %817
        %819 = vrot.lane.b32.xlu0 %v560, 1
        %v820 = vpop.permute.xlu0 %819
        %821 = vrot.lane.b32.xlu0 %v562, 1
        %v822 = vpop.permute.xlu0 %821
        %823 = vrot.lane.b32.xlu0 %v564, 1
        %v824 = vpop.permute.xlu0 %823
        %825 = vrot.lane.b32.xlu0 %v566, 1
        %v826 = vpop.permute.xlu0 %825
        %827 = vrot.lane.b32.xlu0 %v568, 1
        %v828 = vpop.permute.xlu0 %827
        %829 = vrot.lane.b32.xlu0 %v570, 1
        %v830 = vpop.permute.xlu0 %829
        %831 = vrot.lane.b32.xlu0 %v572, 1
        %v832 = vpop.permute.xlu0 %831
        %833 = vrot.lane.b32.xlu0 %v502, 1
        %v834 = vpop.permute.xlu0 %833
        %835 = vrot.lane.b32.xlu0 %v504, 1
        %v836 = vpop.permute.xlu0 %835
        %837 = vrot.lane.b32.xlu0 %v506, 1
        %v838 = vpop.permute.xlu0 %837
        %839 = vrot.lane.b32.xlu0 %v508, 1
        %v840 = vpop.permute.xlu0 %839
        %841 = vrot.lane.b32.xlu0 %v574, 1
        %v842 = vpop.permute.xlu0 %841
        %843 = vrot.lane.b32.xlu0 %v576, 1
        %v844 = vpop.permute.xlu0 %843
        %845 = vrot.lane.b32.xlu0 %v578, 1
        %v846 = vpop.permute.xlu0 %845
        %847 = vrot.lane.b32.xlu0 %v580, 1
        %v848 = vpop.permute.xlu0 %847
        %849 = vrot.lane.b32.xlu0 %v582, 1
        %v850 = vpop.permute.xlu0 %849
        %851 = vrot.lane.b32.xlu0 %v584, 1
        %v852 = vpop.permute.xlu0 %851
        %853 = vrot.lane.b32.xlu0 %v586, 1
        %v854 = vpop.permute.xlu0 %853
        %855 = vrot.lane.b32.xlu0 %v588, 1
        %v856 = vpop.permute.xlu0 %855
        %857 = vrot.lane.b32.xlu0 %v530, 1
        %v858 = vpop.permute.xlu0 %857
        %859 = vrot.lane.b32.xlu0 %v532, 1
        %v860 = vpop.permute.xlu0 %859
        %861 = vrot.lane.b32.xlu0 %v534, 1
        %v862 = vpop.permute.xlu0 %861
        %863 = vrot.lane.b32.xlu0 %v536, 1
        %v864 = vpop.permute.xlu0 %863
        %865 = vrot.lane.b32.xlu0 %v590, 1
        %v866 = vpop.permute.xlu0 %865
        %867 = vrot.lane.b32.xlu0 %v592, 1
        %v868 = vpop.permute.xlu0 %867
        %869 = vrot.lane.b32.xlu0 %v594, 1
        %v870 = vpop.permute.xlu0 %869
        %871 = vrot.lane.b32.xlu0 %v596, 1
        %v872 = vpop.permute.xlu0 %871
        %v873 = vsel %vm468, %v459, %v618
        %v874 = vsel %vm468, %v459, %v620
        %v875 = vsel %vm468, %v459, %v622
        %v876 = vsel %vm468, %v459, %v624
        %v877 = vsel %vm468, %v634, %v636
        %v878 = vsel %vm468, %v638, %v640
        %v879 = vsel %vm468, %v642, %v644
        %v880 = vsel %vm468, %v646, %v648
        %v881 = vsel %vm468, %v459, %v650
        %v882 = vsel %vm468, %v459, %v652
        %v883 = vsel %vm468, %v459, %v654
        %v884 = vsel %vm468, %v459, %v656
        %v885 = vsel %vm468, %v666, %v668
        %v886 = vsel %vm468, %v670, %v672
        %v887 = vsel %vm468, %v674, %v676
        %v888 = vsel %vm468, %v678, %v680
        %v889 = vsel %vm468, %v459, %v682
        %v890 = vsel %vm468, %v459, %v684
        %v891 = vsel %vm468, %v459, %v686
        %v892 = vsel %vm468, %v459, %v688
        %v893 = vsel %vm468, %v698, %v700
        %v894 = vsel %vm468, %v702, %v704
        %v895 = vsel %vm468, %v706, %v708
        %v896 = vsel %vm468, %v710, %v712
        %v897 = vsel %vm468, %v459, %v714
        %v898 = vsel %vm468, %v459, %v716
        %v899 = vsel %vm468, %v459, %v718
        %v900 = vsel %vm468, %v459, %v720
        %v901 = vsel %vm468, %v730, %v732
        %v902 = vsel %vm468, %v734, %v736
        %v903 = vsel %vm468, %v738, %v740
        %v904 = vsel %vm468, %v742, %v744
        %v905 = vsel %vm468, %v459, %v746
        %v906 = vsel %vm468, %v459, %v748
        %v907 = vsel %vm468, %v459, %v750
        %v908 = vsel %vm468, %v459, %v752
        %v909 = vsel %vm468, %v762, %v764
        %v910 = vsel %vm468, %v766, %v768
        %v911 = vsel %vm468, %v770, %v772
        %v912 = vsel %vm468, %v774, %v776
        %v913 = vsel %vm468, %v459, %v778
        %v914 = vsel %vm468, %v459, %v780
        %v915 = vsel %vm468, %v459, %v782
        %v916 = vsel %vm468, %v459, %v784
        %vm1025 = vcmask 785408
        %v1027 = vsel %vm1025, %v203, 0
        %v1030 = vsel %vm1025, %v210, 0
        %v1033 = vsel %vm1025, %v217, 0
        %v1036 = vsel %vm1025, %v224, 0
        %1038 = vmatpush.msra.mxu0 %v884
        %1039 = vmatpush.msra.mxu0 %v883
        %1040 = vmatpush.msra.mxu0 %v882
        %1041 = vmatpush.msra.mxu0 %v881
        %1042 = vmatpush.msra.mxu0 %v880
        %1043 = vmatpush.msra.mxu0 %v879
        %1044 = vmatpush.msra.mxu0 %v878
        %1045 = vmatpush.msra.mxu0 %v877
        %1046 = vmatpush.msra.mxu0 %v632
        %1047 = vmatpush.msra.mxu0 %v630
        %1048 = vmatpush.msra.mxu0 %v628
        %1049 = vmatpush.msra.mxu0 %v626
        %1050 = vmatpush.msra.mxu0 %v876
        %1051 = vmatpush.msra.mxu0 %v875
        %1052 = vmatpush.msra.mxu0 %v874
        %1053 = vmatpush.msra.mxu0 %v873
        %1054 = vmatmul.f32.gmra.mxu0 %v197
        %v1055 = vpop.f32.mrf.mxu0
        %v1056 = vadd.f32 %v600, %v1055
        %1057 = vmatmul.f32.gmra.mxu0 %v204
        %v1058 = vpop.f32.mrf.mxu0
        %v1059 = vadd.f32 %v605, %v1058
        %1060 = vmatmul.f32.gmra.mxu0 %v211
        %v1061 = vpop.f32.mrf.mxu0
        %v1062 = vadd.f32 %v610, %v1061
        %1063 = vmatmul.f32.gmra.mxu0 %v218
        %v1064 = vpop.f32.mrf.mxu0
        %v1065 = vadd.f32 %v615, %v1064
        %1066 = vdwg.mxu0
        %1067 = vmatpush.msra.mxu0 %v696
        %1068 = vmatpush.msra.mxu0 %v694
        %1069 = vmatpush.msra.mxu0 %v692
        %1070 = vmatpush.msra.mxu0 %v690
        %1071 = vmatpush.msra.mxu0 %v892
        %1072 = vmatpush.msra.mxu0 %v891
        %1073 = vmatpush.msra.mxu0 %v890
        %1074 = vmatpush.msra.mxu0 %v889
        %1075 = vmatpush.msra.mxu0 %v888
        %1076 = vmatpush.msra.mxu0 %v887
        %1077 = vmatpush.msra.mxu0 %v886
        %1078 = vmatpush.msra.mxu0 %v885
        %1079 = vmatpush.msra.mxu0 %v664
        %1080 = vmatpush.msra.mxu0 %v662
        %1081 = vmatpush.msra.mxu0 %v660
        %1082 = vmatpush.msra.mxu0 %v658
        %1083 = vmatmul.f32.gmra.mxu0 %v198
        %v1084 = vpop.f32.mrf.mxu0
        %v1085 = vadd.f32 %v1056, %v1084
        %1086 = vmatmul.f32.gmra.mxu0 %v205
        %v1087 = vpop.f32.mrf.mxu0
        %v1088 = vadd.f32 %v1059, %v1087
        %1089 = vmatmul.f32.gmra.mxu0 %v212
        %v1090 = vpop.f32.mrf.mxu0
        %v1091 = vadd.f32 %v1062, %v1090
        %1092 = vmatmul.f32.gmra.mxu0 %v219
        %v1093 = vpop.f32.mrf.mxu0
        %v1094 = vadd.f32 %v1065, %v1093
        %1095 = vdwg.mxu0
        %1096 = vmatpush.msra.mxu0 %v904
        %1097 = vmatpush.msra.mxu0 %v903
        %1098 = vmatpush.msra.mxu0 %v902
        %1099 = vmatpush.msra.mxu0 %v901
        %1100 = vmatpush.msra.mxu0 %v728
        %1101 = vmatpush.msra.mxu0 %v726
        %1102 = vmatpush.msra.mxu0 %v724
        %1103 = vmatpush.msra.mxu0 %v722
        %1104 = vmatpush.msra.mxu0 %v900
        %1105 = vmatpush.msra.mxu0 %v899
        %1106 = vmatpush.msra.mxu0 %v898
        %1107 = vmatpush.msra.mxu0 %v897
        %1108 = vmatpush.msra.mxu0 %v896
        %1109 = vmatpush.msra.mxu0 %v895
        %1110 = vmatpush.msra.mxu0 %v894
        %1111 = vmatpush.msra.mxu0 %v893
        %1112 = vmatmul.f32.gmra.mxu0 %v199
        %v1113 = vpop.f32.mrf.mxu0
        %v1114 = vadd.f32 %v1085, %v1113
        %1115 = vmatmul.f32.gmra.mxu0 %v206
        %v1116 = vpop.f32.mrf.mxu0
        %v1117 = vadd.f32 %v1088, %v1116
        %1118 = vmatmul.f32.gmra.mxu0 %v213
        %v1119 = vpop.f32.mrf.mxu0
        %v1120 = vadd.f32 %v1091, %v1119
        %1121 = vmatmul.f32.gmra.mxu0 %v220
        %v1122 = vpop.f32.mrf.mxu0
        %v1123 = vadd.f32 %v1094, %v1122
        %1124 = vdwg.mxu0
        %1125 = vmatpush.msra.mxu0 %v916
        %1126 = vmatpush.msra.mxu0 %v915
        %1127 = vmatpush.msra.mxu0 %v914
        %1128 = vmatpush.msra.mxu0 %v913
        %1129 = vmatpush.msra.mxu0 %v912
        %1130 = vmatpush.msra.mxu0 %v911
        %1131 = vmatpush.msra.mxu0 %v910
        %1132 = vmatpush.msra.mxu0 %v909
        %1133 = vmatpush.msra.mxu0 %v760
        %1134 = vmatpush.msra.mxu0 %v758
        %1135 = vmatpush.msra.mxu0 %v756
        %1136 = vmatpush.msra.mxu0 %v754
        %1137 = vmatpush.msra.mxu0 %v908
        %1138 = vmatpush.msra.mxu0 %v907
        %1139 = vmatpush.msra.mxu0 %v906
        %1140 = vmatpush.msra.mxu0 %v905
        %1141 = vmatmul.f32.gmra.mxu0 %v200
        %v1142 = vpop.f32.mrf.mxu0
        %v1143 = vadd.f32 %v1114, %v1142
        %1144 = vmatmul.f32.gmra.mxu0 %v207
        %v1145 = vpop.f32.mrf.mxu0
        %v1146 = vadd.f32 %v1117, %v1145
        %1147 = vmatmul.f32.gmra.mxu0 %v214
        %v1148 = vpop.f32.mrf.mxu0
        %v1149 = vadd.f32 %v1120, %v1148
        %1150 = vmatmul.f32.gmra.mxu0 %v221
        %v1151 = vpop.f32.mrf.mxu0
        %v1152 = vadd.f32 %v1123, %v1151
        %1153 = vdwg.mxu0
        %1154 = vmatpush.msra.mxu0 %v816
        %1155 = vmatpush.msra.mxu0 %v814
        %1156 = vmatpush.msra.mxu0 %v812
        %1157 = vmatpush.msra.mxu0 %v810
        %1158 = vmatpush.msra.mxu0 %v808
        %1159 = vmatpush.msra.mxu0 %v806
        %1160 = vmatpush.msra.mxu0 %v804
        %1161 = vmatpush.msra.mxu0 %v802
        %1162 = vmatpush.msra.mxu0 %v800
        %1163 = vmatpush.msra.mxu0 %v798
        %1164 = vmatpush.msra.mxu0 %v796
        %1165 = vmatpush.msra.mxu0 %v794
        %1166 = vmatpush.msra.mxu0 %v792
        %1167 = vmatpush.msra.mxu0 %v790
        %1168 = vmatpush.msra.mxu0 %v788
        %1169 = vmatpush.msra.mxu0 %v786
        %1170 = vmatmul.f32.gmra.mxu0 %v201
        %v1171 = vpop.f32.mrf.mxu0
        %v1172 = vadd.f32 %v1143, %v1171
        %1173 = vmatmul.f32.gmra.mxu0 %v208
        %v1174 = vpop.f32.mrf.mxu0
        %v1175 = vadd.f32 %v1146, %v1174
        %1176 = vmatmul.f32.gmra.mxu0 %v215
        %v1177 = vpop.f32.mrf.mxu0
        %v1178 = vadd.f32 %v1149, %v1177
        %1179 = vmatmul.f32.gmra.mxu0 %v222
        %v1180 = vpop.f32.mrf.mxu0
        %v1181 = vadd.f32 %v1152, %v1180
        %1182 = vdwg.mxu0
        %1183 = vmatpush.msra.mxu0 %v848
        %1184 = vmatpush.msra.mxu0 %v846
        %1185 = vmatpush.msra.mxu0 %v844
        %1186 = vmatpush.msra.mxu0 %v842
        %1187 = vmatpush.msra.mxu0 %v840
        %1188 = vmatpush.msra.mxu0 %v838
        %1189 = vmatpush.msra.mxu0 %v836
        %1190 = vmatpush.msra.mxu0 %v834
        %1191 = vmatpush.msra.mxu0 %v832
        %1192 = vmatpush.msra.mxu0 %v830
        %1193 = vmatpush.msra.mxu0 %v828
        %1194 = vmatpush.msra.mxu0 %v826
        %1195 = vmatpush.msra.mxu0 %v824
        %1196 = vmatpush.msra.mxu0 %v822
        %1197 = vmatpush.msra.mxu0 %v820
        %1198 = vmatpush.msra.mxu0 %v818
        %1199 = vmatmul.f32.gmra.mxu0 %v202
        %v1200 = vpop.f32.mrf.mxu0
        %v1201 = vadd.f32 %v1172, %v1200
        %1202 = vmatmul.f32.gmra.mxu0 %v209
        %v1203 = vpop.f32.mrf.mxu0
        %v1204 = vadd.f32 %v1175, %v1203
        %1205 = vmatmul.f32.gmra.mxu0 %v216
        %v1206 = vpop.f32.mrf.mxu0
        %v1207 = vadd.f32 %v1178, %v1206
        %1208 = vmatmul.f32.gmra.mxu0 %v223
        %v1209 = vpop.f32.mrf.mxu0
        %v1210 = vadd.f32 %v1181, %v1209
        %1211 = vdwg.mxu0
        %1212 = vmatpush.msra.mxu0 0.0
        %1213 = vmatpush.msra.mxu0 0.0
        %1214 = vmatpush.msra.mxu0 0.0
        %1215 = vmatpush.msra.mxu0 0.0
        %1216 = vmatpush.msra.mxu0 %v872
        %1217 = vmatpush.msra.mxu0 %v870
        %1218 = vmatpush.msra.mxu0 %v868
        %1219 = vmatpush.msra.mxu0 %v866
        %1220 = vmatpush.msra.mxu0 %v864
        %1221 = vmatpush.msra.mxu0 %v862
        %1222 = vmatpush.msra.mxu0 %v860
        %1223 = vmatpush.msra.mxu0 %v858
        %1224 = vmatpush.msra.mxu0 %v856
        %1225 = vmatpush.msra.mxu0 %v854
        %1226 = vmatpush.msra.mxu0 %v852
        %1227 = vmatpush.msra.mxu0 %v850
        %1228 = vmatmul.f32.gmra.mxu0 %v1027
        %v1229 = vpop.f32.mrf.mxu0
        %v1230 = vadd.f32 %v1201, %v1229
        %1231 = vmatmul.f32.gmra.mxu0 %v1030
        %v1232 = vpop.f32.mrf.mxu0
        %v1233 = vadd.f32 %v1204, %v1232
        %1234 = vmatmul.f32.gmra.mxu0 %v1033
        %v1235 = vpop.f32.mrf.mxu0
        %v1236 = vadd.f32 %v1207, %v1235
        %1237 = vmatmul.f32.gmra.mxu0 %v1036
        %v1238 = vpop.f32.mrf.mxu0
        %v1239 = vadd.f32 %v1210, %v1238
        %1240 = vdwg.mxu0
        %vm1241 = vcmp.gt.f32.partialorder %v1230, 0.0
        %vm1242 = vcmp.gt.f32.partialorder %v1233, 0.0
        %vm1243 = vcmp.gt.f32.partialorder %v1236, 0.0
        %vm1244 = vcmp.gt.f32.partialorder %v1239, 0.0
        %v1245 = vmul.f32 %v1230, 0.1
        %v1246 = vmul.f32 %v1233, 0.1
        %v1247 = vmul.f32 %v1236, 0.1
        %v1248 = vmul.f32 %v1239, 0.1
        %v1249 = vsel %vm1241, %v1230, %v1245
        %v1250 = vsel %vm1242, %v1233, %v1246
        %v1251 = vsel %vm1243, %v1236, %v1247
        %v1252 = vsel %vm1244, %v1239, %v1248
        %s1253 = scalar_select %p243, 1, 0
        %v1254 = vstv %s1253
        %vm1255 = vcmp.eq.s32.totalorder %v1254, 1
        %vm1256 = vmand %vm1255, %vm231
        %v1257 = vsel %vm1256, %v1249, 0.0
        %v1258 = vsel %vm1256, %v1250, 0.0
        %v1259 = vsel %vm1256, %v1251, 0.0
        %v1260 = vsel %vm1256, %v1252, 0.0
        %s1261 = smul.u32 %s233, 32
        %s1262 = scalar_lea.vmem %s194, %s1261
        %1263 = vst [vmem:[%s1262] sm:$0xff] %v1257
        %1264 = vst [vmem:[%s1262 + $0x8] sm:$0xff] %v1258
        %1265 = vst [vmem:[%s1262 + $0x10] sm:$0xff] %v1259
        %1266 = vst [vmem:[%s1262 + $0x18] sm:$0xff] %v1260
      $region37: #{discriminator_r_forward.10} parent=31 // loop_footer
        %s237 = sadd.s32 1, %s233
      $region38: #{discriminator_r_forward.10} parent=31 // loop_footer_branch
        %232 = sbr.rel target = $region34
      $region39: #{discriminator_r_forward.10} parent=31 // loop_exit
        _
      %s1267 = smul.u32 9, %s19
      %p1268 = scmp.lt.s32.totalorder %s18, 1
      %s1269 = scalar_select %p1268, %s18, 1
      %p1270 = scmp.lt.s32.totalorder %s1267, 8
      %s1271 = scalar_select %p1270, %s1267, 8
      %s1272 = smul.addr %s1271, 4
      %s1273 = smul.addr %s1269, 36
      %s1274 = sadd.s32 %s1272, %s1273
      %s1275 = smul.addr %s1274, 8
      %s1276 = scalar_lea.vmem %s3, %s1275
      // Predicated region
      $region40: #{discriminator_r_forward.10} parent=31 // pred_check
        %p1277 = pneg %p114
      $region41: #{discriminator_r_forward.10} parent=31 // pred_check_branch
        %1279 = sbr.rel (%p1277) target = $region43
      $region42: #{discriminator_r_forward.10} parent=31 // pred_region
        %s1280 = smul.u32 9, %s19
      $region43: #{discriminator_r_forward.10} parent=31 // pred_fallthru
        _
    $region32: #{discriminator_r_forward.10} parent=5 // pred_fallthru
      _
    %p1281 = scmp.le.s32.totalorder 2, %s9
    // Predicated region
    $region44: #{discriminator_r_forward.10} parent=5 // pred_check
      %p1282 = pneg %p1281
    $region45: #{discriminator_r_forward.10} parent=5 // pred_check_branch
      %1284 = sbr.rel (%p1282) target = $region47
    $region46: #{discriminator_r_forward.10} parent=5 // pred_region
      %s1285 = ssub.s32 %s9, 2
      // Predicated region
      $region48: #{discriminator_r_forward.10} parent=46 // pred_check
        %p1286 = pneg %p120
      $region49: #{discriminator_r_forward.10} parent=46 // pred_check_branch
        %1288 = sbr.rel (%p1286) target = $region51
      $region50: #{discriminator_r_forward.10} parent=46 // pred_region
        %s1289 = smul.u32 9, %s21
        %p1290 = scmp.lt.s32.totalorder %s20, 1
        %s1291 = scalar_select %p1290, %s20, 1
        %p1292 = scmp.lt.s32.totalorder %s1289, 8
        %s1293 = scalar_select %p1292, %s1289, 8
        %s1294 = smul.addr %s1293, 4
        %s1295 = smul.addr %s1291, 36
        %s1296 = sadd.s32 %s1294, %s1295
        %s1297 = smul.addr %s1296, 8
        %s1298 = scalar_lea.vmem %s3, %s1297
      $region51: #{discriminator_r_forward.10} parent=46 // pred_fallthru
        _
    $region47: #{discriminator_r_forward.10} parent=5 // pred_fallthru
      _
  $region6: #{discriminator_r_forward.10} parent=0 // loop_footer
    %s13 = sadd.s32 1, %s9
  $region7: #{discriminator_r_forward.10} parent=0 // loop_footer_branch
    %8 = sbr.rel target = $region3
  $region8: #{discriminator_r_forward.10} parent=0 // loop_exit
    _

// kernel: discriminator_r_forward.12
$region0: #{discriminator_r_forward.12}
  #allocation0 [shape = 'u32[]', space=smem, size = 0x4, offset = 0x4, fixed_abs, tag = 'smem constant byte address 0x4 - core index']
  #allocation1 [shape = 'u32[72,128]{1,0:T(1,128)}', space=vmem, size = 0x9000, scoped, tag = 'internal scratch']
  %s0 = inlined_call_operand.vmem [shape: f32[2,3,32,128], index: 0, kind: input, shape index: {}]
  %s1 = inlined_call_operand.vmem [shape: f32[32,288], index: 1, kind: input, shape index: {}]
  %s2 = inlined_call_operand.vmem [shape: f32[32,1], index: 2, kind: input, shape index: {}]
  %s3 = inlined_call_operand.vmem [shape: f32[2,3,32,128], index: 3, kind: output, shape index: {}]
  %s4 = sld [smem:[#allocation0]]
  $region52: #{discriminator_r_forward.12} parent=0
    _
  %s6 = ssub.s32 1, %s4
  %s7 = scalar_select 0, %s6, %s4
  loop: start=0, step=1, limit=4
  $region2: #{discriminator_r_forward.12} parent=0 // loop_pre_header
    _
  $region3: #{discriminator_r_forward.12} parent=0 // loop_header
    %s9 = sphi 0, %s13
    %p10 = scmp.ge.s32.totalorder %s9, 4
    %s16 = sphi 0, %s28
    %s17 = sphi 0, %s24
    %s18 = sphi 0, %s16
    %s19 = sphi 0, %s17
    %s20 = sphi 0, %s18
    %s21 = sphi 0, %s19
    %s31 = sphi 0, %s33
    %s34 = sphi 0, %s31
    %s35 = sphi 0, %s34
    %s51 = sphi 0, %s35
    %s55 = sphi 0, %s55
    %s57 = sphi 0, %s55
    %s58 = sphi 0, %s57
    %s72 = sphi 0, %s58
    %s76 = sphi 0, %s76
    %s78 = sphi 0, %s76
    %s79 = sphi 0, %s78
    %s93 = sphi 0, %s79
    %s101 = sphi 0, %s103
    %s104 = sphi 0, %s101
    %s105 = sphi 0, %s104
    %s121 = sphi 0, %s105
  $region4: #{discriminator_r_forward.12} parent=0 // loop_header_branch
    %12 = sbr.rel (%p10) target = $region8
  $region5: #{discriminator_r_forward.12} parent=0 // loop_body
    %s14 = ssub.s32 %s9, 1
    %s15 = ssub.s32 %s9, 2
    %s22 = sadd.s32 1, %s17
    %p23 = scmp.ge.s32.totalorder %s22, 1
    %s24 = scalar_select %p23, 0, %s22
    %s25 = sadd.s32 1, %s16
    %s26 = scalar_select %p23, %s25, %s16
    %p27 = scmp.ge.s32.totalorder %s26, 2
    %s28 = scalar_select %p27, 0, %s26
    %s29 = ssub.s32 %s16, %s28
    %p30 = scmp.eq.s32.totalorder %s29, 0
    %s32 = sadd.s32 %s31, 1
    %s33 = scalar_select %p30, %s31, %s32
    %p36 = pneg %p30
    %p37 = scmp.eq.s32.totalorder %s9, 1
    %p38 = por %p36, %p37
    %p39 = scmp.ne.s32.totalorder %s31, %s34
    %p40 = scmp.eq.s32.totalorder %s9, 0
    %p41 = por %p39, %p40
    %p42 = scmp.ne.s32.totalorder %s31, %s34
    %p43 = scmp.eq.s32.totalorder %s14, 1
    %p44 = por %p42, %p43
    %p45 = scmp.ne.s32.totalorder %s34, %s35
    %p46 = scmp.eq.s32.totalorder %s14, 0
    %p47 = por %p45, %p46
    %p48 = scmp.ne.s32.totalorder %s34, %s35
    %p49 = scmp.eq.s32.totalorder %s15, 1
    %p50 = por %p48, %p49
    %p52 = scmp.ne.s32.totalorder %s35, %s51
    %p53 = scmp.eq.s32.totalorder %s15, 0
    %p54 = por %p52, %p53
    %s56 = sadd.s32 %s55, 1
    %p59 = scmp.eq.s32.totalorder %s9, 1
    %p60 = scmp.ne.s32.totalorder %s55, %s57
    %p61 = scmp.eq.s32.totalorder %s9, 0
    %p62 = por %p60, %p61
    %p63 = scmp.ne.s32.totalorder %s55, %s57
    %p64 = scmp.eq.s32.totalorder %s14, 1
    %p65 = por %p63, %p64
    %p66 = scmp.ne.s32.totalorder %s57, %s58
    %p67 = scmp.eq.s32.totalorder %s14, 0
    %p68 = por %p66, %p67
    %p69 = scmp.ne.s32.totalorder %s57, %s58
    %p70 = scmp.eq.s32.totalorder %s15, 1
    %p71 = por %p69, %p70
    %p73 = scmp.ne.s32.totalorder %s58, %s72
    %p74 = scmp.eq.s32.totalorder %s15, 0
    %p75 = por %p73, %p74
    %s77 = sadd.s32 %s76, 1
    %p80 = scmp.eq.s32.totalorder %s9, 1
    %p81 = scmp.ne.s32.totalorder %s76, %s78
    %p82 = scmp.eq.s32.totalorder %s9, 0
    %p83 = por %p81, %p82
    %p84 = scmp.ne.s32.totalorder %s76, %s78
    %p85 = scmp.eq.s32.totalorder %s14, 1
    %p86 = por %p84, %p85
    %p87 = scmp.ne.s32.totalorder %s78, %s79
    %p88 = scmp.eq.s32.totalorder %s14, 0
    %p89 = por %p87, %p88
    %p90 = scmp.ne.s32.totalorder %s78, %s79
    %p91 = scmp.eq.s32.totalorder %s15, 1
    %p92 = por %p90, %p91
    %p94 = scmp.ne.s32.totalorder %s79, %s93
    %p95 = scmp.eq.s32.totalorder %s15, 0
    %p96 = por %p94, %p95
    %s97 = ssub.s32 %s16, %s28
    %s98 = ssub.s32 %s17, %s24
    %s99 = sor.u32 %s97, %s98
    %p100 = scmp.eq.s32.totalorder %s99, 0
    %s102 = sadd.s32 %s101, 1
    %s103 = scalar_select %p100, %s101, %s102
    %p106 = pneg %p100
    %p107 = scmp.eq.s32.totalorder %s9, 1
    %p108 = por %p106, %p107
    %p109 = scmp.ne.s32.totalorder %s101, %s104
    %p110 = scmp.eq.s32.totalorder %s9, 0
    %p111 = por %p109, %p110
    %p112 = scmp.ne.s32.totalorder %s101, %s104
    %p113 = scmp.eq.s32.totalorder %s14, 1
    %p114 = por %p112, %p113
    %p115 = scmp.ne.s32.totalorder %s104, %s105
    %p116 = scmp.eq.s32.totalorder %s14, 0
    %p117 = por %p115, %p116
    %p118 = scmp.ne.s32.totalorder %s104, %s105
    %p119 = scmp.eq.s32.totalorder %s15, 1
    %p120 = por %p118, %p119
    %p122 = scmp.ne.s32.totalorder %s105, %s121
    %p123 = scmp.eq.s32.totalorder %s15, 0
    %p124 = por %p122, %p123
    %p125 = scmp.le.s32.totalorder 1, %s9
    %p126 = scmp.lt.s32.totalorder %s9, 3
    %p127 = pnand %p125, %p126
    %p128 = pneg %p127
    // Predicated region
    $region9: #{discriminator_r_forward.12} parent=5 // pred_check
      _
    $region10: #{discriminator_r_forward.12} parent=5 // pred_check_branch
      %130 = sbr.rel (%p127) target = $region12
    $region11: #{discriminator_r_forward.12} parent=5 // pred_region
      %s131 = ssub.s32 %s9, 1
      // Predicated region
      $region13: #{discriminator_r_forward.12} parent=11 // pred_check
        %p132 = pneg %p68
      $region14: #{discriminator_r_forward.12} parent=11 // pred_check_branch
        %134 = sbr.rel (%p132) target = $region16
      $region15: #{discriminator_r_forward.12} parent=11 // pred_region
        _
      $region16: #{discriminator_r_forward.12} parent=11 // pred_fallthru
        _
      // Predicated region
      $region17: #{discriminator_r_forward.12} parent=11 // pred_check
        %p135 = pneg %p89
      $region18: #{discriminator_r_forward.12} parent=11 // pred_check_branch
        %137 = sbr.rel (%p135) target = $region20
      $region19: #{discriminator_r_forward.12} parent=11 // pred_region
        _
      $region20: #{discriminator_r_forward.12} parent=11 // pred_fallthru
        _
    $region12: #{discriminator_r_forward.12} parent=5 // pred_fallthru
      _
    %p138 = scmp.lt.s32.totalorder %s9, 2
    // Predicated region
    $region21: #{discriminator_r_forward.12} parent=5 // pred_check
      %p139 = pneg %p138
    $region22: #{discriminator_r_forward.12} parent=5 // pred_check_branch
      %141 = sbr.rel (%p139) target = $region24
    $region23: #{discriminator_r_forward.12} parent=5 // pred_region
      // Predicated region
      $region25: #{discriminator_r_forward.12} parent=23 // pred_check
        %p142 = pneg %p41
      $region26: #{discriminator_r_forward.12} parent=23 // pred_check_branch
        %144 = sbr.rel (%p142) target = $region28
      $region27: #{discriminator_r_forward.12} parent=23 // pred_region
        %p145 = scmp.lt.s32.totalorder %s16, 1
        %s146 = scalar_select %p145, %s16, 1
        %s147 = smul.addr %s146, 12
        %s148 = smul.addr %s147, 8
        %s149 = scalar_lea.vmem %s0, %s148
      $region28: #{discriminator_r_forward.12} parent=23 // pred_fallthru
        _
    $region24: #{discriminator_r_forward.12} parent=5 // pred_fallthru
      _
    %p150 = scmp.le.s32.totalorder 1, %s9
    %p151 = scmp.lt.s32.totalorder %s9, 3
    %p152 = pnand %p150, %p151
    %p153 = pneg %p152
    // Predicated region
    $region29: #{discriminator_r_forward.12} parent=5 // pred_check
      _
    $region30: #{discriminator_r_forward.12} parent=5 // pred_check_branch
      %155 = sbr.rel (%p152) target = $region32
    $region31: #{discriminator_r_forward.12} parent=5 // pred_region
      %s156 = ssub.s32 %s9, 1
      %p157 = scmp.lt.s32.totalorder %s18, 1
      %s158 = scalar_select %p157, %s18, 1
      %s159 = smul.addr %s158, 12
      %s160 = smul.addr %s159, 8
      %s161 = scalar_lea.vmem %s0, %s160
      %p162 = pneg %p47
      %p163 = pneg %p44
      %p164 = pneg %p68
      %p165 = pneg %p65
      %p166 = pneg %p89
      %p167 = pneg %p86
      %p168 = pneg %p117
      %p169 = pneg %p114
      %s170 = smul.u32 3, %s19
      %p171 = scmp.lt.s32.totalorder %s18, 1
      %s172 = scalar_select %p171, %s18, 1
      %p173 = scmp.lt.s32.totalorder %s170, 2
      %s174 = scalar_select %p173, %s170, 2
      %s175 = smul.addr %s174, 4
      %s176 = smul.addr %s172, 12
      %s177 = sadd.s32 %s175, %s176
      %s178 = smul.addr %s177, 8
      %s179 = scalar_lea.vmem %s3, %s178
      %p180 = scmp.lt.s32.totalorder %s18, 1
      %s181 = scalar_select %p180, %s18, 1
      %s182 = smul.addr %s181, 12
      %s183 = smul.addr %s182, 8
      %s184 = scalar_lea.vmem %s0, %s183
      %s185 = smul.u32 3, %s19
      %p186 = scmp.lt.s32.totalorder %s18, 1
      %s187 = scalar_select %p186, %s18, 1
      %p188 = scmp.lt.s32.totalorder %s185, 2
      %s189 = scalar_select %p188, %s185, 2
      %s190 = smul.addr %s189, 4
      %s191 = smul.addr %s187, 12
      %s192 = sadd.s32 %s190, %s191
      %s193 = smul.addr %s192, 8
      %s194 = scalar_lea.vmem %s3, %s193
      %s195 = smul.u32 3, %s19
      %s196 = smul.u32 %s19, 3
      %v197 = vld [vmem:[%s1] sm:$0xff]
      %v198 = vld [vmem:[%s1 + $0x8] sm:$0xff]
      %v199 = vld [vmem:[%s1 + $0x10] sm:$0xff]
      %v200 = vld [vmem:[%s1 + $0x18] sm:$0xff]
      %v201 = vld [vmem:[%s1 + $0x20] sm:$0xff]
      %v202 = vld [vmem:[%s1 + $0x28] sm:$0xff]
      %v203 = vld [vmem:[%s1 + $0x30] sm:$0xff]
      %v204 = vld [vmem:[%s1 + $0x38] sm:$0xff]
      %v205 = vld [vmem:[%s1 + $0x40] sm:$0xff]
      %v206 = vld [vmem:[%s1 + $0x48] sm:$0xff]
      %v207 = vld [vmem:[%s1 + $0x50] sm:$0xff]
      %v208 = vld [vmem:[%s1 + $0x58] sm:$0xff]
      %v209 = vld [vmem:[%s2] sm:$0xff]
      %v210 = vld [vmem:[%s2 + $0x8] sm:$0xff]
      %v211 = vld [vmem:[%s2 + $0x10] sm:$0xff]
      %v212 = vld [vmem:[%s2 + $0x18] sm:$0xff]
      %v213 = vlaneseq
      %v214 = vand.u32 %v213, 127
      %vm215 = vcmp.lt.s32.totalorder %v214, 17
      loop: start=0, step=1, limit=3
      $region33: #{discriminator_r_forward.12} parent=31 // loop_pre_header
        _
      $region34: #{discriminator_r_forward.12} parent=31 // loop_header
        %s217 = sphi 0, %s221
        %p218 = scmp.ge.s32.totalorder %s217, 3
      $region35: #{discriminator_r_forward.12} parent=31 // loop_header_branch
        %220 = sbr.rel (%p218) target = $region39
      $region36: #{discriminator_r_forward.12} parent=31 // loop_body
        %s222 = sadd.s32 %s196, %s217
        %s223 = ssub.s32 %s222, 1
        %p224 = scmp.ge.s32.totalorder %s223, 0
        %p225 = scmp.lt.s32.totalorder %s223, 1
        %p226 = pnand %p224, %p225
        %p227 = pneg %p226
        %p228 = scmp.gt.s32.totalorder %s223, 0
        %s229 = scalar_select %p228, %s223, 0
        %p230 = scmp.lt.s32.totalorder %s229, 0
        %s231 = scalar_select %p230, %s229, 0
        %s232 = smul.u32 %s231, 32
        %s233 = scalar_lea.vmem %s184, %s232
        %v234 = vld [vmem:[%s233] sm:$0xff]
        %v235 = vld [vmem:[%s233 + $0x8] sm:$0xff]
        %v236 = vld [vmem:[%s233 + $0x10] sm:$0xff]
        %v237 = vld [vmem:[%s233 + $0x18] sm:$0xff]
        %s238 = sadd.s32 %s231, 1
        %s239 = smul.u32 %s238, 32
        %s240 = scalar_lea.vmem %s184, %s239
        %v241 = vld [vmem:[%s240] sm:$0xff]
        %v242 = vld [vmem:[%s240 + $0x8] sm:$0xff]
        %v243 = vld [vmem:[%s240 + $0x10] sm:$0xff]
        %v244 = vld [vmem:[%s240 + $0x18] sm:$0xff]
        %s245 = sadd.s32 %s231, 2
        %s246 = smul.u32 %s245, 32
        %s247 = scalar_lea.vmem %s184, %s246
        %v248 = vld [vmem:[%s247] sm:$0xff]
        %v249 = vld [vmem:[%s247 + $0x8] sm:$0xff]
        %v250 = vld [vmem:[%s247 + $0x10] sm:$0xff]
        %v251 = vld [vmem:[%s247 + $0x18] sm:$0xff]
        %256 = vrot.lane.b32.xlu0 %v234, 127
        %v257 = vpop.permute.xlu0 %256
        %258 = vrot.lane.b32.xlu0 %v235, 127
        %v259 = vpop.permute.xlu0 %258
        %260 = vrot.lane.b32.xlu0 %v236, 127
        %v261 = vpop.permute.xlu0 %260
        %262 = vrot.lane.b32.xlu0 %v237, 127
        %v263 = vpop.permute.xlu0 %262
        %265 = vrot.lane.b32.xlu0 %v234, 126
        %v266 = vpop.permute.xlu0 %265
        %267 = vrot.lane.b32.xlu0 0.0, 126
        %v268 = vpop.permute.xlu0 %267
        %269 = vrot.lane.b32.xlu0 %v235, 126
        %v270 = vpop.permute.xlu0 %269
        %271 = vrot.lane.b32.xlu0 %v236, 126
        %v272 = vpop.permute.xlu0 %271
        %273 = vrot.lane.b32.xlu0 %v237, 126
        %v274 = vpop.permute.xlu0 %273
        %vm275 = vcmask 1031168
        %v276 = vsel %vm275, %v266, %v268
        %v277 = vsel %vm275, %v270, %v268
        %v278 = vsel %vm275, %v272, %v268
        %v279 = vsel %vm275, %v274, %v268
        %284 = vrot.lane.b32.xlu0 %v241, 127
        %v285 = vpop.permute.xlu0 %284
        %286 = vrot.lane.b32.xlu0 %v242, 127
        %v287 = vpop.permute.xlu0 %286
        %288 = vrot.lane.b32.xlu0 %v243, 127
        %v289 = vpop.permute.xlu0 %288
        %290 = vrot.lane.b32.xlu0 %v244, 127
        %v291 = vpop.permute.xlu0 %290
        %292 = vrot.lane.b32.xlu0 %v241, 126
        %v293 = vpop.permute.xlu0 %292
        %294 = vrot.lane.b32.xlu0 %v242, 126
        %v295 = vpop.permute.xlu0 %294
        %296 = vrot.lane.b32.xlu0 %v243, 126
        %v297 = vpop.permute.xlu0 %296
        %298 = vrot.lane.b32.xlu0 %v244, 126
        %v299 = vpop.permute.xlu0 %298
        %v300 = vsel %vm275, %v293, %v268
        %v301 = vsel %vm275, %v295, %v268
        %v302 = vsel %vm275, %v297, %v268
        %v303 = vsel %vm275, %v299, %v268
        %308 = vrot.lane.b32.xlu0 %v248, 127
        %v309 = vpop.permute.xlu0 %308
        %310 = vrot.lane.b32.xlu0 %v249, 127
        %v311 = vpop.permute.xlu0 %310
        %312 = vrot.lane.b32.xlu0 %v250, 127
        %v313 = vpop.permute.xlu0 %312
        %314 = vrot.lane.b32.xlu0 %v251, 127
        %v315 = vpop.permute.xlu0 %314
        %316 = vrot.lane.b32.xlu0 %v248, 126
        %v317 = vpop.permute.xlu0 %316
        %318 = vrot.lane.b32.xlu0 %v249, 126
        %v319 = vpop.permute.xlu0 %318
        %320 = vrot.lane.b32.xlu0 %v250, 126
        %v321 = vpop.permute.xlu0 %320
        %322 = vrot.lane.b32.xlu0 %v251, 126
        %v323 = vpop.permute.xlu0 %322
        %v324 = vsel %vm275, %v317, %v268
        %v325 = vsel %vm275, %v319, %v268
        %v326 = vsel %vm275, %v321, %v268
        %v327 = vsel %vm275, %v323, %v268
        %329 = vset.pattern.permute.xlu0 0
        %330 = vperm.xlu0 %329, %v209
        %v331 = vpop.permute.xlu0 %330
        %334 = vset.pattern.permute.xlu0 0
        %335 = vperm.xlu0 %334, %v210
        %v336 = vpop.permute.xlu0 %335
        %339 = vset.pattern.permute.xlu0 0
        %340 = vperm.xlu0 %339, %v211
        %v341 = vpop.permute.xlu0 %340
        %344 = vset.pattern.permute.xlu0 0
        %345 = vperm.xlu0 %344, %v212
        %v346 = vpop.permute.xlu0 %345
        %348 = vrot.lane.b32.xlu0 0.0, 1
        %v349 = vpop.permute.xlu0 %348
        %350 = vrot.lane.b32.xlu0 %v234, 1
        %v351 = vpop.permute.xlu0 %350
        %352 = vrot.lane.b32.xlu0 %v235, 1
        %v353 = vpop.permute.xlu0 %352
        %354 = vrot.lane.b32.xlu0 %v236, 1
        %v355 = vpop.permute.xlu0 %354
        %356 = vrot.lane.b32.xlu0 %v237, 1
        %v357 = vpop.permute.xlu0 %356
        %358 = vrot.lane.b32.xlu0 %v257, 1
        %v359 = vpop.permute.xlu0 %358
        %360 = vrot.lane.b32.xlu0 %v259, 1
        %v361 = vpop.permute.xlu0 %360
        %362 = vrot.lane.b32.xlu0 %v261, 1
        %v363 = vpop.permute.xlu0 %362
        %364 = vrot.lane.b32.xlu0 %v263, 1
        %v365 = vpop.permute.xlu0 %364
        %366 = vrot.lane.b32.xlu0 %v266, 1
        %v367 = vpop.permute.xlu0 %366
        %368 = vrot.lane.b32.xlu0 %v276, 1
        %v369 = vpop.permute.xlu0 %368
        %370 = vrot.lane.b32.xlu0 %v270, 1
        %v371 = vpop.permute.xlu0 %370
        %372 = vrot.lane.b32.xlu0 %v277, 1
        %v373 = vpop.permute.xlu0 %372
        %374 = vrot.lane.b32.xlu0 %v272, 1
        %v375 = vpop.permute.xlu0 %374
        %376 = vrot.lane.b32.xlu0 %v278, 1
        %v377 = vpop.permute.xlu0 %376
        %378 = vrot.lane.b32.xlu0 %v274, 1
        %v379 = vpop.permute.xlu0 %378
        %380 = vrot.lane.b32.xlu0 %v279, 1
        %v381 = vpop.permute.xlu0 %380
        %382 = vrot.lane.b32.xlu0 %v241, 1
        %v383 = vpop.permute.xlu0 %382
        %384 = vrot.lane.b32.xlu0 %v242, 1
        %v385 = vpop.permute.xlu0 %384
        %386 = vrot.lane.b32.xlu0 %v243, 1
        %v387 = vpop.permute.xlu0 %386
        %388 = vrot.lane.b32.xlu0 %v244, 1
        %v389 = vpop.permute.xlu0 %388
        %390 = vrot.lane.b32.xlu0 %v285, 1
        %v391 = vpop.permute.xlu0 %390
        %392 = vrot.lane.b32.xlu0 %v287, 1
        %v393 = vpop.permute.xlu0 %392
        %394 = vrot.lane.b32.xlu0 %v289, 1
        %v395 = vpop.permute.xlu0 %394
        %396 = vrot.lane.b32.xlu0 %v291, 1
        %v397 = vpop.permute.xlu0 %396
        %398 = vrot.lane.b32.xlu0 %v293, 1
        %v399 = vpop.permute.xlu0 %398
        %400 = vrot.lane.b32.xlu0 %v300, 1
        %v401 = vpop.permute.xlu0 %400
        %402 = vrot.lane.b32.xlu0 %v295, 1
        %v403 = vpop.permute.xlu0 %402
        %404 = vrot.lane.b32.xlu0 %v301, 1
        %v405 = vpop.permute.xlu0 %404
        %406 = vrot.lane.b32.xlu0 %v297, 1
        %v407 = vpop.permute.xlu0 %406
        %408 = vrot.lane.b32.xlu0 %v302, 1
        %v409 = vpop.permute.xlu0 %408
        %410 = vrot.lane.b32.xlu0 %v299, 1
        %v411 = vpop.permute.xlu0 %410
        %412 = vrot.lane.b32.xlu0 %v303, 1
        %v413 = vpop.permute.xlu0 %412
        %414 = vrot.lane.b32.xlu0 %v248, 1
        %v415 = vpop.permute.xlu0 %414
        %416 = vrot.lane.b32.xlu0 %v249, 1
        %v417 = vpop.permute.xlu0 %416
        %418 = vrot.lane.b32.xlu0 %v250, 1
        %v419 = vpop.permute.xlu0 %418
        %420 = vrot.lane.b32.xlu0 %v251, 1
        %v421 = vpop.permute.xlu0 %420
        %422 = vrot.lane.b32.xlu0 %v309, 1
        %v423 = vpop.permute.xlu0 %422
        %424 = vrot.lane.b32.xlu0 %v311, 1
        %v425 = vpop.permute.xlu0 %424
        %426 = vrot.lane.b32.xlu0 %v313, 1
        %v427 = vpop.permute.xlu0 %426
        %428 = vrot.lane.b32.xlu0 %v315, 1
        %v429 = vpop.permute.xlu0 %428
        %430 = vrot.lane.b32.xlu0 %v317, 1
        %v431 = vpop.permute.xlu0 %430
        %432 = vrot.lane.b32.xlu0 %v324, 1
        %v433 = vpop.permute.xlu0 %432
        %434 = vrot.lane.b32.xlu0 %v319, 1
        %v435 = vpop.permute.xlu0 %434
        %436 = vrot.lane.b32.xlu0 %v325, 1
        %v437 = vpop.permute.xlu0 %436
        %438 = vrot.lane.b32.xlu0 %v321, 1
        %v439 = vpop.permute.xlu0 %438
        %440 = vrot.lane.b32.xlu0 %v326, 1
        %v441 = vpop.permute.xlu0 %440
        %442 = vrot.lane.b32.xlu0 %v323, 1
        %v443 = vpop.permute.xlu0 %442
        %444 = vrot.lane.b32.xlu0 %v327, 1
        %v445 = vpop.permute.xlu0 %444
        %vm446 = vcmask 7168
        %v447 = vsel %vm446, %v349, %v351
        %v448 = vsel %vm446, %v349, %v353
        %v449 = vsel %vm446, %v349, %v355
        %v450 = vsel %vm446, %v349, %v357
        %v451 = vsel %vm446, %v367, %v369
        %v452 = vsel %vm446, %v371, %v373
        %v453 = vsel %vm446, %v375, %v377
        %v454 = vsel %vm446, %v379, %v381
        %v455 = vsel %vm446, %v349, %v383
        %v456 = vsel %vm446, %v349, %v385
        %v457 = vsel %vm446, %v349, %v387
        %v458 = vsel %vm446, %v349, %v389
        %v459 = vsel %vm446, %v399, %v401
        %v460 = vsel %vm446, %v403, %v405
        %v461 = vsel %vm446, %v407, %v409
        %v462 = vsel %vm446, %v411, %v413
        %v463 = vsel %vm446, %v349, %v415
        %v464 = vsel %vm446, %v349, %v417
        %v465 = vsel %vm446, %v349, %v419
        %v466 = vsel %vm446, %v349, %v421
        %v467 = vsel %vm446, %v431, %v433
        %v468 = vsel %vm446, %v435, %v437
        %v469 = vsel %vm446, %v439, %v441
        %v470 = vsel %vm446, %v443, %v445
        %vm507 = vcmask 261120
        %v509 = vsel %vm507, %v199, 0
        %v512 = vsel %vm507, %v202, 0
        %v515 = vsel %vm507, %v205, 0
        %v518 = vsel %vm507, %v208, 0
        %520 = vmatpush.msra.mxu0 %v458
        %521 = vmatpush.msra.mxu0 %v457
        %522 = vmatpush.msra.mxu0 %v456
        %523 = vmatpush.msra.mxu0 %v455
        %524 = vmatpush.msra.mxu0 %v454
        %525 = vmatpush.msra.mxu0 %v453
        %526 = vmatpush.msra.mxu0 %v452
        %527 = vmatpush.msra.mxu0 %v451
        %528 = vmatpush.msra.mxu0 %v365
        %529 = vmatpush.msra.mxu0 %v363
        %530 = vmatpush.msra.mxu0 %v361
        %531 = vmatpush.msra.mxu0 %v359
        %532 = vmatpush.msra.mxu0 %v450
        %533 = vmatpush.msra.mxu0 %v449
        %534 = vmatpush.msra.mxu0 %v448
        %535 = vmatpush.msra.mxu0 %v447
        %536 = vmatmul.f32.gmra.mxu0 %v197
        %v537 = vpop.f32.mrf.mxu0
        %v538 = vadd.f32 %v331, %v537
        %539 = vmatmul.f32.gmra.mxu0 %v200
        %v540 = vpop.f32.mrf.mxu0
        %v541 = vadd.f32 %v336, %v540
        %542 = vmatmul.f32.gmra.mxu0 %v203
        %v543 = vpop.f32.mrf.mxu0
        %v544 = vadd.f32 %v341, %v543
        %545 = vmatmul.f32.gmra.mxu0 %v206
        %v546 = vpop.f32.mrf.mxu0
        %v547 = vadd.f32 %v346, %v546
        %548 = vdwg.mxu0
        %549 = vmatpush.msra.mxu0 %v429
        %550 = vmatpush.msra.mxu0 %v427
        %551 = vmatpush.msra.mxu0 %v425
        %552 = vmatpush.msra.mxu0 %v423
        %553 = vmatpush.msra.mxu0 %v466
        %554 = vmatpush.msra.mxu0 %v465
        %555 = vmatpush.msra.mxu0 %v464
        %556 = vmatpush.msra.mxu0 %v463
        %557 = vmatpush.msra.mxu0 %v462
        %558 = vmatpush.msra.mxu0 %v461
        %559 = vmatpush.msra.mxu0 %v460
        %560 = vmatpush.msra.mxu0 %v459
        %561 = vmatpush.msra.mxu0 %v397
        %562 = vmatpush.msra.mxu0 %v395
        %563 = vmatpush.msra.mxu0 %v393
        %564 = vmatpush.msra.mxu0 %v391
        %565 = vmatmul.f32.gmra.mxu0 %v198
        %v566 = vpop.f32.mrf.mxu0
        %v567 = vadd.f32 %v538, %v566
        %568 = vmatmul.f32.gmra.mxu0 %v201
        %v569 = vpop.f32.mrf.mxu0
        %v570 = vadd.f32 %v541, %v569
        %571 = vmatmul.f32.gmra.mxu0 %v204
        %v572 = vpop.f32.mrf.mxu0
        %v573 = vadd.f32 %v544, %v572
        %574 = vmatmul.f32.gmra.mxu0 %v207
        %v575 = vpop.f32.mrf.mxu0
        %v576 = vadd.f32 %v547, %v575
        %577 = vdwg.mxu0
        %578 = vmatpush.msra.mxu0 0.0
        %579 = vmatpush.msra.mxu0 0.0
        %580 = vmatpush.msra.mxu0 0.0
        %581 = vmatpush.msra.mxu0 0.0
        %582 = vmatpush.msra.mxu0 0.0
        %583 = vmatpush.msra.mxu0 0.0
        %584 = vmatpush.msra.mxu0 0.0
        %585 = vmatpush.msra.mxu0 0.0
        %586 = vmatpush.msra.mxu0 0.0
        %587 = vmatpush.msra.mxu0 0.0
        %588 = vmatpush.msra.mxu0 0.0
        %589 = vmatpush.msra.mxu0 0.0
        %590 = vmatpush.msra.mxu0 %v470
        %591 = vmatpush.msra.mxu0 %v469
        %592 = vmatpush.msra.mxu0 %v468
        %593 = vmatpush.msra.mxu0 %v467
        %594 = vmatmul.f32.gmra.mxu0 %v509
        %v595 = vpop.f32.mrf.mxu0
        %v596 = vadd.f32 %v567, %v595
        %597 = vmatmul.f32.gmra.mxu0 %v512
        %v598 = vpop.f32.mrf.mxu0
        %v599 = vadd.f32 %v570, %v598
        %600 = vmatmul.f32.gmra.mxu0 %v515
        %v601 = vpop.f32.mrf.mxu0
        %v602 = vadd.f32 %v573, %v601
        %603 = vmatmul.f32.gmra.mxu0 %v518
        %v604 = vpop.f32.mrf.mxu0
        %v605 = vadd.f32 %v576, %v604
        %606 = vdwg.mxu0
        %vm607 = vcmp.gt.f32.partialorder %v596, 0.0
        %vm608 = vcmp.gt.f32.partialorder %v599, 0.0
        %vm609 = vcmp.gt.f32.partialorder %v602, 0.0
        %vm610 = vcmp.gt.f32.partialorder %v605, 0.0
        %v611 = vmul.f32 %v596, 0.1
        %v612 = vmul.f32 %v599, 0.1
        %v613 = vmul.f32 %v602, 0.1
        %v614 = vmul.f32 %v605, 0.1
        %v615 = vsel %vm607, %v596, %v611
        %v616 = vsel %vm608, %v599, %v612
        %v617 = vsel %vm609, %v602, %v613
        %v618 = vsel %vm610, %v605, %v614
        %s619 = scalar_select %p227, 1, 0
        %v620 = vstv %s619
        %vm621 = vcmp.eq.s32.totalorder %v620, 1
        %vm622 = vmand %vm621, %vm215
        %v623 = vsel %vm622, %v615, 0.0
        %v624 = vsel %vm622, %v616, 0.0
        %v625 = vsel %vm622, %v617, 0.0
        %v626 = vsel %vm622, %v618, 0.0
        %s627 = smul.u32 %s217, 32
        %s628 = scalar_lea.vmem %s194, %s627
        %629 = vst [vmem:[%s628] sm:$0xff] %v623
        %630 = vst [vmem:[%s628 + $0x8] sm:$0xff] %v624
        %631 = vst [vmem:[%s628 + $0x10] sm:$0xff] %v625
        %632 = vst [vmem:[%s628 + $0x18] sm:$0xff] %v626
      $region37: #{discriminator_r_forward.12} parent=31 // loop_footer
        %s221 = sadd.s32 1, %s217
      $region38: #{discriminator_r_forward.12} parent=31 // loop_footer_branch
        %216 = sbr.rel target = $region34
      $region39: #{discriminator_r_forward.12} parent=31 // loop_exit
        _
      %s633 = smul.u32 3, %s19
      %p634 = scmp.lt.s32.totalorder %s18, 1
      %s635 = scalar_select %p634, %s18, 1
      %p636 = scmp.lt.s32.totalorder %s633, 2
      %s637 = scalar_select %p636, %s633, 2
      %s638 = smul.addr %s637, 4
      %s639 = smul.addr %s635, 12
      %s640 = sadd.s32 %s638, %s639
      %s641 = smul.addr %s640, 8
      %s642 = scalar_lea.vmem %s3, %s641
      // Predicated region
      $region40: #{discriminator_r_forward.12} parent=31 // pred_check
        %p643 = pneg %p114
      $region41: #{discriminator_r_forward.12} parent=31 // pred_check_branch
        %645 = sbr.rel (%p643) target = $region43
      $region42: #{discriminator_r_forward.12} parent=31 // pred_region
        %s646 = smul.u32 3, %s19
      $region43: #{discriminator_r_forward.12} parent=31 // pred_fallthru
        _
    $region32: #{discriminator_r_forward.12} parent=5 // pred_fallthru
      _
    %p647 = scmp.le.s32.totalorder 2, %s9
    // Predicated region
    $region44: #{discriminator_r_forward.12} parent=5 // pred_check
      %p648 = pneg %p647
    $region45: #{discriminator_r_forward.12} parent=5 // pred_check_branch
      %650 = sbr.rel (%p648) target = $region47
    $region46: #{discriminator_r_forward.12} parent=5 // pred_region
      %s651 = ssub.s32 %s9, 2
      // Predicated region
      $region48: #{discriminator_r_forward.12} parent=46 // pred_check
        %p652 = pneg %p120
      $region49: #{discriminator_r_forward.12} parent=46 // pred_check_branch
        %654 = sbr.rel (%p652) target = $region51
      $region50: #{discriminator_r_forward.12} parent=46 // pred_region
        %s655 = smul.u32 3, %s21
        %p656 = scmp.lt.s32.totalorder %s20, 1
        %s657 = scalar_select %p656, %s20, 1
        %p658 = scmp.lt.s32.totalorder %s655, 2
        %s659 = scalar_select %p658, %s655, 2
        %s660 = smul.addr %s659, 4
        %s661 = smul.addr %s657, 12
        %s662 = sadd.s32 %s660, %s661
        %s663 = smul.addr %s662, 8
        %s664 = scalar_lea.vmem %s3, %s663
      $region51: #{discriminator_r_forward.12} parent=46 // pred_fallthru
        _
    $region47: #{discriminator_r_forward.12} parent=5 // pred_fallthru
      _
  $region6: #{discriminator_r_forward.12} parent=0 // loop_footer
    %s13 = sadd.s32 1, %s9
  $region7: #{discriminator_r_forward.12} parent=0 // loop_footer_branch
    %8 = sbr.rel target = $region3
  $region8: #{discriminator_r_forward.12} parent=0 // loop_exit
    _

// kernel: discriminator_r_forward.11
$region0: #{discriminator_r_forward.11}
  #allocation0 [shape = 'u32[]', space=smem, size = 0x4, offset = 0x4, fixed_abs, tag = 'smem constant byte address 0x4 - core index']
  #allocation1 [shape = 'u32[72,128]{1,0:T(1,128)}', space=vmem, size = 0x9000, scoped, tag = 'internal scratch']
  %s0 = inlined_call_operand.vmem [shape: f32[2,9,32,128], index: 0, kind: input, shape index: {}]
  %s1 = inlined_call_operand.vmem [shape: f32[32,864], index: 1, kind: input, shape index: {}]
  %s2 = inlined_call_operand.vmem [shape: f32[32,1], index: 2, kind: input, shape index: {}]
  %s3 = inlined_call_operand.vmem [shape: f32[2,3,32,128], index: 3, kind: output, shape index: {}]
  %s4 = sld [smem:[#allocation0]]
  $region52: #{discriminator_r_forward.11} parent=0
    _
  %s6 = ssub.s32 1, %s4
  %s7 = scalar_select 0, %s6, %s4
  loop: start=0, step=1, limit=4
  $region2: #{discriminator_r_forward.11} parent=0 // loop_pre_header
    _
  $region3: #{discriminator_r_forward.11} parent=0 // loop_header
    %s9 = sphi 0, %s13
    %p10 = scmp.ge.s32.totalorder %s9, 4
    %s16 = sphi 0, %s28
    %s17 = sphi 0, %s24
    %s18 = sphi 0, %s16
    %s19 = sphi 0, %s17
    %s20 = sphi 0, %s18
    %s21 = sphi 0, %s19
    %s31 = sphi 0, %s33
    %s34 = sphi 0, %s31
    %s35 = sphi 0, %s34
    %s51 = sphi 0, %s35
    %s55 = sphi 0, %s55
    %s57 = sphi 0, %s55
    %s58 = sphi 0, %s57
    %s72 = sphi 0, %s58
    %s76 = sphi 0, %s76
    %s78 = sphi 0, %s76
    %s79 = sphi 0, %s78
    %s93 = sphi 0, %s79
    %s101 = sphi 0, %s103
    %s104 = sphi 0, %s101
    %s105 = sphi 0, %s104
    %s121 = sphi 0, %s105
  $region4: #{discriminator_r_forward.11} parent=0 // loop_header_branch
    %12 = sbr.rel (%p10) target = $region8
  $region5: #{discriminator_r_forward.11} parent=0 // loop_body
    %s14 = ssub.s32 %s9, 1
    %s15 = ssub.s32 %s9, 2
    %s22 = sadd.s32 1, %s17
    %p23 = scmp.ge.s32.totalorder %s22, 1
    %s24 = scalar_select %p23, 0, %s22
    %s25 = sadd.s32 1, %s16
    %s26 = scalar_select %p23, %s25, %s16
    %p27 = scmp.ge.s32.totalorder %s26, 2
    %s28 = scalar_select %p27, 0, %s26
    %s29 = ssub.s32 %s16, %s28
    %p30 = scmp.eq.s32.totalorder %s29, 0
    %s32 = sadd.s32 %s31, 1
    %s33 = scalar_select %p30, %s31, %s32
    %p36 = pneg %p30
    %p37 = scmp.eq.s32.totalorder %s9, 1
    %p38 = por %p36, %p37
    %p39 = scmp.ne.s32.totalorder %s31, %s34
    %p40 = scmp.eq.s32.totalorder %s9, 0
    %p41 = por %p39, %p40
    %p42 = scmp.ne.s32.totalorder %s31, %s34
    %p43 = scmp.eq.s32.totalorder %s14, 1
    %p44 = por %p42, %p43
    %p45 = scmp.ne.s32.totalorder %s34, %s35
    %p46 = scmp.eq.s32.totalorder %s14, 0
    %p47 = por %p45, %p46
    %p48 = scmp.ne.s32.totalorder %s34, %s35
    %p49 = scmp.eq.s32.totalorder %s15, 1
    %p50 = por %p48, %p49
    %p52 = scmp.ne.s32.totalorder %s35, %s51
    %p53 = scmp.eq.s32.totalorder %s15, 0
    %p54 = por %p52, %p53
    %s56 = sadd.s32 %s55, 1
    %p59 = scmp.eq.s32.totalorder %s9, 1
    %p60 = scmp.ne.s32.totalorder %s55, %s57
    %p61 = scmp.eq.s32.totalorder %s9, 0
    %p62 = por %p60, %p61
    %p63 = scmp.ne.s32.totalorder %s55, %s57
    %p64 = scmp.eq.s32.totalorder %s14, 1
    %p65 = por %p63, %p64
    %p66 = scmp.ne.s32.totalorder %s57, %s58
    %p67 = scmp.eq.s32.totalorder %s14, 0
    %p68 = por %p66, %p67
    %p69 = scmp.ne.s32.totalorder %s57, %s58
    %p70 = scmp.eq.s32.totalorder %s15, 1
    %p71 = por %p69, %p70
    %p73 = scmp.ne.s32.totalorder %s58, %s72
    %p74 = scmp.eq.s32.totalorder %s15, 0
    %p75 = por %p73, %p74
    %s77 = sadd.s32 %s76, 1
    %p80 = scmp.eq.s32.totalorder %s9, 1
    %p81 = scmp.ne.s32.totalorder %s76, %s78
    %p82 = scmp.eq.s32.totalorder %s9, 0
    %p83 = por %p81, %p82
    %p84 = scmp.ne.s32.totalorder %s76, %s78
    %p85 = scmp.eq.s32.totalorder %s14, 1
    %p86 = por %p84, %p85
    %p87 = scmp.ne.s32.totalorder %s78, %s79
    %p88 = scmp.eq.s32.totalorder %s14, 0
    %p89 = por %p87, %p88
    %p90 = scmp.ne.s32.totalorder %s78, %s79
    %p91 = scmp.eq.s32.totalorder %s15, 1
    %p92 = por %p90, %p91
    %p94 = scmp.ne.s32.totalorder %s79, %s93
    %p95 = scmp.eq.s32.totalorder %s15, 0
    %p96 = por %p94, %p95
    %s97 = ssub.s32 %s16, %s28
    %s98 = ssub.s32 %s17, %s24
    %s99 = sor.u32 %s97, %s98
    %p100 = scmp.eq.s32.totalorder %s99, 0
    %s102 = sadd.s32 %s101, 1
    %s103 = scalar_select %p100, %s101, %s102
    %p106 = pneg %p100
    %p107 = scmp.eq.s32.totalorder %s9, 1
    %p108 = por %p106, %p107
    %p109 = scmp.ne.s32.totalorder %s101, %s104
    %p110 = scmp.eq.s32.totalorder %s9, 0
    %p111 = por %p109, %p110
    %p112 = scmp.ne.s32.totalorder %s101, %s104
    %p113 = scmp.eq.s32.totalorder %s14, 1
    %p114 = por %p112, %p113
    %p115 = scmp.ne.s32.totalorder %s104, %s105
    %p116 = scmp.eq.s32.totalorder %s14, 0
    %p117 = por %p115, %p116
    %p118 = scmp.ne.s32.totalorder %s104, %s105
    %p119 = scmp.eq.s32.totalorder %s15, 1
    %p120 = por %p118, %p119
    %p122 = scmp.ne.s32.totalorder %s105, %s121
    %p123 = scmp.eq.s32.totalorder %s15, 0
    %p124 = por %p122, %p123
    %p125 = scmp.le.s32.totalorder 1, %s9
    %p126 = scmp.lt.s32.totalorder %s9, 3
    %p127 = pnand %p125, %p126
    %p128 = pneg %p127
    // Predicated region
    $region9: #{discriminator_r_forward.11} parent=5 // pred_check
      _
    $region10: #{discriminator_r_forward.11} parent=5 // pred_check_branch
      %130 = sbr.rel (%p127) target = $region12
    $region11: #{discriminator_r_forward.11} parent=5 // pred_region
      %s131 = ssub.s32 %s9, 1
      // Predicated region
      $region13: #{discriminator_r_forward.11} parent=11 // pred_check
        %p132 = pneg %p68
      $region14: #{discriminator_r_forward.11} parent=11 // pred_check_branch
        %134 = sbr.rel (%p132) target = $region16
      $region15: #{discriminator_r_forward.11} parent=11 // pred_region
        _
      $region16: #{discriminator_r_forward.11} parent=11 // pred_fallthru
        _
      // Predicated region
      $region17: #{discriminator_r_forward.11} parent=11 // pred_check
        %p135 = pneg %p89
      $region18: #{discriminator_r_forward.11} parent=11 // pred_check_branch
        %137 = sbr.rel (%p135) target = $region20
      $region19: #{discriminator_r_forward.11} parent=11 // pred_region
        _
      $region20: #{discriminator_r_forward.11} parent=11 // pred_fallthru
        _
    $region12: #{discriminator_r_forward.11} parent=5 // pred_fallthru
      _
    %p138 = scmp.lt.s32.totalorder %s9, 2
    // Predicated region
    $region21: #{discriminator_r_forward.11} parent=5 // pred_check
      %p139 = pneg %p138
    $region22: #{discriminator_r_forward.11} parent=5 // pred_check_branch
      %141 = sbr.rel (%p139) target = $region24
    $region23: #{discriminator_r_forward.11} parent=5 // pred_region
      // Predicated region
      $region25: #{discriminator_r_forward.11} parent=23 // pred_check
        %p142 = pneg %p41
      $region26: #{discriminator_r_forward.11} parent=23 // pred_check_branch
        %144 = sbr.rel (%p142) target = $region28
      $region27: #{discriminator_r_forward.11} parent=23 // pred_region
        %p145 = scmp.lt.s32.totalorder %s16, 1
        %s146 = scalar_select %p145, %s16, 1
        %s147 = smul.addr %s146, 36
        %s148 = smul.addr %s147, 8
        %s149 = scalar_lea.vmem %s0, %s148
      $region28: #{discriminator_r_forward.11} parent=23 // pred_fallthru
        _
    $region24: #{discriminator_r_forward.11} parent=5 // pred_fallthru
      _
    %p150 = scmp.le.s32.totalorder 1, %s9
    %p151 = scmp.lt.s32.totalorder %s9, 3
    %p152 = pnand %p150, %p151
    %p153 = pneg %p152
    // Predicated region
    $region29: #{discriminator_r_forward.11} parent=5 // pred_check
      _
    $region30: #{discriminator_r_forward.11} parent=5 // pred_check_branch
      %155 = sbr.rel (%p152) target = $region32
    $region31: #{discriminator_r_forward.11} parent=5 // pred_region
      %s156 = ssub.s32 %s9, 1
      %p157 = scmp.lt.s32.totalorder %s18, 1
      %s158 = scalar_select %p157, %s18, 1
      %s159 = smul.addr %s158, 36
      %s160 = smul.addr %s159, 8
      %s161 = scalar_lea.vmem %s0, %s160
      %p162 = pneg %p47
      %p163 = pneg %p44
      %p164 = pneg %p68
      %p165 = pneg %p65
      %p166 = pneg %p89
      %p167 = pneg %p86
      %p168 = pneg %p117
      %p169 = pneg %p114
      %s170 = smul.u32 3, %s19
      %p171 = scmp.lt.s32.totalorder %s18, 1
      %s172 = scalar_select %p171, %s18, 1
      %p173 = scmp.lt.s32.totalorder %s170, 2
      %s174 = scalar_select %p173, %s170, 2
      %s175 = smul.addr %s174, 4
      %s176 = smul.addr %s172, 12
      %s177 = sadd.s32 %s175, %s176
      %s178 = smul.addr %s177, 8
      %s179 = scalar_lea.vmem %s3, %s178
      %p180 = scmp.lt.s32.totalorder %s18, 1
      %s181 = scalar_select %p180, %s18, 1
      %s182 = smul.addr %s181, 36
      %s183 = smul.addr %s182, 8
      %s184 = scalar_lea.vmem %s0, %s183
      %s185 = smul.u32 3, %s19
      %p186 = scmp.lt.s32.totalorder %s18, 1
      %s187 = scalar_select %p186, %s18, 1
      %p188 = scmp.lt.s32.totalorder %s185, 2
      %s189 = scalar_select %p188, %s185, 2
      %s190 = smul.addr %s189, 4
      %s191 = smul.addr %s187, 12
      %s192 = sadd.s32 %s190, %s191
      %s193 = smul.addr %s192, 8
      %s194 = scalar_lea.vmem %s3, %s193
      %s195 = smul.u32 3, %s19
      %s196 = smul.u32 %s19, 3
      %v197 = vld [vmem:[%s1] sm:$0xff]
      %v198 = vld [vmem:[%s1 + $0x8] sm:$0xff]
      %v199 = vld [vmem:[%s1 + $0x10] sm:$0xff]
      %v200 = vld [vmem:[%s1 + $0x18] sm:$0xff]
      %v201 = vld [vmem:[%s1 + $0x20] sm:$0xff]
      %v202 = vld [vmem:[%s1 + $0x28] sm:$0xff]
      %v203 = vld [vmem:[%s1 + $0x30] sm:$0xff]
      %v204 = vld [vmem:[%s1 + $0x38] sm:$0xff]
      %v205 = vld [vmem:[%s1 + $0x40] sm:$0xff]
      %v206 = vld [vmem:[%s1 + $0x48] sm:$0xff]
      %v207 = vld [vmem:[%s1 + $0x50] sm:$0xff]
      %v208 = vld [vmem:[%s1 + $0x58] sm:$0xff]
      %v209 = vld [vmem:[%s1 + $0x60] sm:$0xff]
      %v210 = vld [vmem:[%s1 + $0x68] sm:$0xff]
      %v211 = vld [vmem:[%s1 + $0x70] sm:$0xff]
      %v212 = vld [vmem:[%s1 + $0x78] sm:$0xff]
      %v213 = vld [vmem:[%s1 + $0x80] sm:$0xff]
      %v214 = vld [vmem:[%s1 + $0x88] sm:$0xff]
      %v215 = vld [vmem:[%s1 + $0x90] sm:$0xff]
      %v216 = vld [vmem:[%s1 + $0x98] sm:$0xff]
      %v217 = vld [vmem:[%s1 + $0xa0] sm:$0xff]
      %v218 = vld [vmem:[%s1 + $0xa8] sm:$0xff]
      %v219 = vld [vmem:[%s1 + $0xb0] sm:$0xff]
      %v220 = vld [vmem:[%s1 + $0xb8] sm:$0xff]
      %v221 = vld [vmem:[%s1 + $0xc0] sm:$0xff]
      %v222 = vld [vmem:[%s1 + $0xc8] sm:$0xff]
      %v223 = vld [vmem:[%s1 + $0xd0] sm:$0xff]
      %v224 = vld [vmem:[%s1 + $0xd8] sm:$0xff]
      %v225 = vld [vmem:[%s2] sm:$0xff]
      %v226 = vld [vmem:[%s2 + $0x8] sm:$0xff]
      %v227 = vld [vmem:[%s2 + $0x10] sm:$0xff]
      %v228 = vld [vmem:[%s2 + $0x18] sm:$0xff]
      %v229 = vlaneseq
      %v230 = vand.u32 %v229, 127
      %vm231 = vcmp.lt.s32.totalorder %v230, 17
      loop: start=0, step=1, limit=3
      $region33: #{discriminator_r_forward.11} parent=31 // loop_pre_header
        _
      $region34: #{discriminator_r_forward.11} parent=31 // loop_header
        %s233 = sphi 0, %s237
        %p234 = scmp.ge.s32.totalorder %s233, 3
      $region35: #{discriminator_r_forward.11} parent=31 // loop_header_branch
        %236 = sbr.rel (%p234) target = $region39
      $region36: #{discriminator_r_forward.11} parent=31 // loop_body
        %s238 = sadd.s32 %s196, %s233
        %s239 = ssub.s32 %s238, 1
        %p240 = scmp.ge.s32.totalorder %s239, 0
        %p241 = scmp.lt.s32.totalorder %s239, 1
        %p242 = pnand %p240, %p241
        %p243 = pneg %p242
        %s244 = smul.u32 %s239, 2
        %p245 = scmp.gt.s32.totalorder %s244, 0
        %s246 = scalar_select %p245, %s244, 0
        %p247 = scmp.lt.s32.totalorder %s246, 0
        %s248 = scalar_select %p247, %s246, 0
        %s249 = smul.u32 %s248, 32
        %s250 = scalar_lea.vmem %s184, %s249
        %v251 = vld [vmem:[%s250] sm:$0xff]
        %v252 = vld [vmem:[%s250 + $0x8] sm:$0xff]
        %v253 = vld [vmem:[%s250 + $0x10] sm:$0xff]
        %v254 = vld [vmem:[%s250 + $0x18] sm:$0xff]
        %s255 = sadd.s32 %s248, 1
        %s256 = smul.u32 %s255, 32
        %s257 = scalar_lea.vmem %s184, %s256
        %v258 = vld [vmem:[%s257] sm:$0xff]
        %v259 = vld [vmem:[%s257 + $0x8] sm:$0xff]
        %v260 = vld [vmem:[%s257 + $0x10] sm:$0xff]
        %v261 = vld [vmem:[%s257 + $0x18] sm:$0xff]
        %s262 = sadd.s32 %s248, 2
        %s263 = smul.u32 %s262, 32
        %s264 = scalar_lea.vmem %s184, %s263
        %v265 = vld [vmem:[%s264] sm:$0xff]
        %v266 = vld [vmem:[%s264 + $0x8] sm:$0xff]
        %v267 = vld [vmem:[%s264 + $0x10] sm:$0xff]
        %v268 = vld [vmem:[%s264 + $0x18] sm:$0xff]
        %s269 = sadd.s32 %s248, 3
        %s270 = smul.u32 %s269, 32
        %s271 = scalar_lea.vmem %s184, %s270
        %v272 = vld [vmem:[%s271] sm:$0xff]
        %v273 = vld [vmem:[%s271 + $0x8] sm:$0xff]
        %v274 = vld [vmem:[%s271 + $0x10] sm:$0xff]
        %v275 = vld [vmem:[%s271 + $0x18] sm:$0xff]
        %s276 = sadd.s32 %s248, 4
        %s277 = smul.u32 %s276, 32
        %s278 = scalar_lea.vmem %s184, %s277
        %v279 = vld [vmem:[%s278] sm:$0xff]
        %v280 = vld [vmem:[%s278 + $0x8] sm:$0xff]
        %v281 = vld [vmem:[%s278 + $0x10] sm:$0xff]
        %v282 = vld [vmem:[%s278 + $0x18] sm:$0xff]
        %s283 = sadd.s32 %s248, 5
        %s284 = smul.u32 %s283, 32
        %s285 = scalar_lea.vmem %s184, %s284
        %v286 = vld [vmem:[%s285] sm:$0xff]
        %v287 = vld [vmem:[%s285 + $0x8] sm:$0xff]
        %v288 = vld [vmem:[%s285 + $0x10] sm:$0xff]
        %v289 = vld [vmem:[%s285 + $0x18] sm:$0xff]
        %s290 = sadd.s32 %s248, 6
        %s291 = smul.u32 %s290, 32
        %s292 = scalar_lea.vmem %s184, %s291
        %v293 = vld [vmem:[%s292] sm:$0xff]
        %v294 = vld [vmem:[%s292 + $0x8] sm:$0xff]
        %v295 = vld [vmem:[%s292 + $0x10] sm:$0xff]
        %v296 = vld [vmem:[%s292 + $0x18] sm:$0xff]
        %s297 = sadd.s32 %s248, 7
        %s298 = smul.u32 %s297, 32
        %s299 = scalar_lea.vmem %s184, %s298
        %v300 = vld [vmem:[%s299] sm:$0xff]
        %v301 = vld [vmem:[%s299 + $0x8] sm:$0xff]
        %v302 = vld [vmem:[%s299 + $0x10] sm:$0xff]
        %v303 = vld [vmem:[%s299 + $0x18] sm:$0xff]
        %s304 = sadd.s32 %s248, 8
        %s305 = smul.u32 %s304, 32
        %s306 = scalar_lea.vmem %s184, %s305
        %v307 = vld [vmem:[%s306] sm:$0xff]
        %v308 = vld [vmem:[%s306 + $0x8] sm:$0xff]
        %v309 = vld [vmem:[%s306 + $0x10] sm:$0xff]
        %v310 = vld [vmem:[%s306 + $0x18] sm:$0xff]
        %315 = vrot.lane.b32.xlu0 %v251, 127
        %v316 = vpop.permute.xlu0 %315
        %317 = vrot.lane.b32.xlu0 %v252, 127
        %v318 = vpop.permute.xlu0 %317
        %319 = vrot.lane.b32.xlu0 %v253, 127
        %v320 = vpop.permute.xlu0 %319
        %321 = vrot.lane.b32.xlu0 %v254, 127
        %v322 = vpop.permute.xlu0 %321
        %324 = vrot.lane.b32.xlu0 %v251, 126
        %v325 = vpop.permute.xlu0 %324
        %326 = vrot.lane.b32.xlu0 0.0, 126
        %v327 = vpop.permute.xlu0 %326
        %328 = vrot.lane.b32.xlu0 %v252, 126
        %v329 = vpop.permute.xlu0 %328
        %330 = vrot.lane.b32.xlu0 %v253, 126
        %v331 = vpop.permute.xlu0 %330
        %332 = vrot.lane.b32.xlu0 %v254, 126
        %v333 = vpop.permute.xlu0 %332
        %vm334 = vcmask 1031168
        %v335 = vsel %vm334, %v325, %v327
        %v336 = vsel %vm334, %v329, %v327
        %v337 = vsel %vm334, %v331, %v327
        %v338 = vsel %vm334, %v333, %v327
        %343 = vrot.lane.b32.xlu0 %v258, 127
        %v344 = vpop.permute.xlu0 %343
        %345 = vrot.lane.b32.xlu0 %v259, 127
        %v346 = vpop.permute.xlu0 %345
        %347 = vrot.lane.b32.xlu0 %v260, 127
        %v348 = vpop.permute.xlu0 %347
        %349 = vrot.lane.b32.xlu0 %v261, 127
        %v350 = vpop.permute.xlu0 %349
        %351 = vrot.lane.b32.xlu0 %v258, 126
        %v352 = vpop.permute.xlu0 %351
        %353 = vrot.lane.b32.xlu0 %v259, 126
        %v354 = vpop.permute.xlu0 %353
        %355 = vrot.lane.b32.xlu0 %v260, 126
        %v356 = vpop.permute.xlu0 %355
        %357 = vrot.lane.b32.xlu0 %v261, 126
        %v358 = vpop.permute.xlu0 %357
        %v359 = vsel %vm334, %v352, %v327
        %v360 = vsel %vm334, %v354, %v327
        %v361 = vsel %vm334, %v356, %v327
        %v362 = vsel %vm334, %v358, %v327
        %367 = vrot.lane.b32.xlu0 %v265, 127
        %v368 = vpop.permute.xlu0 %367
        %369 = vrot.lane.b32.xlu0 %v266, 127
        %v370 = vpop.permute.xlu0 %369
        %371 = vrot.lane.b32.xlu0 %v267, 127
        %v372 = vpop.permute.xlu0 %371
        %373 = vrot.lane.b32.xlu0 %v268, 127
        %v374 = vpop.permute.xlu0 %373
        %375 = vrot.lane.b32.xlu0 %v265, 126
        %v376 = vpop.permute.xlu0 %375
        %377 = vrot.lane.b32.xlu0 %v266, 126
        %v378 = vpop.permute.xlu0 %377
        %379 = vrot.lane.b32.xlu0 %v267, 126
        %v380 = vpop.permute.xlu0 %379
        %381 = vrot.lane.b32.xlu0 %v268, 126
        %v382 = vpop.permute.xlu0 %381
        %v383 = vsel %vm334, %v376, %v327
        %v384 = vsel %vm334, %v378, %v327
        %v385 = vsel %vm334, %v380, %v327
        %v386 = vsel %vm334, %v382, %v327
        %391 = vrot.lane.b32.xlu0 %v272, 127
        %v392 = vpop.permute.xlu0 %391
        %393 = vrot.lane.b32.xlu0 %v273, 127
        %v394 = vpop.permute.xlu0 %393
        %395 = vrot.lane.b32.xlu0 %v274, 127
        %v396 = vpop.permute.xlu0 %395
        %397 = vrot.lane.b32.xlu0 %v275, 127
        %v398 = vpop.permute.xlu0 %397
        %399 = vrot.lane.b32.xlu0 %v272, 126
        %v400 = vpop.permute.xlu0 %399
        %401 = vrot.lane.b32.xlu0 %v273, 126
        %v402 = vpop.permute.xlu0 %401
        %403 = vrot.lane.b32.xlu0 %v274, 126
        %v404 = vpop.permute.xlu0 %403
        %405 = vrot.lane.b32.xlu0 %v275, 126
        %v406 = vpop.permute.xlu0 %405
        %v407 = vsel %vm334, %v400, %v327
        %v408 = vsel %vm334, %v402, %v327
        %v409 = vsel %vm334, %v404, %v327
        %v410 = vsel %vm334, %v406, %v327
        %415 = vrot.lane.b32.xlu0 %v279, 127
        %v416 = vpop.permute.xlu0 %415
        %417 = vrot.lane.b32.xlu0 %v280, 127
        %v418 = vpop.permute.xlu0 %417
        %419 = vrot.lane.b32.xlu0 %v281, 127
        %v420 = vpop.permute.xlu0 %419
        %421 = vrot.lane.b32.xlu0 %v282, 127
        %v422 = vpop.permute.xlu0 %421
        %423 = vrot.lane.b32.xlu0 %v279, 126
        %v424 = vpop.permute.xlu0 %423
        %425 = vrot.lane.b32.xlu0 %v280, 126
        %v426 = vpop.permute.xlu0 %425
        %427 = vrot.lane.b32.xlu0 %v281, 126
        %v428 = vpop.permute.xlu0 %427
        %429 = vrot.lane.b32.xlu0 %v282, 126
        %v430 = vpop.permute.xlu0 %429
        %v431 = vsel %vm334, %v424, %v327
        %v432 = vsel %vm334, %v426, %v327
        %v433 = vsel %vm334, %v428, %v327
        %v434 = vsel %vm334, %v430, %v327
        %439 = vrot.lane.b32.xlu0 %v286, 127
        %v440 = vpop.permute.xlu0 %439
        %441 = vrot.lane.b32.xlu0 0.0, 127
        %v442 = vpop.permute.xlu0 %441
        %443 = vrot.lane.b32.xlu0 %v287, 127
        %v444 = vpop.permute.xlu0 %443
        %445 = vrot.lane.b32.xlu0 %v288, 127
        %v446 = vpop.permute.xlu0 %445
        %447 = vrot.lane.b32.xlu0 %v289, 127
        %v448 = vpop.permute.xlu0 %447
        %vm449 = vcmask 1039360
        %v450 = vsel %vm449, %v440, %v442
        %v451 = vsel %vm449, %v444, %v442
        %v452 = vsel %vm449, %v446, %v442
        %v453 = vsel %vm449, %v448, %v442
        %458 = vrot.lane.b32.xlu0 0.0, 1
        %v459 = vpop.permute.xlu0 %458
        %460 = vrot.lane.b32.xlu0 %v293, 1
        %v461 = vpop.permute.xlu0 %460
        %462 = vrot.lane.b32.xlu0 %v294, 1
        %v463 = vpop.permute.xlu0 %462
        %464 = vrot.lane.b32.xlu0 %v295, 1
        %v465 = vpop.permute.xlu0 %464
        %466 = vrot.lane.b32.xlu0 %v296, 1
        %v467 = vpop.permute.xlu0 %466
        %vm468 = vcmask 7168
        %v469 = vsel %vm468, %v459, %v461
        %v470 = vsel %vm468, %v459, %v463
        %v471 = vsel %vm468, %v459, %v465
        %v472 = vsel %vm468, %v459, %v467
        %473 = vrot.lane.b32.xlu0 %v293, 127
        %v474 = vpop.permute.xlu0 %473
        %475 = vrot.lane.b32.xlu0 %v294, 127
        %v476 = vpop.permute.xlu0 %475
        %477 = vrot.lane.b32.xlu0 %v295, 127
        %v478 = vpop.permute.xlu0 %477
        %479 = vrot.lane.b32.xlu0 %v296, 127
        %v480 = vpop.permute.xlu0 %479
        %v481 = vsel %vm449, %v474, %v442
        %v482 = vsel %vm449, %v476, %v442
        %v483 = vsel %vm449, %v478, %v442
        %v484 = vsel %vm449, %v480, %v442
        %489 = vrot.lane.b32.xlu0 %v300, 1
        %v490 = vpop.permute.xlu0 %489
        %491 = vrot.lane.b32.xlu0 %v301, 1
        %v492 = vpop.permute.xlu0 %491
        %493 = vrot.lane.b32.xlu0 %v302, 1
        %v494 = vpop.permute.xlu0 %493
        %495 = vrot.lane.b32.xlu0 %v303, 1
        %v496 = vpop.permute.xlu0 %495
        %v497 = vsel %vm468, %v459, %v490
        %v498 = vsel %vm468, %v459, %v492
        %v499 = vsel %vm468, %v459, %v494
        %v500 = vsel %vm468, %v459, %v496
        %501 = vrot.lane.b32.xlu0 %v300, 127
        %v502 = vpop.permute.xlu0 %501
        %503 = vrot.lane.b32.xlu0 %v301, 127
        %v504 = vpop.permute.xlu0 %503
        %505 = vrot.lane.b32.xlu0 %v302, 127
        %v506 = vpop.permute.xlu0 %505
        %507 = vrot.lane.b32.xlu0 %v303, 127
        %v508 = vpop.permute.xlu0 %507
        %v509 = vsel %vm449, %v502, %v442
        %v510 = vsel %vm449, %v504, %v442
        %v511 = vsel %vm449, %v506, %v442
        %v512 = vsel %vm449, %v508, %v442
        %517 = vrot.lane.b32.xlu0 %v307, 1
        %v518 = vpop.permute.xlu0 %517
        %519 = vrot.lane.b32.xlu0 %v308, 1
        %v520 = vpop.permute.xlu0 %519
        %521 = vrot.lane.b32.xlu0 %v309, 1
        %v522 = vpop.permute.xlu0 %521
        %523 = vrot.lane.b32.xlu0 %v310, 1
        %v524 = vpop.permute.xlu0 %523
        %v525 = vsel %vm468, %v459, %v518
        %v526 = vsel %vm468, %v459, %v520
        %v527 = vsel %vm468, %v459, %v522
        %v528 = vsel %vm468, %v459, %v524
        %529 = vrot.lane.b32.xlu0 %v307, 127
        %v530 = vpop.permute.xlu0 %529
        %531 = vrot.lane.b32.xlu0 %v308, 127
        %v532 = vpop.permute.xlu0 %531
        %533 = vrot.lane.b32.xlu0 %v309, 127
        %v534 = vpop.permute.xlu0 %533
        %535 = vrot.lane.b32.xlu0 %v310, 127
        %v536 = vpop.permute.xlu0 %535
        %v537 = vsel %vm449, %v530, %v442
        %v538 = vsel %vm449, %v532, %v442
        %v539 = vsel %vm449, %v534, %v442
        %v540 = vsel %vm449, %v536, %v442
        %541 = vrot.lane.b32.xlu0 %v450, 127
        %v542 = vpop.permute.xlu0 %541
        %543 = vrot.lane.b32.xlu0 %v451, 127
        %v544 = vpop.permute.xlu0 %543
        %545 = vrot.lane.b32.xlu0 %v452, 127
        %v546 = vpop.permute.xlu0 %545
        %547 = vrot.lane.b32.xlu0 %v453, 127
        %v548 = vpop.permute.xlu0 %547
        %549 = vrot.lane.b32.xlu0 %v469, 127
        %v550 = vpop.permute.xlu0 %549
        %551 = vrot.lane.b32.xlu0 %v470, 127
        %v552 = vpop.permute.xlu0 %551
        %553 = vrot.lane.b32.xlu0 %v471, 127
        %v554 = vpop.permute.xlu0 %553
        %555 = vrot.lane.b32.xlu0 %v472, 127
        %v556 = vpop.permute.xlu0 %555
        %557 = vrot.lane.b32.xlu0 %v481, 127
        %v558 = vpop.permute.xlu0 %557
        %559 = vrot.lane.b32.xlu0 %v482, 127
        %v560 = vpop.permute.xlu0 %559
        %561 = vrot.lane.b32.xlu0 %v483, 127
        %v562 = vpop.permute.xlu0 %561
        %563 = vrot.lane.b32.xlu0 %v484, 127
        %v564 = vpop.permute.xlu0 %563
        %565 = vrot.lane.b32.xlu0 %v497, 127
        %v566 = vpop.permute.xlu0 %565
        %567 = vrot.lane.b32.xlu0 %v498, 127
        %v568 = vpop.permute.xlu0 %567
        %569 = vrot.lane.b32.xlu0 %v499, 127
        %v570 = vpop.permute.xlu0 %569
        %571 = vrot.lane.b32.xlu0 %v500, 127
        %v572 = vpop.permute.xlu0 %571
        %573 = vrot.lane.b32.xlu0 %v509, 127
        %v574 = vpop.permute.xlu0 %573
        %575 = vrot.lane.b32.xlu0 %v510, 127
        %v576 = vpop.permute.xlu0 %575
        %577 = vrot.lane.b32.xlu0 %v511, 127
        %v578 = vpop.permute.xlu0 %577
        %579 = vrot.lane.b32.xlu0 %v512, 127
        %v580 = vpop.permute.xlu0 %579
        %581 = vrot.lane.b32.xlu0 %v525, 127
        %v582 = vpop.permute.xlu0 %581
        %583 = vrot.lane.b32.xlu0 %v526, 127
        %v584 = vpop.permute.xlu0 %583
        %585 = vrot.lane.b32.xlu0 %v527, 127
        %v586 = vpop.permute.xlu0 %585
        %587 = vrot.lane.b32.xlu0 %v528, 127
        %v588 = vpop.permute.xlu0 %587
        %589 = vrot.lane.b32.xlu0 %v537, 127
        %v590 = vpop.permute.xlu0 %589
        %591 = vrot.lane.b32.xlu0 %v538, 127
        %v592 = vpop.permute.xlu0 %591
        %593 = vrot.lane.b32.xlu0 %v539, 127
        %v594 = vpop.permute.xlu0 %593
        %595 = vrot.lane.b32.xlu0 %v540, 127
        %v596 = vpop.permute.xlu0 %595
        %598 = vset.pattern.permute.xlu0 0
        %599 = vperm.xlu0 %598, %v225
        %v600 = vpop.permute.xlu0 %599
        %603 = vset.pattern.permute.xlu0 0
        %604 = vperm.xlu0 %603, %v226
        %v605 = vpop.permute.xlu0 %604
        %608 = vset.pattern.permute.xlu0 0
        %609 = vperm.xlu0 %608, %v227
        %v610 = vpop.permute.xlu0 %609
        %613 = vset.pattern.permute.xlu0 0
        %614 = vperm.xlu0 %613, %v228
        %v615 = vpop.permute.xlu0 %614
        %617 = vrot.lane.b32.xlu0 %v251, 1
        %v618 = vpop.permute.xlu0 %617
        %619 = vrot.lane.b32.xlu0 %v252, 1
        %v620 = vpop.permute.xlu0 %619
        %621 = vrot.lane.b32.xlu0 %v253, 1
        %v622 = vpop.permute.xlu0 %621
        %623 = vrot.lane.b32.xlu0 %v254, 1
        %v624 = vpop.permute.xlu0 %623
        %625 = vrot.lane.b32.xlu0 %v316, 1
        %v626 = vpop.permute.xlu0 %625
        %627 = vrot.lane.b32.xlu0 %v318, 1
        %v628 = vpop.permute.xlu0 %627
        %629 = vrot.lane.b32.xlu0 %v320, 1
        %v630 = vpop.permute.xlu0 %629
        %631 = vrot.lane.b32.xlu0 %v322, 1
        %v632 = vpop.permute.xlu0 %631
        %633 = vrot.lane.b32.xlu0 %v325, 1
        %v634 = vpop.permute.xlu0 %633
        %635 = vrot.lane.b32.xlu0 %v335, 1
        %v636 = vpop.permute.xlu0 %635
        %637 = vrot.lane.b32.xlu0 %v329, 1
        %v638 = vpop.permute.xlu0 %637
        %639 = vrot.lane.b32.xlu0 %v336, 1
        %v640 = vpop.permute.xlu0 %639
        %641 = vrot.lane.b32.xlu0 %v331, 1
        %v642 = vpop.permute.xlu0 %641
        %643 = vrot.lane.b32.xlu0 %v337, 1
        %v644 = vpop.permute.xlu0 %643
        %645 = vrot.lane.b32.xlu0 %v333, 1
        %v646 = vpop.permute.xlu0 %645
        %647 = vrot.lane.b32.xlu0 %v338, 1
        %v648 = vpop.permute.xlu0 %647
        %649 = vrot.lane.b32.xlu0 %v258, 1
        %v650 = vpop.permute.xlu0 %649
        %651 = vrot.lane.b32.xlu0 %v259, 1
        %v652 = vpop.permute.xlu0 %651
        %653 = vrot.lane.b32.xlu0 %v260, 1
        %v654 = vpop.permute.xlu0 %653
        %655 = vrot.lane.b32.xlu0 %v261, 1
        %v656 = vpop.permute.xlu0 %655
        %657 = vrot.lane.b32.xlu0 %v344, 1
        %v658 = vpop.permute.xlu0 %657
        %659 = vrot.lane.b32.xlu0 %v346, 1
        %v660 = vpop.permute.xlu0 %659
        %661 = vrot.lane.b32.xlu0 %v348, 1
        %v662 = vpop.permute.xlu0 %661
        %663 = vrot.lane.b32.xlu0 %v350, 1
        %v664 = vpop.permute.xlu0 %663
        %665 = vrot.lane.b32.xlu0 %v352, 1
        %v666 = vpop.permute.xlu0 %665
        %667 = vrot.lane.b32.xlu0 %v359, 1
        %v668 = vpop.permute.xlu0 %667
        %669 = vrot.lane.b32.xlu0 %v354, 1
        %v670 = vpop.permute.xlu0 %669
        %671 = vrot.lane.b32.xlu0 %v360, 1
        %v672 = vpop.permute.xlu0 %671
        %673 = vrot.lane.b32.xlu0 %v356, 1
        %v674 = vpop.permute.xlu0 %673
        %675 = vrot.lane.b32.xlu0 %v361, 1
        %v676 = vpop.permute.xlu0 %675
        %677 = vrot.lane.b32.xlu0 %v358, 1
        %v678 = vpop.permute.xlu0 %677
        %679 = vrot.lane.b32.xlu0 %v362, 1
        %v680 = vpop.permute.xlu0 %679
        %681 = vrot.lane.b32.xlu0 %v265, 1
        %v682 = vpop.permute.xlu0 %681
        %683 = vrot.lane.b32.xlu0 %v266, 1
        %v684 = vpop.permute.xlu0 %683
        %685 = vrot.lane.b32.xlu0 %v267, 1
        %v686 = vpop.permute.xlu0 %685
        %687 = vrot.lane.b32.xlu0 %v268, 1
        %v688 = vpop.permute.xlu0 %687
        %689 = vrot.lane.b32.xlu0 %v368, 1
        %v690 = vpop.permute.xlu0 %689
        %691 = vrot.lane.b32.xlu0 %v370, 1
        %v692 = vpop.permute.xlu0 %691
        %693 = vrot.lane.b32.xlu0 %v372, 1
        %v694 = vpop.permute.xlu0 %693
        %695 = vrot.lane.b32.xlu0 %v374, 1
        %v696 = vpop.permute.xlu0 %695
        %697 = vrot.lane.b32.xlu0 %v376, 1
        %v698 = vpop.permute.xlu0 %697
        %699 = vrot.lane.b32.xlu0 %v383, 1
        %v700 = vpop.permute.xlu0 %699
        %701 = vrot.lane.b32.xlu0 %v378, 1
        %v702 = vpop.permute.xlu0 %701
        %703 = vrot.lane.b32.xlu0 %v384, 1
        %v704 = vpop.permute.xlu0 %703
        %705 = vrot.lane.b32.xlu0 %v380, 1
        %v706 = vpop.permute.xlu0 %705
        %707 = vrot.lane.b32.xlu0 %v385, 1
        %v708 = vpop.permute.xlu0 %707
        %709 = vrot.lane.b32.xlu0 %v382, 1
        %v710 = vpop.permute.xlu0 %709
        %711 = vrot.lane.b32.xlu0 %v386, 1
        %v712 = vpop.permute.xlu0 %711
        %713 = vrot.lane.b32.xlu0 %v272, 1
        %v714 = vpop.permute.xlu0 %713
        %715 = vrot.lane.b32.xlu0 %v273, 1
        %v716 = vpop.permute.xlu0 %715
        %717 = vrot.lane.b32.xlu0 %v274, 1
        %v718 = vpop.permute.xlu0 %717
        %719 = vrot.lane.b32.xlu0 %v275, 1
        %v720 = vpop.permute.xlu0 %719
        %721 = vrot.lane.b32.xlu0 %v392, 1
        %v722 = vpop.permute.xlu0 %721
        %723 = vrot.lane.b32.xlu0 %v394, 1
        %v724 = vpop.permute.xlu0 %723
        %725 = vrot.lane.b32.xlu0 %v396, 1
        %v726 = vpop.permute.xlu0 %725
        %727 = vrot.lane.b32.xlu0 %v398, 1
        %v728 = vpop.permute.xlu0 %727
        %729 = vrot.lane.b32.xlu0 %v400, 1
        %v730 = vpop.permute.xlu0 %729
        %731 = vrot.lane.b32.xlu0 %v407, 1
        %v732 = vpop.permute.xlu0 %731
        %733 = vrot.lane.b32.xlu0 %v402, 1
        %v734 = vpop.permute.xlu0 %733
        %735 = vrot.lane.b32.xlu0 %v408, 1
        %v736 = vpop.permute.xlu0 %735
        %737 = vrot.lane.b32.xlu0 %v404, 1
        %v738 = vpop.permute.xlu0 %737
        %739 = vrot.lane.b32.xlu0 %v409, 1
        %v740 = vpop.permute.xlu0 %739
        %741 = vrot.lane.b32.xlu0 %v406, 1
        %v742 = vpop.permute.xlu0 %741
        %743 = vrot.lane.b32.xlu0 %v410, 1
        %v744 = vpop.permute.xlu0 %743
        %745 = vrot.lane.b32.xlu0 %v279, 1
        %v746 = vpop.permute.xlu0 %745
        %747 = vrot.lane.b32.xlu0 %v280, 1
        %v748 = vpop.permute.xlu0 %747
        %749 = vrot.lane.b32.xlu0 %v281, 1
        %v750 = vpop.permute.xlu0 %749
        %751 = vrot.lane.b32.xlu0 %v282, 1
        %v752 = vpop.permute.xlu0 %751
        %753 = vrot.lane.b32.xlu0 %v416, 1
        %v754 = vpop.permute.xlu0 %753
        %755 = vrot.lane.b32.xlu0 %v418, 1
        %v756 = vpop.permute.xlu0 %755
        %757 = vrot.lane.b32.xlu0 %v420, 1
        %v758 = vpop.permute.xlu0 %757
        %759 = vrot.lane.b32.xlu0 %v422, 1
        %v760 = vpop.permute.xlu0 %759
        %761 = vrot.lane.b32.xlu0 %v424, 1
        %v762 = vpop.permute.xlu0 %761
        %763 = vrot.lane.b32.xlu0 %v431, 1
        %v764 = vpop.permute.xlu0 %763
        %765 = vrot.lane.b32.xlu0 %v426, 1
        %v766 = vpop.permute.xlu0 %765
        %767 = vrot.lane.b32.xlu0 %v432, 1
        %v768 = vpop.permute.xlu0 %767
        %769 = vrot.lane.b32.xlu0 %v428, 1
        %v770 = vpop.permute.xlu0 %769
        %771 = vrot.lane.b32.xlu0 %v433, 1
        %v772 = vpop.permute.xlu0 %771
        %773 = vrot.lane.b32.xlu0 %v430, 1
        %v774 = vpop.permute.xlu0 %773
        %775 = vrot.lane.b32.xlu0 %v434, 1
        %v776 = vpop.permute.xlu0 %775
        %777 = vrot.lane.b32.xlu0 %v286, 1
        %v778 = vpop.permute.xlu0 %777
        %779 = vrot.lane.b32.xlu0 %v287, 1
        %v780 = vpop.permute.xlu0 %779
        %781 = vrot.lane.b32.xlu0 %v288, 1
        %v782 = vpop.permute.xlu0 %781
        %783 = vrot.lane.b32.xlu0 %v289, 1
        %v784 = vpop.permute.xlu0 %783
        %785 = vrot.lane.b32.xlu0 %v440, 1
        %v786 = vpop.permute.xlu0 %785
        %787 = vrot.lane.b32.xlu0 %v444, 1
        %v788 = vpop.permute.xlu0 %787
        %789 = vrot.lane.b32.xlu0 %v446, 1
        %v790 = vpop.permute.xlu0 %789
        %791 = vrot.lane.b32.xlu0 %v448, 1
        %v792 = vpop.permute.xlu0 %791
        %793 = vrot.lane.b32.xlu0 %v542, 1
        %v794 = vpop.permute.xlu0 %793
        %795 = vrot.lane.b32.xlu0 %v544, 1
        %v796 = vpop.permute.xlu0 %795
        %797 = vrot.lane.b32.xlu0 %v546, 1
        %v798 = vpop.permute.xlu0 %797
        %799 = vrot.lane.b32.xlu0 %v548, 1
        %v800 = vpop.permute.xlu0 %799
        %801 = vrot.lane.b32.xlu0 %v550, 1
        %v802 = vpop.permute.xlu0 %801
        %803 = vrot.lane.b32.xlu0 %v552, 1
        %v804 = vpop.permute.xlu0 %803
        %805 = vrot.lane.b32.xlu0 %v554, 1
        %v806 = vpop.permute.xlu0 %805
        %807 = vrot.lane.b32.xlu0 %v556, 1
        %v808 = vpop.permute.xlu0 %807
        %809 = vrot.lane.b32.xlu0 %v474, 1
        %v810 = vpop.permute.xlu0 %809
        %811 = vrot.lane.b32.xlu0 %v476, 1
        %v812 = vpop.permute.xlu0 %811
        %813 = vrot.lane.b32.xlu0 %v478, 1
        %v814 = vpop.permute.xlu0 %813
        %815 = vrot.lane.b32.xlu0 %v480, 1
        %v816 = vpop.permute.xlu0 %815
        %817 = vrot.lane.b32.xlu0 %v558, 1
        %v818 = vpop.permute.xlu0 %817
        %819 = vrot.lane.b32.xlu0 %v560, 1
        %v820 = vpop.permute.xlu0 %819
        %821 = vrot.lane.b32.xlu0 %v562, 1
        %v822 = vpop.permute.xlu0 %821
        %823 = vrot.lane.b32.xlu0 %v564, 1
        %v824 = vpop.permute.xlu0 %823
        %825 = vrot.lane.b32.xlu0 %v566, 1
        %v826 = vpop.permute.xlu0 %825
        %827 = vrot.lane.b32.xlu0 %v568, 1
        %v828 = vpop.permute.xlu0 %827
        %829 = vrot.lane.b32.xlu0 %v570, 1
        %v830 = vpop.permute.xlu0 %829
        %831 = vrot.lane.b32.xlu0 %v572, 1
        %v832 = vpop.permute.xlu0 %831
        %833 = vrot.lane.b32.xlu0 %v502, 1
        %v834 = vpop.permute.xlu0 %833
        %835 = vrot.lane.b32.xlu0 %v504, 1
        %v836 = vpop.permute.xlu0 %835
        %837 = vrot.lane.b32.xlu0 %v506, 1
        %v838 = vpop.permute.xlu0 %837
        %839 = vrot.lane.b32.xlu0 %v508, 1
        %v840 = vpop.permute.xlu0 %839
        %841 = vrot.lane.b32.xlu0 %v574, 1
        %v842 = vpop.permute.xlu0 %841
        %843 = vrot.lane.b32.xlu0 %v576, 1
        %v844 = vpop.permute.xlu0 %843
        %845 = vrot.lane.b32.xlu0 %v578, 1
        %v846 = vpop.permute.xlu0 %845
        %847 = vrot.lane.b32.xlu0 %v580, 1
        %v848 = vpop.permute.xlu0 %847
        %849 = vrot.lane.b32.xlu0 %v582, 1
        %v850 = vpop.permute.xlu0 %849
        %851 = vrot.lane.b32.xlu0 %v584, 1
        %v852 = vpop.permute.xlu0 %851
        %853 = vrot.lane.b32.xlu0 %v586, 1
        %v854 = vpop.permute.xlu0 %853
        %855 = vrot.lane.b32.xlu0 %v588, 1
        %v856 = vpop.permute.xlu0 %855
        %857 = vrot.lane.b32.xlu0 %v530, 1
        %v858 = vpop.permute.xlu0 %857
        %859 = vrot.lane.b32.xlu0 %v532, 1
        %v860 = vpop.permute.xlu0 %859
        %861 = vrot.lane.b32.xlu0 %v534, 1
        %v862 = vpop.permute.xlu0 %861
        %863 = vrot.lane.b32.xlu0 %v536, 1
        %v864 = vpop.permute.xlu0 %863
        %865 = vrot.lane.b32.xlu0 %v590, 1
        %v866 = vpop.permute.xlu0 %865
        %867 = vrot.lane.b32.xlu0 %v592, 1
        %v868 = vpop.permute.xlu0 %867
        %869 = vrot.lane.b32.xlu0 %v594, 1
        %v870 = vpop.permute.xlu0 %869
        %871 = vrot.lane.b32.xlu0 %v596, 1
        %v872 = vpop.permute.xlu0 %871
        %v873 = vsel %vm468, %v459, %v618
        %v874 = vsel %vm468, %v459, %v620
        %v875 = vsel %vm468, %v459, %v622
        %v876 = vsel %vm468, %v459, %v624
        %v877 = vsel %vm468, %v634, %v636
        %v878 = vsel %vm468, %v638, %v640
        %v879 = vsel %vm468, %v642, %v644
        %v880 = vsel %vm468, %v646, %v648
        %v881 = vsel %vm468, %v459, %v650
        %v882 = vsel %vm468, %v459, %v652
        %v883 = vsel %vm468, %v459, %v654
        %v884 = vsel %vm468, %v459, %v656
        %v885 = vsel %vm468, %v666, %v668
        %v886 = vsel %vm468, %v670, %v672
        %v887 = vsel %vm468, %v674, %v676
        %v888 = vsel %vm468, %v678, %v680
        %v889 = vsel %vm468, %v459, %v682
        %v890 = vsel %vm468, %v459, %v684
        %v891 = vsel %vm468, %v459, %v686
        %v892 = vsel %vm468, %v459, %v688
        %v893 = vsel %vm468, %v698, %v700
        %v894 = vsel %vm468, %v702, %v704
        %v895 = vsel %vm468, %v706, %v708
        %v896 = vsel %vm468, %v710, %v712
        %v897 = vsel %vm468, %v459, %v714
        %v898 = vsel %vm468, %v459, %v716
        %v899 = vsel %vm468, %v459, %v718
        %v900 = vsel %vm468, %v459, %v720
        %v901 = vsel %vm468, %v730, %v732
        %v902 = vsel %vm468, %v734, %v736
        %v903 = vsel %vm468, %v738, %v740
        %v904 = vsel %vm468, %v742, %v744
        %v905 = vsel %vm468, %v459, %v746
        %v906 = vsel %vm468, %v459, %v748
        %v907 = vsel %vm468, %v459, %v750
        %v908 = vsel %vm468, %v459, %v752
        %v909 = vsel %vm468, %v762, %v764
        %v910 = vsel %vm468, %v766, %v768
        %v911 = vsel %vm468, %v770, %v772
        %v912 = vsel %vm468, %v774, %v776
        %v913 = vsel %vm468, %v459, %v778
        %v914 = vsel %vm468, %v459, %v780
        %v915 = vsel %vm468, %v459, %v782
        %v916 = vsel %vm468, %v459, %v784
        %vm1025 = vcmask 785408
        %v1027 = vsel %vm1025, %v203, 0
        %v1030 = vsel %vm1025, %v210, 0
        %v1033 = vsel %vm1025, %v217, 0
        %v1036 = vsel %vm1025, %v224, 0
        %1038 = vmatpush.msra.mxu0 %v884
        %1039 = vmatpush.msra.mxu0 %v883
        %1040 = vmatpush.msra.mxu0 %v882
        %1041 = vmatpush.msra.mxu0 %v881
        %1042 = vmatpush.msra.mxu0 %v880
        %1043 = vmatpush.msra.mxu0 %v879
        %1044 = vmatpush.msra.mxu0 %v878
        %1045 = vmatpush.msra.mxu0 %v877
        %1046 = vmatpush.msra.mxu0 %v632
        %1047 = vmatpush.msra.mxu0 %v630
        %1048 = vmatpush.msra.mxu0 %v628
        %1049 = vmatpush.msra.mxu0 %v626
        %1050 = vmatpush.msra.mxu0 %v876
        %1051 = vmatpush.msra.mxu0 %v875
        %1052 = vmatpush.msra.mxu0 %v874
        %1053 = vmatpush.msra.mxu0 %v873
        %1054 = vmatmul.f32.gmra.mxu0 %v197
        %v1055 = vpop.f32.mrf.mxu0
        %v1056 = vadd.f32 %v600, %v1055
        %1057 = vmatmul.f32.gmra.mxu0 %v204
        %v1058 = vpop.f32.mrf.mxu0
        %v1059 = vadd.f32 %v605, %v1058
        %1060 = vmatmul.f32.gmra.mxu0 %v211
        %v1061 = vpop.f32.mrf.mxu0
        %v1062 = vadd.f32 %v610, %v1061
        %1063 = vmatmul.f32.gmra.mxu0 %v218
        %v1064 = vpop.f32.mrf.mxu0
        %v1065 = vadd.f32 %v615, %v1064
        %1066 = vdwg.mxu0
        %1067 = vmatpush.msra.mxu0 %v696
        %1068 = vmatpush.msra.mxu0 %v694
        %1069 = vmatpush.msra.mxu0 %v692
        %1070 = vmatpush.msra.mxu0 %v690
        %1071 = vmatpush.msra.mxu0 %v892
        %1072 = vmatpush.msra.mxu0 %v891
        %1073 = vmatpush.msra.mxu0 %v890
        %1074 = vmatpush.msra.mxu0 %v889
        %1075 = vmatpush.msra.mxu0 %v888
        %1076 = vmatpush.msra.mxu0 %v887
        %1077 = vmatpush.msra.mxu0 %v886
        %1078 = vmatpush.msra.mxu0 %v885
        %1079 = vmatpush.msra.mxu0 %v664
        %1080 = vmatpush.msra.mxu0 %v662
        %1081 = vmatpush.msra.mxu0 %v660
        %1082 = vmatpush.msra.mxu0 %v658
        %1083 = vmatmul.f32.gmra.mxu0 %v198
        %v1084 = vpop.f32.mrf.mxu0
        %v1085 = vadd.f32 %v1056, %v1084
        %1086 = vmatmul.f32.gmra.mxu0 %v205
        %v1087 = vpop.f32.mrf.mxu0
        %v1088 = vadd.f32 %v1059, %v1087
        %1089 = vmatmul.f32.gmra.mxu0 %v212
        %v1090 = vpop.f32.mrf.mxu0
        %v1091 = vadd.f32 %v1062, %v1090
        %1092 = vmatmul.f32.gmra.mxu0 %v219
        %v1093 = vpop.f32.mrf.mxu0
        %v1094 = vadd.f32 %v1065, %v1093
        %1095 = vdwg.mxu0
        %1096 = vmatpush.msra.mxu0 %v904
        %1097 = vmatpush.msra.mxu0 %v903
        %1098 = vmatpush.msra.mxu0 %v902
        %1099 = vmatpush.msra.mxu0 %v901
        %1100 = vmatpush.msra.mxu0 %v728
        %1101 = vmatpush.msra.mxu0 %v726
        %1102 = vmatpush.msra.mxu0 %v724
        %1103 = vmatpush.msra.mxu0 %v722
        %1104 = vmatpush.msra.mxu0 %v900
        %1105 = vmatpush.msra.mxu0 %v899
        %1106 = vmatpush.msra.mxu0 %v898
        %1107 = vmatpush.msra.mxu0 %v897
        %1108 = vmatpush.msra.mxu0 %v896
        %1109 = vmatpush.msra.mxu0 %v895
        %1110 = vmatpush.msra.mxu0 %v894
        %1111 = vmatpush.msra.mxu0 %v893
        %1112 = vmatmul.f32.gmra.mxu0 %v199
        %v1113 = vpop.f32.mrf.mxu0
        %v1114 = vadd.f32 %v1085, %v1113
        %1115 = vmatmul.f32.gmra.mxu0 %v206
        %v1116 = vpop.f32.mrf.mxu0
        %v1117 = vadd.f32 %v1088, %v1116
        %1118 = vmatmul.f32.gmra.mxu0 %v213
        %v1119 = vpop.f32.mrf.mxu0
        %v1120 = vadd.f32 %v1091, %v1119
        %1121 = vmatmul.f32.gmra.mxu0 %v220
        %v1122 = vpop.f32.mrf.mxu0
        %v1123 = vadd.f32 %v1094, %v1122
        %1124 = vdwg.mxu0
        %1125 = vmatpush.msra.mxu0 %v916
        %1126 = vmatpush.msra.mxu0 %v915
        %1127 = vmatpush.msra.mxu0 %v914
        %1128 = vmatpush.msra.mxu0 %v913
        %1129 = vmatpush.msra.mxu0 %v912
        %1130 = vmatpush.msra.mxu0 %v911
        %1131 = vmatpush.msra.mxu0 %v910
        %1132 = vmatpush.msra.mxu0 %v909
        %1133 = vmatpush.msra.mxu0 %v760
        %1134 = vmatpush.msra.mxu0 %v758
        %1135 = vmatpush.msra.mxu0 %v756
        %1136 = vmatpush.msra.mxu0 %v754
        %1137 = vmatpush.msra.mxu0 %v908
        %1138 = vmatpush.msra.mxu0 %v907
        %1139 = vmatpush.msra.mxu0 %v906
        %1140 = vmatpush.msra.mxu0 %v905
        %1141 = vmatmul.f32.gmra.mxu0 %v200
        %v1142 = vpop.f32.mrf.mxu0
        %v1143 = vadd.f32 %v1114, %v1142
        %1144 = vmatmul.f32.gmra.mxu0 %v207
        %v1145 = vpop.f32.mrf.mxu0
        %v1146 = vadd.f32 %v1117, %v1145
        %1147 = vmatmul.f32.gmra.mxu0 %v214
        %v1148 = vpop.f32.mrf.mxu0
        %v1149 = vadd.f32 %v1120, %v1148
        %1150 = vmatmul.f32.gmra.mxu0 %v221
        %v1151 = vpop.f32.mrf.mxu0
        %v1152 = vadd.f32 %v1123, %v1151
        %1153 = vdwg.mxu0
        %1154 = vmatpush.msra.mxu0 %v816
        %1155 = vmatpush.msra.mxu0 %v814
        %1156 = vmatpush.msra.mxu0 %v812
        %1157 = vmatpush.msra.mxu0 %v810
        %1158 = vmatpush.msra.mxu0 %v808
        %1159 = vmatpush.msra.mxu0 %v806
        %1160 = vmatpush.msra.mxu0 %v804
        %1161 = vmatpush.msra.mxu0 %v802
        %1162 = vmatpush.msra.mxu0 %v800
        %1163 = vmatpush.msra.mxu0 %v798
        %1164 = vmatpush.msra.mxu0 %v796
        %1165 = vmatpush.msra.mxu0 %v794
        %1166 = vmatpush.msra.mxu0 %v792
        %1167 = vmatpush.msra.mxu0 %v790
        %1168 = vmatpush.msra.mxu0 %v788
        %1169 = vmatpush.msra.mxu0 %v786
        %1170 = vmatmul.f32.gmra.mxu0 %v201
        %v1171 = vpop.f32.mrf.mxu0
        %v1172 = vadd.f32 %v1143, %v1171
        %1173 = vmatmul.f32.gmra.mxu0 %v208
        %v1174 = vpop.f32.mrf.mxu0
        %v1175 = vadd.f32 %v1146, %v1174
        %1176 = vmatmul.f32.gmra.mxu0 %v215
        %v1177 = vpop.f32.mrf.mxu0
        %v1178 = vadd.f32 %v1149, %v1177
        %1179 = vmatmul.f32.gmra.mxu0 %v222
        %v1180 = vpop.f32.mrf.mxu0
        %v1181 = vadd.f32 %v1152, %v1180
        %1182 = vdwg.mxu0
        %1183 = vmatpush.msra.mxu0 %v848
        %1184 = vmatpush.msra.mxu0 %v846
        %1185 = vmatpush.msra.mxu0 %v844
        %1186 = vmatpush.msra.mxu0 %v842
        %1187 = vmatpush.msra.mxu0 %v840
        %1188 = vmatpush.msra.mxu0 %v838
        %1189 = vmatpush.msra.mxu0 %v836
        %1190 = vmatpush.msra.mxu0 %v834
        %1191 = vmatpush.msra.mxu0 %v832
        %1192 = vmatpush.msra.mxu0 %v830
        %1193 = vmatpush.msra.mxu0 %v828
        %1194 = vmatpush.msra.mxu0 %v826
        %1195 = vmatpush.msra.mxu0 %v824
        %1196 = vmatpush.msra.mxu0 %v822
        %1197 = vmatpush.msra.mxu0 %v820
        %1198 = vmatpush.msra.mxu0 %v818
        %1199 = vmatmul.f32.gmra.mxu0 %v202
        %v1200 = vpop.f32.mrf.mxu0
        %v1201 = vadd.f32 %v1172, %v1200
        %1202 = vmatmul.f32.gmra.mxu0 %v209
        %v1203 = vpop.f32.mrf.mxu0
        %v1204 = vadd.f32 %v1175, %v1203
        %1205 = vmatmul.f32.gmra.mxu0 %v216
        %v1206 = vpop.f32.mrf.mxu0
        %v1207 = vadd.f32 %v1178, %v1206
        %1208 = vmatmul.f32.gmra.mxu0 %v223
        %v1209 = vpop.f32.mrf.mxu0
        %v1210 = vadd.f32 %v1181, %v1209
        %1211 = vdwg.mxu0
        %1212 = vmatpush.msra.mxu0 0.0
        %1213 = vmatpush.msra.mxu0 0.0
        %1214 = vmatpush.msra.mxu0 0.0
        %1215 = vmatpush.msra.mxu0 0.0
        %1216 = vmatpush.msra.mxu0 %v872
        %1217 = vmatpush.msra.mxu0 %v870
        %1218 = vmatpush.msra.mxu0 %v868
        %1219 = vmatpush.msra.mxu0 %v866
        %1220 = vmatpush.msra.mxu0 %v864
        %1221 = vmatpush.msra.mxu0 %v862
        %1222 = vmatpush.msra.mxu0 %v860
        %1223 = vmatpush.msra.mxu0 %v858
        %1224 = vmatpush.msra.mxu0 %v856
        %1225 = vmatpush.msra.mxu0 %v854
        %1226 = vmatpush.msra.mxu0 %v852
        %1227 = vmatpush.msra.mxu0 %v850
        %1228 = vmatmul.f32.gmra.mxu0 %v1027
        %v1229 = vpop.f32.mrf.mxu0
        %v1230 = vadd.f32 %v1201, %v1229
        %1231 = vmatmul.f32.gmra.mxu0 %v1030
        %v1232 = vpop.f32.mrf.mxu0
        %v1233 = vadd.f32 %v1204, %v1232
        %1234 = vmatmul.f32.gmra.mxu0 %v1033
        %v1235 = vpop.f32.mrf.mxu0
        %v1236 = vadd.f32 %v1207, %v1235
        %1237 = vmatmul.f32.gmra.mxu0 %v1036
        %v1238 = vpop.f32.mrf.mxu0
        %v1239 = vadd.f32 %v1210, %v1238
        %1240 = vdwg.mxu0
        %vm1241 = vcmp.gt.f32.partialorder %v1230, 0.0
        %vm1242 = vcmp.gt.f32.partialorder %v1233, 0.0
        %vm1243 = vcmp.gt.f32.partialorder %v1236, 0.0
        %vm1244 = vcmp.gt.f32.partialorder %v1239, 0.0
        %v1245 = vmul.f32 %v1230, 0.1
        %v1246 = vmul.f32 %v1233, 0.1
        %v1247 = vmul.f32 %v1236, 0.1
        %v1248 = vmul.f32 %v1239, 0.1
        %v1249 = vsel %vm1241, %v1230, %v1245
        %v1250 = vsel %vm1242, %v1233, %v1246
        %v1251 = vsel %vm1243, %v1236, %v1247
        %v1252 = vsel %vm1244, %v1239, %v1248
        %s1253 = scalar_select %p243, 1, 0
        %v1254 = vstv %s1253
        %vm1255 = vcmp.eq.s32.totalorder %v1254, 1
        %vm1256 = vmand %vm1255, %vm231
        %v1257 = vsel %vm1256, %v1249, 0.0
        %v1258 = vsel %vm1256, %v1250, 0.0
        %v1259 = vsel %vm1256, %v1251, 0.0
        %v1260 = vsel %vm1256, %v1252, 0.0
        %s1261 = smul.u32 %s233, 32
        %s1262 = scalar_lea.vmem %s194, %s1261
        %1263 = vst [vmem:[%s1262] sm:$0xff] %v1257
        %1264 = vst [vmem:[%s1262 + $0x8] sm:$0xff] %v1258
        %1265 = vst [vmem:[%s1262 + $0x10] sm:$0xff] %v1259
        %1266 = vst [vmem:[%s1262 + $0x18] sm:$0xff] %v1260
      $region37: #{discriminator_r_forward.11} parent=31 // loop_footer
        %s237 = sadd.s32 1, %s233
      $region38: #{discriminator_r_forward.11} parent=31 // loop_footer_branch
        %232 = sbr.rel target = $region34
      $region39: #{discriminator_r_forward.11} parent=31 // loop_exit
        _
      %s1267 = smul.u32 3, %s19
      %p1268 = scmp.lt.s32.totalorder %s18, 1
      %s1269 = scalar_select %p1268, %s18, 1
      %p1270 = scmp.lt.s32.totalorder %s1267, 2
      %s1271 = scalar_select %p1270, %s1267, 2
      %s1272 = smul.addr %s1271, 4
      %s1273 = smul.addr %s1269, 12
      %s1274 = sadd.s32 %s1272, %s1273
      %s1275 = smul.addr %s1274, 8
      %s1276 = scalar_lea.vmem %s3, %s1275
      // Predicated region
      $region40: #{discriminator_r_forward.11} parent=31 // pred_check
        %p1277 = pneg %p114
      $region41: #{discriminator_r_forward.11} parent=31 // pred_check_branch
        %1279 = sbr.rel (%p1277) target = $region43
      $region42: #{discriminator_r_forward.11} parent=31 // pred_region
        %s1280 = smul.u32 3, %s19
      $region43: #{discriminator_r_forward.11} parent=31 // pred_fallthru
        _
    $region32: #{discriminator_r_forward.11} parent=5 // pred_fallthru
      _
    %p1281 = scmp.le.s32.totalorder 2, %s9
    // Predicated region
    $region44: #{discriminator_r_forward.11} parent=5 // pred_check
      %p1282 = pneg %p1281
    $region45: #{discriminator_r_forward.11} parent=5 // pred_check_branch
      %1284 = sbr.rel (%p1282) target = $region47
    $region46: #{discriminator_r_forward.11} parent=5 // pred_region
      %s1285 = ssub.s32 %s9, 2
      // Predicated region
      $region48: #{discriminator_r_forward.11} parent=46 // pred_check
        %p1286 = pneg %p120
      $region49: #{discriminator_r_forward.11} parent=46 // pred_check_branch
        %1288 = sbr.rel (%p1286) target = $region51
      $region50: #{discriminator_r_forward.11} parent=46 // pred_region
        %s1289 = smul.u32 3, %s21
        %p1290 = scmp.lt.s32.totalorder %s20, 1
        %s1291 = scalar_select %p1290, %s20, 1
        %p1292 = scmp.lt.s32.totalorder %s1289, 2
        %s1293 = scalar_select %p1292, %s1289, 2
        %s1294 = smul.addr %s1293, 4
        %s1295 = smul.addr %s1291, 12
        %s1296 = sadd.s32 %s1294, %s1295
        %s1297 = smul.addr %s1296, 8
        %s1298 = scalar_lea.vmem %s3, %s1297
      $region51: #{discriminator_r_forward.11} parent=46 // pred_fallthru
        _
    $region47: #{discriminator_r_forward.11} parent=5 // pred_fallthru
      _
  $region6: #{discriminator_r_forward.11} parent=0 // loop_footer
    %s13 = sadd.s32 1, %s9
  $region7: #{discriminator_r_forward.11} parent=0 // loop_footer_branch
    %8 = sbr.rel target = $region3
  $region8: #{discriminator_r_forward.11} parent=0 // loop_exit
    _

// kernel: discriminator_r_forward.13
$region0: #{discriminator_r_forward.13}
  #allocation0 [shape = 'u32[]', space=smem, size = 0x4, offset = 0x4, fixed_abs, tag = 'smem constant byte address 0x4 - core index']
  #allocation1 [shape = 'u32[72,128]{1,0:T(1,128)}', space=vmem, size = 0x9000, scoped, tag = 'internal scratch']
  #allocation2 [shape = 'f32[1,1]{1,0:T(1,128)S(1)}', space=vmem, size = 0x200, scoped, tag = 'scoped memory for discriminator_r_forward.13']
  %s0 = inlined_call_operand.vmem [shape: f32[2,3,32,128], index: 0, kind: input, shape index: {}]
  %s1 = inlined_call_operand.vmem [shape: f32[1,288], index: 1, kind: input, shape index: {}]
  %s2 = inlined_call_operand.<no memory space> [shape: f32[1,1], index: 2, kind: input, shape index: {}]
  %s3 = inlined_call_operand.vmem [shape: f32[2,1,1,128], index: 3, kind: output, shape index: {}]
  %s4 = sld [smem:[#allocation0]]
  $region45: #{discriminator_r_forward.13} parent=0
    _
  %s6 = ssub.s32 1, %s4
  %s7 = scalar_select 0, %s6, %s4
  %v8 = vstv %s2
  %9 = vst [vmem:[#allocation2] sm:$0x1] %v8
  loop: start=0, step=1, limit=4
  $region2: #{discriminator_r_forward.13} parent=0 // loop_pre_header
    _
  $region3: #{discriminator_r_forward.13} parent=0 // loop_header
    %s11 = sphi 0, %s15
    %p12 = scmp.ge.s32.totalorder %s11, 4
    %s18 = sphi 0, %s30
    %s19 = sphi 0, %s26
    %s20 = sphi 0, %s18
    %s21 = sphi 0, %s19
    %s22 = sphi 0, %s20
    %s23 = sphi 0, %s21
    %s33 = sphi 0, %s35
    %s36 = sphi 0, %s33
    %s37 = sphi 0, %s36
    %s53 = sphi 0, %s37
    %s57 = sphi 0, %s57
    %s59 = sphi 0, %s57
    %s60 = sphi 0, %s59
    %s74 = sphi 0, %s60
    %s78 = sphi 0, %s78
    %s80 = sphi 0, %s78
    %s81 = sphi 0, %s80
    %s95 = sphi 0, %s81
    %s103 = sphi 0, %s105
    %s106 = sphi 0, %s103
    %s107 = sphi 0, %s106
    %s123 = sphi 0, %s107
  $region4: #{discriminator_r_forward.13} parent=0 // loop_header_branch
    %14 = sbr.rel (%p12) target = $region8
  $region5: #{discriminator_r_forward.13} parent=0 // loop_body
    %s16 = ssub.s32 %s11, 1
    %s17 = ssub.s32 %s11, 2
    %s24 = sadd.s32 1, %s19
    %p25 = scmp.ge.s32.totalorder %s24, 1
    %s26 = scalar_select %p25, 0, %s24
    %s27 = sadd.s32 1, %s18
    %s28 = scalar_select %p25, %s27, %s18
    %p29 = scmp.ge.s32.totalorder %s28, 2
    %s30 = scalar_select %p29, 0, %s28
    %s31 = ssub.s32 %s18, %s30
    %p32 = scmp.eq.s32.totalorder %s31, 0
    %s34 = sadd.s32 %s33, 1
    %s35 = scalar_select %p32, %s33, %s34
    %p38 = pneg %p32
    %p39 = scmp.eq.s32.totalorder %s11, 1
    %p40 = por %p38, %p39
    %p41 = scmp.ne.s32.totalorder %s33, %s36
    %p42 = scmp.eq.s32.totalorder %s11, 0
    %p43 = por %p41, %p42
    %p44 = scmp.ne.s32.totalorder %s33, %s36
    %p45 = scmp.eq.s32.totalorder %s16, 1
    %p46 = por %p44, %p45
    %p47 = scmp.ne.s32.totalorder %s36, %s37
    %p48 = scmp.eq.s32.totalorder %s16, 0
    %p49 = por %p47, %p48
    %p50 = scmp.ne.s32.totalorder %s36, %s37
    %p51 = scmp.eq.s32.totalorder %s17, 1
    %p52 = por %p50, %p51
    %p54 = scmp.ne.s32.totalorder %s37, %s53
    %p55 = scmp.eq.s32.totalorder %s17, 0
    %p56 = por %p54, %p55
    %s58 = sadd.s32 %s57, 1
    %p61 = scmp.eq.s32.totalorder %s11, 1
    %p62 = scmp.ne.s32.totalorder %s57, %s59
    %p63 = scmp.eq.s32.totalorder %s11, 0
    %p64 = por %p62, %p63
    %p65 = scmp.ne.s32.totalorder %s57, %s59
    %p66 = scmp.eq.s32.totalorder %s16, 1
    %p67 = por %p65, %p66
    %p68 = scmp.ne.s32.totalorder %s59, %s60
    %p69 = scmp.eq.s32.totalorder %s16, 0
    %p70 = por %p68, %p69
    %p71 = scmp.ne.s32.totalorder %s59, %s60
    %p72 = scmp.eq.s32.totalorder %s17, 1
    %p73 = por %p71, %p72
    %p75 = scmp.ne.s32.totalorder %s60, %s74
    %p76 = scmp.eq.s32.totalorder %s17, 0
    %p77 = por %p75, %p76
    %s79 = sadd.s32 %s78, 1
    %p82 = scmp.eq.s32.totalorder %s11, 1
    %p83 = scmp.ne.s32.totalorder %s78, %s80
    %p84 = scmp.eq.s32.totalorder %s11, 0
    %p85 = por %p83, %p84
    %p86 = scmp.ne.s32.totalorder %s78, %s80
    %p87 = scmp.eq.s32.totalorder %s16, 1
    %p88 = por %p86, %p87
    %p89 = scmp.ne.s32.totalorder %s80, %s81
    %p90 = scmp.eq.s32.totalorder %s16, 0
    %p91 = por %p89, %p90
    %p92 = scmp.ne.s32.totalorder %s80, %s81
    %p93 = scmp.eq.s32.totalorder %s17, 1
    %p94 = por %p92, %p93
    %p96 = scmp.ne.s32.totalorder %s81, %s95
    %p97 = scmp.eq.s32.totalorder %s17, 0
    %p98 = por %p96, %p97
    %s99 = ssub.s32 %s18, %s30
    %s100 = ssub.s32 %s19, %s26
    %s101 = sor.u32 %s99, %s100
    %p102 = scmp.eq.s32.totalorder %s101, 0
    %s104 = sadd.s32 %s103, 1
    %s105 = scalar_select %p102, %s103, %s104
    %p108 = pneg %p102
    %p109 = scmp.eq.s32.totalorder %s11, 1
    %p110 = por %p108, %p109
    %p111 = scmp.ne.s32.totalorder %s103, %s106
    %p112 = scmp.eq.s32.totalorder %s11, 0
    %p113 = por %p111, %p112
    %p114 = scmp.ne.s32.totalorder %s103, %s106
    %p115 = scmp.eq.s32.totalorder %s16, 1
    %p116 = por %p114, %p115
    %p117 = scmp.ne.s32.totalorder %s106, %s107
    %p118 = scmp.eq.s32.totalorder %s16, 0
    %p119 = por %p117, %p118
    %p120 = scmp.ne.s32.totalorder %s106, %s107
    %p121 = scmp.eq.s32.totalorder %s17, 1
    %p122 = por %p120, %p121
    %p124 = scmp.ne.s32.totalorder %s107, %s123
    %p125 = scmp.eq.s32.totalorder %s17, 0
    %p126 = por %p124, %p125
    %p127 = scmp.le.s32.totalorder 1, %s11
    %p128 = scmp.lt.s32.totalorder %s11, 3
    %p129 = pnand %p127, %p128
    %p130 = pneg %p129
    // Predicated region
    $region9: #{discriminator_r_forward.13} parent=5 // pred_check
      _
    $region10: #{discriminator_r_forward.13} parent=5 // pred_check_branch
      %132 = sbr.rel (%p129) target = $region12
    $region11: #{discriminator_r_forward.13} parent=5 // pred_region
      %s133 = ssub.s32 %s11, 1
      // Predicated region
      $region13: #{discriminator_r_forward.13} parent=11 // pred_check
        %p134 = pneg %p70
      $region14: #{discriminator_r_forward.13} parent=11 // pred_check_branch
        %136 = sbr.rel (%p134) target = $region16
      $region15: #{discriminator_r_forward.13} parent=11 // pred_region
        _
      $region16: #{discriminator_r_forward.13} parent=11 // pred_fallthru
        _
      // Predicated region
      $region17: #{discriminator_r_forward.13} parent=11 // pred_check
        %p137 = pneg %p91
      $region18: #{discriminator_r_forward.13} parent=11 // pred_check_branch
        %139 = sbr.rel (%p137) target = $region20
      $region19: #{discriminator_r_forward.13} parent=11 // pred_region
        _
      $region20: #{discriminator_r_forward.13} parent=11 // pred_fallthru
        _
    $region12: #{discriminator_r_forward.13} parent=5 // pred_fallthru
      _
    %p140 = scmp.lt.s32.totalorder %s11, 2
    // Predicated region
    $region21: #{discriminator_r_forward.13} parent=5 // pred_check
      %p141 = pneg %p140
    $region22: #{discriminator_r_forward.13} parent=5 // pred_check_branch
      %143 = sbr.rel (%p141) target = $region24
    $region23: #{discriminator_r_forward.13} parent=5 // pred_region
      // Predicated region
      $region25: #{discriminator_r_forward.13} parent=23 // pred_check
        %p144 = pneg %p43
      $region26: #{discriminator_r_forward.13} parent=23 // pred_check_branch
        %146 = sbr.rel (%p144) target = $region28
      $region27: #{discriminator_r_forward.13} parent=23 // pred_region
        %p147 = scmp.lt.s32.totalorder %s18, 1
        %s148 = scalar_select %p147, %s18, 1
        %s149 = smul.addr %s148, 12
        %s150 = smul.addr %s149, 8
        %s151 = scalar_lea.vmem %s0, %s150
      $region28: #{discriminator_r_forward.13} parent=23 // pred_fallthru
        _
    $region24: #{discriminator_r_forward.13} parent=5 // pred_fallthru
      _
    %p152 = scmp.le.s32.totalorder 1, %s11
    %p153 = scmp.lt.s32.totalorder %s11, 3
    %p154 = pnand %p152, %p153
    %p155 = pneg %p154
    // Predicated region
    $region29: #{discriminator_r_forward.13} parent=5 // pred_check
      _
    $region30: #{discriminator_r_forward.13} parent=5 // pred_check_branch
      %157 = sbr.rel (%p154) target = $region32
    $region31: #{discriminator_r_forward.13} parent=5 // pred_region
      %s158 = ssub.s32 %s11, 1
      %p159 = scmp.lt.s32.totalorder %s20, 1
      %s160 = scalar_select %p159, %s20, 1
      %s161 = smul.addr %s160, 12
      %s162 = smul.addr %s161, 8
      %s163 = scalar_lea.vmem %s0, %s162
      %p164 = pneg %p49
      %p165 = pneg %p46
      %p166 = pneg %p70
      %p167 = pneg %p67
      %p168 = pneg %p91
      %p169 = pneg %p88
      %p170 = pneg %p119
      %p171 = pneg %p116
      %p172 = scmp.lt.s32.totalorder %s20, 1
      %s173 = scalar_select %p172, %s20, 1
      %p174 = scmp.lt.s32.totalorder %s21, 0
      %s175 = scalar_select %p174, %s21, 0
      %s176 = sadd.s32 %s175, %s173
      %s177 = scalar_lea.vmem %s3, %s176
      %p178 = scmp.lt.s32.totalorder %s20, 1
      %s179 = scalar_select %p178, %s20, 1
      %s180 = smul.addr %s179, 12
      %s181 = smul.addr %s180, 8
      %s182 = scalar_lea.vmem %s0, %s181
      %p183 = scmp.lt.s32.totalorder %s20, 1
      %s184 = scalar_select %p183, %s20, 1
      %p185 = scmp.lt.s32.totalorder %s21, 0
      %s186 = scalar_select %p185, %s21, 0
      %s187 = sadd.s32 %s186, %s184
      %s188 = scalar_lea.vmem %s3, %s187
      %v189 = vld [vmem:[%s1] sm:$0x7]
      %v190 = vld [vmem:[#allocation2] sm:$0x1]
      %v191 = vlaneseq
      %v192 = vand.u32 %v191, 127
      %vm193 = vcmp.lt.s32.totalorder %v192, 17
      %p194 = scmp.ge.s32.totalorder %s21, 0
      %p195 = scmp.lt.s32.totalorder %s21, 1
      %p196 = pnand %p194, %p195
      %p197 = pneg %p196
      %p198 = scmp.gt.s32.totalorder %s21, 0
      %s199 = scalar_select %p198, %s21, 0
      %p200 = scmp.lt.s32.totalorder %s199, 0
      %s201 = scalar_select %p200, %s199, 0
      %s202 = smul.u32 %s201, 32
      %s203 = scalar_lea.vmem %s182, %s202
      %v204 = vld [vmem:[%s203] sm:$0xff]
      %v205 = vld [vmem:[%s203 + $0x8] sm:$0xff]
      %v206 = vld [vmem:[%s203 + $0x10] sm:$0xff]
      %v207 = vld [vmem:[%s203 + $0x18] sm:$0xff]
      %s208 = sadd.s32 %s201, 1
      %s209 = smul.u32 %s208, 32
      %s210 = scalar_lea.vmem %s182, %s209
      %v211 = vld [vmem:[%s210] sm:$0xff]
      %v212 = vld [vmem:[%s210 + $0x8] sm:$0xff]
      %v213 = vld [vmem:[%s210 + $0x10] sm:$0xff]
      %v214 = vld [vmem:[%s210 + $0x18] sm:$0xff]
      %s215 = sadd.s32 %s201, 2
      %s216 = smul.u32 %s215, 32
      %s217 = scalar_lea.vmem %s182, %s216
      %v218 = vld [vmem:[%s217] sm:$0xff]
      %v219 = vld [vmem:[%s217 + $0x8] sm:$0xff]
      %v220 = vld [vmem:[%s217 + $0x10] sm:$0xff]
      %v221 = vld [vmem:[%s217 + $0x18] sm:$0xff]
      %226 = vrot.lane.b32.xlu0 %v204, 127
      %v227 = vpop.permute.xlu0 %226
      %228 = vrot.lane.b32.xlu0 %v205, 127
      %v229 = vpop.permute.xlu0 %228
      %230 = vrot.lane.b32.xlu0 %v206, 127
      %v231 = vpop.permute.xlu0 %230
      %232 = vrot.lane.b32.xlu0 %v207, 127
      %v233 = vpop.permute.xlu0 %232
      %235 = vrot.lane.b32.xlu0 %v204, 126
      %v236 = vpop.permute.xlu0 %235
      %237 = vrot.lane.b32.xlu0 0.0, 126
      %v238 = vpop.permute.xlu0 %237
      %239 = vrot.lane.b32.xlu0 %v205, 126
      %v240 = vpop.permute.xlu0 %239
      %241 = vrot.lane.b32.xlu0 %v206, 126
      %v242 = vpop.permute.xlu0 %241
      %243 = vrot.lane.b32.xlu0 %v207, 126
      %v244 = vpop.permute.xlu0 %243
      %vm245 = vcmask 1031168
      %v246 = vsel %vm245, %v236, %v238
      %v247 = vsel %vm245, %v240, %v238
      %v248 = vsel %vm245, %v242, %v238
      %v249 = vsel %vm245, %v244, %v238
      %254 = vrot.lane.b32.xlu0 %v211, 127
      %v255 = vpop.permute.xlu0 %254
      %256 = vrot.lane.b32.xlu0 %v212, 127
      %v257 = vpop.permute.xlu0 %256
      %258 = vrot.lane.b32.xlu0 %v213, 127
      %v259 = vpop.permute.xlu0 %258
      %260 = vrot.lane.b32.xlu0 %v214, 127
      %v261 = vpop.permute.xlu0 %260
      %262 = vrot.lane.b32.xlu0 %v211, 126
      %v263 = vpop.permute.xlu0 %262
      %264 = vrot.lane.b32.xlu0 %v212, 126
      %v265 = vpop.permute.xlu0 %264
      %266 = vrot.lane.b32.xlu0 %v213, 126
      %v267 = vpop.permute.xlu0 %266
      %268 = vrot.lane.b32.xlu0 %v214, 126
      %v269 = vpop.permute.xlu0 %268
      %v270 = vsel %vm245, %v263, %v238
      %v271 = vsel %vm245, %v265, %v238
      %v272 = vsel %vm245, %v267, %v238
      %v273 = vsel %vm245, %v269, %v238
      %278 = vrot.lane.b32.xlu0 %v218, 127
      %v279 = vpop.permute.xlu0 %278
      %280 = vrot.lane.b32.xlu0 %v219, 127
      %v281 = vpop.permute.xlu0 %280
      %282 = vrot.lane.b32.xlu0 %v220, 127
      %v283 = vpop.permute.xlu0 %282
      %284 = vrot.lane.b32.xlu0 %v221, 127
      %v285 = vpop.permute.xlu0 %284
      %286 = vrot.lane.b32.xlu0 %v218, 126
      %v287 = vpop.permute.xlu0 %286
      %288 = vrot.lane.b32.xlu0 %v219, 126
      %v289 = vpop.permute.xlu0 %288
      %290 = vrot.lane.b32.xlu0 %v220, 126
      %v291 = vpop.permute.xlu0 %290
      %292 = vrot.lane.b32.xlu0 %v221, 126
      %v293 = vpop.permute.xlu0 %292
      %v294 = vsel %vm245, %v287, %v238
      %v295 = vsel %vm245, %v289, %v238
      %v296 = vsel %vm245, %v291, %v238
      %v297 = vsel %vm245, %v293, %v238
      %299 = vset.pattern.permute.xlu0 0
      %300 = vperm.xlu0 %299, %v190
      %v301 = vpop.permute.xlu0 %300
      %v303 = vperm.slane %v301, 0
      %v305 = vperm.slane %v189, 0
      %v306 = vperm.slane %v189, 1
      %v307 = vperm.slane %v189, 2
      %310 = vrot.lane.b32.xlu0 0.0, 1
      %v311 = vpop.permute.xlu0 %310
      %312 = vrot.lane.b32.xlu0 %v204, 1
      %v313 = vpop.permute.xlu0 %312
      %314 = vrot.lane.b32.xlu0 %v205, 1
      %v315 = vpop.permute.xlu0 %314
      %316 = vrot.lane.b32.xlu0 %v206, 1
      %v317 = vpop.permute.xlu0 %316
      %318 = vrot.lane.b32.xlu0 %v207, 1
      %v319 = vpop.permute.xlu0 %318
      %320 = vrot.lane.b32.xlu0 %v227, 1
      %v321 = vpop.permute.xlu0 %320
      %322 = vrot.lane.b32.xlu0 %v229, 1
      %v323 = vpop.permute.xlu0 %322
      %324 = vrot.lane.b32.xlu0 %v231, 1
      %v325 = vpop.permute.xlu0 %324
      %326 = vrot.lane.b32.xlu0 %v233, 1
      %v327 = vpop.permute.xlu0 %326
      %328 = vrot.lane.b32.xlu0 %v236, 1
      %v329 = vpop.permute.xlu0 %328
      %330 = vrot.lane.b32.xlu0 %v246, 1
      %v331 = vpop.permute.xlu0 %330
      %332 = vrot.lane.b32.xlu0 %v240, 1
      %v333 = vpop.permute.xlu0 %332
      %334 = vrot.lane.b32.xlu0 %v247, 1
      %v335 = vpop.permute.xlu0 %334
      %336 = vrot.lane.b32.xlu0 %v242, 1
      %v337 = vpop.permute.xlu0 %336
      %338 = vrot.lane.b32.xlu0 %v248, 1
      %v339 = vpop.permute.xlu0 %338
      %340 = vrot.lane.b32.xlu0 %v244, 1
      %v341 = vpop.permute.xlu0 %340
      %342 = vrot.lane.b32.xlu0 %v249, 1
      %v343 = vpop.permute.xlu0 %342
      %344 = vrot.lane.b32.xlu0 %v211, 1
      %v345 = vpop.permute.xlu0 %344
      %346 = vrot.lane.b32.xlu0 %v212, 1
      %v347 = vpop.permute.xlu0 %346
      %348 = vrot.lane.b32.xlu0 %v213, 1
      %v349 = vpop.permute.xlu0 %348
      %350 = vrot.lane.b32.xlu0 %v214, 1
      %v351 = vpop.permute.xlu0 %350
      %352 = vrot.lane.b32.xlu0 %v255, 1
      %v353 = vpop.permute.xlu0 %352
      %354 = vrot.lane.b32.xlu0 %v257, 1
      %v355 = vpop.permute.xlu0 %354
      %356 = vrot.lane.b32.xlu0 %v259, 1
      %v357 = vpop.permute.xlu0 %356
      %358 = vrot.lane.b32.xlu0 %v261, 1
      %v359 = vpop.permute.xlu0 %358
      %360 = vrot.lane.b32.xlu0 %v263, 1
      %v361 = vpop.permute.xlu0 %360
      %362 = vrot.lane.b32.xlu0 %v270, 1
      %v363 = vpop.permute.xlu0 %362
      %364 = vrot.lane.b32.xlu0 %v265, 1
      %v365 = vpop.permute.xlu0 %364
      %366 = vrot.lane.b32.xlu0 %v271, 1
      %v367 = vpop.permute.xlu0 %366
      %368 = vrot.lane.b32.xlu0 %v267, 1
      %v369 = vpop.permute.xlu0 %368
      %370 = vrot.lane.b32.xlu0 %v272, 1
      %v371 = vpop.permute.xlu0 %370
      %372 = vrot.lane.b32.xlu0 %v269, 1
      %v373 = vpop.permute.xlu0 %372
      %374 = vrot.lane.b32.xlu0 %v273, 1
      %v375 = vpop.permute.xlu0 %374
      %376 = vrot.lane.b32.xlu0 %v218, 1
      %v377 = vpop.permute.xlu0 %376
      %378 = vrot.lane.b32.xlu0 %v219, 1
      %v379 = vpop.permute.xlu0 %378
      %380 = vrot.lane.b32.xlu0 %v220, 1
      %v381 = vpop.permute.xlu0 %380
      %382 = vrot.lane.b32.xlu0 %v221, 1
      %v383 = vpop.permute.xlu0 %382
      %384 = vrot.lane.b32.xlu0 %v279, 1
      %v385 = vpop.permute.xlu0 %384
      %386 = vrot.lane.b32.xlu0 %v281, 1
      %v387 = vpop.permute.xlu0 %386
      %388 = vrot.lane.b32.xlu0 %v283, 1
      %v389 = vpop.permute.xlu0 %388
      %390 = vrot.lane.b32.xlu0 %v285, 1
      %v391 = vpop.permute.xlu0 %390
      %392 = vrot.lane.b32.xlu0 %v287, 1
      %v393 = vpop.permute.xlu0 %392
      %394 = vrot.lane.b32.xlu0 %v294, 1
      %v395 = vpop.permute.xlu0 %394
      %396 = vrot.lane.b32.xlu0 %v289, 1
      %v397 = vpop.permute.xlu0 %396
      %398 = vrot.lane.b32.xlu0 %v295, 1
      %v399 = vpop.permute.xlu0 %398
      %400 = vrot.lane.b32.xlu0 %v291, 1
      %v401 = vpop.permute.xlu0 %400
      %402 = vrot.lane.b32.xlu0 %v296, 1
      %v403 = vpop.permute.xlu0 %402
      %404 = vrot.lane.b32.xlu0 %v293, 1
      %v405 = vpop.permute.xlu0 %404
      %406 = vrot.lane.b32.xlu0 %v297, 1
      %v407 = vpop.permute.xlu0 %406
      %vm408 = vcmask 7168
      %v409 = vsel %vm408, %v311, %v313
      %v410 = vsel %vm408, %v311, %v315
      %v411 = vsel %vm408, %v311, %v317
      %v412 = vsel %vm408, %v311, %v319
      %v413 = vsel %vm408, %v329, %v331
      %v414 = vsel %vm408, %v333, %v335
      %v415 = vsel %vm408, %v337, %v339
      %v416 = vsel %vm408, %v341, %v343
      %v417 = vsel %vm408, %v311, %v345
      %v418 = vsel %vm408, %v311, %v347
      %v419 = vsel %vm408, %v311, %v349
      %v420 = vsel %vm408, %v311, %v351
      %v421 = vsel %vm408, %v361, %v363
      %v422 = vsel %vm408, %v365, %v367
      %v423 = vsel %vm408, %v369, %v371
      %v424 = vsel %vm408, %v373, %v375
      %v425 = vsel %vm408, %v311, %v377
      %v426 = vsel %vm408, %v311, %v379
      %v427 = vsel %vm408, %v311, %v381
      %v428 = vsel %vm408, %v311, %v383
      %v429 = vsel %vm408, %v393, %v395
      %v430 = vsel %vm408, %v397, %v399
      %v431 = vsel %vm408, %v401, %v403
      %v432 = vsel %vm408, %v405, %v407
      %vm469 = vcmask 261120
      %v470 = vsel %vm469, %v307, 0
      %472 = vmatpush.msra.mxu0 %v420
      %473 = vmatpush.msra.mxu0 %v419
      %474 = vmatpush.msra.mxu0 %v418
      %475 = vmatpush.msra.mxu0 %v417
      %476 = vmatpush.msra.mxu0 %v416
      %477 = vmatpush.msra.mxu0 %v415
      %478 = vmatpush.msra.mxu0 %v414
      %479 = vmatpush.msra.mxu0 %v413
      %480 = vmatpush.msra.mxu0 %v327
      %481 = vmatpush.msra.mxu0 %v325
      %482 = vmatpush.msra.mxu0 %v323
      %483 = vmatpush.msra.mxu0 %v321
      %484 = vmatpush.msra.mxu0 %v412
      %485 = vmatpush.msra.mxu0 %v411
      %486 = vmatpush.msra.mxu0 %v410
      %487 = vmatpush.msra.mxu0 %v409
      %488 = vmatmul.f32.gmra.mxu0 %v305
      %v489 = vpop.f32.mrf.mxu0
      %v490 = vadd.f32 %v303, %v489
      %491 = vdwg.mxu0
      %492 = vmatpush.msra.mxu0 %v391
      %493 = vmatpush.msra.mxu0 %v389
      %494 = vmatpush.msra.mxu0 %v387
      %495 = vmatpush.msra.mxu0 %v385
      %496 = vmatpush.msra.mxu0 %v428
      %497 = vmatpush.msra.mxu0 %v427
      %498 = vmatpush.msra.mxu0 %v426
      %499 = vmatpush.msra.mxu0 %v425
      %500 = vmatpush.msra.mxu0 %v424
      %501 = vmatpush.msra.mxu0 %v423
      %502 = vmatpush.msra.mxu0 %v422
      %503 = vmatpush.msra.mxu0 %v421
      %504 = vmatpush.msra.mxu0 %v359
      %505 = vmatpush.msra.mxu0 %v357
      %506 = vmatpush.msra.mxu0 %v355
      %507 = vmatpush.msra.mxu0 %v353
      %508 = vmatmul.f32.gmra.mxu0 %v306
      %v509 = vpop.f32.mrf.mxu0
      %v510 = vadd.f32 %v490, %v509
      %511 = vdwg.mxu0
      %512 = vmatpush.msra.mxu0 0.0
      %513 = vmatpush.msra.mxu0 0.0
      %514 = vmatpush.msra.mxu0 0.0
      %515 = vmatpush.msra.mxu0 0.0
      %516 = vmatpush.msra.mxu0 0.0
      %517 = vmatpush.msra.mxu0 0.0
      %518 = vmatpush.msra.mxu0 0.0
      %519 = vmatpush.msra.mxu0 0.0
      %520 = vmatpush.msra.mxu0 0.0
      %521 = vmatpush.msra.mxu0 0.0
      %522 = vmatpush.msra.mxu0 0.0
      %523 = vmatpush.msra.mxu0 0.0
      %524 = vmatpush.msra.mxu0 %v432
      %525 = vmatpush.msra.mxu0 %v431
      %526 = vmatpush.msra.mxu0 %v430
      %527 = vmatpush.msra.mxu0 %v429
      %528 = vmatmul.f32.gmra.mxu0 %v470
      %v529 = vpop.f32.mrf.mxu0
      %v530 = vadd.f32 %v510, %v529
      %531 = vdwg.mxu0
      %s532 = scalar_select %p197, 1, 0
      %v533 = vstv %s532
      %vm534 = vcmp.eq.s32.totalorder %v533, 1
      %vm535 = vmand %vm534, %vm193
      %v536 = vsel %vm535, %v530, 0.0
      %537 = vst [vmem:[%s188] sm:$0x1] %v536
      %p538 = scmp.lt.s32.totalorder %s20, 1
      %s539 = scalar_select %p538, %s20, 1
      %p540 = scmp.lt.s32.totalorder %s21, 0
      %s541 = scalar_select %p540, %s21, 0
      %s542 = sadd.s32 %s541, %s539
      %s543 = scalar_lea.vmem %s3, %s542
      // Predicated region
      $region33: #{discriminator_r_forward.13} parent=31 // pred_check
        %p544 = pneg %p116
      $region34: #{discriminator_r_forward.13} parent=31 // pred_check_branch
        %546 = sbr.rel (%p544) target = $region36
      $region35: #{discriminator_r_forward.13} parent=31 // pred_region
        _
      $region36: #{discriminator_r_forward.13} parent=31 // pred_fallthru
        _
    $region32: #{discriminator_r_forward.13} parent=5 // pred_fallthru
      _
    %p547 = scmp.le.s32.totalorder 2, %s11
    // Predicated region
    $region37: #{discriminator_r_forward.13} parent=5 // pred_check
      %p548 = pneg %p547
    $region38: #{discriminator_r_forward.13} parent=5 // pred_check_branch
      %550 = sbr.rel (%p548) target = $region40
    $region39: #{discriminator_r_forward.13} parent=5 // pred_region
      %s551 = ssub.s32 %s11, 2
      // Predicated region
      $region41: #{discriminator_r_forward.13} parent=39 // pred_check
        %p552 = pneg %p122
      $region42: #{discriminator_r_forward.13} parent=39 // pred_check_branch
        %554 = sbr.rel (%p552) target = $region44
      $region43: #{discriminator_r_forward.13} parent=39 // pred_region
        %p555 = scmp.lt.s32.totalorder %s22, 1
        %s556 = scalar_select %p555, %s22, 1
        %p557 = scmp.lt.s32.totalorder %s23, 0
        %s558 = scalar_select %p557, %s23, 0
        %s559 = sadd.s32 %s558, %s556
        %s560 = scalar_lea.vmem %s3, %s559
      $region44: #{discriminator_r_forward.13} parent=39 // pred_fallthru
        _
    $region40: #{discriminator_r_forward.13} parent=5 // pred_fallthru
      _
  $region6: #{discriminator_r_forward.13} parent=0 // loop_footer
    %s15 = sadd.s32 1, %s11
  $region7: #{discriminator_r_forward.13} parent=0 // loop_footer_branch
    %10 = sbr.rel target = $region3
  $region8: #{discriminator_r_forward.13} parent=0 // loop_exit
    _

</llo_original>
